<compile_context>
chip_gen: v5e
topology: v5e:2x2
jax: 0.10.0
libtpu: 0.0.40
codegen_flags: <defaults>
</compile_context>

<pallas_src>
import jax
import jax.numpy as jnp
from jax import lax
from jax.experimental import pallas as pl
from jax.experimental.pallas import tpu as pltpu

# Plain Python floats only: a module-level jnp scalar would be captured by the
# kernel trace as a constant and rejected by pallas_call.
_RMS_EPS = 1.1920928955078125e-07       # torch.finfo(torch.float32).eps
_NEG_BIG = -1.0e30                      # finite "-inf": NaN-safe for masked blocks
_ATTN_SCALE = 0.12
_VMEM_LIMIT = 48 * 1024 * 1024          # above 16/32 MiB scoped defaults, < v7x physical


# ---------------------------------------------------------------------------
# Tiled matmul kernel: y = a @ b  (bf16 MXU operands, f32 accumulator)
# ---------------------------------------------------------------------------
def _matmul_kernel(a_ref, b_ref, o_ref, acc_ref):
    @pl.when(pl.program_id(2) == 0)
    def _():
        acc_ref[...] = jnp.zeros_like(acc_ref)

    acc_ref[...] += jnp.dot(a_ref[...].astype(jnp.bfloat16),
                            b_ref[...].astype(jnp.bfloat16),
                            preferred_element_type=jnp.float32)

    @pl.when(pl.program_id(2) == pl.num_programs(2) - 1)
    def _():
        o_ref[...] = acc_ref[...].astype(o_ref.dtype)


def _fit_tile(n, cap, prefer=256):
    """Largest tile <= cap dividing n. Prefers multiples of 256 (fills the
    256-wide MXU passes on v6e/v7x); falls back to multiples of 128
    (n is asserted to be a multiple of 128, so this always terminates)."""
    cap = max(128, min(n, cap))
    if n % prefer == 0 and cap >= prefer:
        t = cap - cap % prefer
        while n % t:
            t -= prefer
        return t
    t = cap - cap % 128
    while n % t:
        t -= 128
    return t


def matmul(a, b, *, tm_cap=512, tn_cap=512, tk_cap=512, out_dtype=jnp.float32):
    M, K = a.shape
    K2, N = b.shape
    assert K == K2
    assert M % 128 == 0 and N % 128 == 0 and K % 128 == 0, (M, K, N)
    tm, tn, tk = _fit_tile(M, tm_cap), _fit_tile(N, tn_cap), _fit_tile(K, tk_cap)
    cost = pl.CostEstimate(
        flops=2 * M * N * K,
        transcendentals=0,
        bytes_accessed=(M * K * jnp.dtype(a.dtype).itemsize
                        + K * N * jnp.dtype(b.dtype).itemsize
                        + M * N * jnp.dtype(out_dtype).itemsize))
    return pl.pallas_call(
        _matmul_kernel,
        out_shape=jax.ShapeDtypeStruct((M, N), out_dtype),
        grid_spec=pltpu.PrefetchScalarGridSpec(
            num_scalar_prefetch=0,
            grid=(M // tm, N // tn, K // tk),
            in_specs=[pl.BlockSpec((tm, tk), lambda i, j, k: (i, k)),
                      pl.BlockSpec((tk, tn), lambda i, j, k: (k, j))],
            out_specs=pl.BlockSpec((tm, tn), lambda i, j, k: (i, j)),
            scratch_shapes=[pltpu.VMEM((tm, tn), jnp.float32)]),
        compiler_params=pltpu.CompilerParams(
            dimension_semantics=("parallel", "parallel", "arbitrary"),
            vmem_limit_bytes=_VMEM_LIMIT),
        cost_estimate=cost,
    )(a, b)


# ---------------------------------------------------------------------------
# Fused attention kernel:
#   per head:  K <- rotary(rms(K)) once, V <- l0*V (+ l1*VE) once  (VMEM scratch)
#   per q tile: q <- 0.12 * rotary(rms(q));  flash-style online softmax over
#               kv blocks, skipping blocks above the causal diagonal.
# ---------------------------------------------------------------------------
def _rms_rot(x, cos_s, sin_s):
    """RMSNorm over head_dim then rotary, all in f32.
    Tables are pre-baked full-width: cos_s = [cos, cos], sin_s = [sin, -sin],
    so  y = x * cos_s + swap_halves(x) * sin_s  (swap == roll by D/2)."""
    x = x.astype(jnp.float32)
    ms = jnp.mean(x * x, axis=-1, keepdims=True)
    x = x * lax.rsqrt(ms + _RMS_EPS)
    half = x.shape[-1] // 2
    x_sw = jnp.concatenate([x[:, half:], x[:, :half]], axis=-1)
    return x * cos_s.astype(jnp.float32) + x_sw * sin_s.astype(jnp.float32)


def _make_attn_kernel(*, has_ve, tk):
    def kernel(lam_ref, cosq_ref, sinq_ref, cosk_ref, sink_ref,
               q_ref, k_ref, v_ref, *rest):
        if has_ve:
            ve_ref, o_ref, kprep_ref, vprep_ref = rest
        else:
            o_ref, kprep_ref, vprep_ref = rest
        tq, D = q_ref.shape
        qi = pl.program_id(1)

        # ---- per-head prep: runs only on the first q tile of each head ----
        @pl.when(qi == 0)
        def _():
            kprep_ref[...] = _rms_rot(k_ref[...], cosk_ref[...],
                                      sink_ref[...]).astype(jnp.bfloat16)
            v = lam_ref[0] * v_ref[...].astype(jnp.float32)
            if has_ve:
                v = v + lam_ref[1] * ve_ref[...].astype(jnp.float32)
            vprep_ref[...] = v.astype(jnp.bfloat16)

        # ---- q prep: fold the 0.12 score scale into q before the bf16 cast
        q = (_rms_rot(q_ref[...], cosq_ref[...], sinq_ref[...])
             * _ATTN_SCALE).astype(jnp.bfloat16)

        # ---- flash-style online softmax over kv blocks; skip blocks that
        #      lie entirely above the causal diagonal --------------------
        row = qi * tq + lax.broadcasted_iota(jnp.int32, (tq, tk), 0)
        num_kv = pl.cdiv((qi + 1) * tq, tk)

        def body(kv, carry):
            m_i, l_i, acc = carry
            start = kv * tk
            k_blk = kprep_ref[pl.ds(start, tk), :]
            v_blk = vprep_ref[pl.ds(start, tk), :]
            s = lax.dot_general(q, k_blk, (((1,), (1,)), ((), ())),
                                preferred_element_type=jnp.float32)
            col = start + lax.broadcasted_iota(jnp.int32, (tq, tk), 1)
            s = jnp.where(col <= row, s, _NEG_BIG)
            m_new = jnp.maximum(m_i, jnp.max(s, axis=-1, keepdims=True))
            alpha = jnp.exp(m_i - m_new)
            p = jnp.exp(s - m_new)
            l_new = alpha * l_i + jnp.sum(p, axis=-1, keepdims=True)
            acc_new = alpha * acc + jnp.dot(p.astype(jnp.bfloat16), v_blk,
                                            preferred_element_type=jnp.float32)
            return m_new, l_new, acc_new

        m0 = jnp.full((tq, 1), _NEG_BIG, jnp.float32)
        l0 = jnp.zeros((tq, 1), jnp.float32)
        acc0 = jnp.zeros((tq, D), jnp.float32)
        _, l_f, acc_f = lax.fori_loop(0, num_kv, body, (m0, l0, acc0))

        # exact per-row divide (cheap; tightens parity with the f32 reference)
        o_ref[...] = (acc_f / l_f).astype(o_ref.dtype)

    return kernel


def attention_heads(lambdas, cos_full, sin_full, qkv, ve, *, num_heads,
                    head_dim, tq=128, tk=128):
    T, three_hdim = qkv.shape
    H, D = num_heads, head_dim
    assert three_hdim == 3 * H * D
    tq, tk = min(tq, T), min(tk, T)
    assert T % tq == 0 and T % tk == 0 and D % 128 == 0

    has_ve = ve is not None
    kernel = _make_attn_kernel(has_ve=has_ve, tk=tk)

    qtile_spec = pl.BlockSpec((tq, D), lambda h, qi: (qi, 0))   # cos/sin of q tile
    full_spec = pl.BlockSpec((T, D), lambda h, qi: (0, 0))      # cos/sin for all k rows
    q_spec = pl.BlockSpec((tq, D), lambda h, qi: (qi, h))       # views into QKV slab
    k_spec = pl.BlockSpec((T, D), lambda h, qi: (0, H + h))
    v_spec = pl.BlockSpec((T, D), lambda h, qi: (0, 2 * H + h))

    in_specs = [pl.BlockSpec(memory_space=pltpu.MemorySpace.SMEM),  # lambdas
                qtile_spec, qtile_spec, full_spec, full_spec,
                q_spec, k_spec, v_spec]
    operands = [lambdas, cos_full, sin_full, cos_full, sin_full, qkv, qkv, qkv]
    if has_ve:
        in_specs.append(pl.BlockSpec((T, D), lambda h, qi: (0, h)))
        operands.append(ve)

    elt = jnp.dtype(qkv.dtype).itemsize
    bytes_accessed = int((qkv.size + (ve.size if has_ve else 0) + 4 * T * D) * elt
                         + T * H * D * 2)
    cost = pl.CostEstimate(flops=2 * H * T * T * D,               # causal QK^T + P@V
                           transcendentals=H * T * T // 2 + 3 * H * T,
                           bytes_accessed=bytes_accessed)

    return pl.pallas_call(
        kernel,
        out_shape=jax.ShapeDtypeStruct((T, H * D), jnp.bfloat16),
        grid_spec=pltpu.PrefetchScalarGridSpec(
            num_scalar_prefetch=0,
            grid=(H, T // tq),
            in_specs=in_specs,
            out_specs=pl.BlockSpec((tq, D), lambda h, qi: (qi, h)),
            scratch_shapes=[pltpu.VMEM((T, D), jnp.bfloat16),    # K prepped (per head)
                            pltpu.VMEM((T, D), jnp.bfloat16)]),  # V mixed   (per head)
        compiler_params=pltpu.CompilerParams(
            # H stays "parallel" so v7x megacore can split heads across TCs;
            # qi must be "arbitrary" because of the per-head scratch init.
            dimension_semantics=("parallel", "arbitrary"),
            vmem_limit_bytes=_VMEM_LIMIT),
        cost_estimate=cost,
    )(*operands)


# ---------------------------------------------------------------------------
# One-time parameter / table prep (outside the hot path)
# ---------------------------------------------------------------------------
def prepare_params(qkv_w, c_proj_w):
    """Flatten + transpose weights to (in, out) and cast to bf16 for the MXU."""
    three, hdim, dim = qkv_w.shape
    assert three == 3
    w_qkv_t = jnp.transpose(qkv_w.reshape(3 * hdim, dim)).astype(jnp.bfloat16)
    w_proj_t = jnp.transpose(c_proj_w).astype(jnp.bfloat16)
    return w_qkv_t, w_proj_t


def prepare_rotary(head_dim, max_seq_len):
    """Rotary tables expanded to full head_dim width (lane-dense) with the
    second-half sign baked into sin; stored bf16 (upcast in-kernel)."""
    quarter = head_dim // 4
    angular_freq = (1.0 / 1024) ** jnp.linspace(0.0, 1.0, quarter,
                                                dtype=jnp.float32)
    angular_freq = jnp.concatenate(
        [angular_freq, jnp.zeros(quarter, jnp.float32)])
    t = jnp.arange(max_seq_len, dtype=jnp.float32)
    theta = jnp.einsum("i,j->ij", t, angular_freq)      # (S, head_dim//2)
    cos, sin = jnp.cos(theta), jnp.sin(theta)
    cos_full = jnp.concatenate([cos, cos], axis=-1).astype(jnp.bfloat16)
    sin_full = jnp.concatenate([sin, -sin], axis=-1).astype(jnp.bfloat16)
    return cos_full, sin_full


# ---------------------------------------------------------------------------
# Module-equivalent forward
# ---------------------------------------------------------------------------
def causal_self_attention(x, w_qkv_t, lambdas, w_proj_t, cos_full, sin_full,
                          *, num_heads, head_dim, ve=None):
    B, T, dim = x.shape
    assert B == 1, "Must use batch size = 1 (matches the PyTorch module)"
    hdim = num_heads * head_dim
    assert w_qkv_t.shape == (dim, 3 * hdim)
    assert w_proj_t.shape == (hdim, dim)

    # QKV projection -> bf16 slab (both consumers want bf16 anyway).
    qkv = matmul(x[0], w_qkv_t, out_dtype=jnp.bfloat16)          # (T, 3*hdim)

    ve2 = None if ve is None else ve.reshape(T, hdim).astype(jnp.bfloat16)

    # Fused norm + rotary + lambda-mix + causal flash attention (bf16 out).
    y = attention_heads(lambdas, cos_full[:T], sin_full[:T], qkv, ve2,
                        num_heads=num_heads, head_dim=head_dim,
                        tq=min(T, 128), tk=min(T, 128))

    out = matmul(y, w_proj_t)                                    # (T, dim) f32
    return out[None]


# ---------------------------------------------------------------------------
# Pure-JAX reference (direct port of the PyTorch forward) for validation
# ---------------------------------------------------------------------------
def reference_forward(x, qkv_w, lambdas, c_proj_w, num_heads, head_dim,
                      max_seq_len, ve):
    B, T, dim = x.shape
    hdim = num_heads * head_dim
    half = head_dim // 2

    quarter = head_dim // 4
    angular_freq = (1.0 / 1024) ** jnp.linspace(0.0, 1.0, quarter,
                                                dtype=jnp.float32)
    angular_freq = jnp.concatenate(
        [angular_freq, jnp.zeros(quarter, jnp.float32)])
    t = jnp.arange(max_seq_len, dtype=jnp.float32)
    theta = jnp.einsum("i,j->ij", t, angular_freq)
    cos = jnp.cos(theta)[None, :T, None, :]
    sin = jnp.sin(theta)[None, :T, None, :]

    w = qkv_w.reshape(3 * hdim, dim)
    qkv = jnp.einsum("btd,nd->btn", x, w).reshape(B, T, 3 * num_heads, head_dim)
    q = qkv[:, :, :num_heads]
    k = qkv[:, :, num_heads:2 * num_heads]
    v = qkv[:, :, 2 * num_heads:]

    def rms(u):
        ms = jnp.mean(u * u, axis=-1, keepdims=True)
        return u * lax.rsqrt(ms + 1.1920928955078125e-07)

    def rot(u):
        u1, u2 = u[..., :half], u[..., half:]
        return jnp.concatenate([u1 * cos + u2 * sin, -u1 * sin + u2 * cos],
                               axis=-1)

    q, k = rot(rms(q)), rot(rms(k))
    v = lambdas[0] * v + lambdas[1] * ve.reshape(B, T, num_heads, head_dim)

    qh, kh, vh = (jnp.transpose(u, (0, 2, 1, 3)) for u in (q, k, v))
    s = jnp.einsum("bhqd,bhkd->bhqk", qh, kh) * 0.12
    mask = jnp.tril(jnp.ones((T, T), dtype=bool))
    s = jnp.where(mask[None, None], s, -jnp.inf)
    p = jax.nn.softmax(s, axis=-1)
    y = jnp.einsum("bhqk,bhkd->bhqd", p, vh)
    y = jnp.transpose(y, (0, 2, 1, 3)).reshape(B, T, hdim)
    return jnp.einsum("bth,dh->btd", y, c_proj_w)


# ---------------------------------------------------------------------------
if __name__ == "__main__":
    # Small shapes consistent with the module (head_dim fixed at 128).
    dim = 128
    num_heads = 2
    head_dim = 128
    hdim = num_heads * head_dim
    T = 256
    max_seq_len = 256
    B = 1

    key = jax.random.PRNGKey(0)
    k1, k2, k3, k4 = jax.random.split(key, 4)

    # Parameter init follows the module's uniform scheme.
    std = 0.5 * dim ** (-0.5)
    bound = (3.0 ** 0.5) * std
    qkv_w = jax.random.uniform(k1, (3, hdim, dim), jnp.float32, -bound, bound)
    lambdas = jnp.array([0.5, 0.5], dtype=jnp.float32)
    # NOTE: the module zero-inits c_proj (output would be trivially zero);
    # use the CastedLinear uniform init here so the numeric check is meaningful.
    pstd = 0.5 * hdim ** (-0.5)
    pbound = (3.0 ** 0.5) * pstd
    c_proj_w = jax.random.uniform(k4, (dim, hdim), jnp.float32, -pbound, pbound)

    # Inputs.
    x = jax.random.normal(k2, (B, T, dim), jnp.float32)
    ve = jax.random.normal(k3, (B, T, hdim), jnp.float32)

    # One-time layout prep (outside the hot path).
    w_qkv_t, w_proj_t = prepare_params(qkv_w, c_proj_w)
    cos_full, sin_full = prepare_rotary(head_dim, max_seq_len)

    fwd = jax.jit(lambda xx, vv: causal_self_attention(
        xx, w_qkv_t, lambdas, w_proj_t, cos_full, sin_full,
        num_heads=num_heads, head_dim=head_dim, ve=vv))
    fwd_no_ve = jax.jit(lambda xx: causal_self_attention(
        xx, w_qkv_t, lambdas, w_proj_t, cos_full, sin_full,
        num_heads=num_heads, head_dim=head_dim, ve=None))

    y = fwd(x, ve)
    jax.block_until_ready(y)
    assert y.shape == (B, T, dim)
    assert bool(jnp.all(jnp.isfinite(y)))

    # Validate against the pure-JAX (f32) reference; bf16 slabs/tables give
    # ~1% relative error at these scales.
    y_ref = reference_forward(x, qkv_w, lambdas, c_proj_w, num_heads, head_dim,
                              max_seq_len, ve)
    rel_err = float(jnp.linalg.norm(y - y_ref)
                    / (jnp.linalg.norm(y_ref) + 1e-12))
    assert rel_err < 5e-2, f"relative error too large: {rel_err}"

    # ve=None path (specialized kernel without the VE operand).
    y2 = fwd_no_ve(x)
    jax.block_until_ready(y2)
    y2_ref = reference_forward(x, qkv_w, lambdas, c_proj_w, num_heads, head_dim,
                               max_seq_len, jnp.zeros_like(ve))
    rel_err2 = float(jnp.linalg.norm(y2 - y2_ref)
                     / (jnp.linalg.norm(y2_ref) + 1e-12))
    assert rel_err2 < 5e-2, f"relative error (no ve) too large: {rel_err2}"

    print("KERNEL_OK")
</pallas_src>

<mosaic_0001>
module attributes {stable_mosaic.version = 11 : i64} {
  func.func @_matmul_kernel(%arg0: i32, %arg1: i32, %arg2: i32, %arg3: memref<256x128xf32, #tpu.memory_space<vmem>>, %arg4: memref<128x256xbf16, #tpu.memory_space<vmem>>, %arg5: memref<256x256xbf16, #tpu.memory_space<vmem>>, %arg6: memref<256x256xf32, #tpu.memory_space<vmem>>) attributes {dimension_semantics = [#tpu.dimension_semantics<parallel>, #tpu.dimension_semantics<parallel>, #tpu.dimension_semantics<arbitrary>], iteration_bounds = array<i64: 1, 3, 1>, scalar_prefetch = 0 : i64, scratch_operands = 1 : i64, tpu.core_type = #tpu.core_type<tc>, window_params = [{transform_indices = @transform_0, window_bounds = array<i64: 256, 128>}, {transform_indices = @transform_1, window_bounds = array<i64: 128, 256>}, {transform_indices = @transform_2, window_bounds = array<i64: 256, 256>}]} {
    %c0_i32 = arith.constant 0 : i32
    %0 = arith.cmpi eq, %arg2, %c0_i32 : i32
    %1 = arith.extui %0 : i1 to i32
    %c0_i32_0 = arith.constant 0 : i32
    %2 = arith.cmpi ne, %1, %c0_i32_0 : i32
    scf.if %2 {
      %cst_10 = arith.constant 0.000000e+00 : f32
      %13 = vector.broadcast %cst_10 : f32 to vector<256x256xf32>
      %c0_11 = arith.constant 0 : index
      %c0_12 = arith.constant 0 : index
      %14 = vector.load %arg6[%c0_11, %c0_12] : memref<256x256xf32, #tpu.memory_space<vmem>>, vector<256x256xf32>
      tpu.vector_store %arg6[%c0_11, %c0_12], %13 {strides = array<i32>} : memref<256x256xf32, #tpu.memory_space<vmem>>, vector<256x256xf32>,
    } else {
    }
    %c0 = arith.constant 0 : index
    %c0_1 = arith.constant 0 : index
    %3 = vector.load %arg6[%c0, %c0_1] : memref<256x256xf32, #tpu.memory_space<vmem>>, vector<256x256xf32>
    %c0_2 = arith.constant 0 : index
    %c0_3 = arith.constant 0 : index
    %4 = vector.load %arg3[%c0_2, %c0_3] : memref<256x128xf32, #tpu.memory_space<vmem>>, vector<256x128xf32>
    %5 = arith.truncf %4 : vector<256x128xf32> to vector<256x128xbf16>
    %c0_4 = arith.constant 0 : index
    %c0_5 = arith.constant 0 : index
    %6 = vector.load %arg4[%c0_4, %c0_5] : memref<128x256xbf16, #tpu.memory_space<vmem>>, vector<128x256xbf16>
    %cst = arith.constant dense<0.000000e+00> : vector<256x256xf32>
    %7 = tpu.matmul %5, %6, %cst {dimension_numbers = #tpu.dot_dimension_numbers<[1], [0], [0], [1], [0, 0, 1, 1], [], []>} : vector<256x128xbf16>, vector<128x256xbf16>, vector<256x256xf32> -> vector<256x256xf32>
    %8 = arith.addf %3, %7 : vector<256x256xf32>
    %c0_6 = arith.constant 0 : index
    %c0_7 = arith.constant 0 : index
    %9 = vector.load %arg6[%c0_6, %c0_7] : memref<256x256xf32, #tpu.memory_space<vmem>>, vector<256x256xf32>
    tpu.vector_store %arg6[%c0_6, %c0_7], %8 {strides = array<i32>} : memref<256x256xf32, #tpu.memory_space<vmem>>, vector<256x256xf32>,
    %c0_i32_8 = arith.constant 0 : i32
    %10 = arith.cmpi eq, %arg2, %c0_i32_8 : i32
    %11 = arith.extui %10 : i1 to i32
    %c0_i32_9 = arith.constant 0 : i32
    %12 = arith.cmpi ne, %11, %c0_i32_9 : i32
    scf.if %12 {
      %c0_10 = arith.constant 0 : index
      %c0_11 = arith.constant 0 : index
      %13 = vector.load %arg6[%c0_10, %c0_11] : memref<256x256xf32, #tpu.memory_space<vmem>>, vector<256x256xf32>
      %14 = arith.truncf %13 : vector<256x256xf32> to vector<256x256xbf16>
      %c0_12 = arith.constant 0 : index
      %c0_13 = arith.constant 0 : index
      %15 = vector.load %arg5[%c0_12, %c0_13] : memref<256x256xbf16, #tpu.memory_space<vmem>>, vector<256x256xbf16>
      tpu.vector_store %arg5[%c0_12, %c0_13], %14 {strides = array<i32>} : memref<256x256xbf16, #tpu.memory_space<vmem>>, vector<256x256xbf16>,
    } else {
    }
    return
  }
  func.func @transform_0(%arg0: i32, %arg1: i32, %arg2: i32) -> (i32, i32) {
    %c0_i32 = arith.constant 0 : i32
    return %arg0, %arg2 : i32, i32
  }
  func.func @transform_1(%arg0: i32, %arg1: i32, %arg2: i32) -> (i32, i32) {
    %c0_i32 = arith.constant 0 : i32
    return %arg2, %arg1 : i32, i32
  }
  func.func @transform_2(%arg0: i32, %arg1: i32, %arg2: i32) -> (i32, i32) {
    %c0_i32 = arith.constant 0 : i32
    return %arg0, %arg1 : i32, i32
  }
}

module attributes {stable_mosaic.version = 11 : i64} {
  func.func @kernel(%arg0: i32, %arg1: i32, %arg2: memref<2xf32, #tpu.memory_space<smem>>, %arg3: memref<128x128xbf16, #tpu.memory_space<vmem>>, %arg4: memref<128x128xbf16, #tpu.memory_space<vmem>>, %arg5: memref<256x128xbf16, #tpu.memory_space<vmem>>, %arg6: memref<256x128xbf16, #tpu.memory_space<vmem>>, %arg7: memref<128x128xbf16, #tpu.memory_space<vmem>>, %arg8: memref<256x128xbf16, #tpu.memory_space<vmem>>, %arg9: memref<256x128xbf16, #tpu.memory_space<vmem>>, %arg10: memref<256x128xbf16, #tpu.memory_space<vmem>>, %arg11: memref<128x128xbf16, #tpu.memory_space<vmem>>, %arg12: memref<256x128xbf16, #tpu.memory_space<vmem>>, %arg13: memref<256x128xbf16, #tpu.memory_space<vmem>>) attributes {dimension_semantics = [#tpu.dimension_semantics<parallel>, #tpu.dimension_semantics<arbitrary>], iteration_bounds = array<i64: 2, 2>, scalar_prefetch = 0 : i64, scratch_operands = 2 : i64, tpu.core_type = #tpu.core_type<tc>, window_params = [{transform_indices = @transform_0, window_bounds = array<i64: 2>}, {transform_indices = @transform_1, window_bounds = array<i64: 128, 128>}, {transform_indices = @transform_2, window_bounds = array<i64: 128, 128>}, {pipeline_mode = #tpu.pipeline_mode<synchronous>, transform_indices = @transform_3, window_bounds = array<i64: 256, 128>}, {pipeline_mode = #tpu.pipeline_mode<synchronous>, transform_indices = @transform_4, window_bounds = array<i64: 256, 128>}, {transform_indices = @transform_5, window_bounds = array<i64: 128, 128>}, {transform_indices = @transform_6, window_bounds = array<i64: 256, 128>}, {transform_indices = @transform_7, window_bounds = array<i64: 256, 128>}, {transform_indices = @transform_8, window_bounds = array<i64: 256, 128>}, {transform_indices = @transform_9, window_bounds = array<i64: 128, 128>}]} {
    %c0_i32 = arith.constant 0 : i32
    %0 = arith.cmpi eq, %arg1, %c0_i32 : i32
    %1 = arith.extui %0 : i1 to i32
    %c0_i32_0 = arith.constant 0 : i32
    %2 = arith.cmpi ne, %1, %c0_i32_0 : i32
    scf.if %2 {
      %c0_18 = arith.constant 0 : index
      %c0_19 = arith.constant 0 : index
      %46 = vector.load %arg8[%c0_18, %c0_19] : memref<256x128xbf16, #tpu.memory_space<vmem>>, vector<256x128xbf16>
      %c0_20 = arith.constant 0 : index
      %c0_21 = arith.constant 0 : index
      %47 = vector.load %arg5[%c0_20, %c0_21] : memref<256x128xbf16, #tpu.memory_space<vmem>>, vector<256x128xbf16>
      %c0_22 = arith.constant 0 : index
      %c0_23 = arith.constant 0 : index
      %48 = vector.load %arg6[%c0_22, %c0_23] : memref<256x128xbf16, #tpu.memory_space<vmem>>, vector<256x128xbf16>
      %49 = arith.extf %46 : vector<256x128xbf16> to vector<256x128xf32>
      %50 = arith.mulf %49, %49 : vector<256x128xf32>
      %cst_24 = arith.constant dense<0.000000e+00> : vector<256xf32>
      %51 = vector.multi_reduction <add>, %50, %cst_24 [1] : vector<256x128xf32> to vector<256xf32>
      %52 = vector.shape_cast %51 : vector<256xf32> to vector<256x1xf32>
      %cst_25 = arith.constant 1.280000e+02 : f32
      %53 = vector.broadcast %cst_25 : f32 to vector<256x1xf32>
      %54 = arith.divf %52, %53 : vector<256x1xf32>
      %cst_26 = arith.constant 1.1920929E-7 : f32
      %55 = vector.broadcast %cst_26 : f32 to vector<256x1xf32>
      %56 = arith.addf %54, %55 : vector<256x1xf32>
      %57 = math.rsqrt %56 : vector<256x1xf32>
      %58 = vector.broadcast %57 : vector<256x1xf32> to vector<256x128xf32>
      %59 = arith.mulf %49, %58 : vector<256x128xf32>
      %60 = vector.extract_strided_slice %59 {offsets = [0, 64], sizes = [256, 64], strides = [1, 1]} : vector<256x128xf32> to vector<256x64xf32>
      %61 = vector.extract_strided_slice %59 {offsets = [0, 0], sizes = [256, 64], strides = [1, 1]} : vector<256x128xf32> to vector<256x64xf32>
      %62 = tpu.concatenate %60, %61 in 1 : vector<256x64xf32>, vector<256x64xf32> -> vector<256x128xf32>
      %63 = arith.extf %47 : vector<256x128xbf16> to vector<256x128xf32>
      %64 = arith.mulf %59, %63 : vector<256x128xf32>
      %65 = arith.extf %48 : vector<256x128xbf16> to vector<256x128xf32>
      %66 = arith.mulf %62, %65 : vector<256x128xf32>
      %67 = arith.addf %64, %66 : vector<256x128xf32>
      %68 = arith.truncf %67 : vector<256x128xf32> to vector<256x128xbf16>
      %c0_27 = arith.constant 0 : index
      %c0_28 = arith.constant 0 : index
      %69 = vector.load %arg12[%c0_27, %c0_28] : memref<256x128xbf16, #tpu.memory_space<vmem>>, vector<256x128xbf16>
      tpu.vector_store %arg12[%c0_27, %c0_28], %68 {strides = array<i32>} : memref<256x128xbf16, #tpu.memory_space<vmem>>, vector<256x128xbf16>,
      %c0_29 = arith.constant 0 : index
      %70 = memref.load %arg2[%c0_29] : memref<2xf32, #tpu.memory_space<smem>>
      %c0_30 = arith.constant 0 : index
      %c0_31 = arith.constant 0 : index
      %71 = vector.load %arg9[%c0_30, %c0_31] : memref<256x128xbf16, #tpu.memory_space<vmem>>, vector<256x128xbf16>
      %72 = arith.extf %71 : vector<256x128xbf16> to vector<256x128xf32>
      %73 = vector.broadcast %70 : f32 to vector<256x128xf32>
      %74 = arith.mulf %73, %72 : vector<256x128xf32>
      %c1 = arith.constant 1 : index
      %75 = memref.load %arg2[%c1] : memref<2xf32, #tpu.memory_space<smem>>
      %c0_32 = arith.constant 0 : index
      %c0_33 = arith.constant 0 : index
      %76 = vector.load %arg10[%c0_32, %c0_33] : memref<256x128xbf16, #tpu.memory_space<vmem>>, vector<256x128xbf16>
      %77 = arith.extf %76 : vector<256x128xbf16> to vector<256x128xf32>
      %78 = vector.broadcast %75 : f32 to vector<256x128xf32>
      %79 = arith.mulf %78, %77 : vector<256x128xf32>
      %80 = arith.addf %74, %79 : vector<256x128xf32>
      %81 = arith.truncf %80 : vector<256x128xf32> to vector<256x128xbf16>
      %c0_34 = arith.constant 0 : index
      %c0_35 = arith.constant 0 : index
      %82 = vector.load %arg13[%c0_34, %c0_35] : memref<256x128xbf16, #tpu.memory_space<vmem>>, vector<256x128xbf16>
      tpu.vector_store %arg13[%c0_34, %c0_35], %81 {strides = array<i32>} : memref<256x128xbf16, #tpu.memory_space<vmem>>, vector<256x128xbf16>,
    } else {
    }
    %c0 = arith.constant 0 : index
    %c0_1 = arith.constant 0 : index
    %3 = vector.load %arg7[%c0, %c0_1] : memref<128x128xbf16, #tpu.memory_space<vmem>>, vector<128x128xbf16>
    %c0_2 = arith.constant 0 : index
    %c0_3 = arith.constant 0 : index
    %4 = vector.load %arg3[%c0_2, %c0_3] : memref<128x128xbf16, #tpu.memory_space<vmem>>, vector<128x128xbf16>
    %c0_4 = arith.constant 0 : index
    %c0_5 = arith.constant 0 : index
    %5 = vector.load %arg4[%c0_4, %c0_5] : memref<128x128xbf16, #tpu.memory_space<vmem>>, vector<128x128xbf16>
    %6 = arith.extf %3 : vector<128x128xbf16> to vector<128x128xf32>
    %7 = arith.mulf %6, %6 : vector<128x128xf32>
    %cst = arith.constant dense<0.000000e+00> : vector<128xf32>
    %8 = vector.multi_reduction <add>, %7, %cst [1] : vector<128x128xf32> to vector<128xf32>
    %9 = vector.shape_cast %8 : vector<128xf32> to vector<128x1xf32>
    %cst_6 = arith.constant 1.280000e+02 : f32
    %10 = vector.broadcast %cst_6 : f32 to vector<128x1xf32>
    %11 = arith.divf %9, %10 : vector<128x1xf32>
    %cst_7 = arith.constant 1.1920929E-7 : f32
    %12 = vector.broadcast %cst_7 : f32 to vector<128x1xf32>
    %13 = arith.addf %11, %12 : vector<128x1xf32>
    %14 = math.rsqrt %13 : vector<128x1xf32>
    %15 = vector.broadcast %14 : vector<128x1xf32> to vector<128x128xf32>
    %16 = arith.mulf %6, %15 : vector<128x128xf32>
    %17 = vector.extract_strided_slice %16 {offsets = [0, 64], sizes = [128, 64], strides = [1, 1]} : vector<128x128xf32> to vector<128x64xf32>
    %18 = vector.extract_strided_slice %16 {offsets = [0, 0], sizes = [128, 64], strides = [1, 1]} : vector<128x128xf32> to vector<128x64xf32>
    %19 = tpu.concatenate %17, %18 in 1 : vector<128x64xf32>, vector<128x64xf32> -> vector<128x128xf32>
    %20 = arith.extf %4 : vector<128x128xbf16> to vector<128x128xf32>
    %21 = arith.mulf %16, %20 : vector<128x128xf32>
    %22 = arith.extf %5 : vector<128x128xbf16> to vector<128x128xf32>
    %23 = arith.mulf %19, %22 : vector<128x128xf32>
    %24 = arith.addf %21, %23 : vector<128x128xf32>
    %cst_8 = arith.constant 1.200000e-01 : f32
    %25 = vector.broadcast %cst_8 : f32 to vector<128x128xf32>
    %26 = arith.mulf %24, %25 : vector<128x128xf32>
    %27 = arith.truncf %26 : vector<128x128xf32> to vector<128x128xbf16>
    %c128_i32 = arith.constant 128 : i32
    %28 = arith.muli %arg1, %c128_i32 : i32
    %29 = tpu.iota {dimensions = array<i32: 0>} : vector<128x128xi32>
    %30 = vector.broadcast %28 : i32 to vector<128x128xi32>
    %31 = arith.addi %30, %29 : vector<128x128xi32>
    %c1_i32 = arith.constant 1 : i32
    %32 = arith.addi %arg1, %c1_i32 : i32
    %c128_i32_9 = arith.constant 128 : i32
    %33 = arith.muli %32, %c128_i32_9 : i32
    %c127_i32 = arith.constant 127 : i32
    %34 = arith.addi %33, %c127_i32 : i32
    %c128_i32_10 = arith.constant 128 : i32
    %35 = arith.divsi %34, %c128_i32_10 : i32
    %cst_11 = arith.constant -1.000000e+30 : f32
    %36 = vector.broadcast %cst_11 : f32 to vector<128x1xf32>
    %cst_12 = arith.constant 0.000000e+00 : f32
    %37 = vector.broadcast %cst_12 : f32 to vector<128x1xf32>
    %cst_13 = arith.constant 0.000000e+00 : f32
    %38 = vector.broadcast %cst_13 : f32 to vector<128x128xf32>
    %c0_i32_14 = arith.constant 0 : i32
    %39 = arith.subi %35, %c0_i32_14 : i32
    %40 = arith.addi %c0_i32_14, %39 : i32
    %c1_i32_15 = arith.constant 1 : i32
    %41:3 = scf.for %arg14 = %c0_i32_14 to %40 step %c1_i32_15 iter_args(%arg15 = %36, %arg16 = %37, %arg17 = %38) -> (vector<128x1xf32>, vector<128x1xf32>, vector<128x128xf32>)  : i32 {
      %c128_i32_18 = arith.constant 128 : i32
      %46 = arith.muli %arg14, %c128_i32_18 : i32
      %47 = arith.index_cast %46 : i32 to index
      %c0_19 = arith.constant 0 : index
      %48 = vector.load %arg12[%47, %c0_19] : memref<256x128xbf16, #tpu.memory_space<vmem>>, vector<128x128xbf16>
      %49 = arith.index_cast %46 : i32 to index
      %c0_20 = arith.constant 0 : index
      %50 = vector.load %arg13[%49, %c0_20] : memref<256x128xbf16, #tpu.memory_space<vmem>>, vector<128x128xbf16>
      %cst_21 = arith.constant dense<0.000000e+00> : vector<128x128xf32>
      %51 = tpu.matmul %27, %48, %cst_21 {dimension_numbers = #tpu.dot_dimension_numbers<[1], [1], [0], [0], [0, 0, 1, 0], [], []>} : vector<128x128xbf16>, vector<128x128xbf16>, vector<128x128xf32> -> vector<128x128xf32>
      %52 = tpu.iota {dimensions = array<i32: 1>} : vector<128x128xi32>
      %53 = vector.broadcast %46 : i32 to vector<128x128xi32>
      %54 = arith.addi %53, %52 : vector<128x128xi32>
      %55 = arith.cmpi sle, %54, %31 : vector<128x128xi32>
      %cst_22 = arith.constant -1.000000e+30 : f32
      %56 = vector.broadcast %cst_22 : f32 to vector<128x128xf32>
      %57 = arith.select %55, %51, %56 : vector<128x128xi1>, vector<128x128xf32>
      %cst_23 = arith.constant dense<0xFF800000> : vector<128xf32>
      %58 = vector.multi_reduction <maximumf>, %57, %cst_23 [1] : vector<128x128xf32> to vector<128xf32>
      %59 = vector.shape_cast %58 : vector<128xf32> to vector<128x1xf32>
      %60 = arith.maximumf %arg15, %59 : vector<128x1xf32>
      %61 = arith.subf %arg15, %60 : vector<128x1xf32>
      %62 = math.exp %61 : vector<128x1xf32>
      %63 = vector.broadcast %60 : vector<128x1xf32> to vector<128x128xf32>
      %64 = arith.subf %57, %63 : vector<128x128xf32>
      %65 = math.exp %64 : vector<128x128xf32>
      %66 = arith.mulf %62, %arg16 : vector<128x1xf32>
      %cst_24 = arith.constant dense<0.000000e+00> : vector<128xf32>
      %67 = vector.multi_reduction <add>, %65, %cst_24 [1] : vector<128x128xf32> to vector<128xf32>
      %68 = vector.shape_cast %67 : vector<128xf32> to vector<128x1xf32>
      %69 = arith.addf %66, %68 : vector<128x1xf32>
      %70 = vector.broadcast %62 : vector<128x1xf32> to vector<128x128xf32>
      %71 = arith.mulf %70, %arg17 : vector<128x128xf32>
      %72 = arith.truncf %65 : vector<128x128xf32> to vector<128x128xbf16>
      %cst_25 = arith.constant dense<0.000000e+00> : vector<128x128xf32>
      %73 = tpu.matmul %72, %50, %cst_25 {dimension_numbers = #tpu.dot_dimension_numbers<[1], [0], [0], [1], [0, 0, 1, 1], [], []>} : vector<128x128xbf16>, vector<128x128xbf16>, vector<128x128xf32> -> vector<128x128xf32>
      %74 = arith.addf %71, %73 : vector<128x128xf32>
      scf.yield %60, %69, %74 : vector<128x1xf32>, vector<128x1xf32>, vector<128x128xf32>
    }
    %42 = vector.broadcast %41#1 : vector<128x1xf32> to vector<128x128xf32>
    %43 = arith.divf %41#2, %42 : vector<128x128xf32>
    %44 = arith.truncf %43 : vector<128x128xf32> to vector<128x128xbf16>
    %c0_16 = arith.constant 0 : index
    %c0_17 = arith.constant 0 : index
    %45 = vector.load %arg11[%c0_16, %c0_17] : memref<128x128xbf16, #tpu.memory_space<vmem>>, vector<128x128xbf16>
    tpu.vector_store %arg11[%c0_16, %c0_17], %44 {strides = array<i32>} : memref<128x128xbf16, #tpu.memory_space<vmem>>, vector<128x128xbf16>,
    return
  }
  func.func @transform_0(%arg0: i32, %arg1: i32) -> i32 {
    %c0_i32 = arith.constant 0 : i32
    %c0_i32_0 = arith.constant 0 : i32
    return %c0_i32 : i32
  }
  func.func @transform_1(%arg0: i32, %arg1: i32) -> (i32, i32) {
    %c0_i32 = arith.constant 0 : i32
    %c0_i32_0 = arith.constant 0 : i32
    return %arg1, %c0_i32 : i32, i32
  }
  func.func @transform_2(%arg0: i32, %arg1: i32) -> (i32, i32) {
    %c0_i32 = arith.constant 0 : i32
    %c0_i32_0 = arith.constant 0 : i32
    return %arg1, %c0_i32 : i32, i32
  }
  func.func @transform_3(%arg0: i32, %arg1: i32) -> (i32, i32) {
    %c0_i32 = arith.constant 0 : i32
    %c0_i32_0 = arith.constant 0 : i32
    %c0_i32_1 = arith.constant 0 : i32
    return %c0_i32, %c0_i32_0 : i32, i32
  }
  func.func @transform_4(%arg0: i32, %arg1: i32) -> (i32, i32) {
    %c0_i32 = arith.constant 0 : i32
    %c0_i32_0 = arith.constant 0 : i32
    %c0_i32_1 = arith.constant 0 : i32
    return %c0_i32, %c0_i32_0 : i32, i32
  }
  func.func @transform_5(%arg0: i32, %arg1: i32) -> (i32, i32) {
    %c0_i32 = arith.constant 0 : i32
    return %arg1, %arg0 : i32, i32
  }
  func.func @transform_6(%arg0: i32, %arg1: i32) -> (i32, i32) {
    %c2_i32 = arith.constant 2 : i32
    %0 = arith.addi %c2_i32, %arg0 : i32
    %c0_i32 = arith.constant 0 : i32
    %c0_i32_0 = arith.constant 0 : i32
    return %c0_i32, %0 : i32, i32
  }
  func.func @transform_7(%arg0: i32, %arg1: i32) -> (i32, i32) {
    %c4_i32 = arith.constant 4 : i32
    %0 = arith.addi %c4_i32, %arg0 : i32
    %c0_i32 = arith.constant 0 : i32
    %c0_i32_0 = arith.constant 0 : i32
    return %c0_i32, %0 : i32, i32
  }
  func.func @transform_8(%arg0: i32, %arg1: i32) -> (i32, i32) {
    %c0_i32 = arith.constant 0 : i32
    %c0_i32_0 = arith.constant 0 : i32
    return %c0_i32, %arg0 : i32, i32
  }
  func.func @transform_9(%arg0: i32, %arg1: i32) -> (i32, i32) {
    %c0_i32 = arith.constant 0 : i32
    return %arg1, %arg0 : i32, i32
  }
}

module attributes {stable_mosaic.version = 11 : i64} {
  func.func @_matmul_kernel(%arg0: i32, %arg1: i32, %arg2: i32, %arg3: memref<256x256xbf16, #tpu.memory_space<vmem>>, %arg4: memref<256x128xbf16, #tpu.memory_space<vmem>>, %arg5: memref<256x128xf32, #tpu.memory_space<vmem>>, %arg6: memref<256x128xf32, #tpu.memory_space<vmem>>) attributes {dimension_semantics = [#tpu.dimension_semantics<parallel>, #tpu.dimension_semantics<parallel>, #tpu.dimension_semantics<arbitrary>], iteration_bounds = array<i64: 1, 1, 1>, scalar_prefetch = 0 : i64, scratch_operands = 1 : i64, tpu.core_type = #tpu.core_type<tc>, window_params = [{transform_indices = @transform_0, window_bounds = array<i64: 256, 256>}, {transform_indices = @transform_1, window_bounds = array<i64: 256, 128>}, {transform_indices = @transform_2, window_bounds = array<i64: 256, 128>}]} {
    %c0_i32 = arith.constant 0 : i32
    %0 = arith.cmpi eq, %arg2, %c0_i32 : i32
    %1 = arith.extui %0 : i1 to i32
    %c0_i32_0 = arith.constant 0 : i32
    %2 = arith.cmpi ne, %1, %c0_i32_0 : i32
    scf.if %2 {
      %cst_10 = arith.constant 0.000000e+00 : f32
      %12 = vector.broadcast %cst_10 : f32 to vector<256x128xf32>
      %c0_11 = arith.constant 0 : index
      %c0_12 = arith.constant 0 : index
      %13 = vector.load %arg6[%c0_11, %c0_12] : memref<256x128xf32, #tpu.memory_space<vmem>>, vector<256x128xf32>
      tpu.vector_store %arg6[%c0_11, %c0_12], %12 {strides = array<i32>} : memref<256x128xf32, #tpu.memory_space<vmem>>, vector<256x128xf32>,
    } else {
    }
    %c0 = arith.constant 0 : index
    %c0_1 = arith.constant 0 : index
    %3 = vector.load %arg6[%c0, %c0_1] : memref<256x128xf32, #tpu.memory_space<vmem>>, vector<256x128xf32>
    %c0_2 = arith.constant 0 : index
    %c0_3 = arith.constant 0 : index
    %4 = vector.load %arg3[%c0_2, %c0_3] : memref<256x256xbf16, #tpu.memory_space<vmem>>, vector<256x256xbf16>
    %c0_4 = arith.constant 0 : index
    %c0_5 = arith.constant 0 : index
    %5 = vector.load %arg4[%c0_4, %c0_5] : memref<256x128xbf16, #tpu.memory_space<vmem>>, vector<256x128xbf16>
    %cst = arith.constant dense<0.000000e+00> : vector<256x128xf32>
    %6 = tpu.matmul %4, %5, %cst {dimension_numbers = #tpu.dot_dimension_numbers<[1], [0], [0], [1], [0, 0, 1, 1], [], []>} : vector<256x256xbf16>, vector<256x128xbf16>, vector<256x128xf32> -> vector<256x128xf32>
    %7 = arith.addf %3, %6 : vector<256x128xf32>
    %c0_6 = arith.constant 0 : index
    %c0_7 = arith.constant 0 : index
    %8 = vector.load %arg6[%c0_6, %c0_7] : memref<256x128xf32, #tpu.memory_space<vmem>>, vector<256x128xf32>
    tpu.vector_store %arg6[%c0_6, %c0_7], %7 {strides = array<i32>} : memref<256x128xf32, #tpu.memory_space<vmem>>, vector<256x128xf32>,
    %c0_i32_8 = arith.constant 0 : i32
    %9 = arith.cmpi eq, %arg2, %c0_i32_8 : i32
    %10 = arith.extui %9 : i1 to i32
    %c0_i32_9 = arith.constant 0 : i32
    %11 = arith.cmpi ne, %10, %c0_i32_9 : i32
    scf.if %11 {
      %c0_10 = arith.constant 0 : index
      %c0_11 = arith.constant 0 : index
      %12 = vector.load %arg6[%c0_10, %c0_11] : memref<256x128xf32, #tpu.memory_space<vmem>>, vector<256x128xf32>
      %c0_12 = arith.constant 0 : index
      %c0_13 = arith.constant 0 : index
      %13 = vector.load %arg5[%c0_12, %c0_13] : memref<256x128xf32, #tpu.memory_space<vmem>>, vector<256x128xf32>
      tpu.vector_store %arg5[%c0_12, %c0_13], %12 {strides = array<i32>} : memref<256x128xf32, #tpu.memory_space<vmem>>, vector<256x128xf32>,
    } else {
    }
    return
  }
  func.func @transform_0(%arg0: i32, %arg1: i32, %arg2: i32) -> (i32, i32) {
    %c0_i32 = arith.constant 0 : i32
    return %arg0, %arg2 : i32, i32
  }
  func.func @transform_1(%arg0: i32, %arg1: i32, %arg2: i32) -> (i32, i32) {
    %c0_i32 = arith.constant 0 : i32
    return %arg2, %arg1 : i32, i32
  }
  func.func @transform_2(%arg0: i32, %arg1: i32, %arg2: i32) -> (i32, i32) {
    %c0_i32 = arith.constant 0 : i32
    return %arg0, %arg1 : i32, i32
  }
}

</mosaic_0001>

<llo_original>
// kernel: _lambda_.5
$region0: #{_lambda_.5}
  #allocation0 [shape = 'u32[]', space=smem, size = 0x4, offset = 0x4, fixed_abs, tag = 'smem constant byte address 0x4 - core index']
  #allocation1 [shape = 'u32[72,128]{1,0:T(1,128)}', space=vmem, size = 0x9000, scoped, tag = 'internal scratch']
  #allocation2 [shape = 'f32[256,128]{1,0:T(8,128)}', space=vmem, size = 0x20000, scoped, tag = 'scratch operand']
  %s0 = inlined_call_operand.vmem [shape: bf16[256,256], index: 0, kind: input, shape index: {}]
  %s1 = inlined_call_operand.vmem [shape: bf16[256,128], index: 1, kind: input, shape index: {}]
  %s2 = inlined_call_operand.hbm [shape: f32[256,128], index: 2, kind: output, shape index: {}]
  %s3 = sld [smem:[#allocation0]]
  $region26: #{_lambda_.5} parent=0
    _
  %s5 = ssub.s32 1, %s3
  %s6 = scalar_select 0, %s5, %s3
  $region1: #{_lambda_.5} parent=0
    #allocation3 [shape = 'u8[131072]{0}', space=vmem, size = 0x20000, scoped, tag = 'output window, operand 0, single buffered']
    #allocation4 [shape = 's32[1]{0}', space=sflag, size = 0x4, scoped, tag = 'scoped memory for _lambda_.5']
    %7 = vsyncpa [#allocation4], 0
    // Predicated region
    $region2: #{_lambda_.5} parent=1 // pred_check
      _
    $region3: #{_lambda_.5} parent=1 // pred_check_branch
      %9 = sbr.rel (0) target = $region5
    $region4: #{_lambda_.5} parent=1 // pred_region
      _
    $region5: #{_lambda_.5} parent=1 // pred_fallthru
      _
    // Predicated region
    $region6: #{_lambda_.5} parent=1 // pred_check
      _
    $region7: #{_lambda_.5} parent=1 // pred_check_branch
      %11 = sbr.rel (0) target = $region9
    $region8: #{_lambda_.5} parent=1 // pred_region
      _
    $region9: #{_lambda_.5} parent=1 // pred_fallthru
      _
    %p12 = scmp.eq.s32.totalorder 0, 0
    // Predicated region
    $region10: #{_lambda_.5} parent=1 // pred_check
      %p13 = pneg %p12
    $region11: #{_lambda_.5} parent=1 // pred_check_branch
      %15 = sbr.rel (%p13) target = $region13
    $region12: #{_lambda_.5} parent=1 // pred_region
      %16 = vst [vmem:[#allocation2] sm:$0xff] 0.0
      %17 = vst [vmem:[#allocation2 + $0x8] sm:$0xff] 0.0
      %18 = vst [vmem:[#allocation2 + $0x10] sm:$0xff] 0.0
      %19 = vst [vmem:[#allocation2 + $0x18] sm:$0xff] 0.0
      %20 = vst [vmem:[#allocation2 + $0x20] sm:$0xff] 0.0
      %21 = vst [vmem:[#allocation2 + $0x28] sm:$0xff] 0.0
      %22 = vst [vmem:[#allocation2 + $0x30] sm:$0xff] 0.0
      %23 = vst [vmem:[#allocation2 + $0x38] sm:$0xff] 0.0
      %24 = vst [vmem:[#allocation2 + $0x40] sm:$0xff] 0.0
      %25 = vst [vmem:[#allocation2 + $0x48] sm:$0xff] 0.0
      %26 = vst [vmem:[#allocation2 + $0x50] sm:$0xff] 0.0
      %27 = vst [vmem:[#allocation2 + $0x58] sm:$0xff] 0.0
      %28 = vst [vmem:[#allocation2 + $0x60] sm:$0xff] 0.0
      %29 = vst [vmem:[#allocation2 + $0x68] sm:$0xff] 0.0
      %30 = vst [vmem:[#allocation2 + $0x70] sm:$0xff] 0.0
      %31 = vst [vmem:[#allocation2 + $0x78] sm:$0xff] 0.0
      %32 = vst [vmem:[#allocation2 + $0x80] sm:$0xff] 0.0
      %33 = vst [vmem:[#allocation2 + $0x88] sm:$0xff] 0.0
      %34 = vst [vmem:[#allocation2 + $0x90] sm:$0xff] 0.0
      %35 = vst [vmem:[#allocation2 + $0x98] sm:$0xff] 0.0
      %36 = vst [vmem:[#allocation2 + $0xa0] sm:$0xff] 0.0
      %37 = vst [vmem:[#allocation2 + $0xa8] sm:$0xff] 0.0
      %38 = vst [vmem:[#allocation2 + $0xb0] sm:$0xff] 0.0
      %39 = vst [vmem:[#allocation2 + $0xb8] sm:$0xff] 0.0
      %40 = vst [vmem:[#allocation2 + $0xc0] sm:$0xff] 0.0
      %41 = vst [vmem:[#allocation2 + $0xc8] sm:$0xff] 0.0
      %42 = vst [vmem:[#allocation2 + $0xd0] sm:$0xff] 0.0
      %43 = vst [vmem:[#allocation2 + $0xd8] sm:$0xff] 0.0
      %44 = vst [vmem:[#allocation2 + $0xe0] sm:$0xff] 0.0
      %45 = vst [vmem:[#allocation2 + $0xe8] sm:$0xff] 0.0
      %46 = vst [vmem:[#allocation2 + $0xf0] sm:$0xff] 0.0
      %47 = vst [vmem:[#allocation2 + $0xf8] sm:$0xff] 0.0
    $region13: #{_lambda_.5} parent=1 // pred_fallthru
      _
    %v48 = vld [vmem:[#allocation2] sm:$0xff]
    %v49 = vld [vmem:[#allocation2 + $0x8] sm:$0xff]
    %v50 = vld [vmem:[#allocation2 + $0x10] sm:$0xff]
    %v51 = vld [vmem:[#allocation2 + $0x18] sm:$0xff]
    %v52 = vld [vmem:[#allocation2 + $0x20] sm:$0xff]
    %v53 = vld [vmem:[#allocation2 + $0x28] sm:$0xff]
    %v54 = vld [vmem:[#allocation2 + $0x30] sm:$0xff]
    %v55 = vld [vmem:[#allocation2 + $0x38] sm:$0xff]
    %v56 = vld [vmem:[#allocation2 + $0x40] sm:$0xff]
    %v57 = vld [vmem:[#allocation2 + $0x48] sm:$0xff]
    %v58 = vld [vmem:[#allocation2 + $0x50] sm:$0xff]
    %v59 = vld [vmem:[#allocation2 + $0x58] sm:$0xff]
    %v60 = vld [vmem:[#allocation2 + $0x60] sm:$0xff]
    %v61 = vld [vmem:[#allocation2 + $0x68] sm:$0xff]
    %v62 = vld [vmem:[#allocation2 + $0x70] sm:$0xff]
    %v63 = vld [vmem:[#allocation2 + $0x78] sm:$0xff]
    %v64 = vld [vmem:[#allocation2 + $0x80] sm:$0xff]
    %v65 = vld [vmem:[#allocation2 + $0x88] sm:$0xff]
    %v66 = vld [vmem:[#allocation2 + $0x90] sm:$0xff]
    %v67 = vld [vmem:[#allocation2 + $0x98] sm:$0xff]
    %v68 = vld [vmem:[#allocation2 + $0xa0] sm:$0xff]
    %v69 = vld [vmem:[#allocation2 + $0xa8] sm:$0xff]
    %v70 = vld [vmem:[#allocation2 + $0xb0] sm:$0xff]
    %v71 = vld [vmem:[#allocation2 + $0xb8] sm:$0xff]
    %v72 = vld [vmem:[#allocation2 + $0xc0] sm:$0xff]
    %v73 = vld [vmem:[#allocation2 + $0xc8] sm:$0xff]
    %v74 = vld [vmem:[#allocation2 + $0xd0] sm:$0xff]
    %v75 = vld [vmem:[#allocation2 + $0xd8] sm:$0xff]
    %v76 = vld [vmem:[#allocation2 + $0xe0] sm:$0xff]
    %v77 = vld [vmem:[#allocation2 + $0xe8] sm:$0xff]
    %v78 = vld [vmem:[#allocation2 + $0xf0] sm:$0xff]
    %v79 = vld [vmem:[#allocation2 + $0xf8] sm:$0xff]
    %v80 = vld [vmem:[%s0] sm:$0xff]
    %v81 = vld [vmem:[%s0 + $0x8] sm:$0xff]
    %v82 = vld [vmem:[%s0 + $0x10] sm:$0xff]
    %v83 = vld [vmem:[%s0 + $0x18] sm:$0xff]
    %v84 = vld [vmem:[%s0 + $0x20] sm:$0xff]
    %v85 = vld [vmem:[%s0 + $0x28] sm:$0xff]
    %v86 = vld [vmem:[%s0 + $0x30] sm:$0xff]
    %v87 = vld [vmem:[%s0 + $0x38] sm:$0xff]
    %v88 = vld [vmem:[%s0 + $0x40] sm:$0xff]
    %v89 = vld [vmem:[%s0 + $0x48] sm:$0xff]
    %v90 = vld [vmem:[%s0 + $0x50] sm:$0xff]
    %v91 = vld [vmem:[%s0 + $0x58] sm:$0xff]
    %v92 = vld [vmem:[%s0 + $0x60] sm:$0xff]
    %v93 = vld [vmem:[%s0 + $0x68] sm:$0xff]
    %v94 = vld [vmem:[%s0 + $0x70] sm:$0xff]
    %v95 = vld [vmem:[%s0 + $0x78] sm:$0xff]
    %v96 = vld [vmem:[%s0 + $0x80] sm:$0xff]
    %v97 = vld [vmem:[%s0 + $0x88] sm:$0xff]
    %v98 = vld [vmem:[%s0 + $0x90] sm:$0xff]
    %v99 = vld [vmem:[%s0 + $0x98] sm:$0xff]
    %v100 = vld [vmem:[%s0 + $0xa0] sm:$0xff]
    %v101 = vld [vmem:[%s0 + $0xa8] sm:$0xff]
    %v102 = vld [vmem:[%s0 + $0xb0] sm:$0xff]
    %v103 = vld [vmem:[%s0 + $0xb8] sm:$0xff]
    %v104 = vld [vmem:[%s0 + $0xc0] sm:$0xff]
    %v105 = vld [vmem:[%s0 + $0xc8] sm:$0xff]
    %v106 = vld [vmem:[%s0 + $0xd0] sm:$0xff]
    %v107 = vld [vmem:[%s0 + $0xd8] sm:$0xff]
    %v108 = vld [vmem:[%s0 + $0xe0] sm:$0xff]
    %v109 = vld [vmem:[%s0 + $0xe8] sm:$0xff]
    %v110 = vld [vmem:[%s0 + $0xf0] sm:$0xff]
    %v111 = vld [vmem:[%s0 + $0xf8] sm:$0xff]
    %v112 = vld [vmem:[%s1] sm:$0xf]
    %v113 = vld [vmem:[%s1 + $0x4] sm:$0xf]
    %v114 = vld [vmem:[%s1 + $0x8] sm:$0xf]
    %v115 = vld [vmem:[%s1 + $0xc] sm:$0xf]
    %v116 = vld [vmem:[%s1 + $0x10] sm:$0xf]
    %v117 = vld [vmem:[%s1 + $0x14] sm:$0xf]
    %v118 = vld [vmem:[%s1 + $0x18] sm:$0xf]
    %v119 = vld [vmem:[%s1 + $0x1c] sm:$0xf]
    %v120 = vld [vmem:[%s1 + $0x20] sm:$0xf]
    %v121 = vld [vmem:[%s1 + $0x24] sm:$0xf]
    %v122 = vld [vmem:[%s1 + $0x28] sm:$0xf]
    %v123 = vld [vmem:[%s1 + $0x2c] sm:$0xf]
    %v124 = vld [vmem:[%s1 + $0x30] sm:$0xf]
    %v125 = vld [vmem:[%s1 + $0x34] sm:$0xf]
    %v126 = vld [vmem:[%s1 + $0x38] sm:$0xf]
    %v127 = vld [vmem:[%s1 + $0x3c] sm:$0xf]
    %v128 = vld [vmem:[%s1 + $0x40] sm:$0xf]
    %v129 = vld [vmem:[%s1 + $0x44] sm:$0xf]
    %v130 = vld [vmem:[%s1 + $0x48] sm:$0xf]
    %v131 = vld [vmem:[%s1 + $0x4c] sm:$0xf]
    %v132 = vld [vmem:[%s1 + $0x50] sm:$0xf]
    %v133 = vld [vmem:[%s1 + $0x54] sm:$0xf]
    %v134 = vld [vmem:[%s1 + $0x58] sm:$0xf]
    %v135 = vld [vmem:[%s1 + $0x5c] sm:$0xf]
    %v136 = vld [vmem:[%s1 + $0x60] sm:$0xf]
    %v137 = vld [vmem:[%s1 + $0x64] sm:$0xf]
    %v138 = vld [vmem:[%s1 + $0x68] sm:$0xf]
    %v139 = vld [vmem:[%s1 + $0x6c] sm:$0xf]
    %v140 = vld [vmem:[%s1 + $0x70] sm:$0xf]
    %v141 = vld [vmem:[%s1 + $0x74] sm:$0xf]
    %v142 = vld [vmem:[%s1 + $0x78] sm:$0xf]
    %v143 = vld [vmem:[%s1 + $0x7c] sm:$0xf]
    %v176 = vunpack.c.l.b16 %v80
    %v177 = vunpack.c.h.b16 %v80
    %v178 = vunpack.c.l.b16 %v81
    %v179 = vunpack.c.h.b16 %v81
    %v180 = vunpack.c.l.b16 %v82
    %v181 = vunpack.c.h.b16 %v82
    %v182 = vunpack.c.l.b16 %v83
    %v183 = vunpack.c.h.b16 %v83
    %v184 = vunpack.c.l.b16 %v84
    %v185 = vunpack.c.h.b16 %v84
    %v186 = vunpack.c.l.b16 %v85
    %v187 = vunpack.c.h.b16 %v85
    %v188 = vunpack.c.l.b16 %v86
    %v189 = vunpack.c.h.b16 %v86
    %v190 = vunpack.c.l.b16 %v87
    %v191 = vunpack.c.h.b16 %v87
    %v192 = vunpack.c.l.b16 %v88
    %v193 = vunpack.c.h.b16 %v88
    %v194 = vunpack.c.l.b16 %v89
    %v195 = vunpack.c.h.b16 %v89
    %v196 = vunpack.c.l.b16 %v90
    %v197 = vunpack.c.h.b16 %v90
    %v198 = vunpack.c.l.b16 %v91
    %v199 = vunpack.c.h.b16 %v91
    %v200 = vunpack.c.l.b16 %v92
    %v201 = vunpack.c.h.b16 %v92
    %v202 = vunpack.c.l.b16 %v93
    %v203 = vunpack.c.h.b16 %v93
    %v204 = vunpack.c.l.b16 %v94
    %v205 = vunpack.c.h.b16 %v94
    %v206 = vunpack.c.l.b16 %v95
    %v207 = vunpack.c.h.b16 %v95
    %v208 = vunpack.c.l.b16 %v96
    %v209 = vunpack.c.h.b16 %v96
    %v210 = vunpack.c.l.b16 %v97
    %v211 = vunpack.c.h.b16 %v97
    %v212 = vunpack.c.l.b16 %v98
    %v213 = vunpack.c.h.b16 %v98
    %v214 = vunpack.c.l.b16 %v99
    %v215 = vunpack.c.h.b16 %v99
    %v216 = vunpack.c.l.b16 %v100
    %v217 = vunpack.c.h.b16 %v100
    %v218 = vunpack.c.l.b16 %v101
    %v219 = vunpack.c.h.b16 %v101
    %v220 = vunpack.c.l.b16 %v102
    %v221 = vunpack.c.h.b16 %v102
    %v222 = vunpack.c.l.b16 %v103
    %v223 = vunpack.c.h.b16 %v103
    %v224 = vunpack.c.l.b16 %v104
    %v225 = vunpack.c.h.b16 %v104
    %v226 = vunpack.c.l.b16 %v105
    %v227 = vunpack.c.h.b16 %v105
    %v228 = vunpack.c.l.b16 %v106
    %v229 = vunpack.c.h.b16 %v106
    %v230 = vunpack.c.l.b16 %v107
    %v231 = vunpack.c.h.b16 %v107
    %v232 = vunpack.c.l.b16 %v108
    %v233 = vunpack.c.h.b16 %v108
    %v234 = vunpack.c.l.b16 %v109
    %v235 = vunpack.c.h.b16 %v109
    %v236 = vunpack.c.l.b16 %v110
    %v237 = vunpack.c.h.b16 %v110
    %v238 = vunpack.c.l.b16 %v111
    %v239 = vunpack.c.h.b16 %v111
    %v240 = vpack.c.b16 %v178, %v176
    %v241 = vpack.c.b16 %v179, %v177
    %v242 = vpack.c.b16 %v182, %v180
    %v243 = vpack.c.b16 %v183, %v181
    %v244 = vpack.c.b16 %v186, %v184
    %v245 = vpack.c.b16 %v187, %v185
    %v246 = vpack.c.b16 %v190, %v188
    %v247 = vpack.c.b16 %v191, %v189
    %v248 = vpack.c.b16 %v194, %v192
    %v249 = vpack.c.b16 %v195, %v193
    %v250 = vpack.c.b16 %v198, %v196
    %v251 = vpack.c.b16 %v199, %v197
    %v252 = vpack.c.b16 %v202, %v200
    %v253 = vpack.c.b16 %v203, %v201
    %v254 = vpack.c.b16 %v206, %v204
    %v255 = vpack.c.b16 %v207, %v205
    %v256 = vpack.c.b16 %v210, %v208
    %v257 = vpack.c.b16 %v211, %v209
    %v258 = vpack.c.b16 %v214, %v212
    %v259 = vpack.c.b16 %v215, %v213
    %v260 = vpack.c.b16 %v218, %v216
    %v261 = vpack.c.b16 %v219, %v217
    %v262 = vpack.c.b16 %v222, %v220
    %v263 = vpack.c.b16 %v223, %v221
    %v264 = vpack.c.b16 %v226, %v224
    %v265 = vpack.c.b16 %v227, %v225
    %v266 = vpack.c.b16 %v230, %v228
    %v267 = vpack.c.b16 %v231, %v229
    %v268 = vpack.c.b16 %v234, %v232
    %v269 = vpack.c.b16 %v235, %v233
    %v270 = vpack.c.b16 %v238, %v236
    %v271 = vpack.c.b16 %v239, %v237
    %v336 = vunpack.c.l.b16 %v112
    %v337 = vunpack.c.l.b16 %v113
    %v338 = vunpack.c.l.b16 %v114
    %v339 = vunpack.c.l.b16 %v115
    %v340 = vunpack.c.l.b16 %v116
    %v341 = vunpack.c.l.b16 %v117
    %v342 = vunpack.c.l.b16 %v118
    %v343 = vunpack.c.l.b16 %v119
    %v344 = vunpack.c.l.b16 %v120
    %v345 = vunpack.c.l.b16 %v121
    %v346 = vunpack.c.l.b16 %v122
    %v347 = vunpack.c.l.b16 %v123
    %v348 = vunpack.c.l.b16 %v124
    %v349 = vunpack.c.l.b16 %v125
    %v350 = vunpack.c.l.b16 %v126
    %v351 = vunpack.c.l.b16 %v127
    %v352 = vunpack.c.l.b16 %v128
    %v353 = vunpack.c.l.b16 %v129
    %v354 = vunpack.c.l.b16 %v130
    %v355 = vunpack.c.l.b16 %v131
    %v356 = vunpack.c.l.b16 %v132
    %v357 = vunpack.c.l.b16 %v133
    %v358 = vunpack.c.l.b16 %v134
    %v359 = vunpack.c.l.b16 %v135
    %v360 = vunpack.c.l.b16 %v136
    %v361 = vunpack.c.l.b16 %v137
    %v362 = vunpack.c.l.b16 %v138
    %v363 = vunpack.c.l.b16 %v139
    %v364 = vunpack.c.l.b16 %v140
    %v365 = vunpack.c.l.b16 %v141
    %v366 = vunpack.c.l.b16 %v142
    %v367 = vunpack.c.l.b16 %v143
    %v368 = vpack.c.b16 %v337, %v336
    %v369 = vpack.c.b16 %v339, %v338
    %v370 = vpack.c.b16 %v341, %v340
    %v371 = vpack.c.b16 %v343, %v342
    %v372 = vpack.c.b16 %v345, %v344
    %v373 = vpack.c.b16 %v347, %v346
    %v374 = vpack.c.b16 %v349, %v348
    %v375 = vpack.c.b16 %v351, %v350
    %v376 = vpack.c.b16 %v353, %v352
    %v377 = vpack.c.b16 %v355, %v354
    %v378 = vpack.c.b16 %v357, %v356
    %v379 = vpack.c.b16 %v359, %v358
    %v380 = vpack.c.b16 %v361, %v360
    %v381 = vpack.c.b16 %v363, %v362
    %v382 = vpack.c.b16 %v365, %v364
    %v383 = vpack.c.b16 %v367, %v366
    %400 = vmatpush.bf16.msra.mxu0 %v375
    %401 = vmatpush.bf16.msra.mxu0 %v374
    %402 = vmatpush.bf16.msra.mxu0 %v373
    %403 = vmatpush.bf16.msra.mxu0 %v372
    %404 = vmatpush.bf16.msra.mxu0 %v371
    %405 = vmatpush.bf16.msra.mxu0 %v370
    %406 = vmatpush.bf16.msra.mxu0 %v369
    %407 = vmatpush.bf16.msra.mxu0 %v368
    %408 = vmatmul.bf16.gmra.mxu0 %v240
    %v409 = vpop.f32.mrf.mxu0
    %v410 = vadd.f32 0.0, %v409
    %v411 = vpop.f32.mrf.mxu0
    %v412 = vadd.f32 0.0, %v411
    %413 = vmatmul.bf16.gmra.mxu0 %v242
    %v414 = vpop.f32.mrf.mxu0
    %v415 = vadd.f32 0.0, %v414
    %v416 = vpop.f32.mrf.mxu0
    %v417 = vadd.f32 0.0, %v416
    %418 = vmatmul.bf16.gmra.mxu0 %v244
    %v419 = vpop.f32.mrf.mxu0
    %v420 = vadd.f32 0.0, %v419
    %v421 = vpop.f32.mrf.mxu0
    %v422 = vadd.f32 0.0, %v421
    %423 = vmatmul.bf16.gmra.mxu0 %v246
    %v424 = vpop.f32.mrf.mxu0
    %v425 = vadd.f32 0.0, %v424
    %v426 = vpop.f32.mrf.mxu0
    %v427 = vadd.f32 0.0, %v426
    %428 = vmatmul.bf16.gmra.mxu0 %v248
    %v429 = vpop.f32.mrf.mxu0
    %v430 = vadd.f32 0.0, %v429
    %v431 = vpop.f32.mrf.mxu0
    %v432 = vadd.f32 0.0, %v431
    %433 = vmatmul.bf16.gmra.mxu0 %v250
    %v434 = vpop.f32.mrf.mxu0
    %v435 = vadd.f32 0.0, %v434
    %v436 = vpop.f32.mrf.mxu0
    %v437 = vadd.f32 0.0, %v436
    %438 = vmatmul.bf16.gmra.mxu0 %v252
    %v439 = vpop.f32.mrf.mxu0
    %v440 = vadd.f32 0.0, %v439
    %v441 = vpop.f32.mrf.mxu0
    %v442 = vadd.f32 0.0, %v441
    %443 = vmatmul.bf16.gmra.mxu0 %v254
    %v444 = vpop.f32.mrf.mxu0
    %v445 = vadd.f32 0.0, %v444
    %v446 = vpop.f32.mrf.mxu0
    %v447 = vadd.f32 0.0, %v446
    %448 = vmatmul.bf16.gmra.mxu0 %v256
    %v449 = vpop.f32.mrf.mxu0
    %v450 = vadd.f32 0.0, %v449
    %v451 = vpop.f32.mrf.mxu0
    %v452 = vadd.f32 0.0, %v451
    %453 = vmatmul.bf16.gmra.mxu0 %v258
    %v454 = vpop.f32.mrf.mxu0
    %v455 = vadd.f32 0.0, %v454
    %v456 = vpop.f32.mrf.mxu0
    %v457 = vadd.f32 0.0, %v456
    %458 = vmatmul.bf16.gmra.mxu0 %v260
    %v459 = vpop.f32.mrf.mxu0
    %v460 = vadd.f32 0.0, %v459
    %v461 = vpop.f32.mrf.mxu0
    %v462 = vadd.f32 0.0, %v461
    %463 = vmatmul.bf16.gmra.mxu0 %v262
    %v464 = vpop.f32.mrf.mxu0
    %v465 = vadd.f32 0.0, %v464
    %v466 = vpop.f32.mrf.mxu0
    %v467 = vadd.f32 0.0, %v466
    %468 = vmatmul.bf16.gmra.mxu0 %v264
    %v469 = vpop.f32.mrf.mxu0
    %v470 = vadd.f32 0.0, %v469
    %v471 = vpop.f32.mrf.mxu0
    %v472 = vadd.f32 0.0, %v471
    %473 = vmatmul.bf16.gmra.mxu0 %v266
    %v474 = vpop.f32.mrf.mxu0
    %v475 = vadd.f32 0.0, %v474
    %v476 = vpop.f32.mrf.mxu0
    %v477 = vadd.f32 0.0, %v476
    %478 = vmatmul.bf16.gmra.mxu0 %v268
    %v479 = vpop.f32.mrf.mxu0
    %v480 = vadd.f32 0.0, %v479
    %v481 = vpop.f32.mrf.mxu0
    %v482 = vadd.f32 0.0, %v481
    %483 = vmatmul.bf16.gmra.mxu0 %v270
    %v484 = vpop.f32.mrf.mxu0
    %v485 = vadd.f32 0.0, %v484
    %v486 = vpop.f32.mrf.mxu0
    %v487 = vadd.f32 0.0, %v486
    %488 = vdwg.mxu0
    %489 = vmatpush.bf16.msra.mxu0 %v383
    %490 = vmatpush.bf16.msra.mxu0 %v382
    %491 = vmatpush.bf16.msra.mxu0 %v381
    %492 = vmatpush.bf16.msra.mxu0 %v380
    %493 = vmatpush.bf16.msra.mxu0 %v379
    %494 = vmatpush.bf16.msra.mxu0 %v378
    %495 = vmatpush.bf16.msra.mxu0 %v377
    %496 = vmatpush.bf16.msra.mxu0 %v376
    %497 = vmatmul.bf16.gmra.mxu0 %v241
    %v498 = vpop.f32.mrf.mxu0
    %v499 = vadd.f32 %v410, %v498
    %v500 = vpop.f32.mrf.mxu0
    %v501 = vadd.f32 %v412, %v500
    %502 = vmatmul.bf16.gmra.mxu0 %v243
    %v503 = vpop.f32.mrf.mxu0
    %v504 = vadd.f32 %v415, %v503
    %v505 = vpop.f32.mrf.mxu0
    %v506 = vadd.f32 %v417, %v505
    %507 = vmatmul.bf16.gmra.mxu0 %v245
    %v508 = vpop.f32.mrf.mxu0
    %v509 = vadd.f32 %v420, %v508
    %v510 = vpop.f32.mrf.mxu0
    %v511 = vadd.f32 %v422, %v510
    %512 = vmatmul.bf16.gmra.mxu0 %v247
    %v513 = vpop.f32.mrf.mxu0
    %v514 = vadd.f32 %v425, %v513
    %v515 = vpop.f32.mrf.mxu0
    %v516 = vadd.f32 %v427, %v515
    %517 = vmatmul.bf16.gmra.mxu0 %v249
    %v518 = vpop.f32.mrf.mxu0
    %v519 = vadd.f32 %v430, %v518
    %v520 = vpop.f32.mrf.mxu0
    %v521 = vadd.f32 %v432, %v520
    %522 = vmatmul.bf16.gmra.mxu0 %v251
    %v523 = vpop.f32.mrf.mxu0
    %v524 = vadd.f32 %v435, %v523
    %v525 = vpop.f32.mrf.mxu0
    %v526 = vadd.f32 %v437, %v525
    %527 = vmatmul.bf16.gmra.mxu0 %v253
    %v528 = vpop.f32.mrf.mxu0
    %v529 = vadd.f32 %v440, %v528
    %v530 = vpop.f32.mrf.mxu0
    %v531 = vadd.f32 %v442, %v530
    %532 = vmatmul.bf16.gmra.mxu0 %v255
    %v533 = vpop.f32.mrf.mxu0
    %v534 = vadd.f32 %v445, %v533
    %v535 = vpop.f32.mrf.mxu0
    %v536 = vadd.f32 %v447, %v535
    %537 = vmatmul.bf16.gmra.mxu0 %v257
    %v538 = vpop.f32.mrf.mxu0
    %v539 = vadd.f32 %v450, %v538
    %v540 = vpop.f32.mrf.mxu0
    %v541 = vadd.f32 %v452, %v540
    %542 = vmatmul.bf16.gmra.mxu0 %v259
    %v543 = vpop.f32.mrf.mxu0
    %v544 = vadd.f32 %v455, %v543
    %v545 = vpop.f32.mrf.mxu0
    %v546 = vadd.f32 %v457, %v545
    %547 = vmatmul.bf16.gmra.mxu0 %v261
    %v548 = vpop.f32.mrf.mxu0
    %v549 = vadd.f32 %v460, %v548
    %v550 = vpop.f32.mrf.mxu0
    %v551 = vadd.f32 %v462, %v550
    %552 = vmatmul.bf16.gmra.mxu0 %v263
    %v553 = vpop.f32.mrf.mxu0
    %v554 = vadd.f32 %v465, %v553
    %v555 = vpop.f32.mrf.mxu0
    %v556 = vadd.f32 %v467, %v555
    %557 = vmatmul.bf16.gmra.mxu0 %v265
    %v558 = vpop.f32.mrf.mxu0
    %v559 = vadd.f32 %v470, %v558
    %v560 = vpop.f32.mrf.mxu0
    %v561 = vadd.f32 %v472, %v560
    %562 = vmatmul.bf16.gmra.mxu0 %v267
    %v563 = vpop.f32.mrf.mxu0
    %v564 = vadd.f32 %v475, %v563
    %v565 = vpop.f32.mrf.mxu0
    %v566 = vadd.f32 %v477, %v565
    %567 = vmatmul.bf16.gmra.mxu0 %v269
    %v568 = vpop.f32.mrf.mxu0
    %v569 = vadd.f32 %v480, %v568
    %v570 = vpop.f32.mrf.mxu0
    %v571 = vadd.f32 %v482, %v570
    %572 = vmatmul.bf16.gmra.mxu0 %v271
    %v573 = vpop.f32.mrf.mxu0
    %v574 = vadd.f32 %v485, %v573
    %v575 = vpop.f32.mrf.mxu0
    %v576 = vadd.f32 %v487, %v575
    %577 = vdwg.mxu0
    %v578 = vadd.f32 %v48, %v499
    %v579 = vadd.f32 %v49, %v501
    %v580 = vadd.f32 %v50, %v504
    %v581 = vadd.f32 %v51, %v506
    %v582 = vadd.f32 %v52, %v509
    %v583 = vadd.f32 %v53, %v511
    %v584 = vadd.f32 %v54, %v514
    %v585 = vadd.f32 %v55, %v516
    %v586 = vadd.f32 %v56, %v519
    %v587 = vadd.f32 %v57, %v521
    %v588 = vadd.f32 %v58, %v524
    %v589 = vadd.f32 %v59, %v526
    %v590 = vadd.f32 %v60, %v529
    %v591 = vadd.f32 %v61, %v531
    %v592 = vadd.f32 %v62, %v534
    %v593 = vadd.f32 %v63, %v536
    %v594 = vadd.f32 %v64, %v539
    %v595 = vadd.f32 %v65, %v541
    %v596 = vadd.f32 %v66, %v544
    %v597 = vadd.f32 %v67, %v546
    %v598 = vadd.f32 %v68, %v549
    %v599 = vadd.f32 %v69, %v551
    %v600 = vadd.f32 %v70, %v554
    %v601 = vadd.f32 %v71, %v556
    %v602 = vadd.f32 %v72, %v559
    %v603 = vadd.f32 %v73, %v561
    %v604 = vadd.f32 %v74, %v564
    %v605 = vadd.f32 %v75, %v566
    %v606 = vadd.f32 %v76, %v569
    %v607 = vadd.f32 %v77, %v571
    %v608 = vadd.f32 %v78, %v574
    %v609 = vadd.f32 %v79, %v576
    %610 = vst [vmem:[#allocation2] sm:$0xff] %v578
    %611 = vst [vmem:[#allocation2 + $0x8] sm:$0xff] %v579
    %612 = vst [vmem:[#allocation2 + $0x10] sm:$0xff] %v580
    %613 = vst [vmem:[#allocation2 + $0x18] sm:$0xff] %v581
    %614 = vst [vmem:[#allocation2 + $0x20] sm:$0xff] %v582
    %615 = vst [vmem:[#allocation2 + $0x28] sm:$0xff] %v583
    %616 = vst [vmem:[#allocation2 + $0x30] sm:$0xff] %v584
    %617 = vst [vmem:[#allocation2 + $0x38] sm:$0xff] %v585
    %618 = vst [vmem:[#allocation2 + $0x40] sm:$0xff] %v586
    %619 = vst [vmem:[#allocation2 + $0x48] sm:$0xff] %v587
    %620 = vst [vmem:[#allocation2 + $0x50] sm:$0xff] %v588
    %621 = vst [vmem:[#allocation2 + $0x58] sm:$0xff] %v589
    %622 = vst [vmem:[#allocation2 + $0x60] sm:$0xff] %v590
    %623 = vst [vmem:[#allocation2 + $0x68] sm:$0xff] %v591
    %624 = vst [vmem:[#allocation2 + $0x70] sm:$0xff] %v592
    %625 = vst [vmem:[#allocation2 + $0x78] sm:$0xff] %v593
    %626 = vst [vmem:[#allocation2 + $0x80] sm:$0xff] %v594
    %627 = vst [vmem:[#allocation2 + $0x88] sm:$0xff] %v595
    %628 = vst [vmem:[#allocation2 + $0x90] sm:$0xff] %v596
    %629 = vst [vmem:[#allocation2 + $0x98] sm:$0xff] %v597
    %630 = vst [vmem:[#allocation2 + $0xa0] sm:$0xff] %v598
    %631 = vst [vmem:[#allocation2 + $0xa8] sm:$0xff] %v599
    %632 = vst [vmem:[#allocation2 + $0xb0] sm:$0xff] %v600
    %633 = vst [vmem:[#allocation2 + $0xb8] sm:$0xff] %v601
    %634 = vst [vmem:[#allocation2 + $0xc0] sm:$0xff] %v602
    %635 = vst [vmem:[#allocation2 + $0xc8] sm:$0xff] %v603
    %636 = vst [vmem:[#allocation2 + $0xd0] sm:$0xff] %v604
    %637 = vst [vmem:[#allocation2 + $0xd8] sm:$0xff] %v605
    %638 = vst [vmem:[#allocation2 + $0xe0] sm:$0xff] %v606
    %639 = vst [vmem:[#allocation2 + $0xe8] sm:$0xff] %v607
    %640 = vst [vmem:[#allocation2 + $0xf0] sm:$0xff] %v608
    %641 = vst [vmem:[#allocation2 + $0xf8] sm:$0xff] %v609
    // Predicated region
    $region14: #{_lambda_.5} parent=1 // pred_check
      %p642 = pneg %p12
    $region15: #{_lambda_.5} parent=1 // pred_check_branch
      %644 = sbr.rel (%p642) target = $region17
    $region16: #{_lambda_.5} parent=1 // pred_region
      %v645 = vld [vmem:[#allocation2] sm:$0xff]
      %v646 = vld [vmem:[#allocation2 + $0x8] sm:$0xff]
      %v647 = vld [vmem:[#allocation2 + $0x10] sm:$0xff]
      %v648 = vld [vmem:[#allocation2 + $0x18] sm:$0xff]
      %v649 = vld [vmem:[#allocation2 + $0x20] sm:$0xff]
      %v650 = vld [vmem:[#allocation2 + $0x28] sm:$0xff]
      %v651 = vld [vmem:[#allocation2 + $0x30] sm:$0xff]
      %v652 = vld [vmem:[#allocation2 + $0x38] sm:$0xff]
      %v653 = vld [vmem:[#allocation2 + $0x40] sm:$0xff]
      %v654 = vld [vmem:[#allocation2 + $0x48] sm:$0xff]
      %v655 = vld [vmem:[#allocation2 + $0x50] sm:$0xff]
      %v656 = vld [vmem:[#allocation2 + $0x58] sm:$0xff]
      %v657 = vld [vmem:[#allocation2 + $0x60] sm:$0xff]
      %v658 = vld [vmem:[#allocation2 + $0x68] sm:$0xff]
      %v659 = vld [vmem:[#allocation2 + $0x70] sm:$0xff]
      %v660 = vld [vmem:[#allocation2 + $0x78] sm:$0xff]
      %v661 = vld [vmem:[#allocation2 + $0x80] sm:$0xff]
      %v662 = vld [vmem:[#allocation2 + $0x88] sm:$0xff]
      %v663 = vld [vmem:[#allocation2 + $0x90] sm:$0xff]
      %v664 = vld [vmem:[#allocation2 + $0x98] sm:$0xff]
      %v665 = vld [vmem:[#allocation2 + $0xa0] sm:$0xff]
      %v666 = vld [vmem:[#allocation2 + $0xa8] sm:$0xff]
      %v667 = vld [vmem:[#allocation2 + $0xb0] sm:$0xff]
      %v668 = vld [vmem:[#allocation2 + $0xb8] sm:$0xff]
      %v669 = vld [vmem:[#allocation2 + $0xc0] sm:$0xff]
      %v670 = vld [vmem:[#allocation2 + $0xc8] sm:$0xff]
      %v671 = vld [vmem:[#allocation2 + $0xd0] sm:$0xff]
      %v672 = vld [vmem:[#allocation2 + $0xd8] sm:$0xff]
      %v673 = vld [vmem:[#allocation2 + $0xe0] sm:$0xff]
      %v674 = vld [vmem:[#allocation2 + $0xe8] sm:$0xff]
      %v675 = vld [vmem:[#allocation2 + $0xf0] sm:$0xff]
      %v676 = vld [vmem:[#allocation2 + $0xf8] sm:$0xff]
      %677 = vst [vmem:[#allocation3] sm:$0xff] %v645
      %678 = vst [vmem:[#allocation3 + $0x8] sm:$0xff] %v646
      %679 = vst [vmem:[#allocation3 + $0x10] sm:$0xff] %v647
      %680 = vst [vmem:[#allocation3 + $0x18] sm:$0xff] %v648
      %681 = vst [vmem:[#allocation3 + $0x20] sm:$0xff] %v649
      %682 = vst [vmem:[#allocation3 + $0x28] sm:$0xff] %v650
      %683 = vst [vmem:[#allocation3 + $0x30] sm:$0xff] %v651
      %684 = vst [vmem:[#allocation3 + $0x38] sm:$0xff] %v652
      %685 = vst [vmem:[#allocation3 + $0x40] sm:$0xff] %v653
      %686 = vst [vmem:[#allocation3 + $0x48] sm:$0xff] %v654
      %687 = vst [vmem:[#allocation3 + $0x50] sm:$0xff] %v655
      %688 = vst [vmem:[#allocation3 + $0x58] sm:$0xff] %v656
      %689 = vst [vmem:[#allocation3 + $0x60] sm:$0xff] %v657
      %690 = vst [vmem:[#allocation3 + $0x68] sm:$0xff] %v658
      %691 = vst [vmem:[#allocation3 + $0x70] sm:$0xff] %v659
      %692 = vst [vmem:[#allocation3 + $0x78] sm:$0xff] %v660
      %693 = vst [vmem:[#allocation3 + $0x80] sm:$0xff] %v661
      %694 = vst [vmem:[#allocation3 + $0x88] sm:$0xff] %v662
      %695 = vst [vmem:[#allocation3 + $0x90] sm:$0xff] %v663
      %696 = vst [vmem:[#allocation3 + $0x98] sm:$0xff] %v664
      %697 = vst [vmem:[#allocation3 + $0xa0] sm:$0xff] %v665
      %698 = vst [vmem:[#allocation3 + $0xa8] sm:$0xff] %v666
      %699 = vst [vmem:[#allocation3 + $0xb0] sm:$0xff] %v667
      %700 = vst [vmem:[#allocation3 + $0xb8] sm:$0xff] %v668
      %701 = vst [vmem:[#allocation3 + $0xc0] sm:$0xff] %v669
      %702 = vst [vmem:[#allocation3 + $0xc8] sm:$0xff] %v670
      %703 = vst [vmem:[#allocation3 + $0xd0] sm:$0xff] %v671
      %704 = vst [vmem:[#allocation3 + $0xd8] sm:$0xff] %v672
      %705 = vst [vmem:[#allocation3 + $0xe0] sm:$0xff] %v673
      %706 = vst [vmem:[#allocation3 + $0xe8] sm:$0xff] %v674
      %707 = vst [vmem:[#allocation3 + $0xf0] sm:$0xff] %v675
      %708 = vst [vmem:[#allocation3 + $0xf8] sm:$0xff] %v676
    $region17: #{_lambda_.5} parent=1 // pred_fallthru
      _
    // Predicated region
    $region18: #{_lambda_.5} parent=1 // pred_check
      _
    $region19: #{_lambda_.5} parent=1 // pred_check_branch
      %710 = sbr.rel (0) target = $region21
    $region20: #{_lambda_.5} parent=1 // pred_region
      %712 = vsyncadd [#allocation4], 0
      %s713 = sshll.u32 [#allocation3], 4
      %s714 = int_to_ptr.vmem [resolvable:$true] %s713
      %s715 = sshll.u32 %s2, 4
      %s716 = int_to_ptr.hbm [resolvable:$true] %s715
      %721 = dma.vmem_to_hbm [thread:$0]  %s714, 4096, %s716, [#allocation4], 128, 128, 8
    $region21: #{_lambda_.5} parent=1 // pred_fallthru
      _
    // Predicated region
    $region22: #{_lambda_.5} parent=1 // pred_check
      _
    $region23: #{_lambda_.5} parent=1 // pred_check_branch
      %723 = sbr.rel (0) target = $region25
    $region24: #{_lambda_.5} parent=1 // pred_region
      %725 = dma.done [#allocation4], 4096
    $region25: #{_lambda_.5} parent=1 // pred_fallthru
      _
    %726 = vsyncpa [#allocation4], 1

// kernel: _lambda_.3
$region0: #{_lambda_.3}
  #allocation0 [shape = 'u32[]', space=smem, size = 0x4, offset = 0x4, fixed_abs, tag = 'smem constant byte address 0x4 - core index']
  #allocation1 [shape = 'u32[72,128]{1,0:T(1,128)}', space=vmem, size = 0x9000, scoped, tag = 'internal scratch']
  #allocation2 [shape = 'f32[256,256]{1,0:T(8,128)}', space=vmem, size = 0x40000, scoped, tag = 'scratch operand']
  %s0 = inlined_call_operand.vmem [shape: f32[256,128], index: 0, kind: input, shape index: {}]
  %s1 = inlined_call_operand.vmem [shape: bf16[128,768], index: 1, kind: input, shape index: {}]
  %s2 = inlined_call_operand.vmem [shape: bf16[256,768], index: 2, kind: output, shape index: {}]
  %s3 = sld [smem:[#allocation0]]
  $region121: #{_lambda_.3} parent=0
    _
  %s5 = ssub.s32 1, %s3
  %s6 = scalar_select 0, %s5, %s3
  $region1: #{_lambda_.3} parent=0
    #allocation3 [shape = 'u8[131072]{0}', space=vmem, size = 0x20000, scoped, tag = 'input window, operand 1']
    #allocation4 [shape = 'u8[262144]{0}', space=vmem, size = 0x40000, scoped, tag = 'output window, operand 0']
    loop: start=0, step=1, limit=5
    $region2: #{_lambda_.3} parent=1 // loop_pre_header
      _
    $region3: #{_lambda_.3} parent=1 // loop_header
      %s8 = sphi 0, %s12
      %p9 = scmp.ge.s32.totalorder %s8, 5
      %s15 = sphi 0, %s34
      %s16 = sphi 0, %s30
      %s17 = sphi 0, %s26
      %s18 = sphi 0, %s15
      %s19 = sphi 0, %s16
      %s20 = sphi 0, %s17
      %s21 = sphi 0, %s18
      %s22 = sphi 0, %s19
      %s23 = sphi 0, %s20
      %s39 = sphi 0, %s41
      %s42 = sphi 0, %s39
      %s43 = sphi 0, %s42
      %s59 = sphi 0, %s43
      %s67 = sphi 0, %s69
      %s70 = sphi 0, %s67
      %s71 = sphi 0, %s70
      %s87 = sphi 0, %s71
      %s95 = sphi 0, %s97
      %s98 = sphi 0, %s95
      %s99 = sphi 0, %s98
      %s115 = sphi 0, %s99
    $region4: #{_lambda_.3} parent=1 // loop_header_branch
      %11 = sbr.rel (%p9) target = $region8
    $region5: #{_lambda_.3} parent=1 // loop_body
      %s13 = ssub.s32 %s8, 1
      %s14 = ssub.s32 %s8, 2
      %s24 = sadd.s32 1, %s17
      %p25 = scmp.ge.s32.totalorder %s24, 1
      %s26 = scalar_select %p25, 0, %s24
      %s27 = sadd.s32 1, %s16
      %s28 = scalar_select %p25, %s27, %s16
      %p29 = scmp.ge.s32.totalorder %s28, 3
      %s30 = scalar_select %p29, 0, %s28
      %s31 = sadd.s32 1, %s15
      %s32 = scalar_select %p29, %s31, %s15
      %p33 = scmp.ge.s32.totalorder %s32, 1
      %s34 = scalar_select %p33, 0, %s32
      %s35 = ssub.s32 %s15, %s34
      %s36 = ssub.s32 %s17, %s26
      %s37 = sor.u32 %s35, %s36
      %p38 = scmp.eq.s32.totalorder %s37, 0
      %s40 = sadd.s32 %s39, 1
      %s41 = scalar_select %p38, %s39, %s40
      %p44 = pneg %p38
      %p45 = scmp.eq.s32.totalorder %s8, 2
      %p46 = por %p44, %p45
      %p47 = scmp.ne.s32.totalorder %s39, %s42
      %p48 = scmp.eq.s32.totalorder %s8, 0
      %p49 = por %p47, %p48
      %p50 = scmp.ne.s32.totalorder %s39, %s42
      %p51 = scmp.eq.s32.totalorder %s13, 2
      %p52 = por %p50, %p51
      %p53 = scmp.ne.s32.totalorder %s42, %s43
      %p54 = scmp.eq.s32.totalorder %s13, 0
      %p55 = por %p53, %p54
      %p56 = scmp.ne.s32.totalorder %s42, %s43
      %p57 = scmp.eq.s32.totalorder %s14, 2
      %p58 = por %p56, %p57
      %p60 = scmp.ne.s32.totalorder %s43, %s59
      %p61 = scmp.eq.s32.totalorder %s14, 0
      %p62 = por %p60, %p61
      %s63 = ssub.s32 %s17, %s26
      %s64 = ssub.s32 %s16, %s30
      %s65 = sor.u32 %s63, %s64
      %p66 = scmp.eq.s32.totalorder %s65, 0
      %s68 = sadd.s32 %s67, 1
      %s69 = scalar_select %p66, %s67, %s68
      %p72 = pneg %p66
      %p73 = scmp.eq.s32.totalorder %s8, 2
      %p74 = por %p72, %p73
      %p75 = scmp.ne.s32.totalorder %s67, %s70
      %p76 = scmp.eq.s32.totalorder %s8, 0
      %p77 = por %p75, %p76
      %p78 = scmp.ne.s32.totalorder %s67, %s70
      %p79 = scmp.eq.s32.totalorder %s13, 2
      %p80 = por %p78, %p79
      %p81 = scmp.ne.s32.totalorder %s70, %s71
      %p82 = scmp.eq.s32.totalorder %s13, 0
      %p83 = por %p81, %p82
      %p84 = scmp.ne.s32.totalorder %s70, %s71
      %p85 = scmp.eq.s32.totalorder %s14, 2
      %p86 = por %p84, %p85
      %p88 = scmp.ne.s32.totalorder %s71, %s87
      %p89 = scmp.eq.s32.totalorder %s14, 0
      %p90 = por %p88, %p89
      %s91 = ssub.s32 %s15, %s34
      %s92 = ssub.s32 %s16, %s30
      %s93 = sor.u32 %s91, %s92
      %p94 = scmp.eq.s32.totalorder %s93, 0
      %s96 = sadd.s32 %s95, 1
      %s97 = scalar_select %p94, %s95, %s96
      %p100 = pneg %p94
      %p101 = scmp.eq.s32.totalorder %s8, 2
      %p102 = por %p100, %p101
      %p103 = scmp.ne.s32.totalorder %s95, %s98
      %p104 = scmp.eq.s32.totalorder %s8, 0
      %p105 = por %p103, %p104
      %p106 = scmp.ne.s32.totalorder %s95, %s98
      %p107 = scmp.eq.s32.totalorder %s13, 2
      %p108 = por %p106, %p107
      %p109 = scmp.ne.s32.totalorder %s98, %s99
      %p110 = scmp.eq.s32.totalorder %s13, 0
      %p111 = por %p109, %p110
      %p112 = scmp.ne.s32.totalorder %s98, %s99
      %p113 = scmp.eq.s32.totalorder %s14, 2
      %p114 = por %p112, %p113
      %p116 = scmp.ne.s32.totalorder %s99, %s115
      %p117 = scmp.eq.s32.totalorder %s14, 0
      %p118 = por %p116, %p117
      %p119 = scmp.le.s32.totalorder 1, %s8
      %p120 = scmp.lt.s32.totalorder %s8, 4
      %p121 = pnand %p119, %p120
      %p122 = pneg %p121
      // Predicated region
      $region9: #{_lambda_.3} parent=5 // pred_check
        _
      $region10: #{_lambda_.3} parent=5 // pred_check_branch
        %124 = sbr.rel (%p121) target = $region12
      $region11: #{_lambda_.3} parent=5 // pred_region
        %s125 = ssub.s32 %s8, 1
        // Predicated region
        $region13: #{_lambda_.3} parent=11 // pred_check
          %p126 = pneg %p55
        $region14: #{_lambda_.3} parent=11 // pred_check_branch
          %128 = sbr.rel (%p126) target = $region16
        $region15: #{_lambda_.3} parent=11 // pred_region
          %s129 = smul.u32 32, %s18
          %p130 = scmp.lt.s32.totalorder %s129, 31
          %s131 = scalar_select %p130, %s129, 31
          %p132 = scmp.lt.s32.totalorder %s20, 0
          %s133 = scalar_select %p132, %s20, 0
          %s134 = sadd.s32 %s133, %s131
          %s135 = smul.addr %s134, 8
          %s136 = scalar_lea.vmem %s0, %s135
          %s137 = smul.u32 32, %s18
        $region16: #{_lambda_.3} parent=11 // pred_fallthru
          _
      $region12: #{_lambda_.3} parent=5 // pred_fallthru
        _
      %p138 = scmp.lt.s32.totalorder %s8, 3
      // Predicated region
      $region17: #{_lambda_.3} parent=5 // pred_check
        %p139 = pneg %p138
      $region18: #{_lambda_.3} parent=5 // pred_check_branch
        %141 = sbr.rel (%p139) target = $region20
      $region19: #{_lambda_.3} parent=5 // pred_region
        // Predicated region
        $region21: #{_lambda_.3} parent=19 // pred_check
          %p142 = pneg %p77
        $region22: #{_lambda_.3} parent=19 // pred_check_branch
          %144 = sbr.rel (%p142) target = $region24
        $region23: #{_lambda_.3} parent=19 // pred_region
          %s145 = sand.u32 %s67, 1
          %s146 = sand.u32 %s67, 1
          %s147 = smul.addr %s146, 128
          %s148 = scalar_lea.vmem [#allocation3], %s147
          %s149 = smul.u32 16, %s17
          %s150 = smul.u32 2, %s16
          %s151 = smul.addr %s149, 6
          %s152 = sadd.s32 %s150, %s151
          %s153 = smul.addr %s152, 4
          %s154 = scalar_lea.vmem %s1, %s153
          // Predicated region
          $region25: #{_lambda_.3} parent=23 // pred_check
            _
          $region26: #{_lambda_.3} parent=23 // pred_check_branch
            %156 = sbr.rel (0) target = $region28
          $region27: #{_lambda_.3} parent=23 // pred_region
            // Predicated region
            $region29: #{_lambda_.3} parent=27 // pred_check
              _
            $region30: #{_lambda_.3} parent=27 // pred_check_branch
              %158 = sbr.rel (0) target = $region32
            $region31: #{_lambda_.3} parent=27 // pred_region
              // Predicated region
              $region44: #{_lambda_.3} parent=31 // pred_check
                _
              $region45: #{_lambda_.3} parent=31 // pred_check_branch
                %204 = sbr.rel (0) target = $region47
              $region46: #{_lambda_.3} parent=31 // pred_region
                loop: start=0, step=1, limit=1
                $region48: #{_lambda_.3} parent=46 // loop_pre_header
                  _
                $region49: #{_lambda_.3} parent=46 // loop_header
                  %s206 = sphi 0, %s210
                  %p207 = scmp.ge.s32.totalorder %s206, 1
                  %s211 = sphi %s154, %s154
                  %s212 = sphi %s148, %s148
                $region50: #{_lambda_.3} parent=46 // loop_header_branch
                  %209 = sbr.rel (%p207) target = $region54
                $region51: #{_lambda_.3} parent=46 // loop_body
                  %v213 = vld [vmem:[%s211] sm:$0xff]
                  %214 = vst [vmem:[%s212] sm:$0xff] %v213
                  %v215 = vld [vmem:[%s211 + $0x18] sm:$0xff]
                  %216 = vst [vmem:[%s212 + $0x8] sm:$0xff] %v215
                  %v217 = vld [vmem:[%s211 + $0x30] sm:$0xff]
                  %218 = vst [vmem:[%s212 + $0x10] sm:$0xff] %v217
                  %v219 = vld [vmem:[%s211 + $0x48] sm:$0xff]
                  %220 = vst [vmem:[%s212 + $0x18] sm:$0xff] %v219
                  %v221 = vld [vmem:[%s211 + $0x60] sm:$0xff]
                  %222 = vst [vmem:[%s212 + $0x20] sm:$0xff] %v221
                  %v223 = vld [vmem:[%s211 + $0x78] sm:$0xff]
                  %224 = vst [vmem:[%s212 + $0x28] sm:$0xff] %v223
                  %v225 = vld [vmem:[%s211 + $0x90] sm:$0xff]
                  %226 = vst [vmem:[%s212 + $0x30] sm:$0xff] %v225
                  %v227 = vld [vmem:[%s211 + $0xa8] sm:$0xff]
                  %228 = vst [vmem:[%s212 + $0x38] sm:$0xff] %v227
                  %v229 = vld [vmem:[%s211 + $0xc0] sm:$0xff]
                  %230 = vst [vmem:[%s212 + $0x40] sm:$0xff] %v229
                  %v231 = vld [vmem:[%s211 + $0xd8] sm:$0xff]
                  %232 = vst [vmem:[%s212 + $0x48] sm:$0xff] %v231
                  %v233 = vld [vmem:[%s211 + $0xf0] sm:$0xff]
                  %234 = vst [vmem:[%s212 + $0x50] sm:$0xff] %v233
                  %v235 = vld [vmem:[%s211 + $0x108] sm:$0xff]
                  %236 = vst [vmem:[%s212 + $0x58] sm:$0xff] %v235
                  %v237 = vld [vmem:[%s211 + $0x120] sm:$0xff]
                  %238 = vst [vmem:[%s212 + $0x60] sm:$0xff] %v237
                  %v239 = vld [vmem:[%s211 + $0x138] sm:$0xff]
                  %240 = vst [vmem:[%s212 + $0x68] sm:$0xff] %v239
                  %v241 = vld [vmem:[%s211 + $0x150] sm:$0xff]
                  %242 = vst [vmem:[%s212 + $0x70] sm:$0xff] %v241
                  %v243 = vld [vmem:[%s211 + $0x168] sm:$0xff]
                  %244 = vst [vmem:[%s212 + $0x78] sm:$0xff] %v243
                $region52: #{_lambda_.3} parent=46 // loop_footer
                  %s210 = sadd.s32 1, %s206
                $region53: #{_lambda_.3} parent=46 // loop_footer_branch
                  %205 = sbr.rel target = $region49
                $region54: #{_lambda_.3} parent=46 // loop_exit
                  _
              $region47: #{_lambda_.3} parent=31 // pred_fallthru
                _
              // Predicated region
              $region55: #{_lambda_.3} parent=31 // pred_check
                _
              $region56: #{_lambda_.3} parent=31 // pred_check_branch
                %246 = sbr.rel target = $region58
              $region57: #{_lambda_.3} parent=31 // pred_region
                _
              $region58: #{_lambda_.3} parent=31 // pred_fallthru
                _
            $region32: #{_lambda_.3} parent=27 // pred_fallthru
              _
            // Predicated region
            $region33: #{_lambda_.3} parent=27 // pred_check
              _
            $region34: #{_lambda_.3} parent=27 // pred_check_branch
              %160 = sbr.rel target = $region36
            $region35: #{_lambda_.3} parent=27 // pred_region
              %s162 = ssub.s32 256, 1
              loop: start=0, step=1, limit=1
              $region37: #{_lambda_.3} parent=35 // loop_pre_header
                _
              $region38: #{_lambda_.3} parent=35 // loop_header
                %s164 = sphi 0, %s168
                %p165 = scmp.ge.s32.totalorder %s164, 1
                %s169 = sphi %s154, %s154
                %s170 = sphi %s148, %s148
              $region39: #{_lambda_.3} parent=35 // loop_header_branch
                %167 = sbr.rel (%p165) target = $region43
              $region40: #{_lambda_.3} parent=35 // loop_body
                %v171 = vld [vmem:[%s169] sm:%s162]
                %172 = vst [vmem:[%s170] sm:%s162] %v171
                %v173 = vld [vmem:[%s169 + $0x18] sm:%s162]
                %174 = vst [vmem:[%s170 + $0x8] sm:%s162] %v173
                %v175 = vld [vmem:[%s169 + $0x30] sm:%s162]
                %176 = vst [vmem:[%s170 + $0x10] sm:%s162] %v175
                %v177 = vld [vmem:[%s169 + $0x48] sm:%s162]
                %178 = vst [vmem:[%s170 + $0x18] sm:%s162] %v177
                %v179 = vld [vmem:[%s169 + $0x60] sm:%s162]
                %180 = vst [vmem:[%s170 + $0x20] sm:%s162] %v179
                %v181 = vld [vmem:[%s169 + $0x78] sm:%s162]
                %182 = vst [vmem:[%s170 + $0x28] sm:%s162] %v181
                %v183 = vld [vmem:[%s169 + $0x90] sm:%s162]
                %184 = vst [vmem:[%s170 + $0x30] sm:%s162] %v183
                %v185 = vld [vmem:[%s169 + $0xa8] sm:%s162]
                %186 = vst [vmem:[%s170 + $0x38] sm:%s162] %v185
                %v187 = vld [vmem:[%s169 + $0xc0] sm:%s162]
                %188 = vst [vmem:[%s170 + $0x40] sm:%s162] %v187
                %v189 = vld [vmem:[%s169 + $0xd8] sm:%s162]
                %190 = vst [vmem:[%s170 + $0x48] sm:%s162] %v189
                %v191 = vld [vmem:[%s169 + $0xf0] sm:%s162]
                %192 = vst [vmem:[%s170 + $0x50] sm:%s162] %v191
                %v193 = vld [vmem:[%s169 + $0x108] sm:%s162]
                %194 = vst [vmem:[%s170 + $0x58] sm:%s162] %v193
                %v195 = vld [vmem:[%s169 + $0x120] sm:%s162]
                %196 = vst [vmem:[%s170 + $0x60] sm:%s162] %v195
                %v197 = vld [vmem:[%s169 + $0x138] sm:%s162]
                %198 = vst [vmem:[%s170 + $0x68] sm:%s162] %v197
                %v199 = vld [vmem:[%s169 + $0x150] sm:%s162]
                %200 = vst [vmem:[%s170 + $0x70] sm:%s162] %v199
                %v201 = vld [vmem:[%s169 + $0x168] sm:%s162]
                %202 = vst [vmem:[%s170 + $0x78] sm:%s162] %v201
              $region41: #{_lambda_.3} parent=35 // loop_footer
                %s168 = sadd.s32 1, %s164
              $region42: #{_lambda_.3} parent=35 // loop_footer_branch
                %163 = sbr.rel target = $region38
              $region43: #{_lambda_.3} parent=35 // loop_exit
                _
            $region36: #{_lambda_.3} parent=27 // pred_fallthru
              _
          $region28: #{_lambda_.3} parent=23 // pred_fallthru
            _
          %247 = vnop
        $region24: #{_lambda_.3} parent=19 // pred_fallthru
          _
      $region20: #{_lambda_.3} parent=5 // pred_fallthru
        _
      %p248 = scmp.le.s32.totalorder 1, %s8
      %p249 = scmp.lt.s32.totalorder %s8, 4
      %p250 = pnand %p248, %p249
      %p251 = pneg %p250
      // Predicated region
      $region59: #{_lambda_.3} parent=5 // pred_check
        _
      $region60: #{_lambda_.3} parent=5 // pred_check_branch
        %253 = sbr.rel (%p250) target = $region62
      $region61: #{_lambda_.3} parent=5 // pred_region
        %s254 = ssub.s32 %s8, 1
        %s255 = sand.u32 %s70, 1
        %s256 = sand.u32 %s70, 1
        %s257 = smul.addr %s256, 128
        %s258 = scalar_lea.vmem [#allocation3], %s257
        // Predicated region
        $region63: #{_lambda_.3} parent=61 // pred_check
          %p259 = pneg %p83
        $region64: #{_lambda_.3} parent=61 // pred_check_branch
          %261 = sbr.rel (%p259) target = $region66
        $region65: #{_lambda_.3} parent=61 // pred_region
          _
        $region66: #{_lambda_.3} parent=61 // pred_fallthru
          _
        %s262 = smul.u32 32, %s18
        %p263 = scmp.lt.s32.totalorder %s262, 31
        %s264 = scalar_select %p263, %s262, 31
        %p265 = scmp.lt.s32.totalorder %s20, 0
        %s266 = scalar_select %p265, %s20, 0
        %s267 = sadd.s32 %s266, %s264
        %s268 = smul.addr %s267, 8
        %s269 = scalar_lea.vmem %s0, %s268
        %p270 = pneg %p55
        %p271 = pneg %p52
        %s272 = sand.u32 %s70, 1
        %s273 = sand.u32 %s70, 1
        %s274 = smul.addr %s273, 128
        %s275 = scalar_lea.vmem [#allocation3], %s274
        %p276 = pneg %p83
        %p277 = pneg %p80
        %p278 = pneg %p111
        %p279 = pneg %p108
        %s280 = sand.u32 %s98, 1
        %s281 = sand.u32 %s98, 1
        %s282 = smul.addr %s281, 256
        %s283 = scalar_lea.vmem [#allocation4], %s282
        %s284 = smul.u32 32, %s18
        %p285 = scmp.lt.s32.totalorder %s284, 31
        %s286 = scalar_select %p285, %s284, 31
        %p287 = scmp.lt.s32.totalorder %s20, 0
        %s288 = scalar_select %p287, %s20, 0
        %s289 = sadd.s32 %s288, %s286
        %s290 = smul.addr %s289, 8
        %s291 = scalar_lea.vmem %s0, %s290
        %s292 = smul.u32 32, %s18
        %s293 = smul.u32 16, %s20
        %s294 = smul.u32 2, %s19
        %s295 = smul.u32 32, %s18
        %s296 = smul.u32 2, %s19
        %p297 = scmp.eq.s32.totalorder %s20, 0
        // Predicated region
        $region67: #{_lambda_.3} parent=61 // pred_check
          %p298 = pneg %p297
        $region68: #{_lambda_.3} parent=61 // pred_check_branch
          %300 = sbr.rel (%p298) target = $region70
        $region69: #{_lambda_.3} parent=61 // pred_region
          %301 = vst [vmem:[#allocation2] sm:$0xff] 0.0
          %302 = vst [vmem:[#allocation2 + $0x8] sm:$0xff] 0.0
          %303 = vst [vmem:[#allocation2 + $0x10] sm:$0xff] 0.0
          %304 = vst [vmem:[#allocation2 + $0x18] sm:$0xff] 0.0
          %305 = vst [vmem:[#allocation2 + $0x20] sm:$0xff] 0.0
          %306 = vst [vmem:[#allocation2 + $0x28] sm:$0xff] 0.0
          %307 = vst [vmem:[#allocation2 + $0x30] sm:$0xff] 0.0
          %308 = vst [vmem:[#allocation2 + $0x38] sm:$0xff] 0.0
          %309 = vst [vmem:[#allocation2 + $0x40] sm:$0xff] 0.0
          %310 = vst [vmem:[#allocation2 + $0x48] sm:$0xff] 0.0
          %311 = vst [vmem:[#allocation2 + $0x50] sm:$0xff] 0.0
          %312 = vst [vmem:[#allocation2 + $0x58] sm:$0xff] 0.0
          %313 = vst [vmem:[#allocation2 + $0x60] sm:$0xff] 0.0
          %314 = vst [vmem:[#allocation2 + $0x68] sm:$0xff] 0.0
          %315 = vst [vmem:[#allocation2 + $0x70] sm:$0xff] 0.0
          %316 = vst [vmem:[#allocation2 + $0x78] sm:$0xff] 0.0
          %317 = vst [vmem:[#allocation2 + $0x80] sm:$0xff] 0.0
          %318 = vst [vmem:[#allocation2 + $0x88] sm:$0xff] 0.0
          %319 = vst [vmem:[#allocation2 + $0x90] sm:$0xff] 0.0
          %320 = vst [vmem:[#allocation2 + $0x98] sm:$0xff] 0.0
          %321 = vst [vmem:[#allocation2 + $0xa0] sm:$0xff] 0.0
          %322 = vst [vmem:[#allocation2 + $0xa8] sm:$0xff] 0.0
          %323 = vst [vmem:[#allocation2 + $0xb0] sm:$0xff] 0.0
          %324 = vst [vmem:[#allocation2 + $0xb8] sm:$0xff] 0.0
          %325 = vst [vmem:[#allocation2 + $0xc0] sm:$0xff] 0.0
          %326 = vst [vmem:[#allocation2 + $0xc8] sm:$0xff] 0.0
          %327 = vst [vmem:[#allocation2 + $0xd0] sm:$0xff] 0.0
          %328 = vst [vmem:[#allocation2 + $0xd8] sm:$0xff] 0.0
          %329 = vst [vmem:[#allocation2 + $0xe0] sm:$0xff] 0.0
          %330 = vst [vmem:[#allocation2 + $0xe8] sm:$0xff] 0.0
          %331 = vst [vmem:[#allocation2 + $0xf0] sm:$0xff] 0.0
          %332 = vst [vmem:[#allocation2 + $0xf8] sm:$0xff] 0.0
          %333 = vst [vmem:[#allocation2 + $0x100] sm:$0xff] 0.0
          %334 = vst [vmem:[#allocation2 + $0x108] sm:$0xff] 0.0
          %335 = vst [vmem:[#allocation2 + $0x110] sm:$0xff] 0.0
          %336 = vst [vmem:[#allocation2 + $0x118] sm:$0xff] 0.0
          %337 = vst [vmem:[#allocation2 + $0x120] sm:$0xff] 0.0
          %338 = vst [vmem:[#allocation2 + $0x128] sm:$0xff] 0.0
          %339 = vst [vmem:[#allocation2 + $0x130] sm:$0xff] 0.0
          %340 = vst [vmem:[#allocation2 + $0x138] sm:$0xff] 0.0
          %341 = vst [vmem:[#allocation2 + $0x140] sm:$0xff] 0.0
          %342 = vst [vmem:[#allocation2 + $0x148] sm:$0xff] 0.0
          %343 = vst [vmem:[#allocation2 + $0x150] sm:$0xff] 0.0
          %344 = vst [vmem:[#allocation2 + $0x158] sm:$0xff] 0.0
          %345 = vst [vmem:[#allocation2 + $0x160] sm:$0xff] 0.0
          %346 = vst [vmem:[#allocation2 + $0x168] sm:$0xff] 0.0
          %347 = vst [vmem:[#allocation2 + $0x170] sm:$0xff] 0.0
          %348 = vst [vmem:[#allocation2 + $0x178] sm:$0xff] 0.0
          %349 = vst [vmem:[#allocation2 + $0x180] sm:$0xff] 0.0
          %350 = vst [vmem:[#allocation2 + $0x188] sm:$0xff] 0.0
          %351 = vst [vmem:[#allocation2 + $0x190] sm:$0xff] 0.0
          %352 = vst [vmem:[#allocation2 + $0x198] sm:$0xff] 0.0
          %353 = vst [vmem:[#allocation2 + $0x1a0] sm:$0xff] 0.0
          %354 = vst [vmem:[#allocation2 + $0x1a8] sm:$0xff] 0.0
          %355 = vst [vmem:[#allocation2 + $0x1b0] sm:$0xff] 0.0
          %356 = vst [vmem:[#allocation2 + $0x1b8] sm:$0xff] 0.0
          %357 = vst [vmem:[#allocation2 + $0x1c0] sm:$0xff] 0.0
          %358 = vst [vmem:[#allocation2 + $0x1c8] sm:$0xff] 0.0
          %359 = vst [vmem:[#allocation2 + $0x1d0] sm:$0xff] 0.0
          %360 = vst [vmem:[#allocation2 + $0x1d8] sm:$0xff] 0.0
          %361 = vst [vmem:[#allocation2 + $0x1e0] sm:$0xff] 0.0
          %362 = vst [vmem:[#allocation2 + $0x1e8] sm:$0xff] 0.0
          %363 = vst [vmem:[#allocation2 + $0x1f0] sm:$0xff] 0.0
          %364 = vst [vmem:[#allocation2 + $0x1f8] sm:$0xff] 0.0
        $region70: #{_lambda_.3} parent=61 // pred_fallthru
          _
        %v365 = vld [vmem:[#allocation2] sm:$0xff]
        %v366 = vld [vmem:[#allocation2 + $0x8] sm:$0xff]
        %v367 = vld [vmem:[#allocation2 + $0x10] sm:$0xff]
        %v368 = vld [vmem:[#allocation2 + $0x18] sm:$0xff]
        %v369 = vld [vmem:[#allocation2 + $0x20] sm:$0xff]
        %v370 = vld [vmem:[#allocation2 + $0x28] sm:$0xff]
        %v371 = vld [vmem:[#allocation2 + $0x30] sm:$0xff]
        %v372 = vld [vmem:[#allocation2 + $0x38] sm:$0xff]
        %v373 = vld [vmem:[#allocation2 + $0x40] sm:$0xff]
        %v374 = vld [vmem:[#allocation2 + $0x48] sm:$0xff]
        %v375 = vld [vmem:[#allocation2 + $0x50] sm:$0xff]
        %v376 = vld [vmem:[#allocation2 + $0x58] sm:$0xff]
        %v377 = vld [vmem:[#allocation2 + $0x60] sm:$0xff]
        %v378 = vld [vmem:[#allocation2 + $0x68] sm:$0xff]
        %v379 = vld [vmem:[#allocation2 + $0x70] sm:$0xff]
        %v380 = vld [vmem:[#allocation2 + $0x78] sm:$0xff]
        %v381 = vld [vmem:[#allocation2 + $0x80] sm:$0xff]
        %v382 = vld [vmem:[#allocation2 + $0x88] sm:$0xff]
        %v383 = vld [vmem:[#allocation2 + $0x90] sm:$0xff]
        %v384 = vld [vmem:[#allocation2 + $0x98] sm:$0xff]
        %v385 = vld [vmem:[#allocation2 + $0xa0] sm:$0xff]
        %v386 = vld [vmem:[#allocation2 + $0xa8] sm:$0xff]
        %v387 = vld [vmem:[#allocation2 + $0xb0] sm:$0xff]
        %v388 = vld [vmem:[#allocation2 + $0xb8] sm:$0xff]
        %v389 = vld [vmem:[#allocation2 + $0xc0] sm:$0xff]
        %v390 = vld [vmem:[#allocation2 + $0xc8] sm:$0xff]
        %v391 = vld [vmem:[#allocation2 + $0xd0] sm:$0xff]
        %v392 = vld [vmem:[#allocation2 + $0xd8] sm:$0xff]
        %v393 = vld [vmem:[#allocation2 + $0xe0] sm:$0xff]
        %v394 = vld [vmem:[#allocation2 + $0xe8] sm:$0xff]
        %v395 = vld [vmem:[#allocation2 + $0xf0] sm:$0xff]
        %v396 = vld [vmem:[#allocation2 + $0xf8] sm:$0xff]
        %v397 = vld [vmem:[#allocation2 + $0x100] sm:$0xff]
        %v398 = vld [vmem:[#allocation2 + $0x108] sm:$0xff]
        %v399 = vld [vmem:[#allocation2 + $0x110] sm:$0xff]
        %v400 = vld [vmem:[#allocation2 + $0x118] sm:$0xff]
        %v401 = vld [vmem:[#allocation2 + $0x120] sm:$0xff]
        %v402 = vld [vmem:[#allocation2 + $0x128] sm:$0xff]
        %v403 = vld [vmem:[#allocation2 + $0x130] sm:$0xff]
        %v404 = vld [vmem:[#allocation2 + $0x138] sm:$0xff]
        %v405 = vld [vmem:[#allocation2 + $0x140] sm:$0xff]
        %v406 = vld [vmem:[#allocation2 + $0x148] sm:$0xff]
        %v407 = vld [vmem:[#allocation2 + $0x150] sm:$0xff]
        %v408 = vld [vmem:[#allocation2 + $0x158] sm:$0xff]
        %v409 = vld [vmem:[#allocation2 + $0x160] sm:$0xff]
        %v410 = vld [vmem:[#allocation2 + $0x168] sm:$0xff]
        %v411 = vld [vmem:[#allocation2 + $0x170] sm:$0xff]
        %v412 = vld [vmem:[#allocation2 + $0x178] sm:$0xff]
        %v413 = vld [vmem:[#allocation2 + $0x180] sm:$0xff]
        %v414 = vld [vmem:[#allocation2 + $0x188] sm:$0xff]
        %v415 = vld [vmem:[#allocation2 + $0x190] sm:$0xff]
        %v416 = vld [vmem:[#allocation2 + $0x198] sm:$0xff]
        %v417 = vld [vmem:[#allocation2 + $0x1a0] sm:$0xff]
        %v418 = vld [vmem:[#allocation2 + $0x1a8] sm:$0xff]
        %v419 = vld [vmem:[#allocation2 + $0x1b0] sm:$0xff]
        %v420 = vld [vmem:[#allocation2 + $0x1b8] sm:$0xff]
        %v421 = vld [vmem:[#allocation2 + $0x1c0] sm:$0xff]
        %v422 = vld [vmem:[#allocation2 + $0x1c8] sm:$0xff]
        %v423 = vld [vmem:[#allocation2 + $0x1d0] sm:$0xff]
        %v424 = vld [vmem:[#allocation2 + $0x1d8] sm:$0xff]
        %v425 = vld [vmem:[#allocation2 + $0x1e0] sm:$0xff]
        %v426 = vld [vmem:[#allocation2 + $0x1e8] sm:$0xff]
        %v427 = vld [vmem:[#allocation2 + $0x1f0] sm:$0xff]
        %v428 = vld [vmem:[#allocation2 + $0x1f8] sm:$0xff]
        %v429 = vld [vmem:[%s291] sm:$0xff]
        %v430 = vld [vmem:[%s291 + $0x8] sm:$0xff]
        %v431 = vld [vmem:[%s291 + $0x10] sm:$0xff]
        %v432 = vld [vmem:[%s291 + $0x18] sm:$0xff]
        %v433 = vld [vmem:[%s291 + $0x20] sm:$0xff]
        %v434 = vld [vmem:[%s291 + $0x28] sm:$0xff]
        %v435 = vld [vmem:[%s291 + $0x30] sm:$0xff]
        %v436 = vld [vmem:[%s291 + $0x38] sm:$0xff]
        %v437 = vld [vmem:[%s291 + $0x40] sm:$0xff]
        %v438 = vld [vmem:[%s291 + $0x48] sm:$0xff]
        %v439 = vld [vmem:[%s291 + $0x50] sm:$0xff]
        %v440 = vld [vmem:[%s291 + $0x58] sm:$0xff]
        %v441 = vld [vmem:[%s291 + $0x60] sm:$0xff]
        %v442 = vld [vmem:[%s291 + $0x68] sm:$0xff]
        %v443 = vld [vmem:[%s291 + $0x70] sm:$0xff]
        %v444 = vld [vmem:[%s291 + $0x78] sm:$0xff]
        %v445 = vld [vmem:[%s291 + $0x80] sm:$0xff]
        %v446 = vld [vmem:[%s291 + $0x88] sm:$0xff]
        %v447 = vld [vmem:[%s291 + $0x90] sm:$0xff]
        %v448 = vld [vmem:[%s291 + $0x98] sm:$0xff]
        %v449 = vld [vmem:[%s291 + $0xa0] sm:$0xff]
        %v450 = vld [vmem:[%s291 + $0xa8] sm:$0xff]
        %v451 = vld [vmem:[%s291 + $0xb0] sm:$0xff]
        %v452 = vld [vmem:[%s291 + $0xb8] sm:$0xff]
        %v453 = vld [vmem:[%s291 + $0xc0] sm:$0xff]
        %v454 = vld [vmem:[%s291 + $0xc8] sm:$0xff]
        %v455 = vld [vmem:[%s291 + $0xd0] sm:$0xff]
        %v456 = vld [vmem:[%s291 + $0xd8] sm:$0xff]
        %v457 = vld [vmem:[%s291 + $0xe0] sm:$0xff]
        %v458 = vld [vmem:[%s291 + $0xe8] sm:$0xff]
        %v459 = vld [vmem:[%s291 + $0xf0] sm:$0xff]
        %v460 = vld [vmem:[%s291 + $0xf8] sm:$0xff]
        %v461 = vpack.c.bf16 %v430, %v429
        %v462 = vpack.c.bf16 %v432, %v431
        %v463 = vpack.c.bf16 %v434, %v433
        %v464 = vpack.c.bf16 %v436, %v435
        %v465 = vpack.c.bf16 %v438, %v437
        %v466 = vpack.c.bf16 %v440, %v439
        %v467 = vpack.c.bf16 %v442, %v441
        %v468 = vpack.c.bf16 %v444, %v443
        %v469 = vpack.c.bf16 %v446, %v445
        %v470 = vpack.c.bf16 %v448, %v447
        %v471 = vpack.c.bf16 %v450, %v449
        %v472 = vpack.c.bf16 %v452, %v451
        %v473 = vpack.c.bf16 %v454, %v453
        %v474 = vpack.c.bf16 %v456, %v455
        %v475 = vpack.c.bf16 %v458, %v457
        %v476 = vpack.c.bf16 %v460, %v459
        %v477 = vld [vmem:[%s258] sm:$0xff]
        %v478 = vld [vmem:[%s258 + $0x8] sm:$0xff]
        %v479 = vld [vmem:[%s258 + $0x10] sm:$0xff]
        %v480 = vld [vmem:[%s258 + $0x18] sm:$0xff]
        %v481 = vld [vmem:[%s258 + $0x20] sm:$0xff]
        %v482 = vld [vmem:[%s258 + $0x28] sm:$0xff]
        %v483 = vld [vmem:[%s258 + $0x30] sm:$0xff]
        %v484 = vld [vmem:[%s258 + $0x38] sm:$0xff]
        %v485 = vld [vmem:[%s258 + $0x40] sm:$0xff]
        %v486 = vld [vmem:[%s258 + $0x48] sm:$0xff]
        %v487 = vld [vmem:[%s258 + $0x50] sm:$0xff]
        %v488 = vld [vmem:[%s258 + $0x58] sm:$0xff]
        %v489 = vld [vmem:[%s258 + $0x60] sm:$0xff]
        %v490 = vld [vmem:[%s258 + $0x68] sm:$0xff]
        %v491 = vld [vmem:[%s258 + $0x70] sm:$0xff]
        %v492 = vld [vmem:[%s258 + $0x78] sm:$0xff]
        %v509 = vunpack.c.l.b16 %v477
        %v510 = vunpack.c.h.b16 %v477
        %v511 = vunpack.c.l.b16 %v478
        %v512 = vunpack.c.h.b16 %v478
        %v513 = vunpack.c.l.b16 %v479
        %v514 = vunpack.c.h.b16 %v479
        %v515 = vunpack.c.l.b16 %v480
        %v516 = vunpack.c.h.b16 %v480
        %v517 = vunpack.c.l.b16 %v481
        %v518 = vunpack.c.h.b16 %v481
        %v519 = vunpack.c.l.b16 %v482
        %v520 = vunpack.c.h.b16 %v482
        %v521 = vunpack.c.l.b16 %v483
        %v522 = vunpack.c.h.b16 %v483
        %v523 = vunpack.c.l.b16 %v484
        %v524 = vunpack.c.h.b16 %v484
        %v525 = vunpack.c.l.b16 %v485
        %v526 = vunpack.c.h.b16 %v485
        %v527 = vunpack.c.l.b16 %v486
        %v528 = vunpack.c.h.b16 %v486
        %v529 = vunpack.c.l.b16 %v487
        %v530 = vunpack.c.h.b16 %v487
        %v531 = vunpack.c.l.b16 %v488
        %v532 = vunpack.c.h.b16 %v488
        %v533 = vunpack.c.l.b16 %v489
        %v534 = vunpack.c.h.b16 %v489
        %v535 = vunpack.c.l.b16 %v490
        %v536 = vunpack.c.h.b16 %v490
        %v537 = vunpack.c.l.b16 %v491
        %v538 = vunpack.c.h.b16 %v491
        %v539 = vunpack.c.l.b16 %v492
        %v540 = vunpack.c.h.b16 %v492
        %v541 = vpack.c.b16 %v511, %v509
        %v542 = vpack.c.b16 %v512, %v510
        %v543 = vpack.c.b16 %v515, %v513
        %v544 = vpack.c.b16 %v516, %v514
        %v545 = vpack.c.b16 %v519, %v517
        %v546 = vpack.c.b16 %v520, %v518
        %v547 = vpack.c.b16 %v523, %v521
        %v548 = vpack.c.b16 %v524, %v522
        %v549 = vpack.c.b16 %v527, %v525
        %v550 = vpack.c.b16 %v528, %v526
        %v551 = vpack.c.b16 %v531, %v529
        %v552 = vpack.c.b16 %v532, %v530
        %v553 = vpack.c.b16 %v535, %v533
        %v554 = vpack.c.b16 %v536, %v534
        %v555 = vpack.c.b16 %v539, %v537
        %v556 = vpack.c.b16 %v540, %v538
        %573 = vmatpush.bf16.msra.mxu0 %v555
        %574 = vmatpush.bf16.msra.mxu0 %v553
        %575 = vmatpush.bf16.msra.mxu0 %v551
        %576 = vmatpush.bf16.msra.mxu0 %v549
        %577 = vmatpush.bf16.msra.mxu0 %v547
        %578 = vmatpush.bf16.msra.mxu0 %v545
        %579 = vmatpush.bf16.msra.mxu0 %v543
        %580 = vmatpush.bf16.msra.mxu0 %v541
        %581 = vmatmul.bf16.gmra.mxu0 %v461
        %v582 = vpop.f32.mrf.mxu0
        %v583 = vadd.f32 0.0, %v582
        %v584 = vpop.f32.mrf.mxu0
        %v585 = vadd.f32 0.0, %v584
        %586 = vmatmul.bf16.gmra.mxu0 %v462
        %v587 = vpop.f32.mrf.mxu0
        %v588 = vadd.f32 0.0, %v587
        %v589 = vpop.f32.mrf.mxu0
        %v590 = vadd.f32 0.0, %v589
        %591 = vmatmul.bf16.gmra.mxu0 %v463
        %v592 = vpop.f32.mrf.mxu0
        %v593 = vadd.f32 0.0, %v592
        %v594 = vpop.f32.mrf.mxu0
        %v595 = vadd.f32 0.0, %v594
        %596 = vmatmul.bf16.gmra.mxu0 %v464
        %v597 = vpop.f32.mrf.mxu0
        %v598 = vadd.f32 0.0, %v597
        %v599 = vpop.f32.mrf.mxu0
        %v600 = vadd.f32 0.0, %v599
        %601 = vmatmul.bf16.gmra.mxu0 %v465
        %v602 = vpop.f32.mrf.mxu0
        %v603 = vadd.f32 0.0, %v602
        %v604 = vpop.f32.mrf.mxu0
        %v605 = vadd.f32 0.0, %v604
        %606 = vmatmul.bf16.gmra.mxu0 %v466
        %v607 = vpop.f32.mrf.mxu0
        %v608 = vadd.f32 0.0, %v607
        %v609 = vpop.f32.mrf.mxu0
        %v610 = vadd.f32 0.0, %v609
        %611 = vmatmul.bf16.gmra.mxu0 %v467
        %v612 = vpop.f32.mrf.mxu0
        %v613 = vadd.f32 0.0, %v612
        %v614 = vpop.f32.mrf.mxu0
        %v615 = vadd.f32 0.0, %v614
        %616 = vmatmul.bf16.gmra.mxu0 %v468
        %v617 = vpop.f32.mrf.mxu0
        %v618 = vadd.f32 0.0, %v617
        %v619 = vpop.f32.mrf.mxu0
        %v620 = vadd.f32 0.0, %v619
        %621 = vmatmul.bf16.gmra.mxu0 %v469
        %v622 = vpop.f32.mrf.mxu0
        %v623 = vadd.f32 0.0, %v622
        %v624 = vpop.f32.mrf.mxu0
        %v625 = vadd.f32 0.0, %v624
        %626 = vmatmul.bf16.gmra.mxu0 %v470
        %v627 = vpop.f32.mrf.mxu0
        %v628 = vadd.f32 0.0, %v627
        %v629 = vpop.f32.mrf.mxu0
        %v630 = vadd.f32 0.0, %v629
        %631 = vmatmul.bf16.gmra.mxu0 %v471
        %v632 = vpop.f32.mrf.mxu0
        %v633 = vadd.f32 0.0, %v632
        %v634 = vpop.f32.mrf.mxu0
        %v635 = vadd.f32 0.0, %v634
        %636 = vmatmul.bf16.gmra.mxu0 %v472
        %v637 = vpop.f32.mrf.mxu0
        %v638 = vadd.f32 0.0, %v637
        %v639 = vpop.f32.mrf.mxu0
        %v640 = vadd.f32 0.0, %v639
        %641 = vmatmul.bf16.gmra.mxu0 %v473
        %v642 = vpop.f32.mrf.mxu0
        %v643 = vadd.f32 0.0, %v642
        %v644 = vpop.f32.mrf.mxu0
        %v645 = vadd.f32 0.0, %v644
        %646 = vmatmul.bf16.gmra.mxu0 %v474
        %v647 = vpop.f32.mrf.mxu0
        %v648 = vadd.f32 0.0, %v647
        %v649 = vpop.f32.mrf.mxu0
        %v650 = vadd.f32 0.0, %v649
        %651 = vmatmul.bf16.gmra.mxu0 %v475
        %v652 = vpop.f32.mrf.mxu0
        %v653 = vadd.f32 0.0, %v652
        %v654 = vpop.f32.mrf.mxu0
        %v655 = vadd.f32 0.0, %v654
        %656 = vmatmul.bf16.gmra.mxu0 %v476
        %v657 = vpop.f32.mrf.mxu0
        %v658 = vadd.f32 0.0, %v657
        %v659 = vpop.f32.mrf.mxu0
        %v660 = vadd.f32 0.0, %v659
        %661 = vdwg.mxu0
        %662 = vmatpush.bf16.msra.mxu0 %v556
        %663 = vmatpush.bf16.msra.mxu0 %v554
        %664 = vmatpush.bf16.msra.mxu0 %v552
        %665 = vmatpush.bf16.msra.mxu0 %v550
        %666 = vmatpush.bf16.msra.mxu0 %v548
        %667 = vmatpush.bf16.msra.mxu0 %v546
        %668 = vmatpush.bf16.msra.mxu0 %v544
        %669 = vmatpush.bf16.msra.mxu0 %v542
        %670 = vmatmul.bf16.gmra.mxu0 %v461
        %v671 = vpop.f32.mrf.mxu0
        %v672 = vadd.f32 0.0, %v671
        %v673 = vpop.f32.mrf.mxu0
        %v674 = vadd.f32 0.0, %v673
        %675 = vmatmul.bf16.gmra.mxu0 %v462
        %v676 = vpop.f32.mrf.mxu0
        %v677 = vadd.f32 0.0, %v676
        %v678 = vpop.f32.mrf.mxu0
        %v679 = vadd.f32 0.0, %v678
        %680 = vmatmul.bf16.gmra.mxu0 %v463
        %v681 = vpop.f32.mrf.mxu0
        %v682 = vadd.f32 0.0, %v681
        %v683 = vpop.f32.mrf.mxu0
        %v684 = vadd.f32 0.0, %v683
        %685 = vmatmul.bf16.gmra.mxu0 %v464
        %v686 = vpop.f32.mrf.mxu0
        %v687 = vadd.f32 0.0, %v686
        %v688 = vpop.f32.mrf.mxu0
        %v689 = vadd.f32 0.0, %v688
        %690 = vmatmul.bf16.gmra.mxu0 %v465
        %v691 = vpop.f32.mrf.mxu0
        %v692 = vadd.f32 0.0, %v691
        %v693 = vpop.f32.mrf.mxu0
        %v694 = vadd.f32 0.0, %v693
        %695 = vmatmul.bf16.gmra.mxu0 %v466
        %v696 = vpop.f32.mrf.mxu0
        %v697 = vadd.f32 0.0, %v696
        %v698 = vpop.f32.mrf.mxu0
        %v699 = vadd.f32 0.0, %v698
        %700 = vmatmul.bf16.gmra.mxu0 %v467
        %v701 = vpop.f32.mrf.mxu0
        %v702 = vadd.f32 0.0, %v701
        %v703 = vpop.f32.mrf.mxu0
        %v704 = vadd.f32 0.0, %v703
        %705 = vmatmul.bf16.gmra.mxu0 %v468
        %v706 = vpop.f32.mrf.mxu0
        %v707 = vadd.f32 0.0, %v706
        %v708 = vpop.f32.mrf.mxu0
        %v709 = vadd.f32 0.0, %v708
        %710 = vmatmul.bf16.gmra.mxu0 %v469
        %v711 = vpop.f32.mrf.mxu0
        %v712 = vadd.f32 0.0, %v711
        %v713 = vpop.f32.mrf.mxu0
        %v714 = vadd.f32 0.0, %v713
        %715 = vmatmul.bf16.gmra.mxu0 %v470
        %v716 = vpop.f32.mrf.mxu0
        %v717 = vadd.f32 0.0, %v716
        %v718 = vpop.f32.mrf.mxu0
        %v719 = vadd.f32 0.0, %v718
        %720 = vmatmul.bf16.gmra.mxu0 %v471
        %v721 = vpop.f32.mrf.mxu0
        %v722 = vadd.f32 0.0, %v721
        %v723 = vpop.f32.mrf.mxu0
        %v724 = vadd.f32 0.0, %v723
        %725 = vmatmul.bf16.gmra.mxu0 %v472
        %v726 = vpop.f32.mrf.mxu0
        %v727 = vadd.f32 0.0, %v726
        %v728 = vpop.f32.mrf.mxu0
        %v729 = vadd.f32 0.0, %v728
        %730 = vmatmul.bf16.gmra.mxu0 %v473
        %v731 = vpop.f32.mrf.mxu0
        %v732 = vadd.f32 0.0, %v731
        %v733 = vpop.f32.mrf.mxu0
        %v734 = vadd.f32 0.0, %v733
        %735 = vmatmul.bf16.gmra.mxu0 %v474
        %v736 = vpop.f32.mrf.mxu0
        %v737 = vadd.f32 0.0, %v736
        %v738 = vpop.f32.mrf.mxu0
        %v739 = vadd.f32 0.0, %v738
        %740 = vmatmul.bf16.gmra.mxu0 %v475
        %v741 = vpop.f32.mrf.mxu0
        %v742 = vadd.f32 0.0, %v741
        %v743 = vpop.f32.mrf.mxu0
        %v744 = vadd.f32 0.0, %v743
        %745 = vmatmul.bf16.gmra.mxu0 %v476
        %v746 = vpop.f32.mrf.mxu0
        %v747 = vadd.f32 0.0, %v746
        %v748 = vpop.f32.mrf.mxu0
        %v749 = vadd.f32 0.0, %v748
        %750 = vdwg.mxu0
        %v751 = vadd.f32 %v365, %v583
        %v752 = vadd.f32 %v366, %v672
        %v753 = vadd.f32 %v367, %v585
        %v754 = vadd.f32 %v368, %v674
        %v755 = vadd.f32 %v369, %v588
        %v756 = vadd.f32 %v370, %v677
        %v757 = vadd.f32 %v371, %v590
        %v758 = vadd.f32 %v372, %v679
        %v759 = vadd.f32 %v373, %v593
        %v760 = vadd.f32 %v374, %v682
        %v761 = vadd.f32 %v375, %v595
        %v762 = vadd.f32 %v376, %v684
        %v763 = vadd.f32 %v377, %v598
        %v764 = vadd.f32 %v378, %v687
        %v765 = vadd.f32 %v379, %v600
        %v766 = vadd.f32 %v380, %v689
        %v767 = vadd.f32 %v381, %v603
        %v768 = vadd.f32 %v382, %v692
        %v769 = vadd.f32 %v383, %v605
        %v770 = vadd.f32 %v384, %v694
        %v771 = vadd.f32 %v385, %v608
        %v772 = vadd.f32 %v386, %v697
        %v773 = vadd.f32 %v387, %v610
        %v774 = vadd.f32 %v388, %v699
        %v775 = vadd.f32 %v389, %v613
        %v776 = vadd.f32 %v390, %v702
        %v777 = vadd.f32 %v391, %v615
        %v778 = vadd.f32 %v392, %v704
        %v779 = vadd.f32 %v393, %v618
        %v780 = vadd.f32 %v394, %v707
        %v781 = vadd.f32 %v395, %v620
        %v782 = vadd.f32 %v396, %v709
        %v783 = vadd.f32 %v397, %v623
        %v784 = vadd.f32 %v398, %v712
        %v785 = vadd.f32 %v399, %v625
        %v786 = vadd.f32 %v400, %v714
        %v787 = vadd.f32 %v401, %v628
        %v788 = vadd.f32 %v402, %v717
        %v789 = vadd.f32 %v403, %v630
        %v790 = vadd.f32 %v404, %v719
        %v791 = vadd.f32 %v405, %v633
        %v792 = vadd.f32 %v406, %v722
        %v793 = vadd.f32 %v407, %v635
        %v794 = vadd.f32 %v408, %v724
        %v795 = vadd.f32 %v409, %v638
        %v796 = vadd.f32 %v410, %v727
        %v797 = vadd.f32 %v411, %v640
        %v798 = vadd.f32 %v412, %v729
        %v799 = vadd.f32 %v413, %v643
        %v800 = vadd.f32 %v414, %v732
        %v801 = vadd.f32 %v415, %v645
        %v802 = vadd.f32 %v416, %v734
        %v803 = vadd.f32 %v417, %v648
        %v804 = vadd.f32 %v418, %v737
        %v805 = vadd.f32 %v419, %v650
        %v806 = vadd.f32 %v420, %v739
        %v807 = vadd.f32 %v421, %v653
        %v808 = vadd.f32 %v422, %v742
        %v809 = vadd.f32 %v423, %v655
        %v810 = vadd.f32 %v424, %v744
        %v811 = vadd.f32 %v425, %v658
        %v812 = vadd.f32 %v426, %v747
        %v813 = vadd.f32 %v427, %v660
        %v814 = vadd.f32 %v428, %v749
        %815 = vst [vmem:[#allocation2] sm:$0xff] %v751
        %816 = vst [vmem:[#allocation2 + $0x8] sm:$0xff] %v752
        %817 = vst [vmem:[#allocation2 + $0x10] sm:$0xff] %v753
        %818 = vst [vmem:[#allocation2 + $0x18] sm:$0xff] %v754
        %819 = vst [vmem:[#allocation2 + $0x20] sm:$0xff] %v755
        %820 = vst [vmem:[#allocation2 + $0x28] sm:$0xff] %v756
        %821 = vst [vmem:[#allocation2 + $0x30] sm:$0xff] %v757
        %822 = vst [vmem:[#allocation2 + $0x38] sm:$0xff] %v758
        %823 = vst [vmem:[#allocation2 + $0x40] sm:$0xff] %v759
        %824 = vst [vmem:[#allocation2 + $0x48] sm:$0xff] %v760
        %825 = vst [vmem:[#allocation2 + $0x50] sm:$0xff] %v761
        %826 = vst [vmem:[#allocation2 + $0x58] sm:$0xff] %v762
        %827 = vst [vmem:[#allocation2 + $0x60] sm:$0xff] %v763
        %828 = vst [vmem:[#allocation2 + $0x68] sm:$0xff] %v764
        %829 = vst [vmem:[#allocation2 + $0x70] sm:$0xff] %v765
        %830 = vst [vmem:[#allocation2 + $0x78] sm:$0xff] %v766
        %831 = vst [vmem:[#allocation2 + $0x80] sm:$0xff] %v767
        %832 = vst [vmem:[#allocation2 + $0x88] sm:$0xff] %v768
        %833 = vst [vmem:[#allocation2 + $0x90] sm:$0xff] %v769
        %834 = vst [vmem:[#allocation2 + $0x98] sm:$0xff] %v770
        %835 = vst [vmem:[#allocation2 + $0xa0] sm:$0xff] %v771
        %836 = vst [vmem:[#allocation2 + $0xa8] sm:$0xff] %v772
        %837 = vst [vmem:[#allocation2 + $0xb0] sm:$0xff] %v773
        %838 = vst [vmem:[#allocation2 + $0xb8] sm:$0xff] %v774
        %839 = vst [vmem:[#allocation2 + $0xc0] sm:$0xff] %v775
        %840 = vst [vmem:[#allocation2 + $0xc8] sm:$0xff] %v776
        %841 = vst [vmem:[#allocation2 + $0xd0] sm:$0xff] %v777
        %842 = vst [vmem:[#allocation2 + $0xd8] sm:$0xff] %v778
        %843 = vst [vmem:[#allocation2 + $0xe0] sm:$0xff] %v779
        %844 = vst [vmem:[#allocation2 + $0xe8] sm:$0xff] %v780
        %845 = vst [vmem:[#allocation2 + $0xf0] sm:$0xff] %v781
        %846 = vst [vmem:[#allocation2 + $0xf8] sm:$0xff] %v782
        %847 = vst [vmem:[#allocation2 + $0x100] sm:$0xff] %v783
        %848 = vst [vmem:[#allocation2 + $0x108] sm:$0xff] %v784
        %849 = vst [vmem:[#allocation2 + $0x110] sm:$0xff] %v785
        %850 = vst [vmem:[#allocation2 + $0x118] sm:$0xff] %v786
        %851 = vst [vmem:[#allocation2 + $0x120] sm:$0xff] %v787
        %852 = vst [vmem:[#allocation2 + $0x128] sm:$0xff] %v788
        %853 = vst [vmem:[#allocation2 + $0x130] sm:$0xff] %v789
        %854 = vst [vmem:[#allocation2 + $0x138] sm:$0xff] %v790
        %855 = vst [vmem:[#allocation2 + $0x140] sm:$0xff] %v791
        %856 = vst [vmem:[#allocation2 + $0x148] sm:$0xff] %v792
        %857 = vst [vmem:[#allocation2 + $0x150] sm:$0xff] %v793
        %858 = vst [vmem:[#allocation2 + $0x158] sm:$0xff] %v794
        %859 = vst [vmem:[#allocation2 + $0x160] sm:$0xff] %v795
        %860 = vst [vmem:[#allocation2 + $0x168] sm:$0xff] %v796
        %861 = vst [vmem:[#allocation2 + $0x170] sm:$0xff] %v797
        %862 = vst [vmem:[#allocation2 + $0x178] sm:$0xff] %v798
        %863 = vst [vmem:[#allocation2 + $0x180] sm:$0xff] %v799
        %864 = vst [vmem:[#allocation2 + $0x188] sm:$0xff] %v800
        %865 = vst [vmem:[#allocation2 + $0x190] sm:$0xff] %v801
        %866 = vst [vmem:[#allocation2 + $0x198] sm:$0xff] %v802
        %867 = vst [vmem:[#allocation2 + $0x1a0] sm:$0xff] %v803
        %868 = vst [vmem:[#allocation2 + $0x1a8] sm:$0xff] %v804
        %869 = vst [vmem:[#allocation2 + $0x1b0] sm:$0xff] %v805
        %870 = vst [vmem:[#allocation2 + $0x1b8] sm:$0xff] %v806
        %871 = vst [vmem:[#allocation2 + $0x1c0] sm:$0xff] %v807
        %872 = vst [vmem:[#allocation2 + $0x1c8] sm:$0xff] %v808
        %873 = vst [vmem:[#allocation2 + $0x1d0] sm:$0xff] %v809
        %874 = vst [vmem:[#allocation2 + $0x1d8] sm:$0xff] %v810
        %875 = vst [vmem:[#allocation2 + $0x1e0] sm:$0xff] %v811
        %876 = vst [vmem:[#allocation2 + $0x1e8] sm:$0xff] %v812
        %877 = vst [vmem:[#allocation2 + $0x1f0] sm:$0xff] %v813
        %878 = vst [vmem:[#allocation2 + $0x1f8] sm:$0xff] %v814
        // Predicated region
        $region71: #{_lambda_.3} parent=61 // pred_check
          %p879 = pneg %p297
        $region72: #{_lambda_.3} parent=61 // pred_check_branch
          %881 = sbr.rel (%p879) target = $region74
        $region73: #{_lambda_.3} parent=61 // pred_region
          %v882 = vld [vmem:[#allocation2] sm:$0xff]
          %v883 = vld [vmem:[#allocation2 + $0x8] sm:$0xff]
          %v884 = vld [vmem:[#allocation2 + $0x10] sm:$0xff]
          %v885 = vld [vmem:[#allocation2 + $0x18] sm:$0xff]
          %v886 = vld [vmem:[#allocation2 + $0x20] sm:$0xff]
          %v887 = vld [vmem:[#allocation2 + $0x28] sm:$0xff]
          %v888 = vld [vmem:[#allocation2 + $0x30] sm:$0xff]
          %v889 = vld [vmem:[#allocation2 + $0x38] sm:$0xff]
          %v890 = vld [vmem:[#allocation2 + $0x40] sm:$0xff]
          %v891 = vld [vmem:[#allocation2 + $0x48] sm:$0xff]
          %v892 = vld [vmem:[#allocation2 + $0x50] sm:$0xff]
          %v893 = vld [vmem:[#allocation2 + $0x58] sm:$0xff]
          %v894 = vld [vmem:[#allocation2 + $0x60] sm:$0xff]
          %v895 = vld [vmem:[#allocation2 + $0x68] sm:$0xff]
          %v896 = vld [vmem:[#allocation2 + $0x70] sm:$0xff]
          %v897 = vld [vmem:[#allocation2 + $0x78] sm:$0xff]
          %v898 = vld [vmem:[#allocation2 + $0x80] sm:$0xff]
          %v899 = vld [vmem:[#allocation2 + $0x88] sm:$0xff]
          %v900 = vld [vmem:[#allocation2 + $0x90] sm:$0xff]
          %v901 = vld [vmem:[#allocation2 + $0x98] sm:$0xff]
          %v902 = vld [vmem:[#allocation2 + $0xa0] sm:$0xff]
          %v903 = vld [vmem:[#allocation2 + $0xa8] sm:$0xff]
          %v904 = vld [vmem:[#allocation2 + $0xb0] sm:$0xff]
          %v905 = vld [vmem:[#allocation2 + $0xb8] sm:$0xff]
          %v906 = vld [vmem:[#allocation2 + $0xc0] sm:$0xff]
          %v907 = vld [vmem:[#allocation2 + $0xc8] sm:$0xff]
          %v908 = vld [vmem:[#allocation2 + $0xd0] sm:$0xff]
          %v909 = vld [vmem:[#allocation2 + $0xd8] sm:$0xff]
          %v910 = vld [vmem:[#allocation2 + $0xe0] sm:$0xff]
          %v911 = vld [vmem:[#allocation2 + $0xe8] sm:$0xff]
          %v912 = vld [vmem:[#allocation2 + $0xf0] sm:$0xff]
          %v913 = vld [vmem:[#allocation2 + $0xf8] sm:$0xff]
          %v914 = vld [vmem:[#allocation2 + $0x100] sm:$0xff]
          %v915 = vld [vmem:[#allocation2 + $0x108] sm:$0xff]
          %v916 = vld [vmem:[#allocation2 + $0x110] sm:$0xff]
          %v917 = vld [vmem:[#allocation2 + $0x118] sm:$0xff]
          %v918 = vld [vmem:[#allocation2 + $0x120] sm:$0xff]
          %v919 = vld [vmem:[#allocation2 + $0x128] sm:$0xff]
          %v920 = vld [vmem:[#allocation2 + $0x130] sm:$0xff]
          %v921 = vld [vmem:[#allocation2 + $0x138] sm:$0xff]
          %v922 = vld [vmem:[#allocation2 + $0x140] sm:$0xff]
          %v923 = vld [vmem:[#allocation2 + $0x148] sm:$0xff]
          %v924 = vld [vmem:[#allocation2 + $0x150] sm:$0xff]
          %v925 = vld [vmem:[#allocation2 + $0x158] sm:$0xff]
          %v926 = vld [vmem:[#allocation2 + $0x160] sm:$0xff]
          %v927 = vld [vmem:[#allocation2 + $0x168] sm:$0xff]
          %v928 = vld [vmem:[#allocation2 + $0x170] sm:$0xff]
          %v929 = vld [vmem:[#allocation2 + $0x178] sm:$0xff]
          %v930 = vld [vmem:[#allocation2 + $0x180] sm:$0xff]
          %v931 = vld [vmem:[#allocation2 + $0x188] sm:$0xff]
          %v932 = vld [vmem:[#allocation2 + $0x190] sm:$0xff]
          %v933 = vld [vmem:[#allocation2 + $0x198] sm:$0xff]
          %v934 = vld [vmem:[#allocation2 + $0x1a0] sm:$0xff]
          %v935 = vld [vmem:[#allocation2 + $0x1a8] sm:$0xff]
          %v936 = vld [vmem:[#allocation2 + $0x1b0] sm:$0xff]
          %v937 = vld [vmem:[#allocation2 + $0x1b8] sm:$0xff]
          %v938 = vld [vmem:[#allocation2 + $0x1c0] sm:$0xff]
          %v939 = vld [vmem:[#allocation2 + $0x1c8] sm:$0xff]
          %v940 = vld [vmem:[#allocation2 + $0x1d0] sm:$0xff]
          %v941 = vld [vmem:[#allocation2 + $0x1d8] sm:$0xff]
          %v942 = vld [vmem:[#allocation2 + $0x1e0] sm:$0xff]
          %v943 = vld [vmem:[#allocation2 + $0x1e8] sm:$0xff]
          %v944 = vld [vmem:[#allocation2 + $0x1f0] sm:$0xff]
          %v945 = vld [vmem:[#allocation2 + $0x1f8] sm:$0xff]
          %v946 = vpack.c.bf16 %v883, %v882
          %v947 = vpack.c.bf16 %v885, %v884
          %v948 = vpack.c.bf16 %v887, %v886
          %v949 = vpack.c.bf16 %v889, %v888
          %v950 = vpack.c.bf16 %v891, %v890
          %v951 = vpack.c.bf16 %v893, %v892
          %v952 = vpack.c.bf16 %v895, %v894
          %v953 = vpack.c.bf16 %v897, %v896
          %v954 = vpack.c.bf16 %v899, %v898
          %v955 = vpack.c.bf16 %v901, %v900
          %v956 = vpack.c.bf16 %v903, %v902
          %v957 = vpack.c.bf16 %v905, %v904
          %v958 = vpack.c.bf16 %v907, %v906
          %v959 = vpack.c.bf16 %v909, %v908
          %v960 = vpack.c.bf16 %v911, %v910
          %v961 = vpack.c.bf16 %v913, %v912
          %v962 = vpack.c.bf16 %v915, %v914
          %v963 = vpack.c.bf16 %v917, %v916
          %v964 = vpack.c.bf16 %v919, %v918
          %v965 = vpack.c.bf16 %v921, %v920
          %v966 = vpack.c.bf16 %v923, %v922
          %v967 = vpack.c.bf16 %v925, %v924
          %v968 = vpack.c.bf16 %v927, %v926
          %v969 = vpack.c.bf16 %v929, %v928
          %v970 = vpack.c.bf16 %v931, %v930
          %v971 = vpack.c.bf16 %v933, %v932
          %v972 = vpack.c.bf16 %v935, %v934
          %v973 = vpack.c.bf16 %v937, %v936
          %v974 = vpack.c.bf16 %v939, %v938
          %v975 = vpack.c.bf16 %v941, %v940
          %v976 = vpack.c.bf16 %v943, %v942
          %v977 = vpack.c.bf16 %v945, %v944
          %978 = vst [vmem:[%s283] sm:$0xff] %v946
          %979 = vst [vmem:[%s283 + $0x8] sm:$0xff] %v947
          %980 = vst [vmem:[%s283 + $0x10] sm:$0xff] %v948
          %981 = vst [vmem:[%s283 + $0x18] sm:$0xff] %v949
          %982 = vst [vmem:[%s283 + $0x20] sm:$0xff] %v950
          %983 = vst [vmem:[%s283 + $0x28] sm:$0xff] %v951
          %984 = vst [vmem:[%s283 + $0x30] sm:$0xff] %v952
          %985 = vst [vmem:[%s283 + $0x38] sm:$0xff] %v953
          %986 = vst [vmem:[%s283 + $0x40] sm:$0xff] %v954
          %987 = vst [vmem:[%s283 + $0x48] sm:$0xff] %v955
          %988 = vst [vmem:[%s283 + $0x50] sm:$0xff] %v956
          %989 = vst [vmem:[%s283 + $0x58] sm:$0xff] %v957
          %990 = vst [vmem:[%s283 + $0x60] sm:$0xff] %v958
          %991 = vst [vmem:[%s283 + $0x68] sm:$0xff] %v959
          %992 = vst [vmem:[%s283 + $0x70] sm:$0xff] %v960
          %993 = vst [vmem:[%s283 + $0x78] sm:$0xff] %v961
          %994 = vst [vmem:[%s283 + $0x80] sm:$0xff] %v962
          %995 = vst [vmem:[%s283 + $0x88] sm:$0xff] %v963
          %996 = vst [vmem:[%s283 + $0x90] sm:$0xff] %v964
          %997 = vst [vmem:[%s283 + $0x98] sm:$0xff] %v965
          %998 = vst [vmem:[%s283 + $0xa0] sm:$0xff] %v966
          %999 = vst [vmem:[%s283 + $0xa8] sm:$0xff] %v967
          %1000 = vst [vmem:[%s283 + $0xb0] sm:$0xff] %v968
          %1001 = vst [vmem:[%s283 + $0xb8] sm:$0xff] %v969
          %1002 = vst [vmem:[%s283 + $0xc0] sm:$0xff] %v970
          %1003 = vst [vmem:[%s283 + $0xc8] sm:$0xff] %v971
          %1004 = vst [vmem:[%s283 + $0xd0] sm:$0xff] %v972
          %1005 = vst [vmem:[%s283 + $0xd8] sm:$0xff] %v973
          %1006 = vst [vmem:[%s283 + $0xe0] sm:$0xff] %v974
          %1007 = vst [vmem:[%s283 + $0xe8] sm:$0xff] %v975
          %1008 = vst [vmem:[%s283 + $0xf0] sm:$0xff] %v976
          %1009 = vst [vmem:[%s283 + $0xf8] sm:$0xff] %v977
        $region74: #{_lambda_.3} parent=61 // pred_fallthru
          _
        %s1010 = sand.u32 %s98, 1
        %s1011 = sand.u32 %s98, 1
        %s1012 = smul.addr %s1011, 256
        %s1013 = scalar_lea.vmem [#allocation4], %s1012
        // Predicated region
        $region75: #{_lambda_.3} parent=61 // pred_check
          %p1014 = pneg %p108
        $region76: #{_lambda_.3} parent=61 // pred_check_branch
          %1016 = sbr.rel (%p1014) target = $region78
        $region77: #{_lambda_.3} parent=61 // pred_region
          %s1017 = smul.u32 32, %s18
          %s1018 = smul.u32 2, %s19
          %s1019 = smul.addr %s1017, 6
          %s1020 = sadd.s32 %s1018, %s1019
          %s1021 = smul.addr %s1020, 4
          %s1022 = scalar_lea.vmem %s2, %s1021
          // Predicated region
          $region79: #{_lambda_.3} parent=77 // pred_check
            _
          $region80: #{_lambda_.3} parent=77 // pred_check_branch
            %1024 = sbr.rel (0) target = $region82
          $region81: #{_lambda_.3} parent=77 // pred_region
            // Predicated region
            $region83: #{_lambda_.3} parent=81 // pred_check
              _
            $region84: #{_lambda_.3} parent=81 // pred_check_branch
              %1026 = sbr.rel (0) target = $region86
            $region85: #{_lambda_.3} parent=81 // pred_region
              // Predicated region
              $region98: #{_lambda_.3} parent=85 // pred_check
                _
              $region99: #{_lambda_.3} parent=85 // pred_check_branch
                %1104 = sbr.rel (0) target = $region101
              $region100: #{_lambda_.3} parent=85 // pred_region
                loop: start=0, step=1, limit=1
                $region102: #{_lambda_.3} parent=100 // loop_pre_header
                  _
                $region103: #{_lambda_.3} parent=100 // loop_header
                  %s1106 = sphi 0, %s1110
                  %p1107 = scmp.ge.s32.totalorder %s1106, 1
                  %s1111 = sphi %s1013, %s1013
                  %s1112 = sphi %s1022, %s1022
                $region104: #{_lambda_.3} parent=100 // loop_header_branch
                  %1109 = sbr.rel (%p1107) target = $region108
                $region105: #{_lambda_.3} parent=100 // loop_body
                  %v1113 = vld [vmem:[%s1111] sm:$0xff]
                  %1114 = vst [vmem:[%s1112] sm:$0xff] %v1113
                  %v1115 = vld [vmem:[%s1111 + $0x8] sm:$0xff]
                  %1116 = vst [vmem:[%s1112 + $0x18] sm:$0xff] %v1115
                  %v1117 = vld [vmem:[%s1111 + $0x10] sm:$0xff]
                  %1118 = vst [vmem:[%s1112 + $0x30] sm:$0xff] %v1117
                  %v1119 = vld [vmem:[%s1111 + $0x18] sm:$0xff]
                  %1120 = vst [vmem:[%s1112 + $0x48] sm:$0xff] %v1119
                  %v1121 = vld [vmem:[%s1111 + $0x20] sm:$0xff]
                  %1122 = vst [vmem:[%s1112 + $0x60] sm:$0xff] %v1121
                  %v1123 = vld [vmem:[%s1111 + $0x28] sm:$0xff]
                  %1124 = vst [vmem:[%s1112 + $0x78] sm:$0xff] %v1123
                  %v1125 = vld [vmem:[%s1111 + $0x30] sm:$0xff]
                  %1126 = vst [vmem:[%s1112 + $0x90] sm:$0xff] %v1125
                  %v1127 = vld [vmem:[%s1111 + $0x38] sm:$0xff]
                  %1128 = vst [vmem:[%s1112 + $0xa8] sm:$0xff] %v1127
                  %v1129 = vld [vmem:[%s1111 + $0x40] sm:$0xff]
                  %1130 = vst [vmem:[%s1112 + $0xc0] sm:$0xff] %v1129
                  %v1131 = vld [vmem:[%s1111 + $0x48] sm:$0xff]
                  %1132 = vst [vmem:[%s1112 + $0xd8] sm:$0xff] %v1131
                  %v1133 = vld [vmem:[%s1111 + $0x50] sm:$0xff]
                  %1134 = vst [vmem:[%s1112 + $0xf0] sm:$0xff] %v1133
                  %v1135 = vld [vmem:[%s1111 + $0x58] sm:$0xff]
                  %1136 = vst [vmem:[%s1112 + $0x108] sm:$0xff] %v1135
                  %v1137 = vld [vmem:[%s1111 + $0x60] sm:$0xff]
                  %1138 = vst [vmem:[%s1112 + $0x120] sm:$0xff] %v1137
                  %v1139 = vld [vmem:[%s1111 + $0x68] sm:$0xff]
                  %1140 = vst [vmem:[%s1112 + $0x138] sm:$0xff] %v1139
                  %v1141 = vld [vmem:[%s1111 + $0x70] sm:$0xff]
                  %1142 = vst [vmem:[%s1112 + $0x150] sm:$0xff] %v1141
                  %v1143 = vld [vmem:[%s1111 + $0x78] sm:$0xff]
                  %1144 = vst [vmem:[%s1112 + $0x168] sm:$0xff] %v1143
                  %v1145 = vld [vmem:[%s1111 + $0x80] sm:$0xff]
                  %1146 = vst [vmem:[%s1112 + $0x180] sm:$0xff] %v1145
                  %v1147 = vld [vmem:[%s1111 + $0x88] sm:$0xff]
                  %1148 = vst [vmem:[%s1112 + $0x198] sm:$0xff] %v1147
                  %v1149 = vld [vmem:[%s1111 + $0x90] sm:$0xff]
                  %1150 = vst [vmem:[%s1112 + $0x1b0] sm:$0xff] %v1149
                  %v1151 = vld [vmem:[%s1111 + $0x98] sm:$0xff]
                  %1152 = vst [vmem:[%s1112 + $0x1c8] sm:$0xff] %v1151
                  %v1153 = vld [vmem:[%s1111 + $0xa0] sm:$0xff]
                  %1154 = vst [vmem:[%s1112 + $0x1e0] sm:$0xff] %v1153
                  %v1155 = vld [vmem:[%s1111 + $0xa8] sm:$0xff]
                  %1156 = vst [vmem:[%s1112 + $0x1f8] sm:$0xff] %v1155
                  %v1157 = vld [vmem:[%s1111 + $0xb0] sm:$0xff]
                  %1158 = vst [vmem:[%s1112 + $0x210] sm:$0xff] %v1157
                  %v1159 = vld [vmem:[%s1111 + $0xb8] sm:$0xff]
                  %1160 = vst [vmem:[%s1112 + $0x228] sm:$0xff] %v1159
                  %v1161 = vld [vmem:[%s1111 + $0xc0] sm:$0xff]
                  %1162 = vst [vmem:[%s1112 + $0x240] sm:$0xff] %v1161
                  %v1163 = vld [vmem:[%s1111 + $0xc8] sm:$0xff]
                  %1164 = vst [vmem:[%s1112 + $0x258] sm:$0xff] %v1163
                  %v1165 = vld [vmem:[%s1111 + $0xd0] sm:$0xff]
                  %1166 = vst [vmem:[%s1112 + $0x270] sm:$0xff] %v1165
                  %v1167 = vld [vmem:[%s1111 + $0xd8] sm:$0xff]
                  %1168 = vst [vmem:[%s1112 + $0x288] sm:$0xff] %v1167
                  %v1169 = vld [vmem:[%s1111 + $0xe0] sm:$0xff]
                  %1170 = vst [vmem:[%s1112 + $0x2a0] sm:$0xff] %v1169
                  %v1171 = vld [vmem:[%s1111 + $0xe8] sm:$0xff]
                  %1172 = vst [vmem:[%s1112 + $0x2b8] sm:$0xff] %v1171
                  %v1173 = vld [vmem:[%s1111 + $0xf0] sm:$0xff]
                  %1174 = vst [vmem:[%s1112 + $0x2d0] sm:$0xff] %v1173
                  %v1175 = vld [vmem:[%s1111 + $0xf8] sm:$0xff]
                  %1176 = vst [vmem:[%s1112 + $0x2e8] sm:$0xff] %v1175
                $region106: #{_lambda_.3} parent=100 // loop_footer
                  %s1110 = sadd.s32 1, %s1106
                $region107: #{_lambda_.3} parent=100 // loop_footer_branch
                  %1105 = sbr.rel target = $region103
                $region108: #{_lambda_.3} parent=100 // loop_exit
                  _
              $region101: #{_lambda_.3} parent=85 // pred_fallthru
                _
              // Predicated region
              $region109: #{_lambda_.3} parent=85 // pred_check
                _
              $region110: #{_lambda_.3} parent=85 // pred_check_branch
                %1178 = sbr.rel target = $region112
              $region111: #{_lambda_.3} parent=85 // pred_region
                _
              $region112: #{_lambda_.3} parent=85 // pred_fallthru
                _
            $region86: #{_lambda_.3} parent=81 // pred_fallthru
              _
            // Predicated region
            $region87: #{_lambda_.3} parent=81 // pred_check
              _
            $region88: #{_lambda_.3} parent=81 // pred_check_branch
              %1028 = sbr.rel target = $region90
            $region89: #{_lambda_.3} parent=81 // pred_region
              %s1030 = ssub.s32 256, 1
              loop: start=0, step=1, limit=1
              $region91: #{_lambda_.3} parent=89 // loop_pre_header
                _
              $region92: #{_lambda_.3} parent=89 // loop_header
                %s1032 = sphi 0, %s1036
                %p1033 = scmp.ge.s32.totalorder %s1032, 1
                %s1037 = sphi %s1013, %s1013
                %s1038 = sphi %s1022, %s1022
              $region93: #{_lambda_.3} parent=89 // loop_header_branch
                %1035 = sbr.rel (%p1033) target = $region97
              $region94: #{_lambda_.3} parent=89 // loop_body
                %v1039 = vld [vmem:[%s1037] sm:%s1030]
                %1040 = vst [vmem:[%s1038] sm:%s1030] %v1039
                %v1041 = vld [vmem:[%s1037 + $0x8] sm:%s1030]
                %1042 = vst [vmem:[%s1038 + $0x18] sm:%s1030] %v1041
                %v1043 = vld [vmem:[%s1037 + $0x10] sm:%s1030]
                %1044 = vst [vmem:[%s1038 + $0x30] sm:%s1030] %v1043
                %v1045 = vld [vmem:[%s1037 + $0x18] sm:%s1030]
                %1046 = vst [vmem:[%s1038 + $0x48] sm:%s1030] %v1045
                %v1047 = vld [vmem:[%s1037 + $0x20] sm:%s1030]
                %1048 = vst [vmem:[%s1038 + $0x60] sm:%s1030] %v1047
                %v1049 = vld [vmem:[%s1037 + $0x28] sm:%s1030]
                %1050 = vst [vmem:[%s1038 + $0x78] sm:%s1030] %v1049
                %v1051 = vld [vmem:[%s1037 + $0x30] sm:%s1030]
                %1052 = vst [vmem:[%s1038 + $0x90] sm:%s1030] %v1051
                %v1053 = vld [vmem:[%s1037 + $0x38] sm:%s1030]
                %1054 = vst [vmem:[%s1038 + $0xa8] sm:%s1030] %v1053
                %v1055 = vld [vmem:[%s1037 + $0x40] sm:%s1030]
                %1056 = vst [vmem:[%s1038 + $0xc0] sm:%s1030] %v1055
                %v1057 = vld [vmem:[%s1037 + $0x48] sm:%s1030]
                %1058 = vst [vmem:[%s1038 + $0xd8] sm:%s1030] %v1057
                %v1059 = vld [vmem:[%s1037 + $0x50] sm:%s1030]
                %1060 = vst [vmem:[%s1038 + $0xf0] sm:%s1030] %v1059
                %v1061 = vld [vmem:[%s1037 + $0x58] sm:%s1030]
                %1062 = vst [vmem:[%s1038 + $0x108] sm:%s1030] %v1061
                %v1063 = vld [vmem:[%s1037 + $0x60] sm:%s1030]
                %1064 = vst [vmem:[%s1038 + $0x120] sm:%s1030] %v1063
                %v1065 = vld [vmem:[%s1037 + $0x68] sm:%s1030]
                %1066 = vst [vmem:[%s1038 + $0x138] sm:%s1030] %v1065
                %v1067 = vld [vmem:[%s1037 + $0x70] sm:%s1030]
                %1068 = vst [vmem:[%s1038 + $0x150] sm:%s1030] %v1067
                %v1069 = vld [vmem:[%s1037 + $0x78] sm:%s1030]
                %1070 = vst [vmem:[%s1038 + $0x168] sm:%s1030] %v1069
                %v1071 = vld [vmem:[%s1037 + $0x80] sm:%s1030]
                %1072 = vst [vmem:[%s1038 + $0x180] sm:%s1030] %v1071
                %v1073 = vld [vmem:[%s1037 + $0x88] sm:%s1030]
                %1074 = vst [vmem:[%s1038 + $0x198] sm:%s1030] %v1073
                %v1075 = vld [vmem:[%s1037 + $0x90] sm:%s1030]
                %1076 = vst [vmem:[%s1038 + $0x1b0] sm:%s1030] %v1075
                %v1077 = vld [vmem:[%s1037 + $0x98] sm:%s1030]
                %1078 = vst [vmem:[%s1038 + $0x1c8] sm:%s1030] %v1077
                %v1079 = vld [vmem:[%s1037 + $0xa0] sm:%s1030]
                %1080 = vst [vmem:[%s1038 + $0x1e0] sm:%s1030] %v1079
                %v1081 = vld [vmem:[%s1037 + $0xa8] sm:%s1030]
                %1082 = vst [vmem:[%s1038 + $0x1f8] sm:%s1030] %v1081
                %v1083 = vld [vmem:[%s1037 + $0xb0] sm:%s1030]
                %1084 = vst [vmem:[%s1038 + $0x210] sm:%s1030] %v1083
                %v1085 = vld [vmem:[%s1037 + $0xb8] sm:%s1030]
                %1086 = vst [vmem:[%s1038 + $0x228] sm:%s1030] %v1085
                %v1087 = vld [vmem:[%s1037 + $0xc0] sm:%s1030]
                %1088 = vst [vmem:[%s1038 + $0x240] sm:%s1030] %v1087
                %v1089 = vld [vmem:[%s1037 + $0xc8] sm:%s1030]
                %1090 = vst [vmem:[%s1038 + $0x258] sm:%s1030] %v1089
                %v1091 = vld [vmem:[%s1037 + $0xd0] sm:%s1030]
                %1092 = vst [vmem:[%s1038 + $0x270] sm:%s1030] %v1091
                %v1093 = vld [vmem:[%s1037 + $0xd8] sm:%s1030]
                %1094 = vst [vmem:[%s1038 + $0x288] sm:%s1030] %v1093
                %v1095 = vld [vmem:[%s1037 + $0xe0] sm:%s1030]
                %1096 = vst [vmem:[%s1038 + $0x2a0] sm:%s1030] %v1095
                %v1097 = vld [vmem:[%s1037 + $0xe8] sm:%s1030]
                %1098 = vst [vmem:[%s1038 + $0x2b8] sm:%s1030] %v1097
                %v1099 = vld [vmem:[%s1037 + $0xf0] sm:%s1030]
                %1100 = vst [vmem:[%s1038 + $0x2d0] sm:%s1030] %v1099
                %v1101 = vld [vmem:[%s1037 + $0xf8] sm:%s1030]
                %1102 = vst [vmem:[%s1038 + $0x2e8] sm:%s1030] %v1101
              $region95: #{_lambda_.3} parent=89 // loop_footer
                %s1036 = sadd.s32 1, %s1032
              $region96: #{_lambda_.3} parent=89 // loop_footer_branch
                %1031 = sbr.rel target = $region92
              $region97: #{_lambda_.3} parent=89 // loop_exit
                _
            $region90: #{_lambda_.3} parent=81 // pred_fallthru
              _
          $region82: #{_lambda_.3} parent=77 // pred_fallthru
            _
          %1179 = vnop
        $region78: #{_lambda_.3} parent=61 // pred_fallthru
          _
      $region62: #{_lambda_.3} parent=5 // pred_fallthru
        _
      %p1180 = scmp.le.s32.totalorder 2, %s8
      // Predicated region
      $region113: #{_lambda_.3} parent=5 // pred_check
        %p1181 = pneg %p1180
      $region114: #{_lambda_.3} parent=5 // pred_check_branch
        %1183 = sbr.rel (%p1181) target = $region116
      $region115: #{_lambda_.3} parent=5 // pred_region
        %s1184 = ssub.s32 %s8, 2
        // Predicated region
        $region117: #{_lambda_.3} parent=115 // pred_check
          %p1185 = pneg %p114
        $region118: #{_lambda_.3} parent=115 // pred_check_branch
          %1187 = sbr.rel (%p1185) target = $region120
        $region119: #{_lambda_.3} parent=115 // pred_region
          %s1188 = sand.u32 %s99, 1
          %s1189 = sand.u32 %s99, 1
          %s1190 = smul.addr %s1189, 256
          %s1191 = scalar_lea.vmem [#allocation4], %s1190
        $region120: #{_lambda_.3} parent=115 // pred_fallthru
          _
      $region116: #{_lambda_.3} parent=5 // pred_fallthru
        _
    $region6: #{_lambda_.3} parent=1 // loop_footer
      %s12 = sadd.s32 1, %s8
    $region7: #{_lambda_.3} parent=1 // loop_footer_branch
      %7 = sbr.rel target = $region3
    $region8: #{_lambda_.3} parent=1 // loop_exit
      _

// kernel: _lambda_.4
$region0: #{_lambda_.4}
  #allocation0 [shape = 'u32[]', space=smem, size = 0x4, offset = 0x4, fixed_abs, tag = 'smem constant byte address 0x4 - core index']
  #allocation1 [shape = 'u32[72,128]{1,0:T(1,128)}', space=vmem, size = 0x9000, scoped, tag = 'internal scratch']
  #allocation2 [shape = 'bf16[256,128]{1,0:T(8,128)(2,1)}', space=vmem, size = 0x10000, scoped, tag = 'scratch operand']
  #allocation3 [shape = 'bf16[256,128]{1,0:T(8,128)(2,1)}', space=vmem, size = 0x10000, scoped, tag = 'scratch operand']
  %s0 = inlined_call_operand.vmem [shape: f32[2], index: 0, kind: input, shape index: {}]
  %s1 = inlined_call_operand.vmem [shape: bf16[256,128], index: 1, kind: input, shape index: {}, may-alias: {1,3}]
  %s2 = inlined_call_operand.vmem [shape: bf16[256,128], index: 2, kind: input, shape index: {}, may-alias: {2,4}]
  %s3 = inlined_call_operand.vmem [shape: bf16[256,128], index: 3, kind: input, shape index: {}, may-alias: {1,3}]
  %s4 = inlined_call_operand.vmem [shape: bf16[256,128], index: 4, kind: input, shape index: {}, may-alias: {2,4}]
  %s5 = inlined_call_operand.vmem [shape: bf16[256,768], index: 5, kind: input, shape index: {}, may-alias: {5,6,7}]
  %s6 = inlined_call_operand.vmem [shape: bf16[256,768], index: 6, kind: input, shape index: {}, may-alias: {5,6,7}]
  %s7 = inlined_call_operand.vmem [shape: bf16[256,768], index: 7, kind: input, shape index: {}, may-alias: {5,6,7}]
  %s8 = inlined_call_operand.vmem [shape: bf16[256,256], index: 8, kind: input, shape index: {}]
  %s9 = inlined_call_operand.vmem [shape: bf16[256,256], index: 9, kind: output, shape index: {}]
  %s10 = sld [smem:[#allocation0]]
  $region285: #{_lambda_.4} parent=0
    _
  %s12 = ssub.s32 1, %s10
  %s13 = scalar_select 0, %s12, %s10
  $region1: #{_lambda_.4} parent=0
    #allocation4 [shape = 'u8[512]{0}', space=smem, size = 0x200, scoped, tag = 'input window, operand 0, single buffered']
    #allocation5 [shape = 's32[2]{0}', space=sflag, size = 0x8, scoped, tag = 'scoped memory for _lambda_.4']
    #allocation6 [shape = 'u8[65536]{0}', space=vmem, size = 0x10000, scoped, tag = 'input window, operand 5']
    #allocation7 [shape = 'u8[131072]{0}', space=vmem, size = 0x20000, scoped, tag = 'input window, operand 6']
    #allocation8 [shape = 'u8[131072]{0}', space=vmem, size = 0x20000, scoped, tag = 'input window, operand 7']
    #allocation9 [shape = 'u8[131072]{0}', space=vmem, size = 0x20000, scoped, tag = 'input window, operand 8']
    #allocation10 [shape = 'u8[65536]{0}', space=vmem, size = 0x10000, scoped, tag = 'output window, operand 0']
    %14 = vsyncpa [#allocation5], 0
    loop: start=0, step=1, limit=6
    $region2: #{_lambda_.4} parent=1 // loop_pre_header
      _
    $region3: #{_lambda_.4} parent=1 // loop_header
      %s16 = sphi 0, %s20
      %p17 = scmp.ge.s32.totalorder %s16, 6
      %s23 = sphi 0, %s35
      %s24 = sphi 0, %s31
      %s25 = sphi 0, %s23
      %s26 = sphi 0, %s24
      %s27 = sphi 0, %s25
      %s28 = sphi 0, %s26
      %s36 = sphi 0, %s36
      %s38 = sphi 0, %s36
      %s39 = sphi 0, %s38
      %s53 = sphi 0, %s39
      %s59 = sphi 0, %s61
      %s62 = sphi 0, %s59
      %s63 = sphi 0, %s62
      %s79 = sphi 0, %s63
      %s85 = sphi 0, %s87
      %s88 = sphi 0, %s85
      %s89 = sphi 0, %s88
      %s105 = sphi 0, %s89
      %s109 = sphi 0, %s109
      %s111 = sphi 0, %s109
      %s112 = sphi 0, %s111
      %s126 = sphi 0, %s112
      %s130 = sphi 0, %s130
      %s132 = sphi 0, %s130
      %s133 = sphi 0, %s132
      %s147 = sphi 0, %s133
      %s155 = sphi 0, %s157
      %s158 = sphi 0, %s155
      %s159 = sphi 0, %s158
      %s175 = sphi 0, %s159
      %s183 = sphi 0, %s185
      %s186 = sphi 0, %s183
      %s187 = sphi 0, %s186
      %s203 = sphi 0, %s187
      %s211 = sphi 0, %s213
      %s214 = sphi 0, %s211
      %s215 = sphi 0, %s214
      %s231 = sphi 0, %s215
      %s237 = sphi 0, %s239
      %s240 = sphi 0, %s237
      %s241 = sphi 0, %s240
      %s257 = sphi 0, %s241
      %s265 = sphi 0, %s267
      %s268 = sphi 0, %s265
      %s269 = sphi 0, %s268
      %s285 = sphi 0, %s269
    $region4: #{_lambda_.4} parent=1 // loop_header_branch
      %19 = sbr.rel (%p17) target = $region8
    $region5: #{_lambda_.4} parent=1 // loop_body
      %s21 = ssub.s32 %s16, 1
      %s22 = ssub.s32 %s16, 2
      %s29 = sadd.s32 1, %s24
      %p30 = scmp.ge.s32.totalorder %s29, 2
      %s31 = scalar_select %p30, 0, %s29
      %s32 = sadd.s32 1, %s23
      %s33 = scalar_select %p30, %s32, %s23
      %p34 = scmp.ge.s32.totalorder %s33, 2
      %s35 = scalar_select %p34, 0, %s33
      %s37 = sadd.s32 %s36, 1
      %p40 = scmp.eq.s32.totalorder %s16, 3
      %p41 = scmp.ne.s32.totalorder %s36, %s38
      %p42 = scmp.eq.s32.totalorder %s16, 0
      %p43 = por %p41, %p42
      %p44 = scmp.ne.s32.totalorder %s36, %s38
      %p45 = scmp.eq.s32.totalorder %s21, 3
      %p46 = por %p44, %p45
      %p47 = scmp.ne.s32.totalorder %s38, %s39
      %p48 = scmp.eq.s32.totalorder %s21, 0
      %p49 = por %p47, %p48
      %p50 = scmp.ne.s32.totalorder %s38, %s39
      %p51 = scmp.eq.s32.totalorder %s22, 3
      %p52 = por %p50, %p51
      %p54 = scmp.ne.s32.totalorder %s39, %s53
      %p55 = scmp.eq.s32.totalorder %s22, 0
      %p56 = por %p54, %p55
      %s57 = ssub.s32 %s24, %s31
      %p58 = scmp.eq.s32.totalorder %s57, 0
      %s60 = sadd.s32 %s59, 1
      %s61 = scalar_select %p58, %s59, %s60
      %p64 = pneg %p58
      %p65 = scmp.eq.s32.totalorder %s16, 3
      %p66 = por %p64, %p65
      %p67 = scmp.ne.s32.totalorder %s59, %s62
      %p68 = scmp.eq.s32.totalorder %s16, 0
      %p69 = por %p67, %p68
      %p70 = scmp.ne.s32.totalorder %s59, %s62
      %p71 = scmp.eq.s32.totalorder %s21, 3
      %p72 = por %p70, %p71
      %p73 = scmp.ne.s32.totalorder %s62, %s63
      %p74 = scmp.eq.s32.totalorder %s21, 0
      %p75 = por %p73, %p74
      %p76 = scmp.ne.s32.totalorder %s62, %s63
      %p77 = scmp.eq.s32.totalorder %s22, 3
      %p78 = por %p76, %p77
      %p80 = scmp.ne.s32.totalorder %s63, %s79
      %p81 = scmp.eq.s32.totalorder %s22, 0
      %p82 = por %p80, %p81
      %s83 = ssub.s32 %s24, %s31
      %p84 = scmp.eq.s32.totalorder %s83, 0
      %s86 = sadd.s32 %s85, 1
      %s87 = scalar_select %p84, %s85, %s86
      %p90 = pneg %p84
      %p91 = scmp.eq.s32.totalorder %s16, 3
      %p92 = por %p90, %p91
      %p93 = scmp.ne.s32.totalorder %s85, %s88
      %p94 = scmp.eq.s32.totalorder %s16, 0
      %p95 = por %p93, %p94
      %p96 = scmp.ne.s32.totalorder %s85, %s88
      %p97 = scmp.eq.s32.totalorder %s21, 3
      %p98 = por %p96, %p97
      %p99 = scmp.ne.s32.totalorder %s88, %s89
      %p100 = scmp.eq.s32.totalorder %s21, 0
      %p101 = por %p99, %p100
      %p102 = scmp.ne.s32.totalorder %s88, %s89
      %p103 = scmp.eq.s32.totalorder %s22, 3
      %p104 = por %p102, %p103
      %p106 = scmp.ne.s32.totalorder %s89, %s105
      %p107 = scmp.eq.s32.totalorder %s22, 0
      %p108 = por %p106, %p107
      %s110 = sadd.s32 %s109, 1
      %p113 = scmp.eq.s32.totalorder %s16, 3
      %p114 = scmp.ne.s32.totalorder %s109, %s111
      %p115 = scmp.eq.s32.totalorder %s16, 0
      %p116 = por %p114, %p115
      %p117 = scmp.ne.s32.totalorder %s109, %s111
      %p118 = scmp.eq.s32.totalorder %s21, 3
      %p119 = por %p117, %p118
      %p120 = scmp.ne.s32.totalorder %s111, %s112
      %p121 = scmp.eq.s32.totalorder %s21, 0
      %p122 = por %p120, %p121
      %p123 = scmp.ne.s32.totalorder %s111, %s112
      %p124 = scmp.eq.s32.totalorder %s22, 3
      %p125 = por %p123, %p124
      %p127 = scmp.ne.s32.totalorder %s112, %s126
      %p128 = scmp.eq.s32.totalorder %s22, 0
      %p129 = por %p127, %p128
      %s131 = sadd.s32 %s130, 1
      %p134 = scmp.eq.s32.totalorder %s16, 3
      %p135 = scmp.ne.s32.totalorder %s130, %s132
      %p136 = scmp.eq.s32.totalorder %s16, 0
      %p137 = por %p135, %p136
      %p138 = scmp.ne.s32.totalorder %s130, %s132
      %p139 = scmp.eq.s32.totalorder %s21, 3
      %p140 = por %p138, %p139
      %p141 = scmp.ne.s32.totalorder %s132, %s133
      %p142 = scmp.eq.s32.totalorder %s21, 0
      %p143 = por %p141, %p142
      %p144 = scmp.ne.s32.totalorder %s132, %s133
      %p145 = scmp.eq.s32.totalorder %s22, 3
      %p146 = por %p144, %p145
      %p148 = scmp.ne.s32.totalorder %s133, %s147
      %p149 = scmp.eq.s32.totalorder %s22, 0
      %p150 = por %p148, %p149
      %s151 = ssub.s32 %s24, %s31
      %s152 = ssub.s32 %s23, %s35
      %s153 = sor.u32 %s151, %s152
      %p154 = scmp.eq.s32.totalorder %s153, 0
      %s156 = sadd.s32 %s155, 1
      %s157 = scalar_select %p154, %s155, %s156
      %p160 = pneg %p154
      %p161 = scmp.eq.s32.totalorder %s16, 3
      %p162 = por %p160, %p161
      %p163 = scmp.ne.s32.totalorder %s155, %s158
      %p164 = scmp.eq.s32.totalorder %s16, 0
      %p165 = por %p163, %p164
      %p166 = scmp.ne.s32.totalorder %s155, %s158
      %p167 = scmp.eq.s32.totalorder %s21, 3
      %p168 = por %p166, %p167
      %p169 = scmp.ne.s32.totalorder %s158, %s159
      %p170 = scmp.eq.s32.totalorder %s21, 0
      %p171 = por %p169, %p170
      %p172 = scmp.ne.s32.totalorder %s158, %s159
      %p173 = scmp.eq.s32.totalorder %s22, 3
      %p174 = por %p172, %p173
      %p176 = scmp.ne.s32.totalorder %s159, %s175
      %p177 = scmp.eq.s32.totalorder %s22, 0
      %p178 = por %p176, %p177
      %s179 = sadd.s32 %s23, 2
      %s180 = sadd.s32 %s35, 2
      %s181 = ssub.s32 %s179, %s180
      %p182 = scmp.eq.s32.totalorder %s181, 0
      %s184 = sadd.s32 %s183, 1
      %s185 = scalar_select %p182, %s183, %s184
      %p188 = pneg %p182
      %p189 = scmp.eq.s32.totalorder %s16, 3
      %p190 = por %p188, %p189
      %p191 = scmp.ne.s32.totalorder %s183, %s186
      %p192 = scmp.eq.s32.totalorder %s16, 0
      %p193 = por %p191, %p192
      %p194 = scmp.ne.s32.totalorder %s183, %s186
      %p195 = scmp.eq.s32.totalorder %s21, 3
      %p196 = por %p194, %p195
      %p197 = scmp.ne.s32.totalorder %s186, %s187
      %p198 = scmp.eq.s32.totalorder %s21, 0
      %p199 = por %p197, %p198
      %p200 = scmp.ne.s32.totalorder %s186, %s187
      %p201 = scmp.eq.s32.totalorder %s22, 3
      %p202 = por %p200, %p201
      %p204 = scmp.ne.s32.totalorder %s187, %s203
      %p205 = scmp.eq.s32.totalorder %s22, 0
      %p206 = por %p204, %p205
      %s207 = sadd.s32 %s23, 4
      %s208 = sadd.s32 %s35, 4
      %s209 = ssub.s32 %s207, %s208
      %p210 = scmp.eq.s32.totalorder %s209, 0
      %s212 = sadd.s32 %s211, 1
      %s213 = scalar_select %p210, %s211, %s212
      %p216 = pneg %p210
      %p217 = scmp.eq.s32.totalorder %s16, 3
      %p218 = por %p216, %p217
      %p219 = scmp.ne.s32.totalorder %s211, %s214
      %p220 = scmp.eq.s32.totalorder %s16, 0
      %p221 = por %p219, %p220
      %p222 = scmp.ne.s32.totalorder %s211, %s214
      %p223 = scmp.eq.s32.totalorder %s21, 3
      %p224 = por %p222, %p223
      %p225 = scmp.ne.s32.totalorder %s214, %s215
      %p226 = scmp.eq.s32.totalorder %s21, 0
      %p227 = por %p225, %p226
      %p228 = scmp.ne.s32.totalorder %s214, %s215
      %p229 = scmp.eq.s32.totalorder %s22, 3
      %p230 = por %p228, %p229
      %p232 = scmp.ne.s32.totalorder %s215, %s231
      %p233 = scmp.eq.s32.totalorder %s22, 0
      %p234 = por %p232, %p233
      %s235 = ssub.s32 %s23, %s35
      %p236 = scmp.eq.s32.totalorder %s235, 0
      %s238 = sadd.s32 %s237, 1
      %s239 = scalar_select %p236, %s237, %s238
      %p242 = pneg %p236
      %p243 = scmp.eq.s32.totalorder %s16, 3
      %p244 = por %p242, %p243
      %p245 = scmp.ne.s32.totalorder %s237, %s240
      %p246 = scmp.eq.s32.totalorder %s16, 0
      %p247 = por %p245, %p246
      %p248 = scmp.ne.s32.totalorder %s237, %s240
      %p249 = scmp.eq.s32.totalorder %s21, 3
      %p250 = por %p248, %p249
      %p251 = scmp.ne.s32.totalorder %s240, %s241
      %p252 = scmp.eq.s32.totalorder %s21, 0
      %p253 = por %p251, %p252
      %p254 = scmp.ne.s32.totalorder %s240, %s241
      %p255 = scmp.eq.s32.totalorder %s22, 3
      %p256 = por %p254, %p255
      %p258 = scmp.ne.s32.totalorder %s241, %s257
      %p259 = scmp.eq.s32.totalorder %s22, 0
      %p260 = por %p258, %p259
      %s261 = ssub.s32 %s24, %s31
      %s262 = ssub.s32 %s23, %s35
      %s263 = sor.u32 %s261, %s262
      %p264 = scmp.eq.s32.totalorder %s263, 0
      %s266 = sadd.s32 %s265, 1
      %s267 = scalar_select %p264, %s265, %s266
      %p270 = pneg %p264
      %p271 = scmp.eq.s32.totalorder %s16, 3
      %p272 = por %p270, %p271
      %p273 = scmp.ne.s32.totalorder %s265, %s268
      %p274 = scmp.eq.s32.totalorder %s16, 0
      %p275 = por %p273, %p274
      %p276 = scmp.ne.s32.totalorder %s265, %s268
      %p277 = scmp.eq.s32.totalorder %s21, 3
      %p278 = por %p276, %p277
      %p279 = scmp.ne.s32.totalorder %s268, %s269
      %p280 = scmp.eq.s32.totalorder %s21, 0
      %p281 = por %p279, %p280
      %p282 = scmp.ne.s32.totalorder %s268, %s269
      %p283 = scmp.eq.s32.totalorder %s22, 3
      %p284 = por %p282, %p283
      %p286 = scmp.ne.s32.totalorder %s269, %s285
      %p287 = scmp.eq.s32.totalorder %s22, 0
      %p288 = por %p286, %p287
      %p289 = scmp.le.s32.totalorder 1, %s16
      %p290 = scmp.lt.s32.totalorder %s16, 5
      %p291 = pnand %p289, %p290
      %p292 = pneg %p291
      // Predicated region
      $region9: #{_lambda_.4} parent=5 // pred_check
        _
      $region10: #{_lambda_.4} parent=5 // pred_check_branch
        %294 = sbr.rel (%p291) target = $region12
      $region11: #{_lambda_.4} parent=5 // pred_region
        %s295 = ssub.s32 %s16, 1
        // Predicated region
        $region13: #{_lambda_.4} parent=11 // pred_check
          %p296 = pneg %p49
        $region14: #{_lambda_.4} parent=11 // pred_check_branch
          %298 = sbr.rel (%p296) target = $region16
        $region15: #{_lambda_.4} parent=11 // pred_region
          %300 = vsyncadd [#allocation5], 0
          %s302 = sshll.u32 %s0, 4
          %s303 = int_to_ptr.vmem [resolvable:$true] %s302
          %305 = dma.vmem_to_smem %s303, 16, [#allocation4], [#allocation5]
        $region16: #{_lambda_.4} parent=11 // pred_fallthru
          _
        // Predicated region
        $region17: #{_lambda_.4} parent=11 // pred_check
          %p306 = pneg %p122
        $region18: #{_lambda_.4} parent=11 // pred_check_branch
          %308 = sbr.rel (%p306) target = $region20
        $region19: #{_lambda_.4} parent=11 // pred_region
          _
        $region20: #{_lambda_.4} parent=11 // pred_fallthru
          _
        // Predicated region
        $region21: #{_lambda_.4} parent=11 // pred_check
          %p309 = pneg %p143
        $region22: #{_lambda_.4} parent=11 // pred_check_branch
          %311 = sbr.rel (%p309) target = $region24
        $region23: #{_lambda_.4} parent=11 // pred_region
          _
        $region24: #{_lambda_.4} parent=11 // pred_fallthru
          _
      $region12: #{_lambda_.4} parent=5 // pred_fallthru
        _
      %p312 = scmp.lt.s32.totalorder %s16, 4
      // Predicated region
      $region25: #{_lambda_.4} parent=5 // pred_check
        %p313 = pneg %p312
      $region26: #{_lambda_.4} parent=5 // pred_check_branch
        %315 = sbr.rel (%p313) target = $region28
      $region27: #{_lambda_.4} parent=5 // pred_region
        // Predicated region
        $region29: #{_lambda_.4} parent=27 // pred_check
          %p316 = pneg %p69
        $region30: #{_lambda_.4} parent=27 // pred_check_branch
          %318 = sbr.rel (%p316) target = $region32
        $region31: #{_lambda_.4} parent=27 // pred_region
          %s319 = smul.u32 16, %s24
          %p320 = scmp.lt.s32.totalorder %s319, 31
          %s321 = scalar_select %p320, %s319, 31
          %s322 = smul.addr %s321, 4
          %s323 = scalar_lea.vmem %s1, %s322
          %s324 = smul.u32 16, %s24
        $region32: #{_lambda_.4} parent=27 // pred_fallthru
          _
        // Predicated region
        $region33: #{_lambda_.4} parent=27 // pred_check
          %p325 = pneg %p95
        $region34: #{_lambda_.4} parent=27 // pred_check_branch
          %327 = sbr.rel (%p325) target = $region36
        $region35: #{_lambda_.4} parent=27 // pred_region
          %s328 = smul.u32 16, %s24
          %p329 = scmp.lt.s32.totalorder %s328, 31
          %s330 = scalar_select %p329, %s328, 31
          %s331 = smul.addr %s330, 4
          %s332 = scalar_lea.vmem %s2, %s331
          %s333 = smul.u32 16, %s24
        $region36: #{_lambda_.4} parent=27 // pred_fallthru
          _
        // Predicated region
        $region37: #{_lambda_.4} parent=27 // pred_check
          %p334 = pneg %p165
        $region38: #{_lambda_.4} parent=27 // pred_check_branch
          %336 = sbr.rel (%p334) target = $region40
        $region39: #{_lambda_.4} parent=27 // pred_region
          %s337 = sand.u32 %s155, 1
          %s338 = sand.u32 %s155, 1
          %s339 = smul.addr %s338, 64
          %s340 = scalar_lea.vmem [#allocation6], %s339
          %s341 = smul.u32 16, %s24
          %s342 = smul.addr %s341, 6
          %s343 = sadd.s32 %s23, %s342
          %s344 = smul.addr %s343, 4
          %s345 = scalar_lea.vmem %s5, %s344
          // Predicated region
          $region41: #{_lambda_.4} parent=39 // pred_check
            _
          $region42: #{_lambda_.4} parent=39 // pred_check_branch
            %347 = sbr.rel (0) target = $region44
          $region43: #{_lambda_.4} parent=39 // pred_region
            // Predicated region
            $region45: #{_lambda_.4} parent=43 // pred_check
              _
            $region46: #{_lambda_.4} parent=43 // pred_check_branch
              %349 = sbr.rel target = $region48
            $region47: #{_lambda_.4} parent=43 // pred_region
              // Predicated region
              $region60: #{_lambda_.4} parent=47 // pred_check
                _
              $region61: #{_lambda_.4} parent=47 // pred_check_branch
                %395 = sbr.rel (0) target = $region63
              $region62: #{_lambda_.4} parent=47 // pred_region
                loop: start=0, step=1, limit=1
                $region64: #{_lambda_.4} parent=62 // loop_pre_header
                  _
                $region65: #{_lambda_.4} parent=62 // loop_header
                  %s397 = sphi 0, %s401
                  %p398 = scmp.ge.s32.totalorder %s397, 1
                  %s402 = sphi %s345, %s345
                  %s403 = sphi %s340, %s340
                $region66: #{_lambda_.4} parent=62 // loop_header_branch
                  %400 = sbr.rel (%p398) target = $region70
                $region67: #{_lambda_.4} parent=62 // loop_body
                  _
                $region68: #{_lambda_.4} parent=62 // loop_footer
                  %s401 = sadd.s32 1, %s397
                $region69: #{_lambda_.4} parent=62 // loop_footer_branch
                  %396 = sbr.rel target = $region65
                $region70: #{_lambda_.4} parent=62 // loop_exit
                  _
                %s405 = ssub.s32 16, 1
                loop: start=0, step=1, limit=1
                $region71: #{_lambda_.4} parent=62 // loop_pre_header
                  _
                $region72: #{_lambda_.4} parent=62 // loop_header
                  %s407 = sphi 0, %s411
                  %p408 = scmp.ge.s32.totalorder %s407, 1
                  %s412 = sphi %s345, %s345
                  %s413 = sphi %s340, %s340
                $region73: #{_lambda_.4} parent=62 // loop_header_branch
                  %410 = sbr.rel (%p408) target = $region77
                $region74: #{_lambda_.4} parent=62 // loop_body
                  %v414 = vld [vmem:[%s412] sm:%s405]
                  %415 = vst [vmem:[%s413] sm:%s405] %v414
                  %v416 = vld [vmem:[%s412 + $0x18] sm:%s405]
                  %417 = vst [vmem:[%s413 + $0x4] sm:%s405] %v416
                  %v418 = vld [vmem:[%s412 + $0x30] sm:%s405]
                  %419 = vst [vmem:[%s413 + $0x8] sm:%s405] %v418
                  %v420 = vld [vmem:[%s412 + $0x48] sm:%s405]
                  %421 = vst [vmem:[%s413 + $0xc] sm:%s405] %v420
                  %v422 = vld [vmem:[%s412 + $0x60] sm:%s405]
                  %423 = vst [vmem:[%s413 + $0x10] sm:%s405] %v422
                  %v424 = vld [vmem:[%s412 + $0x78] sm:%s405]
                  %425 = vst [vmem:[%s413 + $0x14] sm:%s405] %v424
                  %v426 = vld [vmem:[%s412 + $0x90] sm:%s405]
                  %427 = vst [vmem:[%s413 + $0x18] sm:%s405] %v426
                  %v428 = vld [vmem:[%s412 + $0xa8] sm:%s405]
                  %429 = vst [vmem:[%s413 + $0x1c] sm:%s405] %v428
                  %v430 = vld [vmem:[%s412 + $0xc0] sm:%s405]
                  %431 = vst [vmem:[%s413 + $0x20] sm:%s405] %v430
                  %v432 = vld [vmem:[%s412 + $0xd8] sm:%s405]
                  %433 = vst [vmem:[%s413 + $0x24] sm:%s405] %v432
                  %v434 = vld [vmem:[%s412 + $0xf0] sm:%s405]
                  %435 = vst [vmem:[%s413 + $0x28] sm:%s405] %v434
                  %v436 = vld [vmem:[%s412 + $0x108] sm:%s405]
                  %437 = vst [vmem:[%s413 + $0x2c] sm:%s405] %v436
                  %v438 = vld [vmem:[%s412 + $0x120] sm:%s405]
                  %439 = vst [vmem:[%s413 + $0x30] sm:%s405] %v438
                  %v440 = vld [vmem:[%s412 + $0x138] sm:%s405]
                  %441 = vst [vmem:[%s413 + $0x34] sm:%s405] %v440
                  %v442 = vld [vmem:[%s412 + $0x150] sm:%s405]
                  %443 = vst [vmem:[%s413 + $0x38] sm:%s405] %v442
                  %v444 = vld [vmem:[%s412 + $0x168] sm:%s405]
                  %445 = vst [vmem:[%s413 + $0x3c] sm:%s405] %v444
                $region75: #{_lambda_.4} parent=62 // loop_footer
                  %s411 = sadd.s32 1, %s407
                $region76: #{_lambda_.4} parent=62 // loop_footer_branch
                  %406 = sbr.rel target = $region72
                $region77: #{_lambda_.4} parent=62 // loop_exit
                  _
              $region63: #{_lambda_.4} parent=47 // pred_fallthru
                _
            $region48: #{_lambda_.4} parent=43 // pred_fallthru
              _
            // Predicated region
            $region49: #{_lambda_.4} parent=43 // pred_check
              _
            $region50: #{_lambda_.4} parent=43 // pred_check_branch
              %351 = sbr.rel (0) target = $region52
            $region51: #{_lambda_.4} parent=43 // pred_region
              %s353 = ssub.s32 16, 1
              loop: start=0, step=1, limit=1
              $region53: #{_lambda_.4} parent=51 // loop_pre_header
                _
              $region54: #{_lambda_.4} parent=51 // loop_header
                %s355 = sphi 0, %s359
                %p356 = scmp.ge.s32.totalorder %s355, 1
                %s360 = sphi %s345, %s345
                %s361 = sphi %s340, %s340
              $region55: #{_lambda_.4} parent=51 // loop_header_branch
                %358 = sbr.rel (%p356) target = $region59
              $region56: #{_lambda_.4} parent=51 // loop_body
                %v362 = vld [vmem:[%s360] sm:%s353]
                %363 = vst [vmem:[%s361] sm:%s353] %v362
                %v364 = vld [vmem:[%s360 + $0x18] sm:%s353]
                %365 = vst [vmem:[%s361 + $0x4] sm:%s353] %v364
                %v366 = vld [vmem:[%s360 + $0x30] sm:%s353]
                %367 = vst [vmem:[%s361 + $0x8] sm:%s353] %v366
                %v368 = vld [vmem:[%s360 + $0x48] sm:%s353]
                %369 = vst [vmem:[%s361 + $0xc] sm:%s353] %v368
                %v370 = vld [vmem:[%s360 + $0x60] sm:%s353]
                %371 = vst [vmem:[%s361 + $0x10] sm:%s353] %v370
                %v372 = vld [vmem:[%s360 + $0x78] sm:%s353]
                %373 = vst [vmem:[%s361 + $0x14] sm:%s353] %v372
                %v374 = vld [vmem:[%s360 + $0x90] sm:%s353]
                %375 = vst [vmem:[%s361 + $0x18] sm:%s353] %v374
                %v376 = vld [vmem:[%s360 + $0xa8] sm:%s353]
                %377 = vst [vmem:[%s361 + $0x1c] sm:%s353] %v376
                %v378 = vld [vmem:[%s360 + $0xc0] sm:%s353]
                %379 = vst [vmem:[%s361 + $0x20] sm:%s353] %v378
                %v380 = vld [vmem:[%s360 + $0xd8] sm:%s353]
                %381 = vst [vmem:[%s361 + $0x24] sm:%s353] %v380
                %v382 = vld [vmem:[%s360 + $0xf0] sm:%s353]
                %383 = vst [vmem:[%s361 + $0x28] sm:%s353] %v382
                %v384 = vld [vmem:[%s360 + $0x108] sm:%s353]
                %385 = vst [vmem:[%s361 + $0x2c] sm:%s353] %v384
                %v386 = vld [vmem:[%s360 + $0x120] sm:%s353]
                %387 = vst [vmem:[%s361 + $0x30] sm:%s353] %v386
                %v388 = vld [vmem:[%s360 + $0x138] sm:%s353]
                %389 = vst [vmem:[%s361 + $0x34] sm:%s353] %v388
                %v390 = vld [vmem:[%s360 + $0x150] sm:%s353]
                %391 = vst [vmem:[%s361 + $0x38] sm:%s353] %v390
                %v392 = vld [vmem:[%s360 + $0x168] sm:%s353]
                %393 = vst [vmem:[%s361 + $0x3c] sm:%s353] %v392
              $region57: #{_lambda_.4} parent=51 // loop_footer
                %s359 = sadd.s32 1, %s355
              $region58: #{_lambda_.4} parent=51 // loop_footer_branch
                %354 = sbr.rel target = $region54
              $region59: #{_lambda_.4} parent=51 // loop_exit
                _
            $region52: #{_lambda_.4} parent=43 // pred_fallthru
              _
          $region44: #{_lambda_.4} parent=39 // pred_fallthru
            _
          %446 = vnop
        $region40: #{_lambda_.4} parent=27 // pred_fallthru
          _
        // Predicated region
        $region78: #{_lambda_.4} parent=27 // pred_check
          %p447 = pneg %p193
        $region79: #{_lambda_.4} parent=27 // pred_check_branch
          %449 = sbr.rel (%p447) target = $region81
        $region80: #{_lambda_.4} parent=27 // pred_region
          %s450 = sand.u32 %s183, 1
          %s451 = sand.u32 %s183, 1
          %s452 = smul.addr %s451, 128
          %s453 = scalar_lea.vmem [#allocation7], %s452
          %s454 = sadd.s32 %s23, 2
          %s455 = smul.addr %s454, 4
          %s456 = scalar_lea.vmem %s6, %s455
          // Predicated region
          $region82: #{_lambda_.4} parent=80 // pred_check
            _
          $region83: #{_lambda_.4} parent=80 // pred_check_branch
            %458 = sbr.rel (0) target = $region85
          $region84: #{_lambda_.4} parent=80 // pred_region
            // Predicated region
            $region86: #{_lambda_.4} parent=84 // pred_check
              _
            $region87: #{_lambda_.4} parent=84 // pred_check_branch
              %460 = sbr.rel target = $region89
            $region88: #{_lambda_.4} parent=84 // pred_region
              // Predicated region
              $region101: #{_lambda_.4} parent=88 // pred_check
                _
              $region102: #{_lambda_.4} parent=88 // pred_check_branch
                %538 = sbr.rel (0) target = $region104
              $region103: #{_lambda_.4} parent=88 // pred_region
                loop: start=0, step=1, limit=1
                $region105: #{_lambda_.4} parent=103 // loop_pre_header
                  _
                $region106: #{_lambda_.4} parent=103 // loop_header
                  %s540 = sphi 0, %s544
                  %p541 = scmp.ge.s32.totalorder %s540, 1
                  %s545 = sphi %s456, %s456
                  %s546 = sphi %s453, %s453
                $region107: #{_lambda_.4} parent=103 // loop_header_branch
                  %543 = sbr.rel (%p541) target = $region111
                $region108: #{_lambda_.4} parent=103 // loop_body
                  _
                $region109: #{_lambda_.4} parent=103 // loop_footer
                  %s544 = sadd.s32 1, %s540
                $region110: #{_lambda_.4} parent=103 // loop_footer_branch
                  %539 = sbr.rel target = $region106
                $region111: #{_lambda_.4} parent=103 // loop_exit
                  _
                %s548 = ssub.s32 16, 1
                loop: start=0, step=1, limit=1
                $region112: #{_lambda_.4} parent=103 // loop_pre_header
                  _
                $region113: #{_lambda_.4} parent=103 // loop_header
                  %s550 = sphi 0, %s554
                  %p551 = scmp.ge.s32.totalorder %s550, 1
                  %s555 = sphi %s456, %s456
                  %s556 = sphi %s453, %s453
                $region114: #{_lambda_.4} parent=103 // loop_header_branch
                  %553 = sbr.rel (%p551) target = $region118
                $region115: #{_lambda_.4} parent=103 // loop_body
                  %v557 = vld [vmem:[%s555] sm:%s548]
                  %558 = vst [vmem:[%s556] sm:%s548] %v557
                  %v559 = vld [vmem:[%s555 + $0x18] sm:%s548]
                  %560 = vst [vmem:[%s556 + $0x4] sm:%s548] %v559
                  %v561 = vld [vmem:[%s555 + $0x30] sm:%s548]
                  %562 = vst [vmem:[%s556 + $0x8] sm:%s548] %v561
                  %v563 = vld [vmem:[%s555 + $0x48] sm:%s548]
                  %564 = vst [vmem:[%s556 + $0xc] sm:%s548] %v563
                  %v565 = vld [vmem:[%s555 + $0x60] sm:%s548]
                  %566 = vst [vmem:[%s556 + $0x10] sm:%s548] %v565
                  %v567 = vld [vmem:[%s555 + $0x78] sm:%s548]
                  %568 = vst [vmem:[%s556 + $0x14] sm:%s548] %v567
                  %v569 = vld [vmem:[%s555 + $0x90] sm:%s548]
                  %570 = vst [vmem:[%s556 + $0x18] sm:%s548] %v569
                  %v571 = vld [vmem:[%s555 + $0xa8] sm:%s548]
                  %572 = vst [vmem:[%s556 + $0x1c] sm:%s548] %v571
                  %v573 = vld [vmem:[%s555 + $0xc0] sm:%s548]
                  %574 = vst [vmem:[%s556 + $0x20] sm:%s548] %v573
                  %v575 = vld [vmem:[%s555 + $0xd8] sm:%s548]
                  %576 = vst [vmem:[%s556 + $0x24] sm:%s548] %v575
                  %v577 = vld [vmem:[%s555 + $0xf0] sm:%s548]
                  %578 = vst [vmem:[%s556 + $0x28] sm:%s548] %v577
                  %v579 = vld [vmem:[%s555 + $0x108] sm:%s548]
                  %580 = vst [vmem:[%s556 + $0x2c] sm:%s548] %v579
                  %v581 = vld [vmem:[%s555 + $0x120] sm:%s548]
                  %582 = vst [vmem:[%s556 + $0x30] sm:%s548] %v581
                  %v583 = vld [vmem:[%s555 + $0x138] sm:%s548]
                  %584 = vst [vmem:[%s556 + $0x34] sm:%s548] %v583
                  %v585 = vld [vmem:[%s555 + $0x150] sm:%s548]
                  %586 = vst [vmem:[%s556 + $0x38] sm:%s548] %v585
                  %v587 = vld [vmem:[%s555 + $0x168] sm:%s548]
                  %588 = vst [vmem:[%s556 + $0x3c] sm:%s548] %v587
                  %v589 = vld [vmem:[%s555 + $0x180] sm:%s548]
                  %590 = vst [vmem:[%s556 + $0x40] sm:%s548] %v589
                  %v591 = vld [vmem:[%s555 + $0x198] sm:%s548]
                  %592 = vst [vmem:[%s556 + $0x44] sm:%s548] %v591
                  %v593 = vld [vmem:[%s555 + $0x1b0] sm:%s548]
                  %594 = vst [vmem:[%s556 + $0x48] sm:%s548] %v593
                  %v595 = vld [vmem:[%s555 + $0x1c8] sm:%s548]
                  %596 = vst [vmem:[%s556 + $0x4c] sm:%s548] %v595
                  %v597 = vld [vmem:[%s555 + $0x1e0] sm:%s548]
                  %598 = vst [vmem:[%s556 + $0x50] sm:%s548] %v597
                  %v599 = vld [vmem:[%s555 + $0x1f8] sm:%s548]
                  %600 = vst [vmem:[%s556 + $0x54] sm:%s548] %v599
                  %v601 = vld [vmem:[%s555 + $0x210] sm:%s548]
                  %602 = vst [vmem:[%s556 + $0x58] sm:%s548] %v601
                  %v603 = vld [vmem:[%s555 + $0x228] sm:%s548]
                  %604 = vst [vmem:[%s556 + $0x5c] sm:%s548] %v603
                  %v605 = vld [vmem:[%s555 + $0x240] sm:%s548]
                  %606 = vst [vmem:[%s556 + $0x60] sm:%s548] %v605
                  %v607 = vld [vmem:[%s555 + $0x258] sm:%s548]
                  %608 = vst [vmem:[%s556 + $0x64] sm:%s548] %v607
                  %v609 = vld [vmem:[%s555 + $0x270] sm:%s548]
                  %610 = vst [vmem:[%s556 + $0x68] sm:%s548] %v609
                  %v611 = vld [vmem:[%s555 + $0x288] sm:%s548]
                  %612 = vst [vmem:[%s556 + $0x6c] sm:%s548] %v611
                  %v613 = vld [vmem:[%s555 + $0x2a0] sm:%s548]
                  %614 = vst [vmem:[%s556 + $0x70] sm:%s548] %v613
                  %v615 = vld [vmem:[%s555 + $0x2b8] sm:%s548]
                  %616 = vst [vmem:[%s556 + $0x74] sm:%s548] %v615
                  %v617 = vld [vmem:[%s555 + $0x2d0] sm:%s548]
                  %618 = vst [vmem:[%s556 + $0x78] sm:%s548] %v617
                  %v619 = vld [vmem:[%s555 + $0x2e8] sm:%s548]
                  %620 = vst [vmem:[%s556 + $0x7c] sm:%s548] %v619
                $region116: #{_lambda_.4} parent=103 // loop_footer
                  %s554 = sadd.s32 1, %s550
                $region117: #{_lambda_.4} parent=103 // loop_footer_branch
                  %549 = sbr.rel target = $region113
                $region118: #{_lambda_.4} parent=103 // loop_exit
                  _
              $region104: #{_lambda_.4} parent=88 // pred_fallthru
                _
            $region89: #{_lambda_.4} parent=84 // pred_fallthru
              _
            // Predicated region
            $region90: #{_lambda_.4} parent=84 // pred_check
              _
            $region91: #{_lambda_.4} parent=84 // pred_check_branch
              %462 = sbr.rel (0) target = $region93
            $region92: #{_lambda_.4} parent=84 // pred_region
              %s464 = ssub.s32 16, 1
              loop: start=0, step=1, limit=1
              $region94: #{_lambda_.4} parent=92 // loop_pre_header
                _
              $region95: #{_lambda_.4} parent=92 // loop_header
                %s466 = sphi 0, %s470
                %p467 = scmp.ge.s32.totalorder %s466, 1
                %s471 = sphi %s456, %s456
                %s472 = sphi %s453, %s453
              $region96: #{_lambda_.4} parent=92 // loop_header_branch
                %469 = sbr.rel (%p467) target = $region100
              $region97: #{_lambda_.4} parent=92 // loop_body
                %v473 = vld [vmem:[%s471] sm:%s464]
                %474 = vst [vmem:[%s472] sm:%s464] %v473
                %v475 = vld [vmem:[%s471 + $0x18] sm:%s464]
                %476 = vst [vmem:[%s472 + $0x4] sm:%s464] %v475
                %v477 = vld [vmem:[%s471 + $0x30] sm:%s464]
                %478 = vst [vmem:[%s472 + $0x8] sm:%s464] %v477
                %v479 = vld [vmem:[%s471 + $0x48] sm:%s464]
                %480 = vst [vmem:[%s472 + $0xc] sm:%s464] %v479
                %v481 = vld [vmem:[%s471 + $0x60] sm:%s464]
                %482 = vst [vmem:[%s472 + $0x10] sm:%s464] %v481
                %v483 = vld [vmem:[%s471 + $0x78] sm:%s464]
                %484 = vst [vmem:[%s472 + $0x14] sm:%s464] %v483
                %v485 = vld [vmem:[%s471 + $0x90] sm:%s464]
                %486 = vst [vmem:[%s472 + $0x18] sm:%s464] %v485
                %v487 = vld [vmem:[%s471 + $0xa8] sm:%s464]
                %488 = vst [vmem:[%s472 + $0x1c] sm:%s464] %v487
                %v489 = vld [vmem:[%s471 + $0xc0] sm:%s464]
                %490 = vst [vmem:[%s472 + $0x20] sm:%s464] %v489
                %v491 = vld [vmem:[%s471 + $0xd8] sm:%s464]
                %492 = vst [vmem:[%s472 + $0x24] sm:%s464] %v491
                %v493 = vld [vmem:[%s471 + $0xf0] sm:%s464]
                %494 = vst [vmem:[%s472 + $0x28] sm:%s464] %v493
                %v495 = vld [vmem:[%s471 + $0x108] sm:%s464]
                %496 = vst [vmem:[%s472 + $0x2c] sm:%s464] %v495
                %v497 = vld [vmem:[%s471 + $0x120] sm:%s464]
                %498 = vst [vmem:[%s472 + $0x30] sm:%s464] %v497
                %v499 = vld [vmem:[%s471 + $0x138] sm:%s464]
                %500 = vst [vmem:[%s472 + $0x34] sm:%s464] %v499
                %v501 = vld [vmem:[%s471 + $0x150] sm:%s464]
                %502 = vst [vmem:[%s472 + $0x38] sm:%s464] %v501
                %v503 = vld [vmem:[%s471 + $0x168] sm:%s464]
                %504 = vst [vmem:[%s472 + $0x3c] sm:%s464] %v503
                %v505 = vld [vmem:[%s471 + $0x180] sm:%s464]
                %506 = vst [vmem:[%s472 + $0x40] sm:%s464] %v505
                %v507 = vld [vmem:[%s471 + $0x198] sm:%s464]
                %508 = vst [vmem:[%s472 + $0x44] sm:%s464] %v507
                %v509 = vld [vmem:[%s471 + $0x1b0] sm:%s464]
                %510 = vst [vmem:[%s472 + $0x48] sm:%s464] %v509
                %v511 = vld [vmem:[%s471 + $0x1c8] sm:%s464]
                %512 = vst [vmem:[%s472 + $0x4c] sm:%s464] %v511
                %v513 = vld [vmem:[%s471 + $0x1e0] sm:%s464]
                %514 = vst [vmem:[%s472 + $0x50] sm:%s464] %v513
                %v515 = vld [vmem:[%s471 + $0x1f8] sm:%s464]
                %516 = vst [vmem:[%s472 + $0x54] sm:%s464] %v515
                %v517 = vld [vmem:[%s471 + $0x210] sm:%s464]
                %518 = vst [vmem:[%s472 + $0x58] sm:%s464] %v517
                %v519 = vld [vmem:[%s471 + $0x228] sm:%s464]
                %520 = vst [vmem:[%s472 + $0x5c] sm:%s464] %v519
                %v521 = vld [vmem:[%s471 + $0x240] sm:%s464]
                %522 = vst [vmem:[%s472 + $0x60] sm:%s464] %v521
                %v523 = vld [vmem:[%s471 + $0x258] sm:%s464]
                %524 = vst [vmem:[%s472 + $0x64] sm:%s464] %v523
                %v525 = vld [vmem:[%s471 + $0x270] sm:%s464]
                %526 = vst [vmem:[%s472 + $0x68] sm:%s464] %v525
                %v527 = vld [vmem:[%s471 + $0x288] sm:%s464]
                %528 = vst [vmem:[%s472 + $0x6c] sm:%s464] %v527
                %v529 = vld [vmem:[%s471 + $0x2a0] sm:%s464]
                %530 = vst [vmem:[%s472 + $0x70] sm:%s464] %v529
                %v531 = vld [vmem:[%s471 + $0x2b8] sm:%s464]
                %532 = vst [vmem:[%s472 + $0x74] sm:%s464] %v531
                %v533 = vld [vmem:[%s471 + $0x2d0] sm:%s464]
                %534 = vst [vmem:[%s472 + $0x78] sm:%s464] %v533
                %v535 = vld [vmem:[%s471 + $0x2e8] sm:%s464]
                %536 = vst [vmem:[%s472 + $0x7c] sm:%s464] %v535
              $region98: #{_lambda_.4} parent=92 // loop_footer
                %s470 = sadd.s32 1, %s466
              $region99: #{_lambda_.4} parent=92 // loop_footer_branch
                %465 = sbr.rel target = $region95
              $region100: #{_lambda_.4} parent=92 // loop_exit
                _
            $region93: #{_lambda_.4} parent=84 // pred_fallthru
              _
          $region85: #{_lambda_.4} parent=80 // pred_fallthru
            _
          %621 = vnop
        $region81: #{_lambda_.4} parent=27 // pred_fallthru
          _
        // Predicated region
        $region119: #{_lambda_.4} parent=27 // pred_check
          %p622 = pneg %p221
        $region120: #{_lambda_.4} parent=27 // pred_check_branch
          %624 = sbr.rel (%p622) target = $region122
        $region121: #{_lambda_.4} parent=27 // pred_region
          %s625 = sand.u32 %s211, 1
          %s626 = sand.u32 %s211, 1
          %s627 = smul.addr %s626, 128
          %s628 = scalar_lea.vmem [#allocation8], %s627
          %s629 = sadd.s32 %s23, 4
          %s630 = smul.addr %s629, 4
          %s631 = scalar_lea.vmem %s7, %s630
          // Predicated region
          $region123: #{_lambda_.4} parent=121 // pred_check
            _
          $region124: #{_lambda_.4} parent=121 // pred_check_branch
            %633 = sbr.rel (0) target = $region126
          $region125: #{_lambda_.4} parent=121 // pred_region
            // Predicated region
            $region127: #{_lambda_.4} parent=125 // pred_check
              _
            $region128: #{_lambda_.4} parent=125 // pred_check_branch
              %635 = sbr.rel target = $region130
            $region129: #{_lambda_.4} parent=125 // pred_region
              // Predicated region
              $region142: #{_lambda_.4} parent=129 // pred_check
                _
              $region143: #{_lambda_.4} parent=129 // pred_check_branch
                %713 = sbr.rel (0) target = $region145
              $region144: #{_lambda_.4} parent=129 // pred_region
                loop: start=0, step=1, limit=1
                $region146: #{_lambda_.4} parent=144 // loop_pre_header
                  _
                $region147: #{_lambda_.4} parent=144 // loop_header
                  %s715 = sphi 0, %s719
                  %p716 = scmp.ge.s32.totalorder %s715, 1
                  %s720 = sphi %s631, %s631
                  %s721 = sphi %s628, %s628
                $region148: #{_lambda_.4} parent=144 // loop_header_branch
                  %718 = sbr.rel (%p716) target = $region152
                $region149: #{_lambda_.4} parent=144 // loop_body
                  _
                $region150: #{_lambda_.4} parent=144 // loop_footer
                  %s719 = sadd.s32 1, %s715
                $region151: #{_lambda_.4} parent=144 // loop_footer_branch
                  %714 = sbr.rel target = $region147
                $region152: #{_lambda_.4} parent=144 // loop_exit
                  _
                %s723 = ssub.s32 16, 1
                loop: start=0, step=1, limit=1
                $region153: #{_lambda_.4} parent=144 // loop_pre_header
                  _
                $region154: #{_lambda_.4} parent=144 // loop_header
                  %s725 = sphi 0, %s729
                  %p726 = scmp.ge.s32.totalorder %s725, 1
                  %s730 = sphi %s631, %s631
                  %s731 = sphi %s628, %s628
                $region155: #{_lambda_.4} parent=144 // loop_header_branch
                  %728 = sbr.rel (%p726) target = $region159
                $region156: #{_lambda_.4} parent=144 // loop_body
                  %v732 = vld [vmem:[%s730] sm:%s723]
                  %733 = vst [vmem:[%s731] sm:%s723] %v732
                  %v734 = vld [vmem:[%s730 + $0x18] sm:%s723]
                  %735 = vst [vmem:[%s731 + $0x4] sm:%s723] %v734
                  %v736 = vld [vmem:[%s730 + $0x30] sm:%s723]
                  %737 = vst [vmem:[%s731 + $0x8] sm:%s723] %v736
                  %v738 = vld [vmem:[%s730 + $0x48] sm:%s723]
                  %739 = vst [vmem:[%s731 + $0xc] sm:%s723] %v738
                  %v740 = vld [vmem:[%s730 + $0x60] sm:%s723]
                  %741 = vst [vmem:[%s731 + $0x10] sm:%s723] %v740
                  %v742 = vld [vmem:[%s730 + $0x78] sm:%s723]
                  %743 = vst [vmem:[%s731 + $0x14] sm:%s723] %v742
                  %v744 = vld [vmem:[%s730 + $0x90] sm:%s723]
                  %745 = vst [vmem:[%s731 + $0x18] sm:%s723] %v744
                  %v746 = vld [vmem:[%s730 + $0xa8] sm:%s723]
                  %747 = vst [vmem:[%s731 + $0x1c] sm:%s723] %v746
                  %v748 = vld [vmem:[%s730 + $0xc0] sm:%s723]
                  %749 = vst [vmem:[%s731 + $0x20] sm:%s723] %v748
                  %v750 = vld [vmem:[%s730 + $0xd8] sm:%s723]
                  %751 = vst [vmem:[%s731 + $0x24] sm:%s723] %v750
                  %v752 = vld [vmem:[%s730 + $0xf0] sm:%s723]
                  %753 = vst [vmem:[%s731 + $0x28] sm:%s723] %v752
                  %v754 = vld [vmem:[%s730 + $0x108] sm:%s723]
                  %755 = vst [vmem:[%s731 + $0x2c] sm:%s723] %v754
                  %v756 = vld [vmem:[%s730 + $0x120] sm:%s723]
                  %757 = vst [vmem:[%s731 + $0x30] sm:%s723] %v756
                  %v758 = vld [vmem:[%s730 + $0x138] sm:%s723]
                  %759 = vst [vmem:[%s731 + $0x34] sm:%s723] %v758
                  %v760 = vld [vmem:[%s730 + $0x150] sm:%s723]
                  %761 = vst [vmem:[%s731 + $0x38] sm:%s723] %v760
                  %v762 = vld [vmem:[%s730 + $0x168] sm:%s723]
                  %763 = vst [vmem:[%s731 + $0x3c] sm:%s723] %v762
                  %v764 = vld [vmem:[%s730 + $0x180] sm:%s723]
                  %765 = vst [vmem:[%s731 + $0x40] sm:%s723] %v764
                  %v766 = vld [vmem:[%s730 + $0x198] sm:%s723]
                  %767 = vst [vmem:[%s731 + $0x44] sm:%s723] %v766
                  %v768 = vld [vmem:[%s730 + $0x1b0] sm:%s723]
                  %769 = vst [vmem:[%s731 + $0x48] sm:%s723] %v768
                  %v770 = vld [vmem:[%s730 + $0x1c8] sm:%s723]
                  %771 = vst [vmem:[%s731 + $0x4c] sm:%s723] %v770
                  %v772 = vld [vmem:[%s730 + $0x1e0] sm:%s723]
                  %773 = vst [vmem:[%s731 + $0x50] sm:%s723] %v772
                  %v774 = vld [vmem:[%s730 + $0x1f8] sm:%s723]
                  %775 = vst [vmem:[%s731 + $0x54] sm:%s723] %v774
                  %v776 = vld [vmem:[%s730 + $0x210] sm:%s723]
                  %777 = vst [vmem:[%s731 + $0x58] sm:%s723] %v776
                  %v778 = vld [vmem:[%s730 + $0x228] sm:%s723]
                  %779 = vst [vmem:[%s731 + $0x5c] sm:%s723] %v778
                  %v780 = vld [vmem:[%s730 + $0x240] sm:%s723]
                  %781 = vst [vmem:[%s731 + $0x60] sm:%s723] %v780
                  %v782 = vld [vmem:[%s730 + $0x258] sm:%s723]
                  %783 = vst [vmem:[%s731 + $0x64] sm:%s723] %v782
                  %v784 = vld [vmem:[%s730 + $0x270] sm:%s723]
                  %785 = vst [vmem:[%s731 + $0x68] sm:%s723] %v784
                  %v786 = vld [vmem:[%s730 + $0x288] sm:%s723]
                  %787 = vst [vmem:[%s731 + $0x6c] sm:%s723] %v786
                  %v788 = vld [vmem:[%s730 + $0x2a0] sm:%s723]
                  %789 = vst [vmem:[%s731 + $0x70] sm:%s723] %v788
                  %v790 = vld [vmem:[%s730 + $0x2b8] sm:%s723]
                  %791 = vst [vmem:[%s731 + $0x74] sm:%s723] %v790
                  %v792 = vld [vmem:[%s730 + $0x2d0] sm:%s723]
                  %793 = vst [vmem:[%s731 + $0x78] sm:%s723] %v792
                  %v794 = vld [vmem:[%s730 + $0x2e8] sm:%s723]
                  %795 = vst [vmem:[%s731 + $0x7c] sm:%s723] %v794
                $region157: #{_lambda_.4} parent=144 // loop_footer
                  %s729 = sadd.s32 1, %s725
                $region158: #{_lambda_.4} parent=144 // loop_footer_branch
                  %724 = sbr.rel target = $region154
                $region159: #{_lambda_.4} parent=144 // loop_exit
                  _
              $region145: #{_lambda_.4} parent=129 // pred_fallthru
                _
            $region130: #{_lambda_.4} parent=125 // pred_fallthru
              _
            // Predicated region
            $region131: #{_lambda_.4} parent=125 // pred_check
              _
            $region132: #{_lambda_.4} parent=125 // pred_check_branch
              %637 = sbr.rel (0) target = $region134
            $region133: #{_lambda_.4} parent=125 // pred_region
              %s639 = ssub.s32 16, 1
              loop: start=0, step=1, limit=1
              $region135: #{_lambda_.4} parent=133 // loop_pre_header
                _
              $region136: #{_lambda_.4} parent=133 // loop_header
                %s641 = sphi 0, %s645
                %p642 = scmp.ge.s32.totalorder %s641, 1
                %s646 = sphi %s631, %s631
                %s647 = sphi %s628, %s628
              $region137: #{_lambda_.4} parent=133 // loop_header_branch
                %644 = sbr.rel (%p642) target = $region141
              $region138: #{_lambda_.4} parent=133 // loop_body
                %v648 = vld [vmem:[%s646] sm:%s639]
                %649 = vst [vmem:[%s647] sm:%s639] %v648
                %v650 = vld [vmem:[%s646 + $0x18] sm:%s639]
                %651 = vst [vmem:[%s647 + $0x4] sm:%s639] %v650
                %v652 = vld [vmem:[%s646 + $0x30] sm:%s639]
                %653 = vst [vmem:[%s647 + $0x8] sm:%s639] %v652
                %v654 = vld [vmem:[%s646 + $0x48] sm:%s639]
                %655 = vst [vmem:[%s647 + $0xc] sm:%s639] %v654
                %v656 = vld [vmem:[%s646 + $0x60] sm:%s639]
                %657 = vst [vmem:[%s647 + $0x10] sm:%s639] %v656
                %v658 = vld [vmem:[%s646 + $0x78] sm:%s639]
                %659 = vst [vmem:[%s647 + $0x14] sm:%s639] %v658
                %v660 = vld [vmem:[%s646 + $0x90] sm:%s639]
                %661 = vst [vmem:[%s647 + $0x18] sm:%s639] %v660
                %v662 = vld [vmem:[%s646 + $0xa8] sm:%s639]
                %663 = vst [vmem:[%s647 + $0x1c] sm:%s639] %v662
                %v664 = vld [vmem:[%s646 + $0xc0] sm:%s639]
                %665 = vst [vmem:[%s647 + $0x20] sm:%s639] %v664
                %v666 = vld [vmem:[%s646 + $0xd8] sm:%s639]
                %667 = vst [vmem:[%s647 + $0x24] sm:%s639] %v666
                %v668 = vld [vmem:[%s646 + $0xf0] sm:%s639]
                %669 = vst [vmem:[%s647 + $0x28] sm:%s639] %v668
                %v670 = vld [vmem:[%s646 + $0x108] sm:%s639]
                %671 = vst [vmem:[%s647 + $0x2c] sm:%s639] %v670
                %v672 = vld [vmem:[%s646 + $0x120] sm:%s639]
                %673 = vst [vmem:[%s647 + $0x30] sm:%s639] %v672
                %v674 = vld [vmem:[%s646 + $0x138] sm:%s639]
                %675 = vst [vmem:[%s647 + $0x34] sm:%s639] %v674
                %v676 = vld [vmem:[%s646 + $0x150] sm:%s639]
                %677 = vst [vmem:[%s647 + $0x38] sm:%s639] %v676
                %v678 = vld [vmem:[%s646 + $0x168] sm:%s639]
                %679 = vst [vmem:[%s647 + $0x3c] sm:%s639] %v678
                %v680 = vld [vmem:[%s646 + $0x180] sm:%s639]
                %681 = vst [vmem:[%s647 + $0x40] sm:%s639] %v680
                %v682 = vld [vmem:[%s646 + $0x198] sm:%s639]
                %683 = vst [vmem:[%s647 + $0x44] sm:%s639] %v682
                %v684 = vld [vmem:[%s646 + $0x1b0] sm:%s639]
                %685 = vst [vmem:[%s647 + $0x48] sm:%s639] %v684
                %v686 = vld [vmem:[%s646 + $0x1c8] sm:%s639]
                %687 = vst [vmem:[%s647 + $0x4c] sm:%s639] %v686
                %v688 = vld [vmem:[%s646 + $0x1e0] sm:%s639]
                %689 = vst [vmem:[%s647 + $0x50] sm:%s639] %v688
                %v690 = vld [vmem:[%s646 + $0x1f8] sm:%s639]
                %691 = vst [vmem:[%s647 + $0x54] sm:%s639] %v690
                %v692 = vld [vmem:[%s646 + $0x210] sm:%s639]
                %693 = vst [vmem:[%s647 + $0x58] sm:%s639] %v692
                %v694 = vld [vmem:[%s646 + $0x228] sm:%s639]
                %695 = vst [vmem:[%s647 + $0x5c] sm:%s639] %v694
                %v696 = vld [vmem:[%s646 + $0x240] sm:%s639]
                %697 = vst [vmem:[%s647 + $0x60] sm:%s639] %v696
                %v698 = vld [vmem:[%s646 + $0x258] sm:%s639]
                %699 = vst [vmem:[%s647 + $0x64] sm:%s639] %v698
                %v700 = vld [vmem:[%s646 + $0x270] sm:%s639]
                %701 = vst [vmem:[%s647 + $0x68] sm:%s639] %v700
                %v702 = vld [vmem:[%s646 + $0x288] sm:%s639]
                %703 = vst [vmem:[%s647 + $0x6c] sm:%s639] %v702
                %v704 = vld [vmem:[%s646 + $0x2a0] sm:%s639]
                %705 = vst [vmem:[%s647 + $0x70] sm:%s639] %v704
                %v706 = vld [vmem:[%s646 + $0x2b8] sm:%s639]
                %707 = vst [vmem:[%s647 + $0x74] sm:%s639] %v706
                %v708 = vld [vmem:[%s646 + $0x2d0] sm:%s639]
                %709 = vst [vmem:[%s647 + $0x78] sm:%s639] %v708
                %v710 = vld [vmem:[%s646 + $0x2e8] sm:%s639]
                %711 = vst [vmem:[%s647 + $0x7c] sm:%s639] %v710
              $region139: #{_lambda_.4} parent=133 // loop_footer
                %s645 = sadd.s32 1, %s641
              $region140: #{_lambda_.4} parent=133 // loop_footer_branch
                %640 = sbr.rel target = $region136
              $region141: #{_lambda_.4} parent=133 // loop_exit
                _
            $region134: #{_lambda_.4} parent=125 // pred_fallthru
              _
          $region126: #{_lambda_.4} parent=121 // pred_fallthru
            _
          %796 = vnop
        $region122: #{_lambda_.4} parent=27 // pred_fallthru
          _
        // Predicated region
        $region160: #{_lambda_.4} parent=27 // pred_check
          %p797 = pneg %p247
        $region161: #{_lambda_.4} parent=27 // pred_check_branch
          %799 = sbr.rel (%p797) target = $region163
        $region162: #{_lambda_.4} parent=27 // pred_region
          %s800 = sand.u32 %s237, 1
          %s801 = sand.u32 %s237, 1
          %s802 = smul.addr %s801, 128
          %s803 = scalar_lea.vmem [#allocation9], %s802
          %s804 = smul.addr %s23, 4
          %s805 = scalar_lea.vmem %s8, %s804
          // Predicated region
          $region164: #{_lambda_.4} parent=162 // pred_check
            _
          $region165: #{_lambda_.4} parent=162 // pred_check_branch
            %807 = sbr.rel (0) target = $region167
          $region166: #{_lambda_.4} parent=162 // pred_region
            // Predicated region
            $region168: #{_lambda_.4} parent=166 // pred_check
              _
            $region169: #{_lambda_.4} parent=166 // pred_check_branch
              %809 = sbr.rel target = $region171
            $region170: #{_lambda_.4} parent=166 // pred_region
              // Predicated region
              $region183: #{_lambda_.4} parent=170 // pred_check
                _
              $region184: #{_lambda_.4} parent=170 // pred_check_branch
                %887 = sbr.rel (0) target = $region186
              $region185: #{_lambda_.4} parent=170 // pred_region
                loop: start=0, step=1, limit=1
                $region187: #{_lambda_.4} parent=185 // loop_pre_header
                  _
                $region188: #{_lambda_.4} parent=185 // loop_header
                  %s889 = sphi 0, %s893
                  %p890 = scmp.ge.s32.totalorder %s889, 1
                  %s894 = sphi %s805, %s805
                  %s895 = sphi %s803, %s803
                $region189: #{_lambda_.4} parent=185 // loop_header_branch
                  %892 = sbr.rel (%p890) target = $region193
                $region190: #{_lambda_.4} parent=185 // loop_body
                  _
                $region191: #{_lambda_.4} parent=185 // loop_footer
                  %s893 = sadd.s32 1, %s889
                $region192: #{_lambda_.4} parent=185 // loop_footer_branch
                  %888 = sbr.rel target = $region188
                $region193: #{_lambda_.4} parent=185 // loop_exit
                  _
                %s897 = ssub.s32 16, 1
                loop: start=0, step=1, limit=1
                $region194: #{_lambda_.4} parent=185 // loop_pre_header
                  _
                $region195: #{_lambda_.4} parent=185 // loop_header
                  %s899 = sphi 0, %s903
                  %p900 = scmp.ge.s32.totalorder %s899, 1
                  %s904 = sphi %s805, %s805
                  %s905 = sphi %s803, %s803
                $region196: #{_lambda_.4} parent=185 // loop_header_branch
                  %902 = sbr.rel (%p900) target = $region200
                $region197: #{_lambda_.4} parent=185 // loop_body
                  %v906 = vld [vmem:[%s904] sm:%s897]
                  %907 = vst [vmem:[%s905] sm:%s897] %v906
                  %v908 = vld [vmem:[%s904 + $0x8] sm:%s897]
                  %909 = vst [vmem:[%s905 + $0x4] sm:%s897] %v908
                  %v910 = vld [vmem:[%s904 + $0x10] sm:%s897]
                  %911 = vst [vmem:[%s905 + $0x8] sm:%s897] %v910
                  %v912 = vld [vmem:[%s904 + $0x18] sm:%s897]
                  %913 = vst [vmem:[%s905 + $0xc] sm:%s897] %v912
                  %v914 = vld [vmem:[%s904 + $0x20] sm:%s897]
                  %915 = vst [vmem:[%s905 + $0x10] sm:%s897] %v914
                  %v916 = vld [vmem:[%s904 + $0x28] sm:%s897]
                  %917 = vst [vmem:[%s905 + $0x14] sm:%s897] %v916
                  %v918 = vld [vmem:[%s904 + $0x30] sm:%s897]
                  %919 = vst [vmem:[%s905 + $0x18] sm:%s897] %v918
                  %v920 = vld [vmem:[%s904 + $0x38] sm:%s897]
                  %921 = vst [vmem:[%s905 + $0x1c] sm:%s897] %v920
                  %v922 = vld [vmem:[%s904 + $0x40] sm:%s897]
                  %923 = vst [vmem:[%s905 + $0x20] sm:%s897] %v922
                  %v924 = vld [vmem:[%s904 + $0x48] sm:%s897]
                  %925 = vst [vmem:[%s905 + $0x24] sm:%s897] %v924
                  %v926 = vld [vmem:[%s904 + $0x50] sm:%s897]
                  %927 = vst [vmem:[%s905 + $0x28] sm:%s897] %v926
                  %v928 = vld [vmem:[%s904 + $0x58] sm:%s897]
                  %929 = vst [vmem:[%s905 + $0x2c] sm:%s897] %v928
                  %v930 = vld [vmem:[%s904 + $0x60] sm:%s897]
                  %931 = vst [vmem:[%s905 + $0x30] sm:%s897] %v930
                  %v932 = vld [vmem:[%s904 + $0x68] sm:%s897]
                  %933 = vst [vmem:[%s905 + $0x34] sm:%s897] %v932
                  %v934 = vld [vmem:[%s904 + $0x70] sm:%s897]
                  %935 = vst [vmem:[%s905 + $0x38] sm:%s897] %v934
                  %v936 = vld [vmem:[%s904 + $0x78] sm:%s897]
                  %937 = vst [vmem:[%s905 + $0x3c] sm:%s897] %v936
                  %v938 = vld [vmem:[%s904 + $0x80] sm:%s897]
                  %939 = vst [vmem:[%s905 + $0x40] sm:%s897] %v938
                  %v940 = vld [vmem:[%s904 + $0x88] sm:%s897]
                  %941 = vst [vmem:[%s905 + $0x44] sm:%s897] %v940
                  %v942 = vld [vmem:[%s904 + $0x90] sm:%s897]
                  %943 = vst [vmem:[%s905 + $0x48] sm:%s897] %v942
                  %v944 = vld [vmem:[%s904 + $0x98] sm:%s897]
                  %945 = vst [vmem:[%s905 + $0x4c] sm:%s897] %v944
                  %v946 = vld [vmem:[%s904 + $0xa0] sm:%s897]
                  %947 = vst [vmem:[%s905 + $0x50] sm:%s897] %v946
                  %v948 = vld [vmem:[%s904 + $0xa8] sm:%s897]
                  %949 = vst [vmem:[%s905 + $0x54] sm:%s897] %v948
                  %v950 = vld [vmem:[%s904 + $0xb0] sm:%s897]
                  %951 = vst [vmem:[%s905 + $0x58] sm:%s897] %v950
                  %v952 = vld [vmem:[%s904 + $0xb8] sm:%s897]
                  %953 = vst [vmem:[%s905 + $0x5c] sm:%s897] %v952
                  %v954 = vld [vmem:[%s904 + $0xc0] sm:%s897]
                  %955 = vst [vmem:[%s905 + $0x60] sm:%s897] %v954
                  %v956 = vld [vmem:[%s904 + $0xc8] sm:%s897]
                  %957 = vst [vmem:[%s905 + $0x64] sm:%s897] %v956
                  %v958 = vld [vmem:[%s904 + $0xd0] sm:%s897]
                  %959 = vst [vmem:[%s905 + $0x68] sm:%s897] %v958
                  %v960 = vld [vmem:[%s904 + $0xd8] sm:%s897]
                  %961 = vst [vmem:[%s905 + $0x6c] sm:%s897] %v960
                  %v962 = vld [vmem:[%s904 + $0xe0] sm:%s897]
                  %963 = vst [vmem:[%s905 + $0x70] sm:%s897] %v962
                  %v964 = vld [vmem:[%s904 + $0xe8] sm:%s897]
                  %965 = vst [vmem:[%s905 + $0x74] sm:%s897] %v964
                  %v966 = vld [vmem:[%s904 + $0xf0] sm:%s897]
                  %967 = vst [vmem:[%s905 + $0x78] sm:%s897] %v966
                  %v968 = vld [vmem:[%s904 + $0xf8] sm:%s897]
                  %969 = vst [vmem:[%s905 + $0x7c] sm:%s897] %v968
                $region198: #{_lambda_.4} parent=185 // loop_footer
                  %s903 = sadd.s32 1, %s899
                $region199: #{_lambda_.4} parent=185 // loop_footer_branch
                  %898 = sbr.rel target = $region195
                $region200: #{_lambda_.4} parent=185 // loop_exit
                  _
              $region186: #{_lambda_.4} parent=170 // pred_fallthru
                _
            $region171: #{_lambda_.4} parent=166 // pred_fallthru
              _
            // Predicated region
            $region172: #{_lambda_.4} parent=166 // pred_check
              _
            $region173: #{_lambda_.4} parent=166 // pred_check_branch
              %811 = sbr.rel (0) target = $region175
            $region174: #{_lambda_.4} parent=166 // pred_region
              %s813 = ssub.s32 16, 1
              loop: start=0, step=1, limit=1
              $region176: #{_lambda_.4} parent=174 // loop_pre_header
                _
              $region177: #{_lambda_.4} parent=174 // loop_header
                %s815 = sphi 0, %s819
                %p816 = scmp.ge.s32.totalorder %s815, 1
                %s820 = sphi %s805, %s805
                %s821 = sphi %s803, %s803
              $region178: #{_lambda_.4} parent=174 // loop_header_branch
                %818 = sbr.rel (%p816) target = $region182
              $region179: #{_lambda_.4} parent=174 // loop_body
                %v822 = vld [vmem:[%s820] sm:%s813]
                %823 = vst [vmem:[%s821] sm:%s813] %v822
                %v824 = vld [vmem:[%s820 + $0x8] sm:%s813]
                %825 = vst [vmem:[%s821 + $0x4] sm:%s813] %v824
                %v826 = vld [vmem:[%s820 + $0x10] sm:%s813]
                %827 = vst [vmem:[%s821 + $0x8] sm:%s813] %v826
                %v828 = vld [vmem:[%s820 + $0x18] sm:%s813]
                %829 = vst [vmem:[%s821 + $0xc] sm:%s813] %v828
                %v830 = vld [vmem:[%s820 + $0x20] sm:%s813]
                %831 = vst [vmem:[%s821 + $0x10] sm:%s813] %v830
                %v832 = vld [vmem:[%s820 + $0x28] sm:%s813]
                %833 = vst [vmem:[%s821 + $0x14] sm:%s813] %v832
                %v834 = vld [vmem:[%s820 + $0x30] sm:%s813]
                %835 = vst [vmem:[%s821 + $0x18] sm:%s813] %v834
                %v836 = vld [vmem:[%s820 + $0x38] sm:%s813]
                %837 = vst [vmem:[%s821 + $0x1c] sm:%s813] %v836
                %v838 = vld [vmem:[%s820 + $0x40] sm:%s813]
                %839 = vst [vmem:[%s821 + $0x20] sm:%s813] %v838
                %v840 = vld [vmem:[%s820 + $0x48] sm:%s813]
                %841 = vst [vmem:[%s821 + $0x24] sm:%s813] %v840
                %v842 = vld [vmem:[%s820 + $0x50] sm:%s813]
                %843 = vst [vmem:[%s821 + $0x28] sm:%s813] %v842
                %v844 = vld [vmem:[%s820 + $0x58] sm:%s813]
                %845 = vst [vmem:[%s821 + $0x2c] sm:%s813] %v844
                %v846 = vld [vmem:[%s820 + $0x60] sm:%s813]
                %847 = vst [vmem:[%s821 + $0x30] sm:%s813] %v846
                %v848 = vld [vmem:[%s820 + $0x68] sm:%s813]
                %849 = vst [vmem:[%s821 + $0x34] sm:%s813] %v848
                %v850 = vld [vmem:[%s820 + $0x70] sm:%s813]
                %851 = vst [vmem:[%s821 + $0x38] sm:%s813] %v850
                %v852 = vld [vmem:[%s820 + $0x78] sm:%s813]
                %853 = vst [vmem:[%s821 + $0x3c] sm:%s813] %v852
                %v854 = vld [vmem:[%s820 + $0x80] sm:%s813]
                %855 = vst [vmem:[%s821 + $0x40] sm:%s813] %v854
                %v856 = vld [vmem:[%s820 + $0x88] sm:%s813]
                %857 = vst [vmem:[%s821 + $0x44] sm:%s813] %v856
                %v858 = vld [vmem:[%s820 + $0x90] sm:%s813]
                %859 = vst [vmem:[%s821 + $0x48] sm:%s813] %v858
                %v860 = vld [vmem:[%s820 + $0x98] sm:%s813]
                %861 = vst [vmem:[%s821 + $0x4c] sm:%s813] %v860
                %v862 = vld [vmem:[%s820 + $0xa0] sm:%s813]
                %863 = vst [vmem:[%s821 + $0x50] sm:%s813] %v862
                %v864 = vld [vmem:[%s820 + $0xa8] sm:%s813]
                %865 = vst [vmem:[%s821 + $0x54] sm:%s813] %v864
                %v866 = vld [vmem:[%s820 + $0xb0] sm:%s813]
                %867 = vst [vmem:[%s821 + $0x58] sm:%s813] %v866
                %v868 = vld [vmem:[%s820 + $0xb8] sm:%s813]
                %869 = vst [vmem:[%s821 + $0x5c] sm:%s813] %v868
                %v870 = vld [vmem:[%s820 + $0xc0] sm:%s813]
                %871 = vst [vmem:[%s821 + $0x60] sm:%s813] %v870
                %v872 = vld [vmem:[%s820 + $0xc8] sm:%s813]
                %873 = vst [vmem:[%s821 + $0x64] sm:%s813] %v872
                %v874 = vld [vmem:[%s820 + $0xd0] sm:%s813]
                %875 = vst [vmem:[%s821 + $0x68] sm:%s813] %v874
                %v876 = vld [vmem:[%s820 + $0xd8] sm:%s813]
                %877 = vst [vmem:[%s821 + $0x6c] sm:%s813] %v876
                %v878 = vld [vmem:[%s820 + $0xe0] sm:%s813]
                %879 = vst [vmem:[%s821 + $0x70] sm:%s813] %v878
                %v880 = vld [vmem:[%s820 + $0xe8] sm:%s813]
                %881 = vst [vmem:[%s821 + $0x74] sm:%s813] %v880
                %v882 = vld [vmem:[%s820 + $0xf0] sm:%s813]
                %883 = vst [vmem:[%s821 + $0x78] sm:%s813] %v882
                %v884 = vld [vmem:[%s820 + $0xf8] sm:%s813]
                %885 = vst [vmem:[%s821 + $0x7c] sm:%s813] %v884
              $region180: #{_lambda_.4} parent=174 // loop_footer
                %s819 = sadd.s32 1, %s815
              $region181: #{_lambda_.4} parent=174 // loop_footer_branch
                %814 = sbr.rel target = $region177
              $region182: #{_lambda_.4} parent=174 // loop_exit
                _
            $region175: #{_lambda_.4} parent=166 // pred_fallthru
              _
          $region167: #{_lambda_.4} parent=162 // pred_fallthru
            _
          %970 = vnop
        $region163: #{_lambda_.4} parent=27 // pred_fallthru
          _
      $region28: #{_lambda_.4} parent=5 // pred_fallthru
        _
      %p971 = scmp.le.s32.totalorder 1, %s16
      %p972 = scmp.lt.s32.totalorder %s16, 5
      %p973 = pnand %p971, %p972
      %p974 = pneg %p973
      // Predicated region
      $region201: #{_lambda_.4} parent=5 // pred_check
        _
      $region202: #{_lambda_.4} parent=5 // pred_check_branch
        %976 = sbr.rel (%p973) target = $region204
      $region203: #{_lambda_.4} parent=5 // pred_region
        %s977 = ssub.s32 %s16, 1
        // Predicated region
        $region205: #{_lambda_.4} parent=203 // pred_check
          %p978 = pneg %p49
        $region206: #{_lambda_.4} parent=203 // pred_check_branch
          %980 = sbr.rel (%p978) target = $region208
        $region207: #{_lambda_.4} parent=203 // pred_region
          %982 = dma.done [#allocation5], 16
        $region208: #{_lambda_.4} parent=203 // pred_fallthru
          _
        %s983 = sand.u32 %s158, 1
        %s984 = sand.u32 %s158, 1
        %s985 = smul.addr %s984, 64
        %s986 = scalar_lea.vmem [#allocation6], %s985
        // Predicated region
        $region209: #{_lambda_.4} parent=203 // pred_check
          %p987 = pneg %p171
        $region210: #{_lambda_.4} parent=203 // pred_check_branch
          %989 = sbr.rel (%p987) target = $region212
        $region211: #{_lambda_.4} parent=203 // pred_region
          _
        $region212: #{_lambda_.4} parent=203 // pred_fallthru
          _
        %s990 = sand.u32 %s186, 1
        %s991 = sand.u32 %s186, 1
        %s992 = smul.addr %s991, 128
        %s993 = scalar_lea.vmem [#allocation7], %s992
        // Predicated region
        $region213: #{_lambda_.4} parent=203 // pred_check
          %p994 = pneg %p199
        $region214: #{_lambda_.4} parent=203 // pred_check_branch
          %996 = sbr.rel (%p994) target = $region216
        $region215: #{_lambda_.4} parent=203 // pred_region
          _
        $region216: #{_lambda_.4} parent=203 // pred_fallthru
          _
        %s997 = sand.u32 %s214, 1
        %s998 = sand.u32 %s214, 1
        %s999 = smul.addr %s998, 128
        %s1000 = scalar_lea.vmem [#allocation8], %s999
        // Predicated region
        $region217: #{_lambda_.4} parent=203 // pred_check
          %p1001 = pneg %p227
        $region218: #{_lambda_.4} parent=203 // pred_check_branch
          %1003 = sbr.rel (%p1001) target = $region220
        $region219: #{_lambda_.4} parent=203 // pred_region
          _
        $region220: #{_lambda_.4} parent=203 // pred_fallthru
          _
        %s1004 = sand.u32 %s240, 1
        %s1005 = sand.u32 %s240, 1
        %s1006 = smul.addr %s1005, 128
        %s1007 = scalar_lea.vmem [#allocation9], %s1006
        // Predicated region
        $region221: #{_lambda_.4} parent=203 // pred_check
          %p1008 = pneg %p253
        $region222: #{_lambda_.4} parent=203 // pred_check_branch
          %1010 = sbr.rel (%p1008) target = $region224
        $region223: #{_lambda_.4} parent=203 // pred_region
          _
        $region224: #{_lambda_.4} parent=203 // pred_fallthru
          _
        %1011 = sfence
        %p1012 = pneg %p49
        %p1013 = pneg %p46
        %s1014 = smul.u32 16, %s26
        %p1015 = scmp.lt.s32.totalorder %s1014, 31
        %s1016 = scalar_select %p1015, %s1014, 31
        %s1017 = smul.addr %s1016, 4
        %s1018 = scalar_lea.vmem %s1, %s1017
        %p1019 = pneg %p75
        %p1020 = pneg %p72
        %s1021 = smul.u32 16, %s26
        %p1022 = scmp.lt.s32.totalorder %s1021, 31
        %s1023 = scalar_select %p1022, %s1021, 31
        %s1024 = smul.addr %s1023, 4
        %s1025 = scalar_lea.vmem %s2, %s1024
        %p1026 = pneg %p101
        %p1027 = pneg %p98
        %p1028 = pneg %p122
        %p1029 = pneg %p119
        %p1030 = pneg %p143
        %p1031 = pneg %p140
        %s1032 = sand.u32 %s158, 1
        %s1033 = sand.u32 %s158, 1
        %s1034 = smul.addr %s1033, 64
        %s1035 = scalar_lea.vmem [#allocation6], %s1034
        %p1036 = pneg %p171
        %p1037 = pneg %p168
        %s1038 = sand.u32 %s186, 1
        %s1039 = sand.u32 %s186, 1
        %s1040 = smul.addr %s1039, 128
        %s1041 = scalar_lea.vmem [#allocation7], %s1040
        %p1042 = pneg %p199
        %p1043 = pneg %p196
        %s1044 = sand.u32 %s214, 1
        %s1045 = sand.u32 %s214, 1
        %s1046 = smul.addr %s1045, 128
        %s1047 = scalar_lea.vmem [#allocation8], %s1046
        %p1048 = pneg %p227
        %p1049 = pneg %p224
        %s1050 = sand.u32 %s240, 1
        %s1051 = sand.u32 %s240, 1
        %s1052 = smul.addr %s1051, 128
        %s1053 = scalar_lea.vmem [#allocation9], %s1052
        %p1054 = pneg %p253
        %p1055 = pneg %p250
        %p1056 = pneg %p281
        %p1057 = pneg %p278
        %s1058 = sand.u32 %s268, 1
        %s1059 = sand.u32 %s268, 1
        %s1060 = smul.addr %s1059, 64
        %s1061 = scalar_lea.vmem [#allocation10], %s1060
        %s1062 = smul.u32 16, %s26
        %p1063 = scmp.lt.s32.totalorder %s1062, 31
        %s1064 = scalar_select %p1063, %s1062, 31
        %s1065 = smul.addr %s1064, 4
        %s1066 = scalar_lea.vmem %s1, %s1065
        %s1067 = smul.u32 16, %s26
        %s1068 = smul.u32 16, %s26
        %p1069 = scmp.lt.s32.totalorder %s1068, 31
        %s1070 = scalar_select %p1069, %s1068, 31
        %s1071 = smul.addr %s1070, 4
        %s1072 = scalar_lea.vmem %s2, %s1071
        %s1073 = smul.u32 16, %s26
        %s1074 = smul.u32 16, %s26
        %s1075 = sadd.s32 %s25, 2
        %s1076 = sadd.s32 %s25, 4
        %s1077 = smul.u32 16, %s26
        %p1078 = scmp.eq.s32.totalorder %s26, 0
        // Predicated region
        $region225: #{_lambda_.4} parent=203 // pred_check
          %p1079 = pneg %p1078
        $region226: #{_lambda_.4} parent=203 // pred_check_branch
          %1081 = sbr.rel (%p1079) target = $region228
        $region227: #{_lambda_.4} parent=203 // pred_region
          %v1082 = vld [vmem:[%s993] sm:$0xf]
          %v1083 = vld [vmem:[%s993 + $0x4] sm:$0xf]
          %v1084 = vld [vmem:[%s993 + $0x8] sm:$0xf]
          %v1085 = vld [vmem:[%s993 + $0xc] sm:$0xf]
          %v1086 = vld [vmem:[%s993 + $0x10] sm:$0xf]
          %v1087 = vld [vmem:[%s993 + $0x14] sm:$0xf]
          %v1088 = vld [vmem:[%s993 + $0x18] sm:$0xf]
          %v1089 = vld [vmem:[%s993 + $0x1c] sm:$0xf]
          %v1090 = vld [vmem:[%s993 + $0x20] sm:$0xf]
          %v1091 = vld [vmem:[%s993 + $0x24] sm:$0xf]
          %v1092 = vld [vmem:[%s993 + $0x28] sm:$0xf]
          %v1093 = vld [vmem:[%s993 + $0x2c] sm:$0xf]
          %v1094 = vld [vmem:[%s993 + $0x30] sm:$0xf]
          %v1095 = vld [vmem:[%s993 + $0x34] sm:$0xf]
          %v1096 = vld [vmem:[%s993 + $0x38] sm:$0xf]
          %v1097 = vld [vmem:[%s993 + $0x3c] sm:$0xf]
          %v1098 = vld [vmem:[%s993 + $0x40] sm:$0xf]
          %v1099 = vld [vmem:[%s993 + $0x44] sm:$0xf]
          %v1100 = vld [vmem:[%s993 + $0x48] sm:$0xf]
          %v1101 = vld [vmem:[%s993 + $0x4c] sm:$0xf]
          %v1102 = vld [vmem:[%s993 + $0x50] sm:$0xf]
          %v1103 = vld [vmem:[%s993 + $0x54] sm:$0xf]
          %v1104 = vld [vmem:[%s993 + $0x58] sm:$0xf]
          %v1105 = vld [vmem:[%s993 + $0x5c] sm:$0xf]
          %v1106 = vld [vmem:[%s993 + $0x60] sm:$0xf]
          %v1107 = vld [vmem:[%s993 + $0x64] sm:$0xf]
          %v1108 = vld [vmem:[%s993 + $0x68] sm:$0xf]
          %v1109 = vld [vmem:[%s993 + $0x6c] sm:$0xf]
          %v1110 = vld [vmem:[%s993 + $0x70] sm:$0xf]
          %v1111 = vld [vmem:[%s993 + $0x74] sm:$0xf]
          %v1112 = vld [vmem:[%s993 + $0x78] sm:$0xf]
          %v1113 = vld [vmem:[%s993 + $0x7c] sm:$0xf]
          %v1114 = vld [vmem:[%s3] sm:$0xf]
          %v1115 = vld [vmem:[%s3 + $0x4] sm:$0xf]
          %v1116 = vld [vmem:[%s3 + $0x8] sm:$0xf]
          %v1117 = vld [vmem:[%s3 + $0xc] sm:$0xf]
          %v1118 = vld [vmem:[%s3 + $0x10] sm:$0xf]
          %v1119 = vld [vmem:[%s3 + $0x14] sm:$0xf]
          %v1120 = vld [vmem:[%s3 + $0x18] sm:$0xf]
          %v1121 = vld [vmem:[%s3 + $0x1c] sm:$0xf]
          %v1122 = vld [vmem:[%s3 + $0x20] sm:$0xf]
          %v1123 = vld [vmem:[%s3 + $0x24] sm:$0xf]
          %v1124 = vld [vmem:[%s3 + $0x28] sm:$0xf]
          %v1125 = vld [vmem:[%s3 + $0x2c] sm:$0xf]
          %v1126 = vld [vmem:[%s3 + $0x30] sm:$0xf]
          %v1127 = vld [vmem:[%s3 + $0x34] sm:$0xf]
          %v1128 = vld [vmem:[%s3 + $0x38] sm:$0xf]
          %v1129 = vld [vmem:[%s3 + $0x3c] sm:$0xf]
          %v1130 = vld [vmem:[%s3 + $0x40] sm:$0xf]
          %v1131 = vld [vmem:[%s3 + $0x44] sm:$0xf]
          %v1132 = vld [vmem:[%s3 + $0x48] sm:$0xf]
          %v1133 = vld [vmem:[%s3 + $0x4c] sm:$0xf]
          %v1134 = vld [vmem:[%s3 + $0x50] sm:$0xf]
          %v1135 = vld [vmem:[%s3 + $0x54] sm:$0xf]
          %v1136 = vld [vmem:[%s3 + $0x58] sm:$0xf]
          %v1137 = vld [vmem:[%s3 + $0x5c] sm:$0xf]
          %v1138 = vld [vmem:[%s3 + $0x60] sm:$0xf]
          %v1139 = vld [vmem:[%s3 + $0x64] sm:$0xf]
          %v1140 = vld [vmem:[%s3 + $0x68] sm:$0xf]
          %v1141 = vld [vmem:[%s3 + $0x6c] sm:$0xf]
          %v1142 = vld [vmem:[%s3 + $0x70] sm:$0xf]
          %v1143 = vld [vmem:[%s3 + $0x74] sm:$0xf]
          %v1144 = vld [vmem:[%s3 + $0x78] sm:$0xf]
          %v1145 = vld [vmem:[%s3 + $0x7c] sm:$0xf]
          %v1146 = vld [vmem:[%s4] sm:$0xf]
          %v1147 = vld [vmem:[%s4 + $0x4] sm:$0xf]
          %v1148 = vld [vmem:[%s4 + $0x8] sm:$0xf]
          %v1149 = vld [vmem:[%s4 + $0xc] sm:$0xf]
          %v1150 = vld [vmem:[%s4 + $0x10] sm:$0xf]
          %v1151 = vld [vmem:[%s4 + $0x14] sm:$0xf]
          %v1152 = vld [vmem:[%s4 + $0x18] sm:$0xf]
          %v1153 = vld [vmem:[%s4 + $0x1c] sm:$0xf]
          %v1154 = vld [vmem:[%s4 + $0x20] sm:$0xf]
          %v1155 = vld [vmem:[%s4 + $0x24] sm:$0xf]
          %v1156 = vld [vmem:[%s4 + $0x28] sm:$0xf]
          %v1157 = vld [vmem:[%s4 + $0x2c] sm:$0xf]
          %v1158 = vld [vmem:[%s4 + $0x30] sm:$0xf]
          %v1159 = vld [vmem:[%s4 + $0x34] sm:$0xf]
          %v1160 = vld [vmem:[%s4 + $0x38] sm:$0xf]
          %v1161 = vld [vmem:[%s4 + $0x3c] sm:$0xf]
          %v1162 = vld [vmem:[%s4 + $0x40] sm:$0xf]
          %v1163 = vld [vmem:[%s4 + $0x44] sm:$0xf]
          %v1164 = vld [vmem:[%s4 + $0x48] sm:$0xf]
          %v1165 = vld [vmem:[%s4 + $0x4c] sm:$0xf]
          %v1166 = vld [vmem:[%s4 + $0x50] sm:$0xf]
          %v1167 = vld [vmem:[%s4 + $0x54] sm:$0xf]
          %v1168 = vld [vmem:[%s4 + $0x58] sm:$0xf]
          %v1169 = vld [vmem:[%s4 + $0x5c] sm:$0xf]
          %v1170 = vld [vmem:[%s4 + $0x60] sm:$0xf]
          %v1171 = vld [vmem:[%s4 + $0x64] sm:$0xf]
          %v1172 = vld [vmem:[%s4 + $0x68] sm:$0xf]
          %v1173 = vld [vmem:[%s4 + $0x6c] sm:$0xf]
          %v1174 = vld [vmem:[%s4 + $0x70] sm:$0xf]
          %v1175 = vld [vmem:[%s4 + $0x74] sm:$0xf]
          %v1176 = vld [vmem:[%s4 + $0x78] sm:$0xf]
          %v1177 = vld [vmem:[%s4 + $0x7c] sm:$0xf]
          %v1178 = vunpack.c.l.bf16 %v1082
          %v1179 = vunpack.c.l.bf16 %v1083
          %v1180 = vunpack.c.l.bf16 %v1084
          %v1181 = vunpack.c.l.bf16 %v1085
          %v1182 = vunpack.c.l.bf16 %v1086
          %v1183 = vunpack.c.l.bf16 %v1087
          %v1184 = vunpack.c.l.bf16 %v1088
          %v1185 = vunpack.c.l.bf16 %v1089
          %v1186 = vunpack.c.l.bf16 %v1090
          %v1187 = vunpack.c.l.bf16 %v1091
          %v1188 = vunpack.c.l.bf16 %v1092
          %v1189 = vunpack.c.l.bf16 %v1093
          %v1190 = vunpack.c.l.bf16 %v1094
          %v1191 = vunpack.c.l.bf16 %v1095
          %v1192 = vunpack.c.l.bf16 %v1096
          %v1193 = vunpack.c.l.bf16 %v1097
          %v1194 = vunpack.c.l.bf16 %v1098
          %v1195 = vunpack.c.l.bf16 %v1099
          %v1196 = vunpack.c.l.bf16 %v1100
          %v1197 = vunpack.c.l.bf16 %v1101
          %v1198 = vunpack.c.l.bf16 %v1102
          %v1199 = vunpack.c.l.bf16 %v1103
          %v1200 = vunpack.c.l.bf16 %v1104
          %v1201 = vunpack.c.l.bf16 %v1105
          %v1202 = vunpack.c.l.bf16 %v1106
          %v1203 = vunpack.c.l.bf16 %v1107
          %v1204 = vunpack.c.l.bf16 %v1108
          %v1205 = vunpack.c.l.bf16 %v1109
          %v1206 = vunpack.c.l.bf16 %v1110
          %v1207 = vunpack.c.l.bf16 %v1111
          %v1208 = vunpack.c.l.bf16 %v1112
          %v1209 = vunpack.c.l.bf16 %v1113
          %v1210 = vmul.f32 %v1178, %v1178
          %v1211 = vmul.f32 %v1179, %v1179
          %v1212 = vmul.f32 %v1180, %v1180
          %v1213 = vmul.f32 %v1181, %v1181
          %v1214 = vmul.f32 %v1182, %v1182
          %v1215 = vmul.f32 %v1183, %v1183
          %v1216 = vmul.f32 %v1184, %v1184
          %v1217 = vmul.f32 %v1185, %v1185
          %v1218 = vmul.f32 %v1186, %v1186
          %v1219 = vmul.f32 %v1187, %v1187
          %v1220 = vmul.f32 %v1188, %v1188
          %v1221 = vmul.f32 %v1189, %v1189
          %v1222 = vmul.f32 %v1190, %v1190
          %v1223 = vmul.f32 %v1191, %v1191
          %v1224 = vmul.f32 %v1192, %v1192
          %v1225 = vmul.f32 %v1193, %v1193
          %v1226 = vmul.f32 %v1194, %v1194
          %v1227 = vmul.f32 %v1195, %v1195
          %v1228 = vmul.f32 %v1196, %v1196
          %v1229 = vmul.f32 %v1197, %v1197
          %v1230 = vmul.f32 %v1198, %v1198
          %v1231 = vmul.f32 %v1199, %v1199
          %v1232 = vmul.f32 %v1200, %v1200
          %v1233 = vmul.f32 %v1201, %v1201
          %v1234 = vmul.f32 %v1202, %v1202
          %v1235 = vmul.f32 %v1203, %v1203
          %v1236 = vmul.f32 %v1204, %v1204
          %v1237 = vmul.f32 %v1205, %v1205
          %v1238 = vmul.f32 %v1206, %v1206
          %v1239 = vmul.f32 %v1207, %v1207
          %v1240 = vmul.f32 %v1208, %v1208
          %v1241 = vmul.f32 %v1209, %v1209
          %1242 = vadd.xlane.f32.xlu0 %v1210
          %v1243 = vpop.xlane.xlu0 %1242
          %1244 = vadd.xlane.f32.xlu0 %v1211
          %v1245 = vpop.xlane.xlu0 %1244
          %1246 = vadd.xlane.f32.xlu0 %v1212
          %v1247 = vpop.xlane.xlu0 %1246
          %1248 = vadd.xlane.f32.xlu0 %v1213
          %v1249 = vpop.xlane.xlu0 %1248
          %1250 = vadd.xlane.f32.xlu0 %v1214
          %v1251 = vpop.xlane.xlu0 %1250
          %1252 = vadd.xlane.f32.xlu0 %v1215
          %v1253 = vpop.xlane.xlu0 %1252
          %1254 = vadd.xlane.f32.xlu0 %v1216
          %v1255 = vpop.xlane.xlu0 %1254
          %1256 = vadd.xlane.f32.xlu0 %v1217
          %v1257 = vpop.xlane.xlu0 %1256
          %1258 = vadd.xlane.f32.xlu0 %v1218
          %v1259 = vpop.xlane.xlu0 %1258
          %1260 = vadd.xlane.f32.xlu0 %v1219
          %v1261 = vpop.xlane.xlu0 %1260
          %1262 = vadd.xlane.f32.xlu0 %v1220
          %v1263 = vpop.xlane.xlu0 %1262
          %1264 = vadd.xlane.f32.xlu0 %v1221
          %v1265 = vpop.xlane.xlu0 %1264
          %1266 = vadd.xlane.f32.xlu0 %v1222
          %v1267 = vpop.xlane.xlu0 %1266
          %1268 = vadd.xlane.f32.xlu0 %v1223
          %v1269 = vpop.xlane.xlu0 %1268
          %1270 = vadd.xlane.f32.xlu0 %v1224
          %v1271 = vpop.xlane.xlu0 %1270
          %1272 = vadd.xlane.f32.xlu0 %v1225
          %v1273 = vpop.xlane.xlu0 %1272
          %1274 = vadd.xlane.f32.xlu0 %v1226
          %v1275 = vpop.xlane.xlu0 %1274
          %1276 = vadd.xlane.f32.xlu0 %v1227
          %v1277 = vpop.xlane.xlu0 %1276
          %1278 = vadd.xlane.f32.xlu0 %v1228
          %v1279 = vpop.xlane.xlu0 %1278
          %1280 = vadd.xlane.f32.xlu0 %v1229
          %v1281 = vpop.xlane.xlu0 %1280
          %1282 = vadd.xlane.f32.xlu0 %v1230
          %v1283 = vpop.xlane.xlu0 %1282
          %1284 = vadd.xlane.f32.xlu0 %v1231
          %v1285 = vpop.xlane.xlu0 %1284
          %1286 = vadd.xlane.f32.xlu0 %v1232
          %v1287 = vpop.xlane.xlu0 %1286
          %1288 = vadd.xlane.f32.xlu0 %v1233
          %v1289 = vpop.xlane.xlu0 %1288
          %1290 = vadd.xlane.f32.xlu0 %v1234
          %v1291 = vpop.xlane.xlu0 %1290
          %1292 = vadd.xlane.f32.xlu0 %v1235
          %v1293 = vpop.xlane.xlu0 %1292
          %1294 = vadd.xlane.f32.xlu0 %v1236
          %v1295 = vpop.xlane.xlu0 %1294
          %1296 = vadd.xlane.f32.xlu0 %v1237
          %v1297 = vpop.xlane.xlu0 %1296
          %1298 = vadd.xlane.f32.xlu0 %v1238
          %v1299 = vpop.xlane.xlu0 %1298
          %1300 = vadd.xlane.f32.xlu0 %v1239
          %v1301 = vpop.xlane.xlu0 %1300
          %1302 = vadd.xlane.f32.xlu0 %v1240
          %v1303 = vpop.xlane.xlu0 %1302
          %1304 = vadd.xlane.f32.xlu0 %v1241
          %v1305 = vpop.xlane.xlu0 %1304
          %v1306 = vrcp.pop 128.0
          %v1307 = vmul.f32 128.0, %v1306
          %v1308 = vsub.f32 1.0, %v1307
          %v1309 = vmul.f32 %v1306, %v1308
          %v1310 = vadd.f32 %v1306, %v1309
          %vm1311 = vweird.f32 %v1306
          %v1312 = vsel %vm1311, %v1306, %v1310
          %v1313 = vmul.f32 %v1243, %v1312
          %v1314 = vmul.f32 %v1245, %v1312
          %v1315 = vmul.f32 %v1247, %v1312
          %v1316 = vmul.f32 %v1249, %v1312
          %v1317 = vmul.f32 %v1251, %v1312
          %v1318 = vmul.f32 %v1253, %v1312
          %v1319 = vmul.f32 %v1255, %v1312
          %v1320 = vmul.f32 %v1257, %v1312
          %v1321 = vmul.f32 %v1259, %v1312
          %v1322 = vmul.f32 %v1261, %v1312
          %v1323 = vmul.f32 %v1263, %v1312
          %v1324 = vmul.f32 %v1265, %v1312
          %v1325 = vmul.f32 %v1267, %v1312
          %v1326 = vmul.f32 %v1269, %v1312
          %v1327 = vmul.f32 %v1271, %v1312
          %v1328 = vmul.f32 %v1273, %v1312
          %v1329 = vmul.f32 %v1275, %v1312
          %v1330 = vmul.f32 %v1277, %v1312
          %v1331 = vmul.f32 %v1279, %v1312
          %v1332 = vmul.f32 %v1281, %v1312
          %v1333 = vmul.f32 %v1283, %v1312
          %v1334 = vmul.f32 %v1285, %v1312
          %v1335 = vmul.f32 %v1287, %v1312
          %v1336 = vmul.f32 %v1289, %v1312
          %v1337 = vmul.f32 %v1291, %v1312
          %v1338 = vmul.f32 %v1293, %v1312
          %v1339 = vmul.f32 %v1295, %v1312
          %v1340 = vmul.f32 %v1297, %v1312
          %v1341 = vmul.f32 %v1299, %v1312
          %v1342 = vmul.f32 %v1301, %v1312
          %v1343 = vmul.f32 %v1303, %v1312
          %v1344 = vmul.f32 %v1305, %v1312
          %v1345 = vadd.f32 %v1313, 1.1920929e-07
          %v1346 = vadd.f32 %v1314, 1.1920929e-07
          %v1347 = vadd.f32 %v1315, 1.1920929e-07
          %v1348 = vadd.f32 %v1316, 1.1920929e-07
          %v1349 = vadd.f32 %v1317, 1.1920929e-07
          %v1350 = vadd.f32 %v1318, 1.1920929e-07
          %v1351 = vadd.f32 %v1319, 1.1920929e-07
          %v1352 = vadd.f32 %v1320, 1.1920929e-07
          %v1353 = vadd.f32 %v1321, 1.1920929e-07
          %v1354 = vadd.f32 %v1322, 1.1920929e-07
          %v1355 = vadd.f32 %v1323, 1.1920929e-07
          %v1356 = vadd.f32 %v1324, 1.1920929e-07
          %v1357 = vadd.f32 %v1325, 1.1920929e-07
          %v1358 = vadd.f32 %v1326, 1.1920929e-07
          %v1359 = vadd.f32 %v1327, 1.1920929e-07
          %v1360 = vadd.f32 %v1328, 1.1920929e-07
          %v1361 = vadd.f32 %v1329, 1.1920929e-07
          %v1362 = vadd.f32 %v1330, 1.1920929e-07
          %v1363 = vadd.f32 %v1331, 1.1920929e-07
          %v1364 = vadd.f32 %v1332, 1.1920929e-07
          %v1365 = vadd.f32 %v1333, 1.1920929e-07
          %v1366 = vadd.f32 %v1334, 1.1920929e-07
          %v1367 = vadd.f32 %v1335, 1.1920929e-07
          %v1368 = vadd.f32 %v1336, 1.1920929e-07
          %v1369 = vadd.f32 %v1337, 1.1920929e-07
          %v1370 = vadd.f32 %v1338, 1.1920929e-07
          %v1371 = vadd.f32 %v1339, 1.1920929e-07
          %v1372 = vadd.f32 %v1340, 1.1920929e-07
          %v1373 = vadd.f32 %v1341, 1.1920929e-07
          %v1374 = vadd.f32 %v1342, 1.1920929e-07
          %v1375 = vadd.f32 %v1343, 1.1920929e-07
          %v1376 = vadd.f32 %v1344, 1.1920929e-07
          %v1377 = vrsqrt.pop %v1345
          %v1378 = vmul.f32 %v1377, %v1345
          %v1379 = vmul.f32 %v1378, %v1377
          %v1380 = vmul.f32 0.5, %v1379
          %v1381 = vsub.f32 1.5, %v1380
          %v1382 = vmul.f32 %v1377, %v1381
          %vm1383 = vweird.f32 %v1345
          %vm1384 = vweird.f32 %v1377
          %vm1385 = vmor %vm1383, %vm1384
          %v1386 = vsel %vm1385, %v1377, %v1382
          %v1387 = vrsqrt.pop %v1346
          %v1388 = vmul.f32 %v1387, %v1346
          %v1389 = vmul.f32 %v1388, %v1387
          %v1390 = vmul.f32 0.5, %v1389
          %v1391 = vsub.f32 1.5, %v1390
          %v1392 = vmul.f32 %v1387, %v1391
          %vm1393 = vweird.f32 %v1346
          %vm1394 = vweird.f32 %v1387
          %vm1395 = vmor %vm1393, %vm1394
          %v1396 = vsel %vm1395, %v1387, %v1392
          %v1397 = vrsqrt.pop %v1347
          %v1398 = vmul.f32 %v1397, %v1347
          %v1399 = vmul.f32 %v1398, %v1397
          %v1400 = vmul.f32 0.5, %v1399
          %v1401 = vsub.f32 1.5, %v1400
          %v1402 = vmul.f32 %v1397, %v1401
          %vm1403 = vweird.f32 %v1347
          %vm1404 = vweird.f32 %v1397
          %vm1405 = vmor %vm1403, %vm1404
          %v1406 = vsel %vm1405, %v1397, %v1402
          %v1407 = vrsqrt.pop %v1348
          %v1408 = vmul.f32 %v1407, %v1348
          %v1409 = vmul.f32 %v1408, %v1407
          %v1410 = vmul.f32 0.5, %v1409
          %v1411 = vsub.f32 1.5, %v1410
          %v1412 = vmul.f32 %v1407, %v1411
          %vm1413 = vweird.f32 %v1348
          %vm1414 = vweird.f32 %v1407
          %vm1415 = vmor %vm1413, %vm1414
          %v1416 = vsel %vm1415, %v1407, %v1412
          %v1417 = vrsqrt.pop %v1349
          %v1418 = vmul.f32 %v1417, %v1349
          %v1419 = vmul.f32 %v1418, %v1417
          %v1420 = vmul.f32 0.5, %v1419
          %v1421 = vsub.f32 1.5, %v1420
          %v1422 = vmul.f32 %v1417, %v1421
          %vm1423 = vweird.f32 %v1349
          %vm1424 = vweird.f32 %v1417
          %vm1425 = vmor %vm1423, %vm1424
          %v1426 = vsel %vm1425, %v1417, %v1422
          %v1427 = vrsqrt.pop %v1350
          %v1428 = vmul.f32 %v1427, %v1350
          %v1429 = vmul.f32 %v1428, %v1427
          %v1430 = vmul.f32 0.5, %v1429
          %v1431 = vsub.f32 1.5, %v1430
          %v1432 = vmul.f32 %v1427, %v1431
          %vm1433 = vweird.f32 %v1350
          %vm1434 = vweird.f32 %v1427
          %vm1435 = vmor %vm1433, %vm1434
          %v1436 = vsel %vm1435, %v1427, %v1432
          %v1437 = vrsqrt.pop %v1351
          %v1438 = vmul.f32 %v1437, %v1351
          %v1439 = vmul.f32 %v1438, %v1437
          %v1440 = vmul.f32 0.5, %v1439
          %v1441 = vsub.f32 1.5, %v1440
          %v1442 = vmul.f32 %v1437, %v1441
          %vm1443 = vweird.f32 %v1351
          %vm1444 = vweird.f32 %v1437
          %vm1445 = vmor %vm1443, %vm1444
          %v1446 = vsel %vm1445, %v1437, %v1442
          %v1447 = vrsqrt.pop %v1352
          %v1448 = vmul.f32 %v1447, %v1352
          %v1449 = vmul.f32 %v1448, %v1447
          %v1450 = vmul.f32 0.5, %v1449
          %v1451 = vsub.f32 1.5, %v1450
          %v1452 = vmul.f32 %v1447, %v1451
          %vm1453 = vweird.f32 %v1352
          %vm1454 = vweird.f32 %v1447
          %vm1455 = vmor %vm1453, %vm1454
          %v1456 = vsel %vm1455, %v1447, %v1452
          %v1457 = vrsqrt.pop %v1353
          %v1458 = vmul.f32 %v1457, %v1353
          %v1459 = vmul.f32 %v1458, %v1457
          %v1460 = vmul.f32 0.5, %v1459
          %v1461 = vsub.f32 1.5, %v1460
          %v1462 = vmul.f32 %v1457, %v1461
          %vm1463 = vweird.f32 %v1353
          %vm1464 = vweird.f32 %v1457
          %vm1465 = vmor %vm1463, %vm1464
          %v1466 = vsel %vm1465, %v1457, %v1462
          %v1467 = vrsqrt.pop %v1354
          %v1468 = vmul.f32 %v1467, %v1354
          %v1469 = vmul.f32 %v1468, %v1467
          %v1470 = vmul.f32 0.5, %v1469
          %v1471 = vsub.f32 1.5, %v1470
          %v1472 = vmul.f32 %v1467, %v1471
          %vm1473 = vweird.f32 %v1354
          %vm1474 = vweird.f32 %v1467
          %vm1475 = vmor %vm1473, %vm1474
          %v1476 = vsel %vm1475, %v1467, %v1472
          %v1477 = vrsqrt.pop %v1355
          %v1478 = vmul.f32 %v1477, %v1355
          %v1479 = vmul.f32 %v1478, %v1477
          %v1480 = vmul.f32 0.5, %v1479
          %v1481 = vsub.f32 1.5, %v1480
          %v1482 = vmul.f32 %v1477, %v1481
          %vm1483 = vweird.f32 %v1355
          %vm1484 = vweird.f32 %v1477
          %vm1485 = vmor %vm1483, %vm1484
          %v1486 = vsel %vm1485, %v1477, %v1482
          %v1487 = vrsqrt.pop %v1356
          %v1488 = vmul.f32 %v1487, %v1356
          %v1489 = vmul.f32 %v1488, %v1487
          %v1490 = vmul.f32 0.5, %v1489
          %v1491 = vsub.f32 1.5, %v1490
          %v1492 = vmul.f32 %v1487, %v1491
          %vm1493 = vweird.f32 %v1356
          %vm1494 = vweird.f32 %v1487
          %vm1495 = vmor %vm1493, %vm1494
          %v1496 = vsel %vm1495, %v1487, %v1492
          %v1497 = vrsqrt.pop %v1357
          %v1498 = vmul.f32 %v1497, %v1357
          %v1499 = vmul.f32 %v1498, %v1497
          %v1500 = vmul.f32 0.5, %v1499
          %v1501 = vsub.f32 1.5, %v1500
          %v1502 = vmul.f32 %v1497, %v1501
          %vm1503 = vweird.f32 %v1357
          %vm1504 = vweird.f32 %v1497
          %vm1505 = vmor %vm1503, %vm1504
          %v1506 = vsel %vm1505, %v1497, %v1502
          %v1507 = vrsqrt.pop %v1358
          %v1508 = vmul.f32 %v1507, %v1358
          %v1509 = vmul.f32 %v1508, %v1507
          %v1510 = vmul.f32 0.5, %v1509
          %v1511 = vsub.f32 1.5, %v1510
          %v1512 = vmul.f32 %v1507, %v1511
          %vm1513 = vweird.f32 %v1358
          %vm1514 = vweird.f32 %v1507
          %vm1515 = vmor %vm1513, %vm1514
          %v1516 = vsel %vm1515, %v1507, %v1512
          %v1517 = vrsqrt.pop %v1359
          %v1518 = vmul.f32 %v1517, %v1359
          %v1519 = vmul.f32 %v1518, %v1517
          %v1520 = vmul.f32 0.5, %v1519
          %v1521 = vsub.f32 1.5, %v1520
          %v1522 = vmul.f32 %v1517, %v1521
          %vm1523 = vweird.f32 %v1359
          %vm1524 = vweird.f32 %v1517
          %vm1525 = vmor %vm1523, %vm1524
          %v1526 = vsel %vm1525, %v1517, %v1522
          %v1527 = vrsqrt.pop %v1360
          %v1528 = vmul.f32 %v1527, %v1360
          %v1529 = vmul.f32 %v1528, %v1527
          %v1530 = vmul.f32 0.5, %v1529
          %v1531 = vsub.f32 1.5, %v1530
          %v1532 = vmul.f32 %v1527, %v1531
          %vm1533 = vweird.f32 %v1360
          %vm1534 = vweird.f32 %v1527
          %vm1535 = vmor %vm1533, %vm1534
          %v1536 = vsel %vm1535, %v1527, %v1532
          %v1537 = vrsqrt.pop %v1361
          %v1538 = vmul.f32 %v1537, %v1361
          %v1539 = vmul.f32 %v1538, %v1537
          %v1540 = vmul.f32 0.5, %v1539
          %v1541 = vsub.f32 1.5, %v1540
          %v1542 = vmul.f32 %v1537, %v1541
          %vm1543 = vweird.f32 %v1361
          %vm1544 = vweird.f32 %v1537
          %vm1545 = vmor %vm1543, %vm1544
          %v1546 = vsel %vm1545, %v1537, %v1542
          %v1547 = vrsqrt.pop %v1362
          %v1548 = vmul.f32 %v1547, %v1362
          %v1549 = vmul.f32 %v1548, %v1547
          %v1550 = vmul.f32 0.5, %v1549
          %v1551 = vsub.f32 1.5, %v1550
          %v1552 = vmul.f32 %v1547, %v1551
          %vm1553 = vweird.f32 %v1362
          %vm1554 = vweird.f32 %v1547
          %vm1555 = vmor %vm1553, %vm1554
          %v1556 = vsel %vm1555, %v1547, %v1552
          %v1557 = vrsqrt.pop %v1363
          %v1558 = vmul.f32 %v1557, %v1363
          %v1559 = vmul.f32 %v1558, %v1557
          %v1560 = vmul.f32 0.5, %v1559
          %v1561 = vsub.f32 1.5, %v1560
          %v1562 = vmul.f32 %v1557, %v1561
          %vm1563 = vweird.f32 %v1363
          %vm1564 = vweird.f32 %v1557
          %vm1565 = vmor %vm1563, %vm1564
          %v1566 = vsel %vm1565, %v1557, %v1562
          %v1567 = vrsqrt.pop %v1364
          %v1568 = vmul.f32 %v1567, %v1364
          %v1569 = vmul.f32 %v1568, %v1567
          %v1570 = vmul.f32 0.5, %v1569
          %v1571 = vsub.f32 1.5, %v1570
          %v1572 = vmul.f32 %v1567, %v1571
          %vm1573 = vweird.f32 %v1364
          %vm1574 = vweird.f32 %v1567
          %vm1575 = vmor %vm1573, %vm1574
          %v1576 = vsel %vm1575, %v1567, %v1572
          %v1577 = vrsqrt.pop %v1365
          %v1578 = vmul.f32 %v1577, %v1365
          %v1579 = vmul.f32 %v1578, %v1577
          %v1580 = vmul.f32 0.5, %v1579
          %v1581 = vsub.f32 1.5, %v1580
          %v1582 = vmul.f32 %v1577, %v1581
          %vm1583 = vweird.f32 %v1365
          %vm1584 = vweird.f32 %v1577
          %vm1585 = vmor %vm1583, %vm1584
          %v1586 = vsel %vm1585, %v1577, %v1582
          %v1587 = vrsqrt.pop %v1366
          %v1588 = vmul.f32 %v1587, %v1366
          %v1589 = vmul.f32 %v1588, %v1587
          %v1590 = vmul.f32 0.5, %v1589
          %v1591 = vsub.f32 1.5, %v1590
          %v1592 = vmul.f32 %v1587, %v1591
          %vm1593 = vweird.f32 %v1366
          %vm1594 = vweird.f32 %v1587
          %vm1595 = vmor %vm1593, %vm1594
          %v1596 = vsel %vm1595, %v1587, %v1592
          %v1597 = vrsqrt.pop %v1367
          %v1598 = vmul.f32 %v1597, %v1367
          %v1599 = vmul.f32 %v1598, %v1597
          %v1600 = vmul.f32 0.5, %v1599
          %v1601 = vsub.f32 1.5, %v1600
          %v1602 = vmul.f32 %v1597, %v1601
          %vm1603 = vweird.f32 %v1367
          %vm1604 = vweird.f32 %v1597
          %vm1605 = vmor %vm1603, %vm1604
          %v1606 = vsel %vm1605, %v1597, %v1602
          %v1607 = vrsqrt.pop %v1368
          %v1608 = vmul.f32 %v1607, %v1368
          %v1609 = vmul.f32 %v1608, %v1607
          %v1610 = vmul.f32 0.5, %v1609
          %v1611 = vsub.f32 1.5, %v1610
          %v1612 = vmul.f32 %v1607, %v1611
          %vm1613 = vweird.f32 %v1368
          %vm1614 = vweird.f32 %v1607
          %vm1615 = vmor %vm1613, %vm1614
          %v1616 = vsel %vm1615, %v1607, %v1612
          %v1617 = vrsqrt.pop %v1369
          %v1618 = vmul.f32 %v1617, %v1369
          %v1619 = vmul.f32 %v1618, %v1617
          %v1620 = vmul.f32 0.5, %v1619
          %v1621 = vsub.f32 1.5, %v1620
          %v1622 = vmul.f32 %v1617, %v1621
          %vm1623 = vweird.f32 %v1369
          %vm1624 = vweird.f32 %v1617
          %vm1625 = vmor %vm1623, %vm1624
          %v1626 = vsel %vm1625, %v1617, %v1622
          %v1627 = vrsqrt.pop %v1370
          %v1628 = vmul.f32 %v1627, %v1370
          %v1629 = vmul.f32 %v1628, %v1627
          %v1630 = vmul.f32 0.5, %v1629
          %v1631 = vsub.f32 1.5, %v1630
          %v1632 = vmul.f32 %v1627, %v1631
          %vm1633 = vweird.f32 %v1370
          %vm1634 = vweird.f32 %v1627
          %vm1635 = vmor %vm1633, %vm1634
          %v1636 = vsel %vm1635, %v1627, %v1632
          %v1637 = vrsqrt.pop %v1371
          %v1638 = vmul.f32 %v1637, %v1371
          %v1639 = vmul.f32 %v1638, %v1637
          %v1640 = vmul.f32 0.5, %v1639
          %v1641 = vsub.f32 1.5, %v1640
          %v1642 = vmul.f32 %v1637, %v1641
          %vm1643 = vweird.f32 %v1371
          %vm1644 = vweird.f32 %v1637
          %vm1645 = vmor %vm1643, %vm1644
          %v1646 = vsel %vm1645, %v1637, %v1642
          %v1647 = vrsqrt.pop %v1372
          %v1648 = vmul.f32 %v1647, %v1372
          %v1649 = vmul.f32 %v1648, %v1647
          %v1650 = vmul.f32 0.5, %v1649
          %v1651 = vsub.f32 1.5, %v1650
          %v1652 = vmul.f32 %v1647, %v1651
          %vm1653 = vweird.f32 %v1372
          %vm1654 = vweird.f32 %v1647
          %vm1655 = vmor %vm1653, %vm1654
          %v1656 = vsel %vm1655, %v1647, %v1652
          %v1657 = vrsqrt.pop %v1373
          %v1658 = vmul.f32 %v1657, %v1373
          %v1659 = vmul.f32 %v1658, %v1657
          %v1660 = vmul.f32 0.5, %v1659
          %v1661 = vsub.f32 1.5, %v1660
          %v1662 = vmul.f32 %v1657, %v1661
          %vm1663 = vweird.f32 %v1373
          %vm1664 = vweird.f32 %v1657
          %vm1665 = vmor %vm1663, %vm1664
          %v1666 = vsel %vm1665, %v1657, %v1662
          %v1667 = vrsqrt.pop %v1374
          %v1668 = vmul.f32 %v1667, %v1374
          %v1669 = vmul.f32 %v1668, %v1667
          %v1670 = vmul.f32 0.5, %v1669
          %v1671 = vsub.f32 1.5, %v1670
          %v1672 = vmul.f32 %v1667, %v1671
          %vm1673 = vweird.f32 %v1374
          %vm1674 = vweird.f32 %v1667
          %vm1675 = vmor %vm1673, %vm1674
          %v1676 = vsel %vm1675, %v1667, %v1672
          %v1677 = vrsqrt.pop %v1375
          %v1678 = vmul.f32 %v1677, %v1375
          %v1679 = vmul.f32 %v1678, %v1677
          %v1680 = vmul.f32 0.5, %v1679
          %v1681 = vsub.f32 1.5, %v1680
          %v1682 = vmul.f32 %v1677, %v1681
          %vm1683 = vweird.f32 %v1375
          %vm1684 = vweird.f32 %v1677
          %vm1685 = vmor %vm1683, %vm1684
          %v1686 = vsel %vm1685, %v1677, %v1682
          %v1687 = vrsqrt.pop %v1376
          %v1688 = vmul.f32 %v1687, %v1376
          %v1689 = vmul.f32 %v1688, %v1687
          %v1690 = vmul.f32 0.5, %v1689
          %v1691 = vsub.f32 1.5, %v1690
          %v1692 = vmul.f32 %v1687, %v1691
          %vm1693 = vweird.f32 %v1376
          %vm1694 = vweird.f32 %v1687
          %vm1695 = vmor %vm1693, %vm1694
          %v1696 = vsel %vm1695, %v1687, %v1692
          %v1697 = vmul.f32 %v1178, %v1386
          %v1698 = vmul.f32 %v1179, %v1396
          %v1699 = vmul.f32 %v1180, %v1406
          %v1700 = vmul.f32 %v1181, %v1416
          %v1701 = vmul.f32 %v1182, %v1426
          %v1702 = vmul.f32 %v1183, %v1436
          %v1703 = vmul.f32 %v1184, %v1446
          %v1704 = vmul.f32 %v1185, %v1456
          %v1705 = vmul.f32 %v1186, %v1466
          %v1706 = vmul.f32 %v1187, %v1476
          %v1707 = vmul.f32 %v1188, %v1486
          %v1708 = vmul.f32 %v1189, %v1496
          %v1709 = vmul.f32 %v1190, %v1506
          %v1710 = vmul.f32 %v1191, %v1516
          %v1711 = vmul.f32 %v1192, %v1526
          %v1712 = vmul.f32 %v1193, %v1536
          %v1713 = vmul.f32 %v1194, %v1546
          %v1714 = vmul.f32 %v1195, %v1556
          %v1715 = vmul.f32 %v1196, %v1566
          %v1716 = vmul.f32 %v1197, %v1576
          %v1717 = vmul.f32 %v1198, %v1586
          %v1718 = vmul.f32 %v1199, %v1596
          %v1719 = vmul.f32 %v1200, %v1606
          %v1720 = vmul.f32 %v1201, %v1616
          %v1721 = vmul.f32 %v1202, %v1626
          %v1722 = vmul.f32 %v1203, %v1636
          %v1723 = vmul.f32 %v1204, %v1646
          %v1724 = vmul.f32 %v1205, %v1656
          %v1725 = vmul.f32 %v1206, %v1666
          %v1726 = vmul.f32 %v1207, %v1676
          %v1727 = vmul.f32 %v1208, %v1686
          %v1728 = vmul.f32 %v1209, %v1696
          %1761 = vrot.lane.b32.xlu0 %v1697, 64
          %v1762 = vpop.permute.xlu0 %1761
          %1763 = vrot.lane.b32.xlu0 %v1698, 64
          %v1764 = vpop.permute.xlu0 %1763
          %1765 = vrot.lane.b32.xlu0 %v1699, 64
          %v1766 = vpop.permute.xlu0 %1765
          %1767 = vrot.lane.b32.xlu0 %v1700, 64
          %v1768 = vpop.permute.xlu0 %1767
          %1769 = vrot.lane.b32.xlu0 %v1701, 64
          %v1770 = vpop.permute.xlu0 %1769
          %1771 = vrot.lane.b32.xlu0 %v1702, 64
          %v1772 = vpop.permute.xlu0 %1771
          %1773 = vrot.lane.b32.xlu0 %v1703, 64
          %v1774 = vpop.permute.xlu0 %1773
          %1775 = vrot.lane.b32.xlu0 %v1704, 64
          %v1776 = vpop.permute.xlu0 %1775
          %1777 = vrot.lane.b32.xlu0 %v1705, 64
          %v1778 = vpop.permute.xlu0 %1777
          %1779 = vrot.lane.b32.xlu0 %v1706, 64
          %v1780 = vpop.permute.xlu0 %1779
          %1781 = vrot.lane.b32.xlu0 %v1707, 64
          %v1782 = vpop.permute.xlu0 %1781
          %1783 = vrot.lane.b32.xlu0 %v1708, 64
          %v1784 = vpop.permute.xlu0 %1783
          %1785 = vrot.lane.b32.xlu0 %v1709, 64
          %v1786 = vpop.permute.xlu0 %1785
          %1787 = vrot.lane.b32.xlu0 %v1710, 64
          %v1788 = vpop.permute.xlu0 %1787
          %1789 = vrot.lane.b32.xlu0 %v1711, 64
          %v1790 = vpop.permute.xlu0 %1789
          %1791 = vrot.lane.b32.xlu0 %v1712, 64
          %v1792 = vpop.permute.xlu0 %1791
          %1793 = vrot.lane.b32.xlu0 %v1713, 64
          %v1794 = vpop.permute.xlu0 %1793
          %1795 = vrot.lane.b32.xlu0 %v1714, 64
          %v1796 = vpop.permute.xlu0 %1795
          %1797 = vrot.lane.b32.xlu0 %v1715, 64
          %v1798 = vpop.permute.xlu0 %1797
          %1799 = vrot.lane.b32.xlu0 %v1716, 64
          %v1800 = vpop.permute.xlu0 %1799
          %1801 = vrot.lane.b32.xlu0 %v1717, 64
          %v1802 = vpop.permute.xlu0 %1801
          %1803 = vrot.lane.b32.xlu0 %v1718, 64
          %v1804 = vpop.permute.xlu0 %1803
          %1805 = vrot.lane.b32.xlu0 %v1719, 64
          %v1806 = vpop.permute.xlu0 %1805
          %1807 = vrot.lane.b32.xlu0 %v1720, 64
          %v1808 = vpop.permute.xlu0 %1807
          %1809 = vrot.lane.b32.xlu0 %v1721, 64
          %v1810 = vpop.permute.xlu0 %1809
          %1811 = vrot.lane.b32.xlu0 %v1722, 64
          %v1812 = vpop.permute.xlu0 %1811
          %1813 = vrot.lane.b32.xlu0 %v1723, 64
          %v1814 = vpop.permute.xlu0 %1813
          %1815 = vrot.lane.b32.xlu0 %v1724, 64
          %v1816 = vpop.permute.xlu0 %1815
          %1817 = vrot.lane.b32.xlu0 %v1725, 64
          %v1818 = vpop.permute.xlu0 %1817
          %1819 = vrot.lane.b32.xlu0 %v1726, 64
          %v1820 = vpop.permute.xlu0 %1819
          %1821 = vrot.lane.b32.xlu0 %v1727, 64
          %v1822 = vpop.permute.xlu0 %1821
          %1823 = vrot.lane.b32.xlu0 %v1728, 64
          %v1824 = vpop.permute.xlu0 %1823
          %v1857 = vunpack.c.l.bf16 %v1114
          %v1858 = vunpack.c.l.bf16 %v1115
          %v1859 = vunpack.c.l.bf16 %v1116
          %v1860 = vunpack.c.l.bf16 %v1117
          %v1861 = vunpack.c.l.bf16 %v1118
          %v1862 = vunpack.c.l.bf16 %v1119
          %v1863 = vunpack.c.l.bf16 %v1120
          %v1864 = vunpack.c.l.bf16 %v1121
          %v1865 = vunpack.c.l.bf16 %v1122
          %v1866 = vunpack.c.l.bf16 %v1123
          %v1867 = vunpack.c.l.bf16 %v1124
          %v1868 = vunpack.c.l.bf16 %v1125
          %v1869 = vunpack.c.l.bf16 %v1126
          %v1870 = vunpack.c.l.bf16 %v1127
          %v1871 = vunpack.c.l.bf16 %v1128
          %v1872 = vunpack.c.l.bf16 %v1129
          %v1873 = vunpack.c.l.bf16 %v1130
          %v1874 = vunpack.c.l.bf16 %v1131
          %v1875 = vunpack.c.l.bf16 %v1132
          %v1876 = vunpack.c.l.bf16 %v1133
          %v1877 = vunpack.c.l.bf16 %v1134
          %v1878 = vunpack.c.l.bf16 %v1135
          %v1879 = vunpack.c.l.bf16 %v1136
          %v1880 = vunpack.c.l.bf16 %v1137
          %v1881 = vunpack.c.l.bf16 %v1138
          %v1882 = vunpack.c.l.bf16 %v1139
          %v1883 = vunpack.c.l.bf16 %v1140
          %v1884 = vunpack.c.l.bf16 %v1141
          %v1885 = vunpack.c.l.bf16 %v1142
          %v1886 = vunpack.c.l.bf16 %v1143
          %v1887 = vunpack.c.l.bf16 %v1144
          %v1888 = vunpack.c.l.bf16 %v1145
          %v1889 = vmul.f32 %v1697, %v1857
          %v1890 = vmul.f32 %v1698, %v1858
          %v1891 = vmul.f32 %v1699, %v1859
          %v1892 = vmul.f32 %v1700, %v1860
          %v1893 = vmul.f32 %v1701, %v1861
          %v1894 = vmul.f32 %v1702, %v1862
          %v1895 = vmul.f32 %v1703, %v1863
          %v1896 = vmul.f32 %v1704, %v1864
          %v1897 = vmul.f32 %v1705, %v1865
          %v1898 = vmul.f32 %v1706, %v1866
          %v1899 = vmul.f32 %v1707, %v1867
          %v1900 = vmul.f32 %v1708, %v1868
          %v1901 = vmul.f32 %v1709, %v1869
          %v1902 = vmul.f32 %v1710, %v1870
          %v1903 = vmul.f32 %v1711, %v1871
          %v1904 = vmul.f32 %v1712, %v1872
          %v1905 = vmul.f32 %v1713, %v1873
          %v1906 = vmul.f32 %v1714, %v1874
          %v1907 = vmul.f32 %v1715, %v1875
          %v1908 = vmul.f32 %v1716, %v1876
          %v1909 = vmul.f32 %v1717, %v1877
          %v1910 = vmul.f32 %v1718, %v1878
          %v1911 = vmul.f32 %v1719, %v1879
          %v1912 = vmul.f32 %v1720, %v1880
          %v1913 = vmul.f32 %v1721, %v1881
          %v1914 = vmul.f32 %v1722, %v1882
          %v1915 = vmul.f32 %v1723, %v1883
          %v1916 = vmul.f32 %v1724, %v1884
          %v1917 = vmul.f32 %v1725, %v1885
          %v1918 = vmul.f32 %v1726, %v1886
          %v1919 = vmul.f32 %v1727, %v1887
          %v1920 = vmul.f32 %v1728, %v1888
          %v1921 = vunpack.c.l.bf16 %v1146
          %v1922 = vunpack.c.l.bf16 %v1147
          %v1923 = vunpack.c.l.bf16 %v1148
          %v1924 = vunpack.c.l.bf16 %v1149
          %v1925 = vunpack.c.l.bf16 %v1150
          %v1926 = vunpack.c.l.bf16 %v1151
          %v1927 = vunpack.c.l.bf16 %v1152
          %v1928 = vunpack.c.l.bf16 %v1153
          %v1929 = vunpack.c.l.bf16 %v1154
          %v1930 = vunpack.c.l.bf16 %v1155
          %v1931 = vunpack.c.l.bf16 %v1156
          %v1932 = vunpack.c.l.bf16 %v1157
          %v1933 = vunpack.c.l.bf16 %v1158
          %v1934 = vunpack.c.l.bf16 %v1159
          %v1935 = vunpack.c.l.bf16 %v1160
          %v1936 = vunpack.c.l.bf16 %v1161
          %v1937 = vunpack.c.l.bf16 %v1162
          %v1938 = vunpack.c.l.bf16 %v1163
          %v1939 = vunpack.c.l.bf16 %v1164
          %v1940 = vunpack.c.l.bf16 %v1165
          %v1941 = vunpack.c.l.bf16 %v1166
          %v1942 = vunpack.c.l.bf16 %v1167
          %v1943 = vunpack.c.l.bf16 %v1168
          %v1944 = vunpack.c.l.bf16 %v1169
          %v1945 = vunpack.c.l.bf16 %v1170
          %v1946 = vunpack.c.l.bf16 %v1171
          %v1947 = vunpack.c.l.bf16 %v1172
          %v1948 = vunpack.c.l.bf16 %v1173
          %v1949 = vunpack.c.l.bf16 %v1174
          %v1950 = vunpack.c.l.bf16 %v1175
          %v1951 = vunpack.c.l.bf16 %v1176
          %v1952 = vunpack.c.l.bf16 %v1177
          %v1953 = vmul.f32 %v1762, %v1921
          %v1954 = vmul.f32 %v1764, %v1922
          %v1955 = vmul.f32 %v1766, %v1923
          %v1956 = vmul.f32 %v1768, %v1924
          %v1957 = vmul.f32 %v1770, %v1925
          %v1958 = vmul.f32 %v1772, %v1926
          %v1959 = vmul.f32 %v1774, %v1927
          %v1960 = vmul.f32 %v1776, %v1928
          %v1961 = vmul.f32 %v1778, %v1929
          %v1962 = vmul.f32 %v1780, %v1930
          %v1963 = vmul.f32 %v1782, %v1931
          %v1964 = vmul.f32 %v1784, %v1932
          %v1965 = vmul.f32 %v1786, %v1933
          %v1966 = vmul.f32 %v1788, %v1934
          %v1967 = vmul.f32 %v1790, %v1935
          %v1968 = vmul.f32 %v1792, %v1936
          %v1969 = vmul.f32 %v1794, %v1937
          %v1970 = vmul.f32 %v1796, %v1938
          %v1971 = vmul.f32 %v1798, %v1939
          %v1972 = vmul.f32 %v1800, %v1940
          %v1973 = vmul.f32 %v1802, %v1941
          %v1974 = vmul.f32 %v1804, %v1942
          %v1975 = vmul.f32 %v1806, %v1943
          %v1976 = vmul.f32 %v1808, %v1944
          %v1977 = vmul.f32 %v1810, %v1945
          %v1978 = vmul.f32 %v1812, %v1946
          %v1979 = vmul.f32 %v1814, %v1947
          %v1980 = vmul.f32 %v1816, %v1948
          %v1981 = vmul.f32 %v1818, %v1949
          %v1982 = vmul.f32 %v1820, %v1950
          %v1983 = vmul.f32 %v1822, %v1951
          %v1984 = vmul.f32 %v1824, %v1952
          %v1985 = vadd.f32 %v1889, %v1953
          %v1986 = vadd.f32 %v1890, %v1954
          %v1987 = vadd.f32 %v1891, %v1955
          %v1988 = vadd.f32 %v1892, %v1956
          %v1989 = vadd.f32 %v1893, %v1957
          %v1990 = vadd.f32 %v1894, %v1958
          %v1991 = vadd.f32 %v1895, %v1959
          %v1992 = vadd.f32 %v1896, %v1960
          %v1993 = vadd.f32 %v1897, %v1961
          %v1994 = vadd.f32 %v1898, %v1962
          %v1995 = vadd.f32 %v1899, %v1963
          %v1996 = vadd.f32 %v1900, %v1964
          %v1997 = vadd.f32 %v1901, %v1965
          %v1998 = vadd.f32 %v1902, %v1966
          %v1999 = vadd.f32 %v1903, %v1967
          %v2000 = vadd.f32 %v1904, %v1968
          %v2001 = vadd.f32 %v1905, %v1969
          %v2002 = vadd.f32 %v1906, %v1970
          %v2003 = vadd.f32 %v1907, %v1971
          %v2004 = vadd.f32 %v1908, %v1972
          %v2005 = vadd.f32 %v1909, %v1973
          %v2006 = vadd.f32 %v1910, %v1974
          %v2007 = vadd.f32 %v1911, %v1975
          %v2008 = vadd.f32 %v1912, %v1976
          %v2009 = vadd.f32 %v1913, %v1977
          %v2010 = vadd.f32 %v1914, %v1978
          %v2011 = vadd.f32 %v1915, %v1979
          %v2012 = vadd.f32 %v1916, %v1980
          %v2013 = vadd.f32 %v1917, %v1981
          %v2014 = vadd.f32 %v1918, %v1982
          %v2015 = vadd.f32 %v1919, %v1983
          %v2016 = vadd.f32 %v1920, %v1984
          %v2017 = vpack.c.bf16 %v1985, %v1985
          %v2018 = vpack.c.bf16 %v1986, %v1986
          %v2019 = vpack.c.bf16 %v1987, %v1987
          %v2020 = vpack.c.bf16 %v1988, %v1988
          %v2021 = vpack.c.bf16 %v1989, %v1989
          %v2022 = vpack.c.bf16 %v1990, %v1990
          %v2023 = vpack.c.bf16 %v1991, %v1991
          %v2024 = vpack.c.bf16 %v1992, %v1992
          %v2025 = vpack.c.bf16 %v1993, %v1993
          %v2026 = vpack.c.bf16 %v1994, %v1994
          %v2027 = vpack.c.bf16 %v1995, %v1995
          %v2028 = vpack.c.bf16 %v1996, %v1996
          %v2029 = vpack.c.bf16 %v1997, %v1997
          %v2030 = vpack.c.bf16 %v1998, %v1998
          %v2031 = vpack.c.bf16 %v1999, %v1999
          %v2032 = vpack.c.bf16 %v2000, %v2000
          %v2033 = vpack.c.bf16 %v2001, %v2001
          %v2034 = vpack.c.bf16 %v2002, %v2002
          %v2035 = vpack.c.bf16 %v2003, %v2003
          %v2036 = vpack.c.bf16 %v2004, %v2004
          %v2037 = vpack.c.bf16 %v2005, %v2005
          %v2038 = vpack.c.bf16 %v2006, %v2006
          %v2039 = vpack.c.bf16 %v2007, %v2007
          %v2040 = vpack.c.bf16 %v2008, %v2008
          %v2041 = vpack.c.bf16 %v2009, %v2009
          %v2042 = vpack.c.bf16 %v2010, %v2010
          %v2043 = vpack.c.bf16 %v2011, %v2011
          %v2044 = vpack.c.bf16 %v2012, %v2012
          %v2045 = vpack.c.bf16 %v2013, %v2013
          %v2046 = vpack.c.bf16 %v2014, %v2014
          %v2047 = vpack.c.bf16 %v2015, %v2015
          %v2048 = vpack.c.bf16 %v2016, %v2016
          %2049 = vst [vmem:[#allocation2] sm:$0xf] %v2017
          %2050 = vst [vmem:[#allocation2 + $0x4] sm:$0xf] %v2018
          %2051 = vst [vmem:[#allocation2 + $0x8] sm:$0xf] %v2019
          %2052 = vst [vmem:[#allocation2 + $0xc] sm:$0xf] %v2020
          %2053 = vst [vmem:[#allocation2 + $0x10] sm:$0xf] %v2021
          %2054 = vst [vmem:[#allocation2 + $0x14] sm:$0xf] %v2022
          %2055 = vst [vmem:[#allocation2 + $0x18] sm:$0xf] %v2023
          %2056 = vst [vmem:[#allocation2 + $0x1c] sm:$0xf] %v2024
          %2057 = vst [vmem:[#allocation2 + $0x20] sm:$0xf] %v2025
          %2058 = vst [vmem:[#allocation2 + $0x24] sm:$0xf] %v2026
          %2059 = vst [vmem:[#allocation2 + $0x28] sm:$0xf] %v2027
          %2060 = vst [vmem:[#allocation2 + $0x2c] sm:$0xf] %v2028
          %2061 = vst [vmem:[#allocation2 + $0x30] sm:$0xf] %v2029
          %2062 = vst [vmem:[#allocation2 + $0x34] sm:$0xf] %v2030
          %2063 = vst [vmem:[#allocation2 + $0x38] sm:$0xf] %v2031
          %2064 = vst [vmem:[#allocation2 + $0x3c] sm:$0xf] %v2032
          %2065 = vst [vmem:[#allocation2 + $0x40] sm:$0xf] %v2033
          %2066 = vst [vmem:[#allocation2 + $0x44] sm:$0xf] %v2034
          %2067 = vst [vmem:[#allocation2 + $0x48] sm:$0xf] %v2035
          %2068 = vst [vmem:[#allocation2 + $0x4c] sm:$0xf] %v2036
          %2069 = vst [vmem:[#allocation2 + $0x50] sm:$0xf] %v2037
          %2070 = vst [vmem:[#allocation2 + $0x54] sm:$0xf] %v2038
          %2071 = vst [vmem:[#allocation2 + $0x58] sm:$0xf] %v2039
          %2072 = vst [vmem:[#allocation2 + $0x5c] sm:$0xf] %v2040
          %2073 = vst [vmem:[#allocation2 + $0x60] sm:$0xf] %v2041
          %2074 = vst [vmem:[#allocation2 + $0x64] sm:$0xf] %v2042
          %2075 = vst [vmem:[#allocation2 + $0x68] sm:$0xf] %v2043
          %2076 = vst [vmem:[#allocation2 + $0x6c] sm:$0xf] %v2044
          %2077 = vst [vmem:[#allocation2 + $0x70] sm:$0xf] %v2045
          %2078 = vst [vmem:[#allocation2 + $0x74] sm:$0xf] %v2046
          %2079 = vst [vmem:[#allocation2 + $0x78] sm:$0xf] %v2047
          %2080 = vst [vmem:[#allocation2 + $0x7c] sm:$0xf] %v2048
          %s2081 = sld [smem:[#allocation4]]
          %v2082 = vld [vmem:[%s1000] sm:$0xf]
          %v2083 = vld [vmem:[%s1000 + $0x4] sm:$0xf]
          %v2084 = vld [vmem:[%s1000 + $0x8] sm:$0xf]
          %v2085 = vld [vmem:[%s1000 + $0xc] sm:$0xf]
          %v2086 = vld [vmem:[%s1000 + $0x10] sm:$0xf]
          %v2087 = vld [vmem:[%s1000 + $0x14] sm:$0xf]
          %v2088 = vld [vmem:[%s1000 + $0x18] sm:$0xf]
          %v2089 = vld [vmem:[%s1000 + $0x1c] sm:$0xf]
          %v2090 = vld [vmem:[%s1000 + $0x20] sm:$0xf]
          %v2091 = vld [vmem:[%s1000 + $0x24] sm:$0xf]
          %v2092 = vld [vmem:[%s1000 + $0x28] sm:$0xf]
          %v2093 = vld [vmem:[%s1000 + $0x2c] sm:$0xf]
          %v2094 = vld [vmem:[%s1000 + $0x30] sm:$0xf]
          %v2095 = vld [vmem:[%s1000 + $0x34] sm:$0xf]
          %v2096 = vld [vmem:[%s1000 + $0x38] sm:$0xf]
          %v2097 = vld [vmem:[%s1000 + $0x3c] sm:$0xf]
          %v2098 = vld [vmem:[%s1000 + $0x40] sm:$0xf]
          %v2099 = vld [vmem:[%s1000 + $0x44] sm:$0xf]
          %v2100 = vld [vmem:[%s1000 + $0x48] sm:$0xf]
          %v2101 = vld [vmem:[%s1000 + $0x4c] sm:$0xf]
          %v2102 = vld [vmem:[%s1000 + $0x50] sm:$0xf]
          %v2103 = vld [vmem:[%s1000 + $0x54] sm:$0xf]
          %v2104 = vld [vmem:[%s1000 + $0x58] sm:$0xf]
          %v2105 = vld [vmem:[%s1000 + $0x5c] sm:$0xf]
          %v2106 = vld [vmem:[%s1000 + $0x60] sm:$0xf]
          %v2107 = vld [vmem:[%s1000 + $0x64] sm:$0xf]
          %v2108 = vld [vmem:[%s1000 + $0x68] sm:$0xf]
          %v2109 = vld [vmem:[%s1000 + $0x6c] sm:$0xf]
          %v2110 = vld [vmem:[%s1000 + $0x70] sm:$0xf]
          %v2111 = vld [vmem:[%s1000 + $0x74] sm:$0xf]
          %v2112 = vld [vmem:[%s1000 + $0x78] sm:$0xf]
          %v2113 = vld [vmem:[%s1000 + $0x7c] sm:$0xf]
          %v2114 = vunpack.c.l.bf16 %v2082
          %v2115 = vunpack.c.l.bf16 %v2083
          %v2116 = vunpack.c.l.bf16 %v2084
          %v2117 = vunpack.c.l.bf16 %v2085
          %v2118 = vunpack.c.l.bf16 %v2086
          %v2119 = vunpack.c.l.bf16 %v2087
          %v2120 = vunpack.c.l.bf16 %v2088
          %v2121 = vunpack.c.l.bf16 %v2089
          %v2122 = vunpack.c.l.bf16 %v2090
          %v2123 = vunpack.c.l.bf16 %v2091
          %v2124 = vunpack.c.l.bf16 %v2092
          %v2125 = vunpack.c.l.bf16 %v2093
          %v2126 = vunpack.c.l.bf16 %v2094
          %v2127 = vunpack.c.l.bf16 %v2095
          %v2128 = vunpack.c.l.bf16 %v2096
          %v2129 = vunpack.c.l.bf16 %v2097
          %v2130 = vunpack.c.l.bf16 %v2098
          %v2131 = vunpack.c.l.bf16 %v2099
          %v2132 = vunpack.c.l.bf16 %v2100
          %v2133 = vunpack.c.l.bf16 %v2101
          %v2134 = vunpack.c.l.bf16 %v2102
          %v2135 = vunpack.c.l.bf16 %v2103
          %v2136 = vunpack.c.l.bf16 %v2104
          %v2137 = vunpack.c.l.bf16 %v2105
          %v2138 = vunpack.c.l.bf16 %v2106
          %v2139 = vunpack.c.l.bf16 %v2107
          %v2140 = vunpack.c.l.bf16 %v2108
          %v2141 = vunpack.c.l.bf16 %v2109
          %v2142 = vunpack.c.l.bf16 %v2110
          %v2143 = vunpack.c.l.bf16 %v2111
          %v2144 = vunpack.c.l.bf16 %v2112
          %v2145 = vunpack.c.l.bf16 %v2113
          %v2146 = vstv %s2081
          %v2147 = vmul.f32 %v2146, %v2114
          %v2148 = vmul.f32 %v2146, %v2115
          %v2149 = vmul.f32 %v2146, %v2116
          %v2150 = vmul.f32 %v2146, %v2117
          %v2151 = vmul.f32 %v2146, %v2118
          %v2152 = vmul.f32 %v2146, %v2119
          %v2153 = vmul.f32 %v2146, %v2120
          %v2154 = vmul.f32 %v2146, %v2121
          %v2155 = vmul.f32 %v2146, %v2122
          %v2156 = vmul.f32 %v2146, %v2123
          %v2157 = vmul.f32 %v2146, %v2124
          %v2158 = vmul.f32 %v2146, %v2125
          %v2159 = vmul.f32 %v2146, %v2126
          %v2160 = vmul.f32 %v2146, %v2127
          %v2161 = vmul.f32 %v2146, %v2128
          %v2162 = vmul.f32 %v2146, %v2129
          %v2163 = vmul.f32 %v2146, %v2130
          %v2164 = vmul.f32 %v2146, %v2131
          %v2165 = vmul.f32 %v2146, %v2132
          %v2166 = vmul.f32 %v2146, %v2133
          %v2167 = vmul.f32 %v2146, %v2134
          %v2168 = vmul.f32 %v2146, %v2135
          %v2169 = vmul.f32 %v2146, %v2136
          %v2170 = vmul.f32 %v2146, %v2137
          %v2171 = vmul.f32 %v2146, %v2138
          %v2172 = vmul.f32 %v2146, %v2139
          %v2173 = vmul.f32 %v2146, %v2140
          %v2174 = vmul.f32 %v2146, %v2141
          %v2175 = vmul.f32 %v2146, %v2142
          %v2176 = vmul.f32 %v2146, %v2143
          %v2177 = vmul.f32 %v2146, %v2144
          %v2178 = vmul.f32 %v2146, %v2145
          %s2179 = sld [smem:[#allocation4 + $0x1]]
          %v2180 = vld [vmem:[%s1007] sm:$0xf]
          %v2181 = vld [vmem:[%s1007 + $0x4] sm:$0xf]
          %v2182 = vld [vmem:[%s1007 + $0x8] sm:$0xf]
          %v2183 = vld [vmem:[%s1007 + $0xc] sm:$0xf]
          %v2184 = vld [vmem:[%s1007 + $0x10] sm:$0xf]
          %v2185 = vld [vmem:[%s1007 + $0x14] sm:$0xf]
          %v2186 = vld [vmem:[%s1007 + $0x18] sm:$0xf]
          %v2187 = vld [vmem:[%s1007 + $0x1c] sm:$0xf]
          %v2188 = vld [vmem:[%s1007 + $0x20] sm:$0xf]
          %v2189 = vld [vmem:[%s1007 + $0x24] sm:$0xf]
          %v2190 = vld [vmem:[%s1007 + $0x28] sm:$0xf]
          %v2191 = vld [vmem:[%s1007 + $0x2c] sm:$0xf]
          %v2192 = vld [vmem:[%s1007 + $0x30] sm:$0xf]
          %v2193 = vld [vmem:[%s1007 + $0x34] sm:$0xf]
          %v2194 = vld [vmem:[%s1007 + $0x38] sm:$0xf]
          %v2195 = vld [vmem:[%s1007 + $0x3c] sm:$0xf]
          %v2196 = vld [vmem:[%s1007 + $0x40] sm:$0xf]
          %v2197 = vld [vmem:[%s1007 + $0x44] sm:$0xf]
          %v2198 = vld [vmem:[%s1007 + $0x48] sm:$0xf]
          %v2199 = vld [vmem:[%s1007 + $0x4c] sm:$0xf]
          %v2200 = vld [vmem:[%s1007 + $0x50] sm:$0xf]
          %v2201 = vld [vmem:[%s1007 + $0x54] sm:$0xf]
          %v2202 = vld [vmem:[%s1007 + $0x58] sm:$0xf]
          %v2203 = vld [vmem:[%s1007 + $0x5c] sm:$0xf]
          %v2204 = vld [vmem:[%s1007 + $0x60] sm:$0xf]
          %v2205 = vld [vmem:[%s1007 + $0x64] sm:$0xf]
          %v2206 = vld [vmem:[%s1007 + $0x68] sm:$0xf]
          %v2207 = vld [vmem:[%s1007 + $0x6c] sm:$0xf]
          %v2208 = vld [vmem:[%s1007 + $0x70] sm:$0xf]
          %v2209 = vld [vmem:[%s1007 + $0x74] sm:$0xf]
          %v2210 = vld [vmem:[%s1007 + $0x78] sm:$0xf]
          %v2211 = vld [vmem:[%s1007 + $0x7c] sm:$0xf]
          %v2212 = vunpack.c.l.bf16 %v2180
          %v2213 = vunpack.c.l.bf16 %v2181
          %v2214 = vunpack.c.l.bf16 %v2182
          %v2215 = vunpack.c.l.bf16 %v2183
          %v2216 = vunpack.c.l.bf16 %v2184
          %v2217 = vunpack.c.l.bf16 %v2185
          %v2218 = vunpack.c.l.bf16 %v2186
          %v2219 = vunpack.c.l.bf16 %v2187
          %v2220 = vunpack.c.l.bf16 %v2188
          %v2221 = vunpack.c.l.bf16 %v2189
          %v2222 = vunpack.c.l.bf16 %v2190
          %v2223 = vunpack.c.l.bf16 %v2191
          %v2224 = vunpack.c.l.bf16 %v2192
          %v2225 = vunpack.c.l.bf16 %v2193
          %v2226 = vunpack.c.l.bf16 %v2194
          %v2227 = vunpack.c.l.bf16 %v2195
          %v2228 = vunpack.c.l.bf16 %v2196
          %v2229 = vunpack.c.l.bf16 %v2197
          %v2230 = vunpack.c.l.bf16 %v2198
          %v2231 = vunpack.c.l.bf16 %v2199
          %v2232 = vunpack.c.l.bf16 %v2200
          %v2233 = vunpack.c.l.bf16 %v2201
          %v2234 = vunpack.c.l.bf16 %v2202
          %v2235 = vunpack.c.l.bf16 %v2203
          %v2236 = vunpack.c.l.bf16 %v2204
          %v2237 = vunpack.c.l.bf16 %v2205
          %v2238 = vunpack.c.l.bf16 %v2206
          %v2239 = vunpack.c.l.bf16 %v2207
          %v2240 = vunpack.c.l.bf16 %v2208
          %v2241 = vunpack.c.l.bf16 %v2209
          %v2242 = vunpack.c.l.bf16 %v2210
          %v2243 = vunpack.c.l.bf16 %v2211
          %v2244 = vstv %s2179
          %v2245 = vmul.f32 %v2244, %v2212
          %v2246 = vmul.f32 %v2244, %v2213
          %v2247 = vmul.f32 %v2244, %v2214
          %v2248 = vmul.f32 %v2244, %v2215
          %v2249 = vmul.f32 %v2244, %v2216
          %v2250 = vmul.f32 %v2244, %v2217
          %v2251 = vmul.f32 %v2244, %v2218
          %v2252 = vmul.f32 %v2244, %v2219
          %v2253 = vmul.f32 %v2244, %v2220
          %v2254 = vmul.f32 %v2244, %v2221
          %v2255 = vmul.f32 %v2244, %v2222
          %v2256 = vmul.f32 %v2244, %v2223
          %v2257 = vmul.f32 %v2244, %v2224
          %v2258 = vmul.f32 %v2244, %v2225
          %v2259 = vmul.f32 %v2244, %v2226
          %v2260 = vmul.f32 %v2244, %v2227
          %v2261 = vmul.f32 %v2244, %v2228
          %v2262 = vmul.f32 %v2244, %v2229
          %v2263 = vmul.f32 %v2244, %v2230
          %v2264 = vmul.f32 %v2244, %v2231
          %v2265 = vmul.f32 %v2244, %v2232
          %v2266 = vmul.f32 %v2244, %v2233
          %v2267 = vmul.f32 %v2244, %v2234
          %v2268 = vmul.f32 %v2244, %v2235
          %v2269 = vmul.f32 %v2244, %v2236
          %v2270 = vmul.f32 %v2244, %v2237
          %v2271 = vmul.f32 %v2244, %v2238
          %v2272 = vmul.f32 %v2244, %v2239
          %v2273 = vmul.f32 %v2244, %v2240
          %v2274 = vmul.f32 %v2244, %v2241
          %v2275 = vmul.f32 %v2244, %v2242
          %v2276 = vmul.f32 %v2244, %v2243
          %v2277 = vadd.f32 %v2147, %v2245
          %v2278 = vadd.f32 %v2148, %v2246
          %v2279 = vadd.f32 %v2149, %v2247
          %v2280 = vadd.f32 %v2150, %v2248
          %v2281 = vadd.f32 %v2151, %v2249
          %v2282 = vadd.f32 %v2152, %v2250
          %v2283 = vadd.f32 %v2153, %v2251
          %v2284 = vadd.f32 %v2154, %v2252
          %v2285 = vadd.f32 %v2155, %v2253
          %v2286 = vadd.f32 %v2156, %v2254
          %v2287 = vadd.f32 %v2157, %v2255
          %v2288 = vadd.f32 %v2158, %v2256
          %v2289 = vadd.f32 %v2159, %v2257
          %v2290 = vadd.f32 %v2160, %v2258
          %v2291 = vadd.f32 %v2161, %v2259
          %v2292 = vadd.f32 %v2162, %v2260
          %v2293 = vadd.f32 %v2163, %v2261
          %v2294 = vadd.f32 %v2164, %v2262
          %v2295 = vadd.f32 %v2165, %v2263
          %v2296 = vadd.f32 %v2166, %v2264
          %v2297 = vadd.f32 %v2167, %v2265
          %v2298 = vadd.f32 %v2168, %v2266
          %v2299 = vadd.f32 %v2169, %v2267
          %v2300 = vadd.f32 %v2170, %v2268
          %v2301 = vadd.f32 %v2171, %v2269
          %v2302 = vadd.f32 %v2172, %v2270
          %v2303 = vadd.f32 %v2173, %v2271
          %v2304 = vadd.f32 %v2174, %v2272
          %v2305 = vadd.f32 %v2175, %v2273
          %v2306 = vadd.f32 %v2176, %v2274
          %v2307 = vadd.f32 %v2177, %v2275
          %v2308 = vadd.f32 %v2178, %v2276
          %v2309 = vpack.c.bf16 %v2277, %v2277
          %v2310 = vpack.c.bf16 %v2278, %v2278
          %v2311 = vpack.c.bf16 %v2279, %v2279
          %v2312 = vpack.c.bf16 %v2280, %v2280
          %v2313 = vpack.c.bf16 %v2281, %v2281
          %v2314 = vpack.c.bf16 %v2282, %v2282
          %v2315 = vpack.c.bf16 %v2283, %v2283
          %v2316 = vpack.c.bf16 %v2284, %v2284
          %v2317 = vpack.c.bf16 %v2285, %v2285
          %v2318 = vpack.c.bf16 %v2286, %v2286
          %v2319 = vpack.c.bf16 %v2287, %v2287
          %v2320 = vpack.c.bf16 %v2288, %v2288
          %v2321 = vpack.c.bf16 %v2289, %v2289
          %v2322 = vpack.c.bf16 %v2290, %v2290
          %v2323 = vpack.c.bf16 %v2291, %v2291
          %v2324 = vpack.c.bf16 %v2292, %v2292
          %v2325 = vpack.c.bf16 %v2293, %v2293
          %v2326 = vpack.c.bf16 %v2294, %v2294
          %v2327 = vpack.c.bf16 %v2295, %v2295
          %v2328 = vpack.c.bf16 %v2296, %v2296
          %v2329 = vpack.c.bf16 %v2297, %v2297
          %v2330 = vpack.c.bf16 %v2298, %v2298
          %v2331 = vpack.c.bf16 %v2299, %v2299
          %v2332 = vpack.c.bf16 %v2300, %v2300
          %v2333 = vpack.c.bf16 %v2301, %v2301
          %v2334 = vpack.c.bf16 %v2302, %v2302
          %v2335 = vpack.c.bf16 %v2303, %v2303
          %v2336 = vpack.c.bf16 %v2304, %v2304
          %v2337 = vpack.c.bf16 %v2305, %v2305
          %v2338 = vpack.c.bf16 %v2306, %v2306
          %v2339 = vpack.c.bf16 %v2307, %v2307
          %v2340 = vpack.c.bf16 %v2308, %v2308
          %2341 = vst [vmem:[#allocation3] sm:$0xf] %v2309
          %2342 = vst [vmem:[#allocation3 + $0x4] sm:$0xf] %v2310
          %2343 = vst [vmem:[#allocation3 + $0x8] sm:$0xf] %v2311
          %2344 = vst [vmem:[#allocation3 + $0xc] sm:$0xf] %v2312
          %2345 = vst [vmem:[#allocation3 + $0x10] sm:$0xf] %v2313
          %2346 = vst [vmem:[#allocation3 + $0x14] sm:$0xf] %v2314
          %2347 = vst [vmem:[#allocation3 + $0x18] sm:$0xf] %v2315
          %2348 = vst [vmem:[#allocation3 + $0x1c] sm:$0xf] %v2316
          %2349 = vst [vmem:[#allocation3 + $0x20] sm:$0xf] %v2317
          %2350 = vst [vmem:[#allocation3 + $0x24] sm:$0xf] %v2318
          %2351 = vst [vmem:[#allocation3 + $0x28] sm:$0xf] %v2319
          %2352 = vst [vmem:[#allocation3 + $0x2c] sm:$0xf] %v2320
          %2353 = vst [vmem:[#allocation3 + $0x30] sm:$0xf] %v2321
          %2354 = vst [vmem:[#allocation3 + $0x34] sm:$0xf] %v2322
          %2355 = vst [vmem:[#allocation3 + $0x38] sm:$0xf] %v2323
          %2356 = vst [vmem:[#allocation3 + $0x3c] sm:$0xf] %v2324
          %2357 = vst [vmem:[#allocation3 + $0x40] sm:$0xf] %v2325
          %2358 = vst [vmem:[#allocation3 + $0x44] sm:$0xf] %v2326
          %2359 = vst [vmem:[#allocation3 + $0x48] sm:$0xf] %v2327
          %2360 = vst [vmem:[#allocation3 + $0x4c] sm:$0xf] %v2328
          %2361 = vst [vmem:[#allocation3 + $0x50] sm:$0xf] %v2329
          %2362 = vst [vmem:[#allocation3 + $0x54] sm:$0xf] %v2330
          %2363 = vst [vmem:[#allocation3 + $0x58] sm:$0xf] %v2331
          %2364 = vst [vmem:[#allocation3 + $0x5c] sm:$0xf] %v2332
          %2365 = vst [vmem:[#allocation3 + $0x60] sm:$0xf] %v2333
          %2366 = vst [vmem:[#allocation3 + $0x64] sm:$0xf] %v2334
          %2367 = vst [vmem:[#allocation3 + $0x68] sm:$0xf] %v2335
          %2368 = vst [vmem:[#allocation3 + $0x6c] sm:$0xf] %v2336
          %2369 = vst [vmem:[#allocation3 + $0x70] sm:$0xf] %v2337
          %2370 = vst [vmem:[#allocation3 + $0x74] sm:$0xf] %v2338
          %2371 = vst [vmem:[#allocation3 + $0x78] sm:$0xf] %v2339
          %2372 = vst [vmem:[#allocation3 + $0x7c] sm:$0xf] %v2340
        $region228: #{_lambda_.4} parent=203 // pred_fallthru
          _
        %v2373 = vld [vmem:[%s986] sm:$0xf]
        %v2374 = vld [vmem:[%s986 + $0x4] sm:$0xf]
        %v2375 = vld [vmem:[%s986 + $0x8] sm:$0xf]
        %v2376 = vld [vmem:[%s986 + $0xc] sm:$0xf]
        %v2377 = vld [vmem:[%s986 + $0x10] sm:$0xf]
        %v2378 = vld [vmem:[%s986 + $0x14] sm:$0xf]
        %v2379 = vld [vmem:[%s986 + $0x18] sm:$0xf]
        %v2380 = vld [vmem:[%s986 + $0x1c] sm:$0xf]
        %v2381 = vld [vmem:[%s986 + $0x20] sm:$0xf]
        %v2382 = vld [vmem:[%s986 + $0x24] sm:$0xf]
        %v2383 = vld [vmem:[%s986 + $0x28] sm:$0xf]
        %v2384 = vld [vmem:[%s986 + $0x2c] sm:$0xf]
        %v2385 = vld [vmem:[%s986 + $0x30] sm:$0xf]
        %v2386 = vld [vmem:[%s986 + $0x34] sm:$0xf]
        %v2387 = vld [vmem:[%s986 + $0x38] sm:$0xf]
        %v2388 = vld [vmem:[%s986 + $0x3c] sm:$0xf]
        %v2389 = vld [vmem:[%s1066] sm:$0xf]
        %v2390 = vld [vmem:[%s1066 + $0x4] sm:$0xf]
        %v2391 = vld [vmem:[%s1066 + $0x8] sm:$0xf]
        %v2392 = vld [vmem:[%s1066 + $0xc] sm:$0xf]
        %v2393 = vld [vmem:[%s1066 + $0x10] sm:$0xf]
        %v2394 = vld [vmem:[%s1066 + $0x14] sm:$0xf]
        %v2395 = vld [vmem:[%s1066 + $0x18] sm:$0xf]
        %v2396 = vld [vmem:[%s1066 + $0x1c] sm:$0xf]
        %v2397 = vld [vmem:[%s1066 + $0x20] sm:$0xf]
        %v2398 = vld [vmem:[%s1066 + $0x24] sm:$0xf]
        %v2399 = vld [vmem:[%s1066 + $0x28] sm:$0xf]
        %v2400 = vld [vmem:[%s1066 + $0x2c] sm:$0xf]
        %v2401 = vld [vmem:[%s1066 + $0x30] sm:$0xf]
        %v2402 = vld [vmem:[%s1066 + $0x34] sm:$0xf]
        %v2403 = vld [vmem:[%s1066 + $0x38] sm:$0xf]
        %v2404 = vld [vmem:[%s1066 + $0x3c] sm:$0xf]
        %v2405 = vld [vmem:[%s1072] sm:$0xf]
        %v2406 = vld [vmem:[%s1072 + $0x4] sm:$0xf]
        %v2407 = vld [vmem:[%s1072 + $0x8] sm:$0xf]
        %v2408 = vld [vmem:[%s1072 + $0xc] sm:$0xf]
        %v2409 = vld [vmem:[%s1072 + $0x10] sm:$0xf]
        %v2410 = vld [vmem:[%s1072 + $0x14] sm:$0xf]
        %v2411 = vld [vmem:[%s1072 + $0x18] sm:$0xf]
        %v2412 = vld [vmem:[%s1072 + $0x1c] sm:$0xf]
        %v2413 = vld [vmem:[%s1072 + $0x20] sm:$0xf]
        %v2414 = vld [vmem:[%s1072 + $0x24] sm:$0xf]
        %v2415 = vld [vmem:[%s1072 + $0x28] sm:$0xf]
        %v2416 = vld [vmem:[%s1072 + $0x2c] sm:$0xf]
        %v2417 = vld [vmem:[%s1072 + $0x30] sm:$0xf]
        %v2418 = vld [vmem:[%s1072 + $0x34] sm:$0xf]
        %v2419 = vld [vmem:[%s1072 + $0x38] sm:$0xf]
        %v2420 = vld [vmem:[%s1072 + $0x3c] sm:$0xf]
        %v2421 = vunpack.c.l.bf16 %v2373
        %v2422 = vunpack.c.l.bf16 %v2374
        %v2423 = vunpack.c.l.bf16 %v2375
        %v2424 = vunpack.c.l.bf16 %v2376
        %v2425 = vunpack.c.l.bf16 %v2377
        %v2426 = vunpack.c.l.bf16 %v2378
        %v2427 = vunpack.c.l.bf16 %v2379
        %v2428 = vunpack.c.l.bf16 %v2380
        %v2429 = vunpack.c.l.bf16 %v2381
        %v2430 = vunpack.c.l.bf16 %v2382
        %v2431 = vunpack.c.l.bf16 %v2383
        %v2432 = vunpack.c.l.bf16 %v2384
        %v2433 = vunpack.c.l.bf16 %v2385
        %v2434 = vunpack.c.l.bf16 %v2386
        %v2435 = vunpack.c.l.bf16 %v2387
        %v2436 = vunpack.c.l.bf16 %v2388
        %v2437 = vmul.f32 %v2421, %v2421
        %v2438 = vmul.f32 %v2422, %v2422
        %v2439 = vmul.f32 %v2423, %v2423
        %v2440 = vmul.f32 %v2424, %v2424
        %v2441 = vmul.f32 %v2425, %v2425
        %v2442 = vmul.f32 %v2426, %v2426
        %v2443 = vmul.f32 %v2427, %v2427
        %v2444 = vmul.f32 %v2428, %v2428
        %v2445 = vmul.f32 %v2429, %v2429
        %v2446 = vmul.f32 %v2430, %v2430
        %v2447 = vmul.f32 %v2431, %v2431
        %v2448 = vmul.f32 %v2432, %v2432
        %v2449 = vmul.f32 %v2433, %v2433
        %v2450 = vmul.f32 %v2434, %v2434
        %v2451 = vmul.f32 %v2435, %v2435
        %v2452 = vmul.f32 %v2436, %v2436
        %2453 = vadd.xlane.f32.xlu0 %v2437
        %v2454 = vpop.xlane.xlu0 %2453
        %2455 = vadd.xlane.f32.xlu0 %v2438
        %v2456 = vpop.xlane.xlu0 %2455
        %2457 = vadd.xlane.f32.xlu0 %v2439
        %v2458 = vpop.xlane.xlu0 %2457
        %2459 = vadd.xlane.f32.xlu0 %v2440
        %v2460 = vpop.xlane.xlu0 %2459
        %2461 = vadd.xlane.f32.xlu0 %v2441
        %v2462 = vpop.xlane.xlu0 %2461
        %2463 = vadd.xlane.f32.xlu0 %v2442
        %v2464 = vpop.xlane.xlu0 %2463
        %2465 = vadd.xlane.f32.xlu0 %v2443
        %v2466 = vpop.xlane.xlu0 %2465
        %2467 = vadd.xlane.f32.xlu0 %v2444
        %v2468 = vpop.xlane.xlu0 %2467
        %2469 = vadd.xlane.f32.xlu0 %v2445
        %v2470 = vpop.xlane.xlu0 %2469
        %2471 = vadd.xlane.f32.xlu0 %v2446
        %v2472 = vpop.xlane.xlu0 %2471
        %2473 = vadd.xlane.f32.xlu0 %v2447
        %v2474 = vpop.xlane.xlu0 %2473
        %2475 = vadd.xlane.f32.xlu0 %v2448
        %v2476 = vpop.xlane.xlu0 %2475
        %2477 = vadd.xlane.f32.xlu0 %v2449
        %v2478 = vpop.xlane.xlu0 %2477
        %2479 = vadd.xlane.f32.xlu0 %v2450
        %v2480 = vpop.xlane.xlu0 %2479
        %2481 = vadd.xlane.f32.xlu0 %v2451
        %v2482 = vpop.xlane.xlu0 %2481
        %2483 = vadd.xlane.f32.xlu0 %v2452
        %v2484 = vpop.xlane.xlu0 %2483
        %v2485 = vrcp.pop 128.0
        %v2486 = vmul.f32 128.0, %v2485
        %v2487 = vsub.f32 1.0, %v2486
        %v2488 = vmul.f32 %v2485, %v2487
        %v2489 = vadd.f32 %v2485, %v2488
        %vm2490 = vweird.f32 %v2485
        %v2491 = vsel %vm2490, %v2485, %v2489
        %v2492 = vmul.f32 %v2454, %v2491
        %v2493 = vmul.f32 %v2456, %v2491
        %v2494 = vmul.f32 %v2458, %v2491
        %v2495 = vmul.f32 %v2460, %v2491
        %v2496 = vmul.f32 %v2462, %v2491
        %v2497 = vmul.f32 %v2464, %v2491
        %v2498 = vmul.f32 %v2466, %v2491
        %v2499 = vmul.f32 %v2468, %v2491
        %v2500 = vmul.f32 %v2470, %v2491
        %v2501 = vmul.f32 %v2472, %v2491
        %v2502 = vmul.f32 %v2474, %v2491
        %v2503 = vmul.f32 %v2476, %v2491
        %v2504 = vmul.f32 %v2478, %v2491
        %v2505 = vmul.f32 %v2480, %v2491
        %v2506 = vmul.f32 %v2482, %v2491
        %v2507 = vmul.f32 %v2484, %v2491
        %v2508 = vadd.f32 %v2492, 1.1920929e-07
        %v2509 = vadd.f32 %v2493, 1.1920929e-07
        %v2510 = vadd.f32 %v2494, 1.1920929e-07
        %v2511 = vadd.f32 %v2495, 1.1920929e-07
        %v2512 = vadd.f32 %v2496, 1.1920929e-07
        %v2513 = vadd.f32 %v2497, 1.1920929e-07
        %v2514 = vadd.f32 %v2498, 1.1920929e-07
        %v2515 = vadd.f32 %v2499, 1.1920929e-07
        %v2516 = vadd.f32 %v2500, 1.1920929e-07
        %v2517 = vadd.f32 %v2501, 1.1920929e-07
        %v2518 = vadd.f32 %v2502, 1.1920929e-07
        %v2519 = vadd.f32 %v2503, 1.1920929e-07
        %v2520 = vadd.f32 %v2504, 1.1920929e-07
        %v2521 = vadd.f32 %v2505, 1.1920929e-07
        %v2522 = vadd.f32 %v2506, 1.1920929e-07
        %v2523 = vadd.f32 %v2507, 1.1920929e-07
        %v2524 = vrsqrt.pop %v2508
        %v2525 = vmul.f32 %v2524, %v2508
        %v2526 = vmul.f32 %v2525, %v2524
        %v2527 = vmul.f32 0.5, %v2526
        %v2528 = vsub.f32 1.5, %v2527
        %v2529 = vmul.f32 %v2524, %v2528
        %vm2530 = vweird.f32 %v2508
        %vm2531 = vweird.f32 %v2524
        %vm2532 = vmor %vm2530, %vm2531
        %v2533 = vsel %vm2532, %v2524, %v2529
        %v2534 = vrsqrt.pop %v2509
        %v2535 = vmul.f32 %v2534, %v2509
        %v2536 = vmul.f32 %v2535, %v2534
        %v2537 = vmul.f32 0.5, %v2536
        %v2538 = vsub.f32 1.5, %v2537
        %v2539 = vmul.f32 %v2534, %v2538
        %vm2540 = vweird.f32 %v2509
        %vm2541 = vweird.f32 %v2534
        %vm2542 = vmor %vm2540, %vm2541
        %v2543 = vsel %vm2542, %v2534, %v2539
        %v2544 = vrsqrt.pop %v2510
        %v2545 = vmul.f32 %v2544, %v2510
        %v2546 = vmul.f32 %v2545, %v2544
        %v2547 = vmul.f32 0.5, %v2546
        %v2548 = vsub.f32 1.5, %v2547
        %v2549 = vmul.f32 %v2544, %v2548
        %vm2550 = vweird.f32 %v2510
        %vm2551 = vweird.f32 %v2544
        %vm2552 = vmor %vm2550, %vm2551
        %v2553 = vsel %vm2552, %v2544, %v2549
        %v2554 = vrsqrt.pop %v2511
        %v2555 = vmul.f32 %v2554, %v2511
        %v2556 = vmul.f32 %v2555, %v2554
        %v2557 = vmul.f32 0.5, %v2556
        %v2558 = vsub.f32 1.5, %v2557
        %v2559 = vmul.f32 %v2554, %v2558
        %vm2560 = vweird.f32 %v2511
        %vm2561 = vweird.f32 %v2554
        %vm2562 = vmor %vm2560, %vm2561
        %v2563 = vsel %vm2562, %v2554, %v2559
        %v2564 = vrsqrt.pop %v2512
        %v2565 = vmul.f32 %v2564, %v2512
        %v2566 = vmul.f32 %v2565, %v2564
        %v2567 = vmul.f32 0.5, %v2566
        %v2568 = vsub.f32 1.5, %v2567
        %v2569 = vmul.f32 %v2564, %v2568
        %vm2570 = vweird.f32 %v2512
        %vm2571 = vweird.f32 %v2564
        %vm2572 = vmor %vm2570, %vm2571
        %v2573 = vsel %vm2572, %v2564, %v2569
        %v2574 = vrsqrt.pop %v2513
        %v2575 = vmul.f32 %v2574, %v2513
        %v2576 = vmul.f32 %v2575, %v2574
        %v2577 = vmul.f32 0.5, %v2576
        %v2578 = vsub.f32 1.5, %v2577
        %v2579 = vmul.f32 %v2574, %v2578
        %vm2580 = vweird.f32 %v2513
        %vm2581 = vweird.f32 %v2574
        %vm2582 = vmor %vm2580, %vm2581
        %v2583 = vsel %vm2582, %v2574, %v2579
        %v2584 = vrsqrt.pop %v2514
        %v2585 = vmul.f32 %v2584, %v2514
        %v2586 = vmul.f32 %v2585, %v2584
        %v2587 = vmul.f32 0.5, %v2586
        %v2588 = vsub.f32 1.5, %v2587
        %v2589 = vmul.f32 %v2584, %v2588
        %vm2590 = vweird.f32 %v2514
        %vm2591 = vweird.f32 %v2584
        %vm2592 = vmor %vm2590, %vm2591
        %v2593 = vsel %vm2592, %v2584, %v2589
        %v2594 = vrsqrt.pop %v2515
        %v2595 = vmul.f32 %v2594, %v2515
        %v2596 = vmul.f32 %v2595, %v2594
        %v2597 = vmul.f32 0.5, %v2596
        %v2598 = vsub.f32 1.5, %v2597
        %v2599 = vmul.f32 %v2594, %v2598
        %vm2600 = vweird.f32 %v2515
        %vm2601 = vweird.f32 %v2594
        %vm2602 = vmor %vm2600, %vm2601
        %v2603 = vsel %vm2602, %v2594, %v2599
        %v2604 = vrsqrt.pop %v2516
        %v2605 = vmul.f32 %v2604, %v2516
        %v2606 = vmul.f32 %v2605, %v2604
        %v2607 = vmul.f32 0.5, %v2606
        %v2608 = vsub.f32 1.5, %v2607
        %v2609 = vmul.f32 %v2604, %v2608
        %vm2610 = vweird.f32 %v2516
        %vm2611 = vweird.f32 %v2604
        %vm2612 = vmor %vm2610, %vm2611
        %v2613 = vsel %vm2612, %v2604, %v2609
        %v2614 = vrsqrt.pop %v2517
        %v2615 = vmul.f32 %v2614, %v2517
        %v2616 = vmul.f32 %v2615, %v2614
        %v2617 = vmul.f32 0.5, %v2616
        %v2618 = vsub.f32 1.5, %v2617
        %v2619 = vmul.f32 %v2614, %v2618
        %vm2620 = vweird.f32 %v2517
        %vm2621 = vweird.f32 %v2614
        %vm2622 = vmor %vm2620, %vm2621
        %v2623 = vsel %vm2622, %v2614, %v2619
        %v2624 = vrsqrt.pop %v2518
        %v2625 = vmul.f32 %v2624, %v2518
        %v2626 = vmul.f32 %v2625, %v2624
        %v2627 = vmul.f32 0.5, %v2626
        %v2628 = vsub.f32 1.5, %v2627
        %v2629 = vmul.f32 %v2624, %v2628
        %vm2630 = vweird.f32 %v2518
        %vm2631 = vweird.f32 %v2624
        %vm2632 = vmor %vm2630, %vm2631
        %v2633 = vsel %vm2632, %v2624, %v2629
        %v2634 = vrsqrt.pop %v2519
        %v2635 = vmul.f32 %v2634, %v2519
        %v2636 = vmul.f32 %v2635, %v2634
        %v2637 = vmul.f32 0.5, %v2636
        %v2638 = vsub.f32 1.5, %v2637
        %v2639 = vmul.f32 %v2634, %v2638
        %vm2640 = vweird.f32 %v2519
        %vm2641 = vweird.f32 %v2634
        %vm2642 = vmor %vm2640, %vm2641
        %v2643 = vsel %vm2642, %v2634, %v2639
        %v2644 = vrsqrt.pop %v2520
        %v2645 = vmul.f32 %v2644, %v2520
        %v2646 = vmul.f32 %v2645, %v2644
        %v2647 = vmul.f32 0.5, %v2646
        %v2648 = vsub.f32 1.5, %v2647
        %v2649 = vmul.f32 %v2644, %v2648
        %vm2650 = vweird.f32 %v2520
        %vm2651 = vweird.f32 %v2644
        %vm2652 = vmor %vm2650, %vm2651
        %v2653 = vsel %vm2652, %v2644, %v2649
        %v2654 = vrsqrt.pop %v2521
        %v2655 = vmul.f32 %v2654, %v2521
        %v2656 = vmul.f32 %v2655, %v2654
        %v2657 = vmul.f32 0.5, %v2656
        %v2658 = vsub.f32 1.5, %v2657
        %v2659 = vmul.f32 %v2654, %v2658
        %vm2660 = vweird.f32 %v2521
        %vm2661 = vweird.f32 %v2654
        %vm2662 = vmor %vm2660, %vm2661
        %v2663 = vsel %vm2662, %v2654, %v2659
        %v2664 = vrsqrt.pop %v2522
        %v2665 = vmul.f32 %v2664, %v2522
        %v2666 = vmul.f32 %v2665, %v2664
        %v2667 = vmul.f32 0.5, %v2666
        %v2668 = vsub.f32 1.5, %v2667
        %v2669 = vmul.f32 %v2664, %v2668
        %vm2670 = vweird.f32 %v2522
        %vm2671 = vweird.f32 %v2664
        %vm2672 = vmor %vm2670, %vm2671
        %v2673 = vsel %vm2672, %v2664, %v2669
        %v2674 = vrsqrt.pop %v2523
        %v2675 = vmul.f32 %v2674, %v2523
        %v2676 = vmul.f32 %v2675, %v2674
        %v2677 = vmul.f32 0.5, %v2676
        %v2678 = vsub.f32 1.5, %v2677
        %v2679 = vmul.f32 %v2674, %v2678
        %vm2680 = vweird.f32 %v2523
        %vm2681 = vweird.f32 %v2674
        %vm2682 = vmor %vm2680, %vm2681
        %v2683 = vsel %vm2682, %v2674, %v2679
        %v2684 = vmul.f32 %v2421, %v2533
        %v2685 = vmul.f32 %v2422, %v2543
        %v2686 = vmul.f32 %v2423, %v2553
        %v2687 = vmul.f32 %v2424, %v2563
        %v2688 = vmul.f32 %v2425, %v2573
        %v2689 = vmul.f32 %v2426, %v2583
        %v2690 = vmul.f32 %v2427, %v2593
        %v2691 = vmul.f32 %v2428, %v2603
        %v2692 = vmul.f32 %v2429, %v2613
        %v2693 = vmul.f32 %v2430, %v2623
        %v2694 = vmul.f32 %v2431, %v2633
        %v2695 = vmul.f32 %v2432, %v2643
        %v2696 = vmul.f32 %v2433, %v2653
        %v2697 = vmul.f32 %v2434, %v2663
        %v2698 = vmul.f32 %v2435, %v2673
        %v2699 = vmul.f32 %v2436, %v2683
        %2716 = vrot.lane.b32.xlu0 %v2684, 64
        %v2717 = vpop.permute.xlu0 %2716
        %2718 = vrot.lane.b32.xlu0 %v2685, 64
        %v2719 = vpop.permute.xlu0 %2718
        %2720 = vrot.lane.b32.xlu0 %v2686, 64
        %v2721 = vpop.permute.xlu0 %2720
        %2722 = vrot.lane.b32.xlu0 %v2687, 64
        %v2723 = vpop.permute.xlu0 %2722
        %2724 = vrot.lane.b32.xlu0 %v2688, 64
        %v2725 = vpop.permute.xlu0 %2724
        %2726 = vrot.lane.b32.xlu0 %v2689, 64
        %v2727 = vpop.permute.xlu0 %2726
        %2728 = vrot.lane.b32.xlu0 %v2690, 64
        %v2729 = vpop.permute.xlu0 %2728
        %2730 = vrot.lane.b32.xlu0 %v2691, 64
        %v2731 = vpop.permute.xlu0 %2730
        %2732 = vrot.lane.b32.xlu0 %v2692, 64
        %v2733 = vpop.permute.xlu0 %2732
        %2734 = vrot.lane.b32.xlu0 %v2693, 64
        %v2735 = vpop.permute.xlu0 %2734
        %2736 = vrot.lane.b32.xlu0 %v2694, 64
        %v2737 = vpop.permute.xlu0 %2736
        %2738 = vrot.lane.b32.xlu0 %v2695, 64
        %v2739 = vpop.permute.xlu0 %2738
        %2740 = vrot.lane.b32.xlu0 %v2696, 64
        %v2741 = vpop.permute.xlu0 %2740
        %2742 = vrot.lane.b32.xlu0 %v2697, 64
        %v2743 = vpop.permute.xlu0 %2742
        %2744 = vrot.lane.b32.xlu0 %v2698, 64
        %v2745 = vpop.permute.xlu0 %2744
        %2746 = vrot.lane.b32.xlu0 %v2699, 64
        %v2747 = vpop.permute.xlu0 %2746
        %v2764 = vunpack.c.l.bf16 %v2389
        %v2765 = vunpack.c.l.bf16 %v2390
        %v2766 = vunpack.c.l.bf16 %v2391
        %v2767 = vunpack.c.l.bf16 %v2392
        %v2768 = vunpack.c.l.bf16 %v2393
        %v2769 = vunpack.c.l.bf16 %v2394
        %v2770 = vunpack.c.l.bf16 %v2395
        %v2771 = vunpack.c.l.bf16 %v2396
        %v2772 = vunpack.c.l.bf16 %v2397
        %v2773 = vunpack.c.l.bf16 %v2398
        %v2774 = vunpack.c.l.bf16 %v2399
        %v2775 = vunpack.c.l.bf16 %v2400
        %v2776 = vunpack.c.l.bf16 %v2401
        %v2777 = vunpack.c.l.bf16 %v2402
        %v2778 = vunpack.c.l.bf16 %v2403
        %v2779 = vunpack.c.l.bf16 %v2404
        %v2780 = vmul.f32 %v2684, %v2764
        %v2781 = vmul.f32 %v2685, %v2765
        %v2782 = vmul.f32 %v2686, %v2766
        %v2783 = vmul.f32 %v2687, %v2767
        %v2784 = vmul.f32 %v2688, %v2768
        %v2785 = vmul.f32 %v2689, %v2769
        %v2786 = vmul.f32 %v2690, %v2770
        %v2787 = vmul.f32 %v2691, %v2771
        %v2788 = vmul.f32 %v2692, %v2772
        %v2789 = vmul.f32 %v2693, %v2773
        %v2790 = vmul.f32 %v2694, %v2774
        %v2791 = vmul.f32 %v2695, %v2775
        %v2792 = vmul.f32 %v2696, %v2776
        %v2793 = vmul.f32 %v2697, %v2777
        %v2794 = vmul.f32 %v2698, %v2778
        %v2795 = vmul.f32 %v2699, %v2779
        %v2796 = vunpack.c.l.bf16 %v2405
        %v2797 = vunpack.c.l.bf16 %v2406
        %v2798 = vunpack.c.l.bf16 %v2407
        %v2799 = vunpack.c.l.bf16 %v2408
        %v2800 = vunpack.c.l.bf16 %v2409
        %v2801 = vunpack.c.l.bf16 %v2410
        %v2802 = vunpack.c.l.bf16 %v2411
        %v2803 = vunpack.c.l.bf16 %v2412
        %v2804 = vunpack.c.l.bf16 %v2413
        %v2805 = vunpack.c.l.bf16 %v2414
        %v2806 = vunpack.c.l.bf16 %v2415
        %v2807 = vunpack.c.l.bf16 %v2416
        %v2808 = vunpack.c.l.bf16 %v2417
        %v2809 = vunpack.c.l.bf16 %v2418
        %v2810 = vunpack.c.l.bf16 %v2419
        %v2811 = vunpack.c.l.bf16 %v2420
        %v2812 = vmul.f32 %v2717, %v2796
        %v2813 = vmul.f32 %v2719, %v2797
        %v2814 = vmul.f32 %v2721, %v2798
        %v2815 = vmul.f32 %v2723, %v2799
        %v2816 = vmul.f32 %v2725, %v2800
        %v2817 = vmul.f32 %v2727, %v2801
        %v2818 = vmul.f32 %v2729, %v2802
        %v2819 = vmul.f32 %v2731, %v2803
        %v2820 = vmul.f32 %v2733, %v2804
        %v2821 = vmul.f32 %v2735, %v2805
        %v2822 = vmul.f32 %v2737, %v2806
        %v2823 = vmul.f32 %v2739, %v2807
        %v2824 = vmul.f32 %v2741, %v2808
        %v2825 = vmul.f32 %v2743, %v2809
        %v2826 = vmul.f32 %v2745, %v2810
        %v2827 = vmul.f32 %v2747, %v2811
        %v2828 = vadd.f32 %v2780, %v2812
        %v2829 = vadd.f32 %v2781, %v2813
        %v2830 = vadd.f32 %v2782, %v2814
        %v2831 = vadd.f32 %v2783, %v2815
        %v2832 = vadd.f32 %v2784, %v2816
        %v2833 = vadd.f32 %v2785, %v2817
        %v2834 = vadd.f32 %v2786, %v2818
        %v2835 = vadd.f32 %v2787, %v2819
        %v2836 = vadd.f32 %v2788, %v2820
        %v2837 = vadd.f32 %v2789, %v2821
        %v2838 = vadd.f32 %v2790, %v2822
        %v2839 = vadd.f32 %v2791, %v2823
        %v2840 = vadd.f32 %v2792, %v2824
        %v2841 = vadd.f32 %v2793, %v2825
        %v2842 = vadd.f32 %v2794, %v2826
        %v2843 = vadd.f32 %v2795, %v2827
        %v2844 = vmul.f32 %v2828, 0.12
        %v2845 = vmul.f32 %v2829, 0.12
        %v2846 = vmul.f32 %v2830, 0.12
        %v2847 = vmul.f32 %v2831, 0.12
        %v2848 = vmul.f32 %v2832, 0.12
        %v2849 = vmul.f32 %v2833, 0.12
        %v2850 = vmul.f32 %v2834, 0.12
        %v2851 = vmul.f32 %v2835, 0.12
        %v2852 = vmul.f32 %v2836, 0.12
        %v2853 = vmul.f32 %v2837, 0.12
        %v2854 = vmul.f32 %v2838, 0.12
        %v2855 = vmul.f32 %v2839, 0.12
        %v2856 = vmul.f32 %v2840, 0.12
        %v2857 = vmul.f32 %v2841, 0.12
        %v2858 = vmul.f32 %v2842, 0.12
        %v2859 = vmul.f32 %v2843, 0.12
        %v2860 = vpack.c.bf16 %v2845, %v2844
        %v2861 = vpack.c.bf16 %v2847, %v2846
        %v2862 = vpack.c.bf16 %v2849, %v2848
        %v2863 = vpack.c.bf16 %v2851, %v2850
        %v2864 = vpack.c.bf16 %v2853, %v2852
        %v2865 = vpack.c.bf16 %v2855, %v2854
        %v2866 = vpack.c.bf16 %v2857, %v2856
        %v2867 = vpack.c.bf16 %v2859, %v2858
        %s2868 = smul.u32 %s26, 128
        %v2869 = vlaneseq
        %v2870 = vshrl.u32 %v2869, 7
        %v2871 = vadd.s32 %v2870, 8
        %v2872 = vadd.s32 %v2870, 16
        %v2873 = vadd.s32 %v2870, 24
        %v2874 = vadd.s32 %v2870, 32
        %v2875 = vadd.s32 %v2870, 40
        %v2876 = vadd.s32 %v2870, 48
        %v2877 = vadd.s32 %v2870, 56
        %v2878 = vadd.s32 %v2870, 64
        %v2879 = vadd.s32 %v2870, 72
        %v2880 = vadd.s32 %v2870, 80
        %v2881 = vadd.s32 %v2870, 88
        %v2882 = vadd.s32 %v2870, 96
        %v2883 = vadd.s32 %v2870, 104
        %v2884 = vadd.s32 %v2870, 112
        %v2885 = vadd.s32 %v2870, 120
        %v2886 = vstv %s2868
        %v2887 = vadd.s32 %v2886, %v2870
        %v2888 = vadd.s32 %v2886, %v2871
        %v2889 = vadd.s32 %v2886, %v2872
        %v2890 = vadd.s32 %v2886, %v2873
        %v2891 = vadd.s32 %v2886, %v2874
        %v2892 = vadd.s32 %v2886, %v2875
        %v2893 = vadd.s32 %v2886, %v2876
        %v2894 = vadd.s32 %v2886, %v2877
        %v2895 = vadd.s32 %v2886, %v2878
        %v2896 = vadd.s32 %v2886, %v2879
        %v2897 = vadd.s32 %v2886, %v2880
        %v2898 = vadd.s32 %v2886, %v2881
        %v2899 = vadd.s32 %v2886, %v2882
        %v2900 = vadd.s32 %v2886, %v2883
        %v2901 = vadd.s32 %v2886, %v2884
        %v2902 = vadd.s32 %v2886, %v2885
        %s2903 = sadd.s32 %s26, 1
        %s2904 = smul.u32 %s2903, 128
        %s2905 = sadd.s32 %s2904, 127
        %p2906 = scmp.lt.s32.totalorder %s2905, 0
        %s2907 = ssub.s32 0, %s2905
        %s2908 = scalar_select %p2906, %s2907, %s2905
        %s2909 = sshrl.u32 %s2908, 7
        %s2910 = ssub.s32 0, %s2909
        %s2911 = scalar_select %p2906, %s2910, %s2909
        // While loop
        $region229: #{_lambda_.4} parent=203 // loop_pre_header
          _
        $region230: #{_lambda_.4} parent=203 // loop_header
          %s2913 = sphi 0, %s2915
          %p2914 = scmp.ge.s32.totalorder %s2913, %s2911
          %v2918 = vphi -1e+30, %v3170
          %v2919 = vphi -1e+30, %v3171
          %v2920 = vphi -1e+30, %v3172
          %v2921 = vphi -1e+30, %v3173
          %v2922 = vphi -1e+30, %v3174
          %v2923 = vphi -1e+30, %v3175
          %v2924 = vphi -1e+30, %v3176
          %v2925 = vphi -1e+30, %v3177
          %v2926 = vphi -1e+30, %v3178
          %v2927 = vphi -1e+30, %v3179
          %v2928 = vphi -1e+30, %v3180
          %v2929 = vphi -1e+30, %v3181
          %v2930 = vphi -1e+30, %v3182
          %v2931 = vphi -1e+30, %v3183
          %v2932 = vphi -1e+30, %v3184
          %v2933 = vphi -1e+30, %v3185
          %v2934 = vphi 0.0, %v3330
          %v2935 = vphi 0.0, %v3331
          %v2936 = vphi 0.0, %v3332
          %v2937 = vphi 0.0, %v3333
          %v2938 = vphi 0.0, %v3334
          %v2939 = vphi 0.0, %v3335
          %v2940 = vphi 0.0, %v3336
          %v2941 = vphi 0.0, %v3337
          %v2942 = vphi 0.0, %v3338
          %v2943 = vphi 0.0, %v3339
          %v2944 = vphi 0.0, %v3340
          %v2945 = vphi 0.0, %v3341
          %v2946 = vphi 0.0, %v3342
          %v2947 = vphi 0.0, %v3343
          %v2948 = vphi 0.0, %v3344
          %v2949 = vphi 0.0, %v3345
          %v2950 = vphi 0.0, %v3467
          %v2951 = vphi 0.0, %v3468
          %v2952 = vphi 0.0, %v3469
          %v2953 = vphi 0.0, %v3470
          %v2954 = vphi 0.0, %v3471
          %v2955 = vphi 0.0, %v3472
          %v2956 = vphi 0.0, %v3473
          %v2957 = vphi 0.0, %v3474
          %v2958 = vphi 0.0, %v3475
          %v2959 = vphi 0.0, %v3476
          %v2960 = vphi 0.0, %v3477
          %v2961 = vphi 0.0, %v3478
          %v2962 = vphi 0.0, %v3479
          %v2963 = vphi 0.0, %v3480
          %v2964 = vphi 0.0, %v3481
          %v2965 = vphi 0.0, %v3482
        $region231: #{_lambda_.4} parent=203 // loop_header_branch
          %2917 = sbr.rel (%p2914) target = $region235
        $region232: #{_lambda_.4} parent=203 // loop_body
          %s2966 = smul.u32 %s2913, 128
          %s2967 = sshra.s32 %s2966, 3
          %s2968 = sand.u32 %s2966, 7
          %s2969 = smul.addr %s2967, 4
          %s2970 = scalar_lea.vmem [#allocation2], %s2969
          %v2971 = vld [vmem:[%s2970] sm:$0xf]
          %v2972 = vld [vmem:[%s2970 + $0x4] sm:$0xf]
          %v2973 = vld [vmem:[%s2970 + $0x8] sm:$0xf]
          %v2974 = vld [vmem:[%s2970 + $0xc] sm:$0xf]
          %v2975 = vld [vmem:[%s2970 + $0x10] sm:$0xf]
          %v2976 = vld [vmem:[%s2970 + $0x14] sm:$0xf]
          %v2977 = vld [vmem:[%s2970 + $0x18] sm:$0xf]
          %v2978 = vld [vmem:[%s2970 + $0x1c] sm:$0xf]
          %v2979 = vld [vmem:[%s2970 + $0x20] sm:$0xf]
          %v2980 = vld [vmem:[%s2970 + $0x24] sm:$0xf]
          %v2981 = vld [vmem:[%s2970 + $0x28] sm:$0xf]
          %v2982 = vld [vmem:[%s2970 + $0x2c] sm:$0xf]
          %v2983 = vld [vmem:[%s2970 + $0x30] sm:$0xf]
          %v2984 = vld [vmem:[%s2970 + $0x34] sm:$0xf]
          %v2985 = vld [vmem:[%s2970 + $0x38] sm:$0xf]
          %v2986 = vld [vmem:[%s2970 + $0x3c] sm:$0xf]
          %s2987 = smul.addr %s2967, 4
          %s2988 = scalar_lea.vmem [#allocation3], %s2987
          %v2989 = vld [vmem:[%s2988] sm:$0xf]
          %v2990 = vld [vmem:[%s2988 + $0x4] sm:$0xf]
          %v2991 = vld [vmem:[%s2988 + $0x8] sm:$0xf]
          %v2992 = vld [vmem:[%s2988 + $0xc] sm:$0xf]
          %v2993 = vld [vmem:[%s2988 + $0x10] sm:$0xf]
          %v2994 = vld [vmem:[%s2988 + $0x14] sm:$0xf]
          %v2995 = vld [vmem:[%s2988 + $0x18] sm:$0xf]
          %v2996 = vld [vmem:[%s2988 + $0x1c] sm:$0xf]
          %v2997 = vld [vmem:[%s2988 + $0x20] sm:$0xf]
          %v2998 = vld [vmem:[%s2988 + $0x24] sm:$0xf]
          %v2999 = vld [vmem:[%s2988 + $0x28] sm:$0xf]
          %v3000 = vld [vmem:[%s2988 + $0x2c] sm:$0xf]
          %v3001 = vld [vmem:[%s2988 + $0x30] sm:$0xf]
          %v3002 = vld [vmem:[%s2988 + $0x34] sm:$0xf]
          %v3003 = vld [vmem:[%s2988 + $0x38] sm:$0xf]
          %v3004 = vld [vmem:[%s2988 + $0x3c] sm:$0xf]
          %v3021 = vunpack.c.l.b16 %v2971
          %v3022 = vunpack.c.l.b16 %v2972
          %v3023 = vunpack.c.l.b16 %v2973
          %v3024 = vunpack.c.l.b16 %v2974
          %v3025 = vunpack.c.l.b16 %v2975
          %v3026 = vunpack.c.l.b16 %v2976
          %v3027 = vunpack.c.l.b16 %v2977
          %v3028 = vunpack.c.l.b16 %v2978
          %v3029 = vunpack.c.l.b16 %v2979
          %v3030 = vunpack.c.l.b16 %v2980
          %v3031 = vunpack.c.l.b16 %v2981
          %v3032 = vunpack.c.l.b16 %v2982
          %v3033 = vunpack.c.l.b16 %v2983
          %v3034 = vunpack.c.l.b16 %v2984
          %v3035 = vunpack.c.l.b16 %v2985
          %v3036 = vunpack.c.l.b16 %v2986
          %v3037 = vpack.c.b16 %v3022, %v3021
          %v3038 = vpack.c.b16 %v3024, %v3023
          %v3039 = vpack.c.b16 %v3026, %v3025
          %v3040 = vpack.c.b16 %v3028, %v3027
          %v3041 = vpack.c.b16 %v3030, %v3029
          %v3042 = vpack.c.b16 %v3032, %v3031
          %v3043 = vpack.c.b16 %v3034, %v3033
          %v3044 = vpack.c.b16 %v3036, %v3035
          %3053 = vmatpush.bf16.xpose.msra.mxu0 %v3044
          %3054 = vmatpush.bf16.xpose.msra.mxu0 %v3043
          %3055 = vmatpush.bf16.xpose.msra.mxu0 %v3042
          %3056 = vmatpush.bf16.xpose.msra.mxu0 %v3041
          %3057 = vmatpush.bf16.xpose.msra.mxu0 %v3040
          %3058 = vmatpush.bf16.xpose.msra.mxu0 %v3039
          %3059 = vmatpush.bf16.xpose.msra.mxu0 %v3038
          %3060 = vmatpush.bf16.xpose.msra.mxu0 %v3037
          %3061 = vmatmul.bf16.gmra.mxu0 %v2860
          %v3062 = vpop.f32.mrf.mxu0
          %v3063 = vadd.f32 0.0, %v3062
          %v3064 = vpop.f32.mrf.mxu0
          %v3065 = vadd.f32 0.0, %v3064
          %3066 = vmatmul.bf16.gmra.mxu0 %v2861
          %v3067 = vpop.f32.mrf.mxu0
          %v3068 = vadd.f32 0.0, %v3067
          %v3069 = vpop.f32.mrf.mxu0
          %v3070 = vadd.f32 0.0, %v3069
          %3071 = vmatmul.bf16.gmra.mxu0 %v2862
          %v3072 = vpop.f32.mrf.mxu0
          %v3073 = vadd.f32 0.0, %v3072
          %v3074 = vpop.f32.mrf.mxu0
          %v3075 = vadd.f32 0.0, %v3074
          %3076 = vmatmul.bf16.gmra.mxu0 %v2863
          %v3077 = vpop.f32.mrf.mxu0
          %v3078 = vadd.f32 0.0, %v3077
          %v3079 = vpop.f32.mrf.mxu0
          %v3080 = vadd.f32 0.0, %v3079
          %3081 = vmatmul.bf16.gmra.mxu0 %v2864
          %v3082 = vpop.f32.mrf.mxu0
          %v3083 = vadd.f32 0.0, %v3082
          %v3084 = vpop.f32.mrf.mxu0
          %v3085 = vadd.f32 0.0, %v3084
          %3086 = vmatmul.bf16.gmra.mxu0 %v2865
          %v3087 = vpop.f32.mrf.mxu0
          %v3088 = vadd.f32 0.0, %v3087
          %v3089 = vpop.f32.mrf.mxu0
          %v3090 = vadd.f32 0.0, %v3089
          %3091 = vmatmul.bf16.gmra.mxu0 %v2866
          %v3092 = vpop.f32.mrf.mxu0
          %v3093 = vadd.f32 0.0, %v3092
          %v3094 = vpop.f32.mrf.mxu0
          %v3095 = vadd.f32 0.0, %v3094
          %3096 = vmatmul.bf16.gmra.mxu0 %v2867
          %v3097 = vpop.f32.mrf.mxu0
          %v3098 = vadd.f32 0.0, %v3097
          %v3099 = vpop.f32.mrf.mxu0
          %v3100 = vadd.f32 0.0, %v3099
          %3101 = vdwg.mxu0
          %v3102 = vlaneseq
          %v3103 = vand.u32 %v3102, 127
          %v3104 = vstv %s2966
          %v3105 = vadd.s32 %v3104, %v3103
          %vm3106 = vcmp.le.s32.totalorder %v3105, %v2887
          %vm3107 = vcmp.le.s32.totalorder %v3105, %v2888
          %vm3108 = vcmp.le.s32.totalorder %v3105, %v2889
          %vm3109 = vcmp.le.s32.totalorder %v3105, %v2890
          %vm3110 = vcmp.le.s32.totalorder %v3105, %v2891
          %vm3111 = vcmp.le.s32.totalorder %v3105, %v2892
          %vm3112 = vcmp.le.s32.totalorder %v3105, %v2893
          %vm3113 = vcmp.le.s32.totalorder %v3105, %v2894
          %vm3114 = vcmp.le.s32.totalorder %v3105, %v2895
          %vm3115 = vcmp.le.s32.totalorder %v3105, %v2896
          %vm3116 = vcmp.le.s32.totalorder %v3105, %v2897
          %vm3117 = vcmp.le.s32.totalorder %v3105, %v2898
          %vm3118 = vcmp.le.s32.totalorder %v3105, %v2899
          %vm3119 = vcmp.le.s32.totalorder %v3105, %v2900
          %vm3120 = vcmp.le.s32.totalorder %v3105, %v2901
          %vm3121 = vcmp.le.s32.totalorder %v3105, %v2902
          %v3122 = vsel %vm3106, %v3063, -1e+30
          %v3123 = vsel %vm3107, %v3065, -1e+30
          %v3124 = vsel %vm3108, %v3068, -1e+30
          %v3125 = vsel %vm3109, %v3070, -1e+30
          %v3126 = vsel %vm3110, %v3073, -1e+30
          %v3127 = vsel %vm3111, %v3075, -1e+30
          %v3128 = vsel %vm3112, %v3078, -1e+30
          %v3129 = vsel %vm3113, %v3080, -1e+30
          %v3130 = vsel %vm3114, %v3083, -1e+30
          %v3131 = vsel %vm3115, %v3085, -1e+30
          %v3132 = vsel %vm3116, %v3088, -1e+30
          %v3133 = vsel %vm3117, %v3090, -1e+30
          %v3134 = vsel %vm3118, %v3093, -1e+30
          %v3135 = vsel %vm3119, %v3095, -1e+30
          %v3136 = vsel %vm3120, %v3098, -1e+30
          %v3137 = vsel %vm3121, %v3100, -1e+30
          %3138 = vmax.xlane.f32.xlu0 %v3122
          %v3139 = vpop.xlane.xlu0 %3138
          %3140 = vmax.xlane.f32.xlu0 %v3123
          %v3141 = vpop.xlane.xlu0 %3140
          %3142 = vmax.xlane.f32.xlu0 %v3124
          %v3143 = vpop.xlane.xlu0 %3142
          %3144 = vmax.xlane.f32.xlu0 %v3125
          %v3145 = vpop.xlane.xlu0 %3144
          %3146 = vmax.xlane.f32.xlu0 %v3126
          %v3147 = vpop.xlane.xlu0 %3146
          %3148 = vmax.xlane.f32.xlu0 %v3127
          %v3149 = vpop.xlane.xlu0 %3148
          %3150 = vmax.xlane.f32.xlu0 %v3128
          %v3151 = vpop.xlane.xlu0 %3150
          %3152 = vmax.xlane.f32.xlu0 %v3129
          %v3153 = vpop.xlane.xlu0 %3152
          %3154 = vmax.xlane.f32.xlu0 %v3130
          %v3155 = vpop.xlane.xlu0 %3154
          %3156 = vmax.xlane.f32.xlu0 %v3131
          %v3157 = vpop.xlane.xlu0 %3156
          %3158 = vmax.xlane.f32.xlu0 %v3132
          %v3159 = vpop.xlane.xlu0 %3158
          %3160 = vmax.xlane.f32.xlu0 %v3133
          %v3161 = vpop.xlane.xlu0 %3160
          %3162 = vmax.xlane.f32.xlu0 %v3134
          %v3163 = vpop.xlane.xlu0 %3162
          %3164 = vmax.xlane.f32.xlu0 %v3135
          %v3165 = vpop.xlane.xlu0 %3164
          %3166 = vmax.xlane.f32.xlu0 %v3136
          %v3167 = vpop.xlane.xlu0 %3166
          %3168 = vmax.xlane.f32.xlu0 %v3137
          %v3169 = vpop.xlane.xlu0 %3168
          %v3170 = vmax.f32 %v2918, %v3139
          %v3171 = vmax.f32 %v2919, %v3141
          %v3172 = vmax.f32 %v2920, %v3143
          %v3173 = vmax.f32 %v2921, %v3145
          %v3174 = vmax.f32 %v2922, %v3147
          %v3175 = vmax.f32 %v2923, %v3149
          %v3176 = vmax.f32 %v2924, %v3151
          %v3177 = vmax.f32 %v2925, %v3153
          %v3178 = vmax.f32 %v2926, %v3155
          %v3179 = vmax.f32 %v2927, %v3157
          %v3180 = vmax.f32 %v2928, %v3159
          %v3181 = vmax.f32 %v2929, %v3161
          %v3182 = vmax.f32 %v2930, %v3163
          %v3183 = vmax.f32 %v2931, %v3165
          %v3184 = vmax.f32 %v2932, %v3167
          %v3185 = vmax.f32 %v2933, %v3169
          %v3186 = vsub.f32 %v2918, %v3170
          %v3187 = vsub.f32 %v2919, %v3171
          %v3188 = vsub.f32 %v2920, %v3172
          %v3189 = vsub.f32 %v2921, %v3173
          %v3190 = vsub.f32 %v2922, %v3174
          %v3191 = vsub.f32 %v2923, %v3175
          %v3192 = vsub.f32 %v2924, %v3176
          %v3193 = vsub.f32 %v2925, %v3177
          %v3194 = vsub.f32 %v2926, %v3178
          %v3195 = vsub.f32 %v2927, %v3179
          %v3196 = vsub.f32 %v2928, %v3180
          %v3197 = vsub.f32 %v2929, %v3181
          %v3198 = vsub.f32 %v2930, %v3182
          %v3199 = vsub.f32 %v2931, %v3183
          %v3200 = vsub.f32 %v2932, %v3184
          %v3201 = vsub.f32 %v2933, %v3185
          %v3202 = vmul.f32 %v3186, 1.442695
          %v3203 = vpow.pop %v3202
          %v3204 = vmul.f32 %v3187, 1.442695
          %v3205 = vpow.pop %v3204
          %v3206 = vmul.f32 %v3188, 1.442695
          %v3207 = vpow.pop %v3206
          %v3208 = vmul.f32 %v3189, 1.442695
          %v3209 = vpow.pop %v3208
          %v3210 = vmul.f32 %v3190, 1.442695
          %v3211 = vpow.pop %v3210
          %v3212 = vmul.f32 %v3191, 1.442695
          %v3213 = vpow.pop %v3212
          %v3214 = vmul.f32 %v3192, 1.442695
          %v3215 = vpow.pop %v3214
          %v3216 = vmul.f32 %v3193, 1.442695
          %v3217 = vpow.pop %v3216
          %v3218 = vmul.f32 %v3194, 1.442695
          %v3219 = vpow.pop %v3218
          %v3220 = vmul.f32 %v3195, 1.442695
          %v3221 = vpow.pop %v3220
          %v3222 = vmul.f32 %v3196, 1.442695
          %v3223 = vpow.pop %v3222
          %v3224 = vmul.f32 %v3197, 1.442695
          %v3225 = vpow.pop %v3224
          %v3226 = vmul.f32 %v3198, 1.442695
          %v3227 = vpow.pop %v3226
          %v3228 = vmul.f32 %v3199, 1.442695
          %v3229 = vpow.pop %v3228
          %v3230 = vmul.f32 %v3200, 1.442695
          %v3231 = vpow.pop %v3230
          %v3232 = vmul.f32 %v3201, 1.442695
          %v3233 = vpow.pop %v3232
          %v3234 = vsub.f32 %v3122, %v3170
          %v3235 = vsub.f32 %v3123, %v3171
          %v3236 = vsub.f32 %v3124, %v3172
          %v3237 = vsub.f32 %v3125, %v3173
          %v3238 = vsub.f32 %v3126, %v3174
          %v3239 = vsub.f32 %v3127, %v3175
          %v3240 = vsub.f32 %v3128, %v3176
          %v3241 = vsub.f32 %v3129, %v3177
          %v3242 = vsub.f32 %v3130, %v3178
          %v3243 = vsub.f32 %v3131, %v3179
          %v3244 = vsub.f32 %v3132, %v3180
          %v3245 = vsub.f32 %v3133, %v3181
          %v3246 = vsub.f32 %v3134, %v3182
          %v3247 = vsub.f32 %v3135, %v3183
          %v3248 = vsub.f32 %v3136, %v3184
          %v3249 = vsub.f32 %v3137, %v3185
          %v3250 = vmul.f32 %v3234, 1.442695
          %v3251 = vpow.pop %v3250
          %v3252 = vmul.f32 %v3235, 1.442695
          %v3253 = vpow.pop %v3252
          %v3254 = vmul.f32 %v3236, 1.442695
          %v3255 = vpow.pop %v3254
          %v3256 = vmul.f32 %v3237, 1.442695
          %v3257 = vpow.pop %v3256
          %v3258 = vmul.f32 %v3238, 1.442695
          %v3259 = vpow.pop %v3258
          %v3260 = vmul.f32 %v3239, 1.442695
          %v3261 = vpow.pop %v3260
          %v3262 = vmul.f32 %v3240, 1.442695
          %v3263 = vpow.pop %v3262
          %v3264 = vmul.f32 %v3241, 1.442695
          %v3265 = vpow.pop %v3264
          %v3266 = vmul.f32 %v3242, 1.442695
          %v3267 = vpow.pop %v3266
          %v3268 = vmul.f32 %v3243, 1.442695
          %v3269 = vpow.pop %v3268
          %v3270 = vmul.f32 %v3244, 1.442695
          %v3271 = vpow.pop %v3270
          %v3272 = vmul.f32 %v3245, 1.442695
          %v3273 = vpow.pop %v3272
          %v3274 = vmul.f32 %v3246, 1.442695
          %v3275 = vpow.pop %v3274
          %v3276 = vmul.f32 %v3247, 1.442695
          %v3277 = vpow.pop %v3276
          %v3278 = vmul.f32 %v3248, 1.442695
          %v3279 = vpow.pop %v3278
          %v3280 = vmul.f32 %v3249, 1.442695
          %v3281 = vpow.pop %v3280
          %v3282 = vmul.f32 %v3203, %v2934
          %v3283 = vmul.f32 %v3205, %v2935
          %v3284 = vmul.f32 %v3207, %v2936
          %v3285 = vmul.f32 %v3209, %v2937
          %v3286 = vmul.f32 %v3211, %v2938
          %v3287 = vmul.f32 %v3213, %v2939
          %v3288 = vmul.f32 %v3215, %v2940
          %v3289 = vmul.f32 %v3217, %v2941
          %v3290 = vmul.f32 %v3219, %v2942
          %v3291 = vmul.f32 %v3221, %v2943
          %v3292 = vmul.f32 %v3223, %v2944
          %v3293 = vmul.f32 %v3225, %v2945
          %v3294 = vmul.f32 %v3227, %v2946
          %v3295 = vmul.f32 %v3229, %v2947
          %v3296 = vmul.f32 %v3231, %v2948
          %v3297 = vmul.f32 %v3233, %v2949
          %3298 = vadd.xlane.f32.xlu0 %v3251
          %v3299 = vpop.xlane.xlu0 %3298
          %3300 = vadd.xlane.f32.xlu0 %v3253
          %v3301 = vpop.xlane.xlu0 %3300
          %3302 = vadd.xlane.f32.xlu0 %v3255
          %v3303 = vpop.xlane.xlu0 %3302
          %3304 = vadd.xlane.f32.xlu0 %v3257
          %v3305 = vpop.xlane.xlu0 %3304
          %3306 = vadd.xlane.f32.xlu0 %v3259
          %v3307 = vpop.xlane.xlu0 %3306
          %3308 = vadd.xlane.f32.xlu0 %v3261
          %v3309 = vpop.xlane.xlu0 %3308
          %3310 = vadd.xlane.f32.xlu0 %v3263
          %v3311 = vpop.xlane.xlu0 %3310
          %3312 = vadd.xlane.f32.xlu0 %v3265
          %v3313 = vpop.xlane.xlu0 %3312
          %3314 = vadd.xlane.f32.xlu0 %v3267
          %v3315 = vpop.xlane.xlu0 %3314
          %3316 = vadd.xlane.f32.xlu0 %v3269
          %v3317 = vpop.xlane.xlu0 %3316
          %3318 = vadd.xlane.f32.xlu0 %v3271
          %v3319 = vpop.xlane.xlu0 %3318
          %3320 = vadd.xlane.f32.xlu0 %v3273
          %v3321 = vpop.xlane.xlu0 %3320
          %3322 = vadd.xlane.f32.xlu0 %v3275
          %v3323 = vpop.xlane.xlu0 %3322
          %3324 = vadd.xlane.f32.xlu0 %v3277
          %v3325 = vpop.xlane.xlu0 %3324
          %3326 = vadd.xlane.f32.xlu0 %v3279
          %v3327 = vpop.xlane.xlu0 %3326
          %3328 = vadd.xlane.f32.xlu0 %v3281
          %v3329 = vpop.xlane.xlu0 %3328
          %v3330 = vadd.f32 %v3282, %v3299
          %v3331 = vadd.f32 %v3283, %v3301
          %v3332 = vadd.f32 %v3284, %v3303
          %v3333 = vadd.f32 %v3285, %v3305
          %v3334 = vadd.f32 %v3286, %v3307
          %v3335 = vadd.f32 %v3287, %v3309
          %v3336 = vadd.f32 %v3288, %v3311
          %v3337 = vadd.f32 %v3289, %v3313
          %v3338 = vadd.f32 %v3290, %v3315
          %v3339 = vadd.f32 %v3291, %v3317
          %v3340 = vadd.f32 %v3292, %v3319
          %v3341 = vadd.f32 %v3293, %v3321
          %v3342 = vadd.f32 %v3294, %v3323
          %v3343 = vadd.f32 %v3295, %v3325
          %v3344 = vadd.f32 %v3296, %v3327
          %v3345 = vadd.f32 %v3297, %v3329
          %v3346 = vmul.f32 %v3203, %v2950
          %v3347 = vmul.f32 %v3205, %v2951
          %v3348 = vmul.f32 %v3207, %v2952
          %v3349 = vmul.f32 %v3209, %v2953
          %v3350 = vmul.f32 %v3211, %v2954
          %v3351 = vmul.f32 %v3213, %v2955
          %v3352 = vmul.f32 %v3215, %v2956
          %v3353 = vmul.f32 %v3217, %v2957
          %v3354 = vmul.f32 %v3219, %v2958
          %v3355 = vmul.f32 %v3221, %v2959
          %v3356 = vmul.f32 %v3223, %v2960
          %v3357 = vmul.f32 %v3225, %v2961
          %v3358 = vmul.f32 %v3227, %v2962
          %v3359 = vmul.f32 %v3229, %v2963
          %v3360 = vmul.f32 %v3231, %v2964
          %v3361 = vmul.f32 %v3233, %v2965
          %v3362 = vpack.c.bf16 %v3253, %v3251
          %v3363 = vpack.c.bf16 %v3257, %v3255
          %v3364 = vpack.c.bf16 %v3261, %v3259
          %v3365 = vpack.c.bf16 %v3265, %v3263
          %v3366 = vpack.c.bf16 %v3269, %v3267
          %v3367 = vpack.c.bf16 %v3273, %v3271
          %v3368 = vpack.c.bf16 %v3277, %v3275
          %v3369 = vpack.c.bf16 %v3281, %v3279
          %v3386 = vunpack.c.l.b16 %v2989
          %v3387 = vunpack.c.l.b16 %v2990
          %v3388 = vunpack.c.l.b16 %v2991
          %v3389 = vunpack.c.l.b16 %v2992
          %v3390 = vunpack.c.l.b16 %v2993
          %v3391 = vunpack.c.l.b16 %v2994
          %v3392 = vunpack.c.l.b16 %v2995
          %v3393 = vunpack.c.l.b16 %v2996
          %v3394 = vunpack.c.l.b16 %v2997
          %v3395 = vunpack.c.l.b16 %v2998
          %v3396 = vunpack.c.l.b16 %v2999
          %v3397 = vunpack.c.l.b16 %v3000
          %v3398 = vunpack.c.l.b16 %v3001
          %v3399 = vunpack.c.l.b16 %v3002
          %v3400 = vunpack.c.l.b16 %v3003
          %v3401 = vunpack.c.l.b16 %v3004
          %v3402 = vpack.c.b16 %v3387, %v3386
          %v3403 = vpack.c.b16 %v3389, %v3388
          %v3404 = vpack.c.b16 %v3391, %v3390
          %v3405 = vpack.c.b16 %v3393, %v3392
          %v3406 = vpack.c.b16 %v3395, %v3394
          %v3407 = vpack.c.b16 %v3397, %v3396
          %v3408 = vpack.c.b16 %v3399, %v3398
          %v3409 = vpack.c.b16 %v3401, %v3400
          %3418 = vmatpush.bf16.msra.mxu0 %v3409
          %3419 = vmatpush.bf16.msra.mxu0 %v3408
          %3420 = vmatpush.bf16.msra.mxu0 %v3407
          %3421 = vmatpush.bf16.msra.mxu0 %v3406
          %3422 = vmatpush.bf16.msra.mxu0 %v3405
          %3423 = vmatpush.bf16.msra.mxu0 %v3404
          %3424 = vmatpush.bf16.msra.mxu0 %v3403
          %3425 = vmatpush.bf16.msra.mxu0 %v3402
          %3426 = vmatmul.bf16.gmra.mxu0 %v3362
          %v3427 = vpop.f32.mrf.mxu0
          %v3428 = vadd.f32 0.0, %v3427
          %v3429 = vpop.f32.mrf.mxu0
          %v3430 = vadd.f32 0.0, %v3429
          %3431 = vmatmul.bf16.gmra.mxu0 %v3363
          %v3432 = vpop.f32.mrf.mxu0
          %v3433 = vadd.f32 0.0, %v3432
          %v3434 = vpop.f32.mrf.mxu0
          %v3435 = vadd.f32 0.0, %v3434
          %3436 = vmatmul.bf16.gmra.mxu0 %v3364
          %v3437 = vpop.f32.mrf.mxu0
          %v3438 = vadd.f32 0.0, %v3437
          %v3439 = vpop.f32.mrf.mxu0
          %v3440 = vadd.f32 0.0, %v3439
          %3441 = vmatmul.bf16.gmra.mxu0 %v3365
          %v3442 = vpop.f32.mrf.mxu0
          %v3443 = vadd.f32 0.0, %v3442
          %v3444 = vpop.f32.mrf.mxu0
          %v3445 = vadd.f32 0.0, %v3444
          %3446 = vmatmul.bf16.gmra.mxu0 %v3366
          %v3447 = vpop.f32.mrf.mxu0
          %v3448 = vadd.f32 0.0, %v3447
          %v3449 = vpop.f32.mrf.mxu0
          %v3450 = vadd.f32 0.0, %v3449
          %3451 = vmatmul.bf16.gmra.mxu0 %v3367
          %v3452 = vpop.f32.mrf.mxu0
          %v3453 = vadd.f32 0.0, %v3452
          %v3454 = vpop.f32.mrf.mxu0
          %v3455 = vadd.f32 0.0, %v3454
          %3456 = vmatmul.bf16.gmra.mxu0 %v3368
          %v3457 = vpop.f32.mrf.mxu0
          %v3458 = vadd.f32 0.0, %v3457
          %v3459 = vpop.f32.mrf.mxu0
          %v3460 = vadd.f32 0.0, %v3459
          %3461 = vmatmul.bf16.gmra.mxu0 %v3369
          %v3462 = vpop.f32.mrf.mxu0
          %v3463 = vadd.f32 0.0, %v3462
          %v3464 = vpop.f32.mrf.mxu0
          %v3465 = vadd.f32 0.0, %v3464
          %3466 = vdwg.mxu0
          %v3467 = vadd.f32 %v3346, %v3428
          %v3468 = vadd.f32 %v3347, %v3430
          %v3469 = vadd.f32 %v3348, %v3433
          %v3470 = vadd.f32 %v3349, %v3435
          %v3471 = vadd.f32 %v3350, %v3438
          %v3472 = vadd.f32 %v3351, %v3440
          %v3473 = vadd.f32 %v3352, %v3443
          %v3474 = vadd.f32 %v3353, %v3445
          %v3475 = vadd.f32 %v3354, %v3448
          %v3476 = vadd.f32 %v3355, %v3450
          %v3477 = vadd.f32 %v3356, %v3453
          %v3478 = vadd.f32 %v3357, %v3455
          %v3479 = vadd.f32 %v3358, %v3458
          %v3480 = vadd.f32 %v3359, %v3460
          %v3481 = vadd.f32 %v3360, %v3463
          %v3482 = vadd.f32 %v3361, %v3465
        $region233: #{_lambda_.4} parent=203 // loop_footer
          %s2915 = sadd.s32 %s2913, 1
        $region234: #{_lambda_.4} parent=203 // loop_footer_branch
          %2912 = sbr.rel target = $region230
        $region235: #{_lambda_.4} parent=203 // loop_exit
          _
        %v3483 = vrcp.pop %v2934
        %v3484 = vmul.f32 %v2934, %v3483
        %v3485 = vsub.f32 1.0, %v3484
        %v3486 = vmul.f32 %v3483, %v3485
        %v3487 = vadd.f32 %v3483, %v3486
        %vm3488 = vweird.f32 %v2934
        %vm3489 = vweird.f32 %v3483
        %vm3490 = vmor %vm3488, %vm3489
        %v3491 = vsel %vm3490, %v3483, %v3487
        %v3492 = vand.u32 2147483647, %v2934
        %vm3493 = vcmp.eq.f32.partialorder %v3492, 8.507059e+37
        %v3494 = vand.u32 %v2934, 2147483648
        %v3495 = vor.u32 1.1754944e-38, %v3494
        %v3496 = vsel %vm3493, %v3495, %v3491
        %v3497 = vmul.f32 %v2950, %v3496
        %v3498 = vrcp.pop %v2935
        %v3499 = vmul.f32 %v2935, %v3498
        %v3500 = vsub.f32 1.0, %v3499
        %v3501 = vmul.f32 %v3498, %v3500
        %v3502 = vadd.f32 %v3498, %v3501
        %vm3503 = vweird.f32 %v2935
        %vm3504 = vweird.f32 %v3498
        %vm3505 = vmor %vm3503, %vm3504
        %v3506 = vsel %vm3505, %v3498, %v3502
        %v3507 = vand.u32 2147483647, %v2935
        %vm3508 = vcmp.eq.f32.partialorder %v3507, 8.507059e+37
        %v3509 = vand.u32 %v2935, 2147483648
        %v3510 = vor.u32 1.1754944e-38, %v3509
        %v3511 = vsel %vm3508, %v3510, %v3506
        %v3512 = vmul.f32 %v2951, %v3511
        %v3513 = vrcp.pop %v2936
        %v3514 = vmul.f32 %v2936, %v3513
        %v3515 = vsub.f32 1.0, %v3514
        %v3516 = vmul.f32 %v3513, %v3515
        %v3517 = vadd.f32 %v3513, %v3516
        %vm3518 = vweird.f32 %v2936
        %vm3519 = vweird.f32 %v3513
        %vm3520 = vmor %vm3518, %vm3519
        %v3521 = vsel %vm3520, %v3513, %v3517
        %v3522 = vand.u32 2147483647, %v2936
        %vm3523 = vcmp.eq.f32.partialorder %v3522, 8.507059e+37
        %v3524 = vand.u32 %v2936, 2147483648
        %v3525 = vor.u32 1.1754944e-38, %v3524
        %v3526 = vsel %vm3523, %v3525, %v3521
        %v3527 = vmul.f32 %v2952, %v3526
        %v3528 = vrcp.pop %v2937
        %v3529 = vmul.f32 %v2937, %v3528
        %v3530 = vsub.f32 1.0, %v3529
        %v3531 = vmul.f32 %v3528, %v3530
        %v3532 = vadd.f32 %v3528, %v3531
        %vm3533 = vweird.f32 %v2937
        %vm3534 = vweird.f32 %v3528
        %vm3535 = vmor %vm3533, %vm3534
        %v3536 = vsel %vm3535, %v3528, %v3532
        %v3537 = vand.u32 2147483647, %v2937
        %vm3538 = vcmp.eq.f32.partialorder %v3537, 8.507059e+37
        %v3539 = vand.u32 %v2937, 2147483648
        %v3540 = vor.u32 1.1754944e-38, %v3539
        %v3541 = vsel %vm3538, %v3540, %v3536
        %v3542 = vmul.f32 %v2953, %v3541
        %v3543 = vrcp.pop %v2938
        %v3544 = vmul.f32 %v2938, %v3543
        %v3545 = vsub.f32 1.0, %v3544
        %v3546 = vmul.f32 %v3543, %v3545
        %v3547 = vadd.f32 %v3543, %v3546
        %vm3548 = vweird.f32 %v2938
        %vm3549 = vweird.f32 %v3543
        %vm3550 = vmor %vm3548, %vm3549
        %v3551 = vsel %vm3550, %v3543, %v3547
        %v3552 = vand.u32 2147483647, %v2938
        %vm3553 = vcmp.eq.f32.partialorder %v3552, 8.507059e+37
        %v3554 = vand.u32 %v2938, 2147483648
        %v3555 = vor.u32 1.1754944e-38, %v3554
        %v3556 = vsel %vm3553, %v3555, %v3551
        %v3557 = vmul.f32 %v2954, %v3556
        %v3558 = vrcp.pop %v2939
        %v3559 = vmul.f32 %v2939, %v3558
        %v3560 = vsub.f32 1.0, %v3559
        %v3561 = vmul.f32 %v3558, %v3560
        %v3562 = vadd.f32 %v3558, %v3561
        %vm3563 = vweird.f32 %v2939
        %vm3564 = vweird.f32 %v3558
        %vm3565 = vmor %vm3563, %vm3564
        %v3566 = vsel %vm3565, %v3558, %v3562
        %v3567 = vand.u32 2147483647, %v2939
        %vm3568 = vcmp.eq.f32.partialorder %v3567, 8.507059e+37
        %v3569 = vand.u32 %v2939, 2147483648
        %v3570 = vor.u32 1.1754944e-38, %v3569
        %v3571 = vsel %vm3568, %v3570, %v3566
        %v3572 = vmul.f32 %v2955, %v3571
        %v3573 = vrcp.pop %v2940
        %v3574 = vmul.f32 %v2940, %v3573
        %v3575 = vsub.f32 1.0, %v3574
        %v3576 = vmul.f32 %v3573, %v3575
        %v3577 = vadd.f32 %v3573, %v3576
        %vm3578 = vweird.f32 %v2940
        %vm3579 = vweird.f32 %v3573
        %vm3580 = vmor %vm3578, %vm3579
        %v3581 = vsel %vm3580, %v3573, %v3577
        %v3582 = vand.u32 2147483647, %v2940
        %vm3583 = vcmp.eq.f32.partialorder %v3582, 8.507059e+37
        %v3584 = vand.u32 %v2940, 2147483648
        %v3585 = vor.u32 1.1754944e-38, %v3584
        %v3586 = vsel %vm3583, %v3585, %v3581
        %v3587 = vmul.f32 %v2956, %v3586
        %v3588 = vrcp.pop %v2941
        %v3589 = vmul.f32 %v2941, %v3588
        %v3590 = vsub.f32 1.0, %v3589
        %v3591 = vmul.f32 %v3588, %v3590
        %v3592 = vadd.f32 %v3588, %v3591
        %vm3593 = vweird.f32 %v2941
        %vm3594 = vweird.f32 %v3588
        %vm3595 = vmor %vm3593, %vm3594
        %v3596 = vsel %vm3595, %v3588, %v3592
        %v3597 = vand.u32 2147483647, %v2941
        %vm3598 = vcmp.eq.f32.partialorder %v3597, 8.507059e+37
        %v3599 = vand.u32 %v2941, 2147483648
        %v3600 = vor.u32 1.1754944e-38, %v3599
        %v3601 = vsel %vm3598, %v3600, %v3596
        %v3602 = vmul.f32 %v2957, %v3601
        %v3603 = vrcp.pop %v2942
        %v3604 = vmul.f32 %v2942, %v3603
        %v3605 = vsub.f32 1.0, %v3604
        %v3606 = vmul.f32 %v3603, %v3605
        %v3607 = vadd.f32 %v3603, %v3606
        %vm3608 = vweird.f32 %v2942
        %vm3609 = vweird.f32 %v3603
        %vm3610 = vmor %vm3608, %vm3609
        %v3611 = vsel %vm3610, %v3603, %v3607
        %v3612 = vand.u32 2147483647, %v2942
        %vm3613 = vcmp.eq.f32.partialorder %v3612, 8.507059e+37
        %v3614 = vand.u32 %v2942, 2147483648
        %v3615 = vor.u32 1.1754944e-38, %v3614
        %v3616 = vsel %vm3613, %v3615, %v3611
        %v3617 = vmul.f32 %v2958, %v3616
        %v3618 = vrcp.pop %v2943
        %v3619 = vmul.f32 %v2943, %v3618
        %v3620 = vsub.f32 1.0, %v3619
        %v3621 = vmul.f32 %v3618, %v3620
        %v3622 = vadd.f32 %v3618, %v3621
        %vm3623 = vweird.f32 %v2943
        %vm3624 = vweird.f32 %v3618
        %vm3625 = vmor %vm3623, %vm3624
        %v3626 = vsel %vm3625, %v3618, %v3622
        %v3627 = vand.u32 2147483647, %v2943
        %vm3628 = vcmp.eq.f32.partialorder %v3627, 8.507059e+37
        %v3629 = vand.u32 %v2943, 2147483648
        %v3630 = vor.u32 1.1754944e-38, %v3629
        %v3631 = vsel %vm3628, %v3630, %v3626
        %v3632 = vmul.f32 %v2959, %v3631
        %v3633 = vrcp.pop %v2944
        %v3634 = vmul.f32 %v2944, %v3633
        %v3635 = vsub.f32 1.0, %v3634
        %v3636 = vmul.f32 %v3633, %v3635
        %v3637 = vadd.f32 %v3633, %v3636
        %vm3638 = vweird.f32 %v2944
        %vm3639 = vweird.f32 %v3633
        %vm3640 = vmor %vm3638, %vm3639
        %v3641 = vsel %vm3640, %v3633, %v3637
        %v3642 = vand.u32 2147483647, %v2944
        %vm3643 = vcmp.eq.f32.partialorder %v3642, 8.507059e+37
        %v3644 = vand.u32 %v2944, 2147483648
        %v3645 = vor.u32 1.1754944e-38, %v3644
        %v3646 = vsel %vm3643, %v3645, %v3641
        %v3647 = vmul.f32 %v2960, %v3646
        %v3648 = vrcp.pop %v2945
        %v3649 = vmul.f32 %v2945, %v3648
        %v3650 = vsub.f32 1.0, %v3649
        %v3651 = vmul.f32 %v3648, %v3650
        %v3652 = vadd.f32 %v3648, %v3651
        %vm3653 = vweird.f32 %v2945
        %vm3654 = vweird.f32 %v3648
        %vm3655 = vmor %vm3653, %vm3654
        %v3656 = vsel %vm3655, %v3648, %v3652
        %v3657 = vand.u32 2147483647, %v2945
        %vm3658 = vcmp.eq.f32.partialorder %v3657, 8.507059e+37
        %v3659 = vand.u32 %v2945, 2147483648
        %v3660 = vor.u32 1.1754944e-38, %v3659
        %v3661 = vsel %vm3658, %v3660, %v3656
        %v3662 = vmul.f32 %v2961, %v3661
        %v3663 = vrcp.pop %v2946
        %v3664 = vmul.f32 %v2946, %v3663
        %v3665 = vsub.f32 1.0, %v3664
        %v3666 = vmul.f32 %v3663, %v3665
        %v3667 = vadd.f32 %v3663, %v3666
        %vm3668 = vweird.f32 %v2946
        %vm3669 = vweird.f32 %v3663
        %vm3670 = vmor %vm3668, %vm3669
        %v3671 = vsel %vm3670, %v3663, %v3667
        %v3672 = vand.u32 2147483647, %v2946
        %vm3673 = vcmp.eq.f32.partialorder %v3672, 8.507059e+37
        %v3674 = vand.u32 %v2946, 2147483648
        %v3675 = vor.u32 1.1754944e-38, %v3674
        %v3676 = vsel %vm3673, %v3675, %v3671
        %v3677 = vmul.f32 %v2962, %v3676
        %v3678 = vrcp.pop %v2947
        %v3679 = vmul.f32 %v2947, %v3678
        %v3680 = vsub.f32 1.0, %v3679
        %v3681 = vmul.f32 %v3678, %v3680
        %v3682 = vadd.f32 %v3678, %v3681
        %vm3683 = vweird.f32 %v2947
        %vm3684 = vweird.f32 %v3678
        %vm3685 = vmor %vm3683, %vm3684
        %v3686 = vsel %vm3685, %v3678, %v3682
        %v3687 = vand.u32 2147483647, %v2947
        %vm3688 = vcmp.eq.f32.partialorder %v3687, 8.507059e+37
        %v3689 = vand.u32 %v2947, 2147483648
        %v3690 = vor.u32 1.1754944e-38, %v3689
        %v3691 = vsel %vm3688, %v3690, %v3686
        %v3692 = vmul.f32 %v2963, %v3691
        %v3693 = vrcp.pop %v2948
        %v3694 = vmul.f32 %v2948, %v3693
        %v3695 = vsub.f32 1.0, %v3694
        %v3696 = vmul.f32 %v3693, %v3695
        %v3697 = vadd.f32 %v3693, %v3696
        %vm3698 = vweird.f32 %v2948
        %vm3699 = vweird.f32 %v3693
        %vm3700 = vmor %vm3698, %vm3699
        %v3701 = vsel %vm3700, %v3693, %v3697
        %v3702 = vand.u32 2147483647, %v2948
        %vm3703 = vcmp.eq.f32.partialorder %v3702, 8.507059e+37
        %v3704 = vand.u32 %v2948, 2147483648
        %v3705 = vor.u32 1.1754944e-38, %v3704
        %v3706 = vsel %vm3703, %v3705, %v3701
        %v3707 = vmul.f32 %v2964, %v3706
        %v3708 = vrcp.pop %v2949
        %v3709 = vmul.f32 %v2949, %v3708
        %v3710 = vsub.f32 1.0, %v3709
        %v3711 = vmul.f32 %v3708, %v3710
        %v3712 = vadd.f32 %v3708, %v3711
        %vm3713 = vweird.f32 %v2949
        %vm3714 = vweird.f32 %v3708
        %vm3715 = vmor %vm3713, %vm3714
        %v3716 = vsel %vm3715, %v3708, %v3712
        %v3717 = vand.u32 2147483647, %v2949
        %vm3718 = vcmp.eq.f32.partialorder %v3717, 8.507059e+37
        %v3719 = vand.u32 %v2949, 2147483648
        %v3720 = vor.u32 1.1754944e-38, %v3719
        %v3721 = vsel %vm3718, %v3720, %v3716
        %v3722 = vmul.f32 %v2965, %v3721
        %v3723 = vpack.c.bf16 %v3497, %v3497
        %v3724 = vpack.c.bf16 %v3512, %v3512
        %v3725 = vpack.c.bf16 %v3527, %v3527
        %v3726 = vpack.c.bf16 %v3542, %v3542
        %v3727 = vpack.c.bf16 %v3557, %v3557
        %v3728 = vpack.c.bf16 %v3572, %v3572
        %v3729 = vpack.c.bf16 %v3587, %v3587
        %v3730 = vpack.c.bf16 %v3602, %v3602
        %v3731 = vpack.c.bf16 %v3617, %v3617
        %v3732 = vpack.c.bf16 %v3632, %v3632
        %v3733 = vpack.c.bf16 %v3647, %v3647
        %v3734 = vpack.c.bf16 %v3662, %v3662
        %v3735 = vpack.c.bf16 %v3677, %v3677
        %v3736 = vpack.c.bf16 %v3692, %v3692
        %v3737 = vpack.c.bf16 %v3707, %v3707
        %v3738 = vpack.c.bf16 %v3722, %v3722
        %3739 = vst [vmem:[%s1061] sm:$0xf] %v3723
        %3740 = vst [vmem:[%s1061 + $0x4] sm:$0xf] %v3724
        %3741 = vst [vmem:[%s1061 + $0x8] sm:$0xf] %v3725
        %3742 = vst [vmem:[%s1061 + $0xc] sm:$0xf] %v3726
        %3743 = vst [vmem:[%s1061 + $0x10] sm:$0xf] %v3727
        %3744 = vst [vmem:[%s1061 + $0x14] sm:$0xf] %v3728
        %3745 = vst [vmem:[%s1061 + $0x18] sm:$0xf] %v3729
        %3746 = vst [vmem:[%s1061 + $0x1c] sm:$0xf] %v3730
        %3747 = vst [vmem:[%s1061 + $0x20] sm:$0xf] %v3731
        %3748 = vst [vmem:[%s1061 + $0x24] sm:$0xf] %v3732
        %3749 = vst [vmem:[%s1061 + $0x28] sm:$0xf] %v3733
        %3750 = vst [vmem:[%s1061 + $0x2c] sm:$0xf] %v3734
        %3751 = vst [vmem:[%s1061 + $0x30] sm:$0xf] %v3735
        %3752 = vst [vmem:[%s1061 + $0x34] sm:$0xf] %v3736
        %3753 = vst [vmem:[%s1061 + $0x38] sm:$0xf] %v3737
        %3754 = vst [vmem:[%s1061 + $0x3c] sm:$0xf] %v3738
        %s3755 = sand.u32 %s268, 1
        %s3756 = sand.u32 %s268, 1
        %s3757 = smul.addr %s3756, 64
        %s3758 = scalar_lea.vmem [#allocation10], %s3757
        // Predicated region
        $region236: #{_lambda_.4} parent=203 // pred_check
          %p3759 = pneg %p278
        $region237: #{_lambda_.4} parent=203 // pred_check_branch
          %3761 = sbr.rel (%p3759) target = $region239
        $region238: #{_lambda_.4} parent=203 // pred_region
          %s3762 = smul.u32 16, %s26
          %s3763 = smul.addr %s3762, 2
          %s3764 = sadd.s32 %s25, %s3763
          %s3765 = smul.addr %s3764, 4
          %s3766 = scalar_lea.vmem %s9, %s3765
          // Predicated region
          $region240: #{_lambda_.4} parent=238 // pred_check
            _
          $region241: #{_lambda_.4} parent=238 // pred_check_branch
            %3768 = sbr.rel (0) target = $region243
          $region242: #{_lambda_.4} parent=238 // pred_region
            // Predicated region
            $region244: #{_lambda_.4} parent=242 // pred_check
              _
            $region245: #{_lambda_.4} parent=242 // pred_check_branch
              %3770 = sbr.rel target = $region247
            $region246: #{_lambda_.4} parent=242 // pred_region
              // Predicated region
              $region259: #{_lambda_.4} parent=246 // pred_check
                _
              $region260: #{_lambda_.4} parent=246 // pred_check_branch
                %3816 = sbr.rel (0) target = $region262
              $region261: #{_lambda_.4} parent=246 // pred_region
                loop: start=0, step=1, limit=1
                $region263: #{_lambda_.4} parent=261 // loop_pre_header
                  _
                $region264: #{_lambda_.4} parent=261 // loop_header
                  %s3818 = sphi 0, %s3822
                  %p3819 = scmp.ge.s32.totalorder %s3818, 1
                  %s3823 = sphi %s3758, %s3758
                  %s3824 = sphi %s3766, %s3766
                $region265: #{_lambda_.4} parent=261 // loop_header_branch
                  %3821 = sbr.rel (%p3819) target = $region269
                $region266: #{_lambda_.4} parent=261 // loop_body
                  _
                $region267: #{_lambda_.4} parent=261 // loop_footer
                  %s3822 = sadd.s32 1, %s3818
                $region268: #{_lambda_.4} parent=261 // loop_footer_branch
                  %3817 = sbr.rel target = $region264
                $region269: #{_lambda_.4} parent=261 // loop_exit
                  _
                %s3826 = ssub.s32 16, 1
                loop: start=0, step=1, limit=1
                $region270: #{_lambda_.4} parent=261 // loop_pre_header
                  _
                $region271: #{_lambda_.4} parent=261 // loop_header
                  %s3828 = sphi 0, %s3832
                  %p3829 = scmp.ge.s32.totalorder %s3828, 1
                  %s3833 = sphi %s3758, %s3758
                  %s3834 = sphi %s3766, %s3766
                $region272: #{_lambda_.4} parent=261 // loop_header_branch
                  %3831 = sbr.rel (%p3829) target = $region276
                $region273: #{_lambda_.4} parent=261 // loop_body
                  %v3835 = vld [vmem:[%s3833] sm:%s3826]
                  %3836 = vst [vmem:[%s3834] sm:%s3826] %v3835
                  %v3837 = vld [vmem:[%s3833 + $0x4] sm:%s3826]
                  %3838 = vst [vmem:[%s3834 + $0x8] sm:%s3826] %v3837
                  %v3839 = vld [vmem:[%s3833 + $0x8] sm:%s3826]
                  %3840 = vst [vmem:[%s3834 + $0x10] sm:%s3826] %v3839
                  %v3841 = vld [vmem:[%s3833 + $0xc] sm:%s3826]
                  %3842 = vst [vmem:[%s3834 + $0x18] sm:%s3826] %v3841
                  %v3843 = vld [vmem:[%s3833 + $0x10] sm:%s3826]
                  %3844 = vst [vmem:[%s3834 + $0x20] sm:%s3826] %v3843
                  %v3845 = vld [vmem:[%s3833 + $0x14] sm:%s3826]
                  %3846 = vst [vmem:[%s3834 + $0x28] sm:%s3826] %v3845
                  %v3847 = vld [vmem:[%s3833 + $0x18] sm:%s3826]
                  %3848 = vst [vmem:[%s3834 + $0x30] sm:%s3826] %v3847
                  %v3849 = vld [vmem:[%s3833 + $0x1c] sm:%s3826]
                  %3850 = vst [vmem:[%s3834 + $0x38] sm:%s3826] %v3849
                  %v3851 = vld [vmem:[%s3833 + $0x20] sm:%s3826]
                  %3852 = vst [vmem:[%s3834 + $0x40] sm:%s3826] %v3851
                  %v3853 = vld [vmem:[%s3833 + $0x24] sm:%s3826]
                  %3854 = vst [vmem:[%s3834 + $0x48] sm:%s3826] %v3853
                  %v3855 = vld [vmem:[%s3833 + $0x28] sm:%s3826]
                  %3856 = vst [vmem:[%s3834 + $0x50] sm:%s3826] %v3855
                  %v3857 = vld [vmem:[%s3833 + $0x2c] sm:%s3826]
                  %3858 = vst [vmem:[%s3834 + $0x58] sm:%s3826] %v3857
                  %v3859 = vld [vmem:[%s3833 + $0x30] sm:%s3826]
                  %3860 = vst [vmem:[%s3834 + $0x60] sm:%s3826] %v3859
                  %v3861 = vld [vmem:[%s3833 + $0x34] sm:%s3826]
                  %3862 = vst [vmem:[%s3834 + $0x68] sm:%s3826] %v3861
                  %v3863 = vld [vmem:[%s3833 + $0x38] sm:%s3826]
                  %3864 = vst [vmem:[%s3834 + $0x70] sm:%s3826] %v3863
                  %v3865 = vld [vmem:[%s3833 + $0x3c] sm:%s3826]
                  %3866 = vst [vmem:[%s3834 + $0x78] sm:%s3826] %v3865
                $region274: #{_lambda_.4} parent=261 // loop_footer
                  %s3832 = sadd.s32 1, %s3828
                $region275: #{_lambda_.4} parent=261 // loop_footer_branch
                  %3827 = sbr.rel target = $region271
                $region276: #{_lambda_.4} parent=261 // loop_exit
                  _
              $region262: #{_lambda_.4} parent=246 // pred_fallthru
                _
            $region247: #{_lambda_.4} parent=242 // pred_fallthru
              _
            // Predicated region
            $region248: #{_lambda_.4} parent=242 // pred_check
              _
            $region249: #{_lambda_.4} parent=242 // pred_check_branch
              %3772 = sbr.rel (0) target = $region251
            $region250: #{_lambda_.4} parent=242 // pred_region
              %s3774 = ssub.s32 16, 1
              loop: start=0, step=1, limit=1
              $region252: #{_lambda_.4} parent=250 // loop_pre_header
                _
              $region253: #{_lambda_.4} parent=250 // loop_header
                %s3776 = sphi 0, %s3780
                %p3777 = scmp.ge.s32.totalorder %s3776, 1
                %s3781 = sphi %s3758, %s3758
                %s3782 = sphi %s3766, %s3766
              $region254: #{_lambda_.4} parent=250 // loop_header_branch
                %3779 = sbr.rel (%p3777) target = $region258
              $region255: #{_lambda_.4} parent=250 // loop_body
                %v3783 = vld [vmem:[%s3781] sm:%s3774]
                %3784 = vst [vmem:[%s3782] sm:%s3774] %v3783
                %v3785 = vld [vmem:[%s3781 + $0x4] sm:%s3774]
                %3786 = vst [vmem:[%s3782 + $0x8] sm:%s3774] %v3785
                %v3787 = vld [vmem:[%s3781 + $0x8] sm:%s3774]
                %3788 = vst [vmem:[%s3782 + $0x10] sm:%s3774] %v3787
                %v3789 = vld [vmem:[%s3781 + $0xc] sm:%s3774]
                %3790 = vst [vmem:[%s3782 + $0x18] sm:%s3774] %v3789
                %v3791 = vld [vmem:[%s3781 + $0x10] sm:%s3774]
                %3792 = vst [vmem:[%s3782 + $0x20] sm:%s3774] %v3791
                %v3793 = vld [vmem:[%s3781 + $0x14] sm:%s3774]
                %3794 = vst [vmem:[%s3782 + $0x28] sm:%s3774] %v3793
                %v3795 = vld [vmem:[%s3781 + $0x18] sm:%s3774]
                %3796 = vst [vmem:[%s3782 + $0x30] sm:%s3774] %v3795
                %v3797 = vld [vmem:[%s3781 + $0x1c] sm:%s3774]
                %3798 = vst [vmem:[%s3782 + $0x38] sm:%s3774] %v3797
                %v3799 = vld [vmem:[%s3781 + $0x20] sm:%s3774]
                %3800 = vst [vmem:[%s3782 + $0x40] sm:%s3774] %v3799
                %v3801 = vld [vmem:[%s3781 + $0x24] sm:%s3774]
                %3802 = vst [vmem:[%s3782 + $0x48] sm:%s3774] %v3801
                %v3803 = vld [vmem:[%s3781 + $0x28] sm:%s3774]
                %3804 = vst [vmem:[%s3782 + $0x50] sm:%s3774] %v3803
                %v3805 = vld [vmem:[%s3781 + $0x2c] sm:%s3774]
                %3806 = vst [vmem:[%s3782 + $0x58] sm:%s3774] %v3805
                %v3807 = vld [vmem:[%s3781 + $0x30] sm:%s3774]
                %3808 = vst [vmem:[%s3782 + $0x60] sm:%s3774] %v3807
                %v3809 = vld [vmem:[%s3781 + $0x34] sm:%s3774]
                %3810 = vst [vmem:[%s3782 + $0x68] sm:%s3774] %v3809
                %v3811 = vld [vmem:[%s3781 + $0x38] sm:%s3774]
                %3812 = vst [vmem:[%s3782 + $0x70] sm:%s3774] %v3811
                %v3813 = vld [vmem:[%s3781 + $0x3c] sm:%s3774]
                %3814 = vst [vmem:[%s3782 + $0x78] sm:%s3774] %v3813
              $region256: #{_lambda_.4} parent=250 // loop_footer
                %s3780 = sadd.s32 1, %s3776
              $region257: #{_lambda_.4} parent=250 // loop_footer_branch
                %3775 = sbr.rel target = $region253
              $region258: #{_lambda_.4} parent=250 // loop_exit
                _
            $region251: #{_lambda_.4} parent=242 // pred_fallthru
              _
          $region243: #{_lambda_.4} parent=238 // pred_fallthru
            _
          %3867 = vnop
        $region239: #{_lambda_.4} parent=203 // pred_fallthru
          _
      $region204: #{_lambda_.4} parent=5 // pred_fallthru
        _
      %p3868 = scmp.le.s32.totalorder 2, %s16
      // Predicated region
      $region277: #{_lambda_.4} parent=5 // pred_check
        %p3869 = pneg %p3868
      $region278: #{_lambda_.4} parent=5 // pred_check_branch
        %3871 = sbr.rel (%p3869) target = $region280
      $region279: #{_lambda_.4} parent=5 // pred_region
        %s3872 = ssub.s32 %s16, 2
        // Predicated region
        $region281: #{_lambda_.4} parent=279 // pred_check
          %p3873 = pneg %p284
        $region282: #{_lambda_.4} parent=279 // pred_check_branch
          %3875 = sbr.rel (%p3873) target = $region284
        $region283: #{_lambda_.4} parent=279 // pred_region
          %s3876 = sand.u32 %s269, 1
          %s3877 = sand.u32 %s269, 1
          %s3878 = smul.addr %s3877, 64
          %s3879 = scalar_lea.vmem [#allocation10], %s3878
        $region284: #{_lambda_.4} parent=279 // pred_fallthru
          _
      $region280: #{_lambda_.4} parent=5 // pred_fallthru
        _
    $region6: #{_lambda_.4} parent=1 // loop_footer
      %s20 = sadd.s32 1, %s16
    $region7: #{_lambda_.4} parent=1 // loop_footer_branch
      %15 = sbr.rel target = $region3
    $region8: #{_lambda_.4} parent=1 // loop_exit
      _
    %3880 = vsyncpa [#allocation5], 1
    %s3881 = scalar_lea.sflag [#allocation5], 1
    %3882 = vsyncpa %s3881, 1

</llo_original>
